<compile_context>
chip_gen: v6e
topology: v6e:2x2x1
jax: 0.10.0
libtpu: 0.0.40
codegen_flags: <defaults>
</compile_context>

<pallas_src>
import functools

import jax
import jax.numpy as jnp
from jax.experimental import pallas as pl
from jax.experimental.pallas import tpu as pltpu

LANE_TILE = 512  # lane (last-dim) tile of the conv GEMM; multiple of 128


def _round_up(x, m):
    return ((x + m - 1) // m) * m


# --------------------------- Conv GEMM (Pallas) -------------------------------

def _conv_gemm_kernel(*refs, relu, has_residual):
    if has_residual:
        w_ref, b_ref, p_ref, r_ref, o_ref = refs
    else:
        w_ref, b_ref, p_ref, o_ref = refs
        r_ref = None
    # bf16 operands on the MXU, f32 accumulation.
    acc = jnp.dot(w_ref[...], p_ref[...], preferred_element_type=jnp.float32)
    acc = acc + b_ref[...]                     # folded-BN bias, broadcast over lanes
    if r_ref is not None:
        acc = acc + r_ref[...]                 # fused BasicBlock3D residual
    if relu:
        acc = jnp.maximum(acc, 0.0)
    o_ref[...] = acc


def _conv_gemm(wm, slab, bias, *, relu, residual=None):
    """(Cout, K) @ (K, M) + bias (+ residual) (+ ReLU); M lane-dense and tiled.

    Returns the (Cout, Mp) f32 result, Mp = M rounded up to the lane tile."""
    Cout, K = wm.shape
    M = slab.shape[1]
    Mp = _round_up(M, 128)
    tn = Mp if Mp <= LANE_TILE else LANE_TILE
    Mp = _round_up(Mp, tn)
    if Mp != M:
        slab = jnp.pad(slab, ((0, 0), (0, Mp - M)))

    in_specs = [
        pl.BlockSpec((Cout, K), lambda i: (0, 0)),   # weights: resident across grid
        pl.BlockSpec((Cout, 1), lambda i: (0, 0)),   # bias: resident across grid
        pl.BlockSpec((K, tn), lambda i: (0, i)),     # patch slab: lane-tiled
    ]
    args = [wm, bias, slab]
    if residual is not None:
        assert residual.shape == (Cout, Mp) and residual.dtype == jnp.float32
        in_specs.append(pl.BlockSpec((Cout, tn), lambda i: (0, i)))
        args.append(residual)

    return pl.pallas_call(
        functools.partial(_conv_gemm_kernel, relu=relu,
                          has_residual=residual is not None),
        out_shape=jax.ShapeDtypeStruct((Cout, Mp), jnp.float32),
        grid=(Mp // tn,),
        in_specs=in_specs,
        out_specs=pl.BlockSpec((Cout, tn), lambda i: (0, i)),
        compiler_params=pltpu.CompilerParams(dimension_semantics=("parallel",)),
    )(*args)


def conv3d_bn(x, w, bias, *, relu, residual=None, out_flat=False):
    """3x3x3 Conv3d, stride 1, padding 1, BN folded into (w, bias).

    x: (Cin, B, D, H, W) f32.  Returns (Cout, B, D, H, W) f32, or the lane-padded
    flat (Cout, Mp) GEMM result when out_flat=True (to be fed back as a residual)."""
    Cin, B, D, H, W = x.shape
    Cout = w.shape[0]
    M = B * D * H * W
    xp = jnp.pad(x.astype(jnp.bfloat16), ((0, 0), (0, 0), (1, 1), (1, 1), (1, 1)))
    taps = [xp[:, :, kd:kd + D, kh:kh + H, kw:kw + W]
            for kd in range(3) for kh in range(3) for kw in range(3)]
    slab = jnp.stack(taps, axis=1).reshape(Cin * 27, M)          # (K, M) bf16
    wm = w.reshape(Cout, Cin * 27).astype(jnp.bfloat16)          # (Cout, K) bf16
    y = _conv_gemm(wm, slab, bias.reshape(Cout, 1).astype(jnp.float32),
                   relu=relu, residual=residual)
    if out_flat:
        return y
    return y[:, :M].reshape(Cout, B, D, H, W)


def basic_block3d(x, p):
    """BasicBlock3D: relu(conv2(relu(conv1(x))) + downsample(x)), BN folded.
    The residual add and the final ReLU are fused into the conv2 GEMM epilogue."""
    r = conv3d_bn(x, p["wd"], p["bd"], relu=False, out_flat=True)   # downsample + BN
    y = conv3d_bn(x, p["w1"], p["b1"], relu=True)                   # conv1 + BN + ReLU
    return conv3d_bn(y, p["w2"], p["b2"], relu=True, residual=r)    # conv2+BN+res+ReLU


# --------------------------- Trilinear interpolation (glue, plain JAX) --------

def _interp_linear_axis(x, axis, out_size):
    in_size = x.shape[axis]
    if out_size == in_size:
        return x
    if out_size == 1:
        coords = jnp.zeros((1,), jnp.float32)
    else:
        coords = jnp.arange(out_size, dtype=jnp.float32) * (
            (in_size - 1) / (out_size - 1))
    lo = jnp.floor(coords).astype(jnp.int32)
    hi = jnp.minimum(lo + 1, in_size - 1)
    wgt = (coords - lo.astype(jnp.float32)).astype(x.dtype)
    xlo = jnp.take(x, lo, axis=axis)
    xhi = jnp.take(x, hi, axis=axis)
    wshape = [1] * x.ndim
    wshape[axis] = out_size
    wgt = wgt.reshape(wshape)
    return xlo * (1.0 - wgt) + xhi * wgt


def upsample_hw2x(x):
    # nn.Upsample(scale_factor=(1,2,2), mode='trilinear', align_corners=True)
    x = _interp_linear_axis(x, 3, x.shape[3] * 2)
    x = _interp_linear_axis(x, 4, x.shape[4] * 2)
    return x


def shrink_depth(x, factor):
    # F.interpolate(scale_factor=(factor,1,1), mode='trilinear', align_corners=True)
    out_d = int(x.shape[2] * factor)
    return _interp_linear_axis(x, 2, out_d)


# --------------------------- Attention (Pallas) --------------------------------

def _attn_scores_kernel(q_ref, kt_ref, ta_ref, sa_ref):
    q = q_ref[0]            # (F, HW) bf16
    kt = kt_ref[0]          # (HW, F) bf16
    ta_ref[0] = jnp.dot(q, kt, preferred_element_type=jnp.float32)   # temp_attn^T
    sa_ref[0] = jnp.dot(kt, q, preferred_element_type=jnp.float32)   # spat_attn


def _attn_apply_kernel(ta_ref, sa_ref, x_ref, o_ref):
    # ta/sa blocks are resident across the inner channel grid axis (index map
    # ignores c); the (F, HW) intermediate never leaves VMEM.
    ta = ta_ref[0]                              # (F, F) bf16
    sa = sa_ref[0]                              # (HW, HW) bf16
    x = x_ref[0, 0]                             # (F, HW) bf16
    t = jnp.dot(ta, x, preferred_element_type=jnp.float32)
    o_ref[0, 0] = jnp.dot(t.astype(jnp.bfloat16), sa,
                          preferred_element_type=jnp.float32)


def attention(k, q, maps):
    """TemporalDecoder2.attention.  k, q: (1, B, F, H, W); maps: (C, B, F, H, W)."""
    C, B, F, H, W = maps.shape
    HW = H * W
    q2 = q[0].reshape(B, F, HW).astype(jnp.bfloat16)
    k2t = jnp.transpose(k[0].reshape(B, F, HW), (0, 2, 1)).astype(jnp.bfloat16)

    ta, sa = pl.pallas_call(
        _attn_scores_kernel,
        out_shape=(jax.ShapeDtypeStruct((B, F, F), jnp.float32),
                   jax.ShapeDtypeStruct((B, HW, HW), jnp.float32)),
        grid=(B,),
        in_specs=[pl.BlockSpec((1, F, HW), lambda b: (b, 0, 0)),
                  pl.BlockSpec((1, HW, F), lambda b: (b, 0, 0))],
        out_specs=(pl.BlockSpec((1, F, F), lambda b: (b, 0, 0)),
                   pl.BlockSpec((1, HW, HW), lambda b: (b, 0, 0))),
        compiler_params=pltpu.CompilerParams(dimension_semantics=("parallel",)),
    )(q2, k2t)
    ta = ta.astype(jnp.bfloat16)
    sa = sa.astype(jnp.bfloat16)

    mf = maps.reshape(C, B, F, HW).astype(jnp.bfloat16)
    out = pl.pallas_call(
        _attn_apply_kernel,
        out_shape=jax.ShapeDtypeStruct((C, B, F, HW), jnp.float32),
        grid=(B, C),                                   # channel axis innermost
        in_specs=[pl.BlockSpec((1, F, F), lambda b, c: (b, 0, 0)),
                  pl.BlockSpec((1, HW, HW), lambda b, c: (b, 0, 0)),
                  pl.BlockSpec((1, 1, F, HW), lambda b, c: (c, b, 0, 0))],
        out_specs=pl.BlockSpec((1, 1, F, HW), lambda b, c: (c, b, 0, 0)),
        compiler_params=pltpu.CompilerParams(
            dimension_semantics=("parallel", "parallel")),
    )(ta, sa, mf)
    return out.reshape(C, B, F, H, W)


# --------------------------- Parameters ----------------------------------------

def _make_conv_bn(key, cin, cout, std=0.05, eps=1e-5):
    ks = jax.random.split(key, 5)
    w = std * jax.random.normal(ks[0], (cout, cin, 3, 3, 3), jnp.float32)
    gamma = 1.0 + 0.1 * jax.random.normal(ks[1], (cout,), jnp.float32)
    beta = 0.1 * jax.random.normal(ks[2], (cout,), jnp.float32)
    mean = 0.1 * jax.random.normal(ks[3], (cout,), jnp.float32)
    var = 0.5 + jnp.abs(jax.random.normal(ks[4], (cout,), jnp.float32))
    scale = gamma / jnp.sqrt(var + eps)
    return w * scale[:, None, None, None, None], beta - mean * scale


def make_basic_block_params(key, cin, cout):
    k1, k2, k3 = jax.random.split(key, 3)
    w1, b1 = _make_conv_bn(k1, cin, cout)
    w2, b2 = _make_conv_bn(k2, cout, cout)
    wd, bd = _make_conv_bn(k3, cin, cout)
    return dict(w1=w1, b1=b1, w2=w2, b2=b2, wd=wd, bd=bd)


def make_params(key, nf, nk):
    names_dims = [
        ("dec1_bb1", nf * 16, nf * 8),
        ("dec1_bb2", nf * 8, nf * 4),
        ("dec2_bb1", nf * 8, nf * 4),
        ("dec2_bb2", nf * 4, nf * 2),
        ("dec3_bb1", nf * 4, nf * 2),
        ("final_bb", nf * 2, nk),
        ("phi2", nf * 4, 1),
        ("theta2", nf * 4, 1),
        ("phi1", nf * 2, 1),
        ("theta1", nf * 2, 1),
    ]
    keys = jax.random.split(key, len(names_dims))
    return {name: make_basic_block_params(k, ci, co)
            for k, (name, ci, co) in zip(keys, names_dims)}


# --------------------------- TemporalDecoder2 forward --------------------------

def temporal_decoder2_forward(params, hl1maps, hl2maps, vl1maps, vl2maps, maps):
    # NCDHW (module interface) -> internal channels-first (C, B, D, H, W).
    cf = lambda a: jnp.transpose(a, (1, 0, 2, 3, 4))
    maps, hl1maps, hl2maps, vl1maps, vl2maps = map(
        cf, (maps, hl1maps, hl2maps, vl1maps, vl2maps))

    # decoderLayer1
    m = basic_block3d(maps, params["dec1_bb1"])
    m = basic_block3d(m, params["dec1_bb2"])
    m = upsample_hw2x(m)

    k2 = basic_block3d(m, params["phi2"])
    q2 = basic_block3d(m, params["theta2"])
    hl2 = shrink_depth(hl2maps, 0.5)
    vl2 = shrink_depth(vl2maps, 0.5)
    l2maps = attention(k2, q2, hl2 + vl2)

    # decoderLayer2
    m = basic_block3d(jnp.concatenate([m, l2maps], axis=0), params["dec2_bb1"])
    m = basic_block3d(m, params["dec2_bb2"])
    m = upsample_hw2x(m)

    k1 = basic_block3d(m, params["phi1"])
    q1 = basic_block3d(m, params["theta1"])
    hl1 = shrink_depth(hl1maps, 0.25)
    vl1 = shrink_depth(vl1maps, 0.25)
    l1maps = attention(k1, q1, hl1 + vl1)

    # decoderLayer3 + finalLayer
    finalfeature = basic_block3d(jnp.concatenate([m, l1maps], axis=0),
                                 params["dec3_bb1"])
    output = basic_block3d(finalfeature, params["final_bb"])

    # back to NCDHW
    return (jnp.transpose(output, (1, 0, 2, 3, 4)),
            jnp.transpose(finalfeature, (1, 0, 2, 3, 4)))


# --------------------------- Main -----------------------------------------------

if __name__ == "__main__":
    # Small synthetic config: numFilters=2, numKeypoints=4, heatmapSize=8,
    # 2 frames at the decoder level (so hl2/vl2 have 4 frames, hl1/vl1 have 8).
    nf, nk, batch, hm, frames = 2, 4, 2, 8, 2

    key = jax.random.PRNGKey(0)
    kp, k0, k1, k2, k3, k4 = jax.random.split(key, 6)

    params = make_params(kp, nf, nk)

    maps = 0.5 * jax.random.normal(k0, (batch, nf * 16, frames, hm // 4, hm // 4),
                                   jnp.float32)
    hl2maps = 0.5 * jax.random.normal(k1, (batch, nf * 4, frames * 2, hm // 2, hm // 2),
                                      jnp.float32)
    vl2maps = 0.5 * jax.random.normal(k2, (batch, nf * 4, frames * 2, hm // 2, hm // 2),
                                      jnp.float32)
    hl1maps = 0.5 * jax.random.normal(k3, (batch, nf * 2, frames * 4, hm, hm),
                                      jnp.float32)
    vl1maps = 0.5 * jax.random.normal(k4, (batch, nf * 2, frames * 4, hm, hm),
                                      jnp.float32)

    fwd = jax.jit(temporal_decoder2_forward)
    output, finalfeature = fwd(params, hl1maps, hl2maps, vl1maps, vl2maps, maps)
    jax.block_until_ready((output, finalfeature))

    assert output.shape == (batch, nk, frames, hm, hm)
    assert finalfeature.shape == (batch, nf * 2, frames, hm, hm)
    print("KERNEL_OK")
</pallas_src>

<mosaic_0001>
module attributes {stable_mosaic.version = 11 : i64} {
  func.func @_conv_gemm_kernel(%arg0: i32, %arg1: memref<16x864xbf16, #tpu.memory_space<vmem>>, %arg2: memref<16x1xf32, #tpu.memory_space<vmem>>, %arg3: memref<864x128xbf16, #tpu.memory_space<vmem>>, %arg4: memref<16x128xf32, #tpu.memory_space<vmem>>) attributes {dimension_semantics = [#tpu.dimension_semantics<parallel>], iteration_bounds = array<i64: 1>, scalar_prefetch = 0 : i64, scratch_operands = 0 : i64, tpu.core_type = #tpu.core_type<tc>, window_params = [{pipeline_mode = #tpu.pipeline_mode<synchronous>, transform_indices = @transform_0, window_bounds = array<i64: 16, 864>}, {pipeline_mode = #tpu.pipeline_mode<synchronous>, transform_indices = @transform_1, window_bounds = array<i64: 16, 1>}, {transform_indices = @transform_2, window_bounds = array<i64: 864, 128>}, {transform_indices = @transform_3, window_bounds = array<i64: 16, 128>}]} {
    %c0 = arith.constant 0 : index
    %c0_0 = arith.constant 0 : index
    %0 = vector.load %arg1[%c0, %c0_0] : memref<16x864xbf16, #tpu.memory_space<vmem>>, vector<16x864xbf16>
    %c0_1 = arith.constant 0 : index
    %c0_2 = arith.constant 0 : index
    %1 = vector.load %arg3[%c0_1, %c0_2] : memref<864x128xbf16, #tpu.memory_space<vmem>>, vector<864x128xbf16>
    %cst = arith.constant dense<0.000000e+00> : vector<16x128xf32>
    %2 = tpu.matmul %0, %1, %cst {dimension_numbers = #tpu.dot_dimension_numbers<[1], [0], [0], [1], [0, 0, 1, 1], [], []>} : vector<16x864xbf16>, vector<864x128xbf16>, vector<16x128xf32> -> vector<16x128xf32>
    %c0_3 = arith.constant 0 : index
    %c0_4 = arith.constant 0 : index
    %3 = vector.load %arg2[%c0_3, %c0_4] : memref<16x1xf32, #tpu.memory_space<vmem>>, vector<16x1xf32>
    %4 = vector.broadcast %3 : vector<16x1xf32> to vector<16x128xf32>
    %5 = arith.addf %2, %4 : vector<16x128xf32>
    %cst_5 = arith.constant 0.000000e+00 : f32
    %6 = vector.broadcast %cst_5 : f32 to vector<16x128xf32>
    %7 = arith.maximumf %5, %6 : vector<16x128xf32>
    %c0_6 = arith.constant 0 : index
    %c0_7 = arith.constant 0 : index
    %8 = vector.load %arg4[%c0_6, %c0_7] : memref<16x128xf32, #tpu.memory_space<vmem>>, vector<16x128xf32>
    tpu.vector_store %arg4[%c0_6, %c0_7], %7 {strides = array<i32>} : memref<16x128xf32, #tpu.memory_space<vmem>>, vector<16x128xf32>,
    return
  }
  func.func @transform_0(%arg0: i32) -> (i32, i32) {
    %c0_i32 = arith.constant 0 : i32
    %c0_i32_0 = arith.constant 0 : i32
    %c0_i32_1 = arith.constant 0 : i32
    return %c0_i32, %c0_i32_0 : i32, i32
  }
  func.func @transform_1(%arg0: i32) -> (i32, i32) {
    %c0_i32 = arith.constant 0 : i32
    %c0_i32_0 = arith.constant 0 : i32
    %c0_i32_1 = arith.constant 0 : i32
    return %c0_i32, %c0_i32_0 : i32, i32
  }
  func.func @transform_2(%arg0: i32) -> (i32, i32) {
    %c0_i32 = arith.constant 0 : i32
    %c0_i32_0 = arith.constant 0 : i32
    return %c0_i32, %arg0 : i32, i32
  }
  func.func @transform_3(%arg0: i32) -> (i32, i32) {
    %c0_i32 = arith.constant 0 : i32
    %c0_i32_0 = arith.constant 0 : i32
    return %c0_i32, %arg0 : i32, i32
  }
}

module attributes {stable_mosaic.version = 11 : i64} {
  func.func @_conv_gemm_kernel(%arg0: i32, %arg1: memref<16x864xbf16, #tpu.memory_space<vmem>>, %arg2: memref<16x1xf32, #tpu.memory_space<vmem>>, %arg3: memref<864x128xbf16, #tpu.memory_space<vmem>>, %arg4: memref<16x128xf32, #tpu.memory_space<vmem>>) attributes {dimension_semantics = [#tpu.dimension_semantics<parallel>], iteration_bounds = array<i64: 1>, scalar_prefetch = 0 : i64, scratch_operands = 0 : i64, tpu.core_type = #tpu.core_type<tc>, window_params = [{pipeline_mode = #tpu.pipeline_mode<synchronous>, transform_indices = @transform_0, window_bounds = array<i64: 16, 864>}, {pipeline_mode = #tpu.pipeline_mode<synchronous>, transform_indices = @transform_1, window_bounds = array<i64: 16, 1>}, {transform_indices = @transform_2, window_bounds = array<i64: 864, 128>}, {transform_indices = @transform_3, window_bounds = array<i64: 16, 128>}]} {
    %c0 = arith.constant 0 : index
    %c0_0 = arith.constant 0 : index
    %0 = vector.load %arg1[%c0, %c0_0] : memref<16x864xbf16, #tpu.memory_space<vmem>>, vector<16x864xbf16>
    %c0_1 = arith.constant 0 : index
    %c0_2 = arith.constant 0 : index
    %1 = vector.load %arg3[%c0_1, %c0_2] : memref<864x128xbf16, #tpu.memory_space<vmem>>, vector<864x128xbf16>
    %cst = arith.constant dense<0.000000e+00> : vector<16x128xf32>
    %2 = tpu.matmul %0, %1, %cst {dimension_numbers = #tpu.dot_dimension_numbers<[1], [0], [0], [1], [0, 0, 1, 1], [], []>} : vector<16x864xbf16>, vector<864x128xbf16>, vector<16x128xf32> -> vector<16x128xf32>
    %c0_3 = arith.constant 0 : index
    %c0_4 = arith.constant 0 : index
    %3 = vector.load %arg2[%c0_3, %c0_4] : memref<16x1xf32, #tpu.memory_space<vmem>>, vector<16x1xf32>
    %4 = vector.broadcast %3 : vector<16x1xf32> to vector<16x128xf32>
    %5 = arith.addf %2, %4 : vector<16x128xf32>
    %c0_5 = arith.constant 0 : index
    %c0_6 = arith.constant 0 : index
    %6 = vector.load %arg4[%c0_5, %c0_6] : memref<16x128xf32, #tpu.memory_space<vmem>>, vector<16x128xf32>
    tpu.vector_store %arg4[%c0_5, %c0_6], %5 {strides = array<i32>} : memref<16x128xf32, #tpu.memory_space<vmem>>, vector<16x128xf32>,
    return
  }
  func.func @transform_0(%arg0: i32) -> (i32, i32) {
    %c0_i32 = arith.constant 0 : i32
    %c0_i32_0 = arith.constant 0 : i32
    %c0_i32_1 = arith.constant 0 : i32
    return %c0_i32, %c0_i32_0 : i32, i32
  }
  func.func @transform_1(%arg0: i32) -> (i32, i32) {
    %c0_i32 = arith.constant 0 : i32
    %c0_i32_0 = arith.constant 0 : i32
    %c0_i32_1 = arith.constant 0 : i32
    return %c0_i32, %c0_i32_0 : i32, i32
  }
  func.func @transform_2(%arg0: i32) -> (i32, i32) {
    %c0_i32 = arith.constant 0 : i32
    %c0_i32_0 = arith.constant 0 : i32
    return %c0_i32, %arg0 : i32, i32
  }
  func.func @transform_3(%arg0: i32) -> (i32, i32) {
    %c0_i32 = arith.constant 0 : i32
    %c0_i32_0 = arith.constant 0 : i32
    return %c0_i32, %arg0 : i32, i32
  }
}

module attributes {stable_mosaic.version = 11 : i64} {
  func.func @_conv_gemm_kernel(%arg0: i32, %arg1: memref<16x432xbf16, #tpu.memory_space<vmem>>, %arg2: memref<16x1xf32, #tpu.memory_space<vmem>>, %arg3: memref<432x128xbf16, #tpu.memory_space<vmem>>, %arg4: memref<16x128xf32, #tpu.memory_space<vmem>>, %arg5: memref<16x128xf32, #tpu.memory_space<vmem>>) attributes {dimension_semantics = [#tpu.dimension_semantics<parallel>], iteration_bounds = array<i64: 1>, scalar_prefetch = 0 : i64, scratch_operands = 0 : i64, tpu.core_type = #tpu.core_type<tc>, window_params = [{pipeline_mode = #tpu.pipeline_mode<synchronous>, transform_indices = @transform_0, window_bounds = array<i64: 16, 432>}, {pipeline_mode = #tpu.pipeline_mode<synchronous>, transform_indices = @transform_1, window_bounds = array<i64: 16, 1>}, {transform_indices = @transform_2, window_bounds = array<i64: 432, 128>}, {transform_indices = @transform_3, window_bounds = array<i64: 16, 128>}, {transform_indices = @transform_4, window_bounds = array<i64: 16, 128>}]} {
    %c0 = arith.constant 0 : index
    %c0_0 = arith.constant 0 : index
    %0 = vector.load %arg1[%c0, %c0_0] : memref<16x432xbf16, #tpu.memory_space<vmem>>, vector<16x432xbf16>
    %c0_1 = arith.constant 0 : index
    %c0_2 = arith.constant 0 : index
    %1 = vector.load %arg3[%c0_1, %c0_2] : memref<432x128xbf16, #tpu.memory_space<vmem>>, vector<432x128xbf16>
    %cst = arith.constant dense<0.000000e+00> : vector<16x128xf32>
    %2 = tpu.matmul %0, %1, %cst {dimension_numbers = #tpu.dot_dimension_numbers<[1], [0], [0], [1], [0, 0, 1, 1], [], []>} : vector<16x432xbf16>, vector<432x128xbf16>, vector<16x128xf32> -> vector<16x128xf32>
    %c0_3 = arith.constant 0 : index
    %c0_4 = arith.constant 0 : index
    %3 = vector.load %arg2[%c0_3, %c0_4] : memref<16x1xf32, #tpu.memory_space<vmem>>, vector<16x1xf32>
    %4 = vector.broadcast %3 : vector<16x1xf32> to vector<16x128xf32>
    %5 = arith.addf %2, %4 : vector<16x128xf32>
    %c0_5 = arith.constant 0 : index
    %c0_6 = arith.constant 0 : index
    %6 = vector.load %arg4[%c0_5, %c0_6] : memref<16x128xf32, #tpu.memory_space<vmem>>, vector<16x128xf32>
    %7 = arith.addf %5, %6 : vector<16x128xf32>
    %cst_7 = arith.constant 0.000000e+00 : f32
    %8 = vector.broadcast %cst_7 : f32 to vector<16x128xf32>
    %9 = arith.maximumf %7, %8 : vector<16x128xf32>
    %c0_8 = arith.constant 0 : index
    %c0_9 = arith.constant 0 : index
    %10 = vector.load %arg5[%c0_8, %c0_9] : memref<16x128xf32, #tpu.memory_space<vmem>>, vector<16x128xf32>
    tpu.vector_store %arg5[%c0_8, %c0_9], %9 {strides = array<i32>} : memref<16x128xf32, #tpu.memory_space<vmem>>, vector<16x128xf32>,
    return
  }
  func.func @transform_0(%arg0: i32) -> (i32, i32) {
    %c0_i32 = arith.constant 0 : i32
    %c0_i32_0 = arith.constant 0 : i32
    %c0_i32_1 = arith.constant 0 : i32
    return %c0_i32, %c0_i32_0 : i32, i32
  }
  func.func @transform_1(%arg0: i32) -> (i32, i32) {
    %c0_i32 = arith.constant 0 : i32
    %c0_i32_0 = arith.constant 0 : i32
    %c0_i32_1 = arith.constant 0 : i32
    return %c0_i32, %c0_i32_0 : i32, i32
  }
  func.func @transform_2(%arg0: i32) -> (i32, i32) {
    %c0_i32 = arith.constant 0 : i32
    %c0_i32_0 = arith.constant 0 : i32
    return %c0_i32, %arg0 : i32, i32
  }
  func.func @transform_3(%arg0: i32) -> (i32, i32) {
    %c0_i32 = arith.constant 0 : i32
    %c0_i32_0 = arith.constant 0 : i32
    return %c0_i32, %arg0 : i32, i32
  }
  func.func @transform_4(%arg0: i32) -> (i32, i32) {
    %c0_i32 = arith.constant 0 : i32
    %c0_i32_0 = arith.constant 0 : i32
    return %c0_i32, %arg0 : i32, i32
  }
}

module attributes {stable_mosaic.version = 11 : i64} {
  func.func @_conv_gemm_kernel(%arg0: i32, %arg1: memref<8x432xbf16, #tpu.memory_space<vmem>>, %arg2: memref<8x1xf32, #tpu.memory_space<vmem>>, %arg3: memref<432x128xbf16, #tpu.memory_space<vmem>>, %arg4: memref<8x128xf32, #tpu.memory_space<vmem>>) attributes {dimension_semantics = [#tpu.dimension_semantics<parallel>], iteration_bounds = array<i64: 1>, scalar_prefetch = 0 : i64, scratch_operands = 0 : i64, tpu.core_type = #tpu.core_type<tc>, window_params = [{pipeline_mode = #tpu.pipeline_mode<synchronous>, transform_indices = @transform_0, window_bounds = array<i64: 8, 432>}, {pipeline_mode = #tpu.pipeline_mode<synchronous>, transform_indices = @transform_1, window_bounds = array<i64: 8, 1>}, {transform_indices = @transform_2, window_bounds = array<i64: 432, 128>}, {transform_indices = @transform_3, window_bounds = array<i64: 8, 128>}]} {
    %c0 = arith.constant 0 : index
    %c0_0 = arith.constant 0 : index
    %0 = vector.load %arg1[%c0, %c0_0] : memref<8x432xbf16, #tpu.memory_space<vmem>>, vector<8x432xbf16>
    %c0_1 = arith.constant 0 : index
    %c0_2 = arith.constant 0 : index
    %1 = vector.load %arg3[%c0_1, %c0_2] : memref<432x128xbf16, #tpu.memory_space<vmem>>, vector<432x128xbf16>
    %cst = arith.constant dense<0.000000e+00> : vector<8x128xf32>
    %2 = tpu.matmul %0, %1, %cst {dimension_numbers = #tpu.dot_dimension_numbers<[1], [0], [0], [1], [0, 0, 1, 1], [], []>} : vector<8x432xbf16>, vector<432x128xbf16>, vector<8x128xf32> -> vector<8x128xf32>
    %c0_3 = arith.constant 0 : index
    %c0_4 = arith.constant 0 : index
    %3 = vector.load %arg2[%c0_3, %c0_4] : memref<8x1xf32, #tpu.memory_space<vmem>>, vector<8x1xf32>
    %4 = vector.broadcast %3 : vector<8x1xf32> to vector<8x128xf32>
    %5 = arith.addf %2, %4 : vector<8x128xf32>
    %cst_5 = arith.constant 0.000000e+00 : f32
    %6 = vector.broadcast %cst_5 : f32 to vector<8x128xf32>
    %7 = arith.maximumf %5, %6 : vector<8x128xf32>
    %c0_6 = arith.constant 0 : index
    %c0_7 = arith.constant 0 : index
    %8 = vector.load %arg4[%c0_6, %c0_7] : memref<8x128xf32, #tpu.memory_space<vmem>>, vector<8x128xf32>
    tpu.vector_store %arg4[%c0_6, %c0_7], %7 {strides = array<i32>} : memref<8x128xf32, #tpu.memory_space<vmem>>, vector<8x128xf32>,
    return
  }
  func.func @transform_0(%arg0: i32) -> (i32, i32) {
    %c0_i32 = arith.constant 0 : i32
    %c0_i32_0 = arith.constant 0 : i32
    %c0_i32_1 = arith.constant 0 : i32
    return %c0_i32, %c0_i32_0 : i32, i32
  }
  func.func @transform_1(%arg0: i32) -> (i32, i32) {
    %c0_i32 = arith.constant 0 : i32
    %c0_i32_0 = arith.constant 0 : i32
    %c0_i32_1 = arith.constant 0 : i32
    return %c0_i32, %c0_i32_0 : i32, i32
  }
  func.func @transform_2(%arg0: i32) -> (i32, i32) {
    %c0_i32 = arith.constant 0 : i32
    %c0_i32_0 = arith.constant 0 : i32
    return %c0_i32, %arg0 : i32, i32
  }
  func.func @transform_3(%arg0: i32) -> (i32, i32) {
    %c0_i32 = arith.constant 0 : i32
    %c0_i32_0 = arith.constant 0 : i32
    return %c0_i32, %arg0 : i32, i32
  }
}

module attributes {stable_mosaic.version = 11 : i64} {
  func.func @_conv_gemm_kernel(%arg0: i32, %arg1: memref<8x432xbf16, #tpu.memory_space<vmem>>, %arg2: memref<8x1xf32, #tpu.memory_space<vmem>>, %arg3: memref<432x128xbf16, #tpu.memory_space<vmem>>, %arg4: memref<8x128xf32, #tpu.memory_space<vmem>>) attributes {dimension_semantics = [#tpu.dimension_semantics<parallel>], iteration_bounds = array<i64: 1>, scalar_prefetch = 0 : i64, scratch_operands = 0 : i64, tpu.core_type = #tpu.core_type<tc>, window_params = [{pipeline_mode = #tpu.pipeline_mode<synchronous>, transform_indices = @transform_0, window_bounds = array<i64: 8, 432>}, {pipeline_mode = #tpu.pipeline_mode<synchronous>, transform_indices = @transform_1, window_bounds = array<i64: 8, 1>}, {transform_indices = @transform_2, window_bounds = array<i64: 432, 128>}, {transform_indices = @transform_3, window_bounds = array<i64: 8, 128>}]} {
    %c0 = arith.constant 0 : index
    %c0_0 = arith.constant 0 : index
    %0 = vector.load %arg1[%c0, %c0_0] : memref<8x432xbf16, #tpu.memory_space<vmem>>, vector<8x432xbf16>
    %c0_1 = arith.constant 0 : index
    %c0_2 = arith.constant 0 : index
    %1 = vector.load %arg3[%c0_1, %c0_2] : memref<432x128xbf16, #tpu.memory_space<vmem>>, vector<432x128xbf16>
    %cst = arith.constant dense<0.000000e+00> : vector<8x128xf32>
    %2 = tpu.matmul %0, %1, %cst {dimension_numbers = #tpu.dot_dimension_numbers<[1], [0], [0], [1], [0, 0, 1, 1], [], []>} : vector<8x432xbf16>, vector<432x128xbf16>, vector<8x128xf32> -> vector<8x128xf32>
    %c0_3 = arith.constant 0 : index
    %c0_4 = arith.constant 0 : index
    %3 = vector.load %arg2[%c0_3, %c0_4] : memref<8x1xf32, #tpu.memory_space<vmem>>, vector<8x1xf32>
    %4 = vector.broadcast %3 : vector<8x1xf32> to vector<8x128xf32>
    %5 = arith.addf %2, %4 : vector<8x128xf32>
    %c0_5 = arith.constant 0 : index
    %c0_6 = arith.constant 0 : index
    %6 = vector.load %arg4[%c0_5, %c0_6] : memref<8x128xf32, #tpu.memory_space<vmem>>, vector<8x128xf32>
    tpu.vector_store %arg4[%c0_5, %c0_6], %5 {strides = array<i32>} : memref<8x128xf32, #tpu.memory_space<vmem>>, vector<8x128xf32>,
    return
  }
  func.func @transform_0(%arg0: i32) -> (i32, i32) {
    %c0_i32 = arith.constant 0 : i32
    %c0_i32_0 = arith.constant 0 : i32
    %c0_i32_1 = arith.constant 0 : i32
    return %c0_i32, %c0_i32_0 : i32, i32
  }
  func.func @transform_1(%arg0: i32) -> (i32, i32) {
    %c0_i32 = arith.constant 0 : i32
    %c0_i32_0 = arith.constant 0 : i32
    %c0_i32_1 = arith.constant 0 : i32
    return %c0_i32, %c0_i32_0 : i32, i32
  }
  func.func @transform_2(%arg0: i32) -> (i32, i32) {
    %c0_i32 = arith.constant 0 : i32
    %c0_i32_0 = arith.constant 0 : i32
    return %c0_i32, %arg0 : i32, i32
  }
  func.func @transform_3(%arg0: i32) -> (i32, i32) {
    %c0_i32 = arith.constant 0 : i32
    %c0_i32_0 = arith.constant 0 : i32
    return %c0_i32, %arg0 : i32, i32
  }
}

module attributes {stable_mosaic.version = 11 : i64} {
  func.func @_conv_gemm_kernel(%arg0: i32, %arg1: memref<8x216xbf16, #tpu.memory_space<vmem>>, %arg2: memref<8x1xf32, #tpu.memory_space<vmem>>, %arg3: memref<216x128xbf16, #tpu.memory_space<vmem>>, %arg4: memref<8x128xf32, #tpu.memory_space<vmem>>, %arg5: memref<8x128xf32, #tpu.memory_space<vmem>>) attributes {dimension_semantics = [#tpu.dimension_semantics<parallel>], iteration_bounds = array<i64: 1>, scalar_prefetch = 0 : i64, scratch_operands = 0 : i64, tpu.core_type = #tpu.core_type<tc>, window_params = [{pipeline_mode = #tpu.pipeline_mode<synchronous>, transform_indices = @transform_0, window_bounds = array<i64: 8, 216>}, {pipeline_mode = #tpu.pipeline_mode<synchronous>, transform_indices = @transform_1, window_bounds = array<i64: 8, 1>}, {transform_indices = @transform_2, window_bounds = array<i64: 216, 128>}, {transform_indices = @transform_3, window_bounds = array<i64: 8, 128>}, {transform_indices = @transform_4, window_bounds = array<i64: 8, 128>}]} {
    %c0 = arith.constant 0 : index
    %c0_0 = arith.constant 0 : index
    %0 = vector.load %arg1[%c0, %c0_0] : memref<8x216xbf16, #tpu.memory_space<vmem>>, vector<8x216xbf16>
    %c0_1 = arith.constant 0 : index
    %c0_2 = arith.constant 0 : index
    %1 = vector.load %arg3[%c0_1, %c0_2] : memref<216x128xbf16, #tpu.memory_space<vmem>>, vector<216x128xbf16>
    %cst = arith.constant dense<0.000000e+00> : vector<8x128xf32>
    %2 = tpu.matmul %0, %1, %cst {dimension_numbers = #tpu.dot_dimension_numbers<[1], [0], [0], [1], [0, 0, 1, 1], [], []>} : vector<8x216xbf16>, vector<216x128xbf16>, vector<8x128xf32> -> vector<8x128xf32>
    %c0_3 = arith.constant 0 : index
    %c0_4 = arith.constant 0 : index
    %3 = vector.load %arg2[%c0_3, %c0_4] : memref<8x1xf32, #tpu.memory_space<vmem>>, vector<8x1xf32>
    %4 = vector.broadcast %3 : vector<8x1xf32> to vector<8x128xf32>
    %5 = arith.addf %2, %4 : vector<8x128xf32>
    %c0_5 = arith.constant 0 : index
    %c0_6 = arith.constant 0 : index
    %6 = vector.load %arg4[%c0_5, %c0_6] : memref<8x128xf32, #tpu.memory_space<vmem>>, vector<8x128xf32>
    %7 = arith.addf %5, %6 : vector<8x128xf32>
    %cst_7 = arith.constant 0.000000e+00 : f32
    %8 = vector.broadcast %cst_7 : f32 to vector<8x128xf32>
    %9 = arith.maximumf %7, %8 : vector<8x128xf32>
    %c0_8 = arith.constant 0 : index
    %c0_9 = arith.constant 0 : index
    %10 = vector.load %arg5[%c0_8, %c0_9] : memref<8x128xf32, #tpu.memory_space<vmem>>, vector<8x128xf32>
    tpu.vector_store %arg5[%c0_8, %c0_9], %9 {strides = array<i32>} : memref<8x128xf32, #tpu.memory_space<vmem>>, vector<8x128xf32>,
    return
  }
  func.func @transform_0(%arg0: i32) -> (i32, i32) {
    %c0_i32 = arith.constant 0 : i32
    %c0_i32_0 = arith.constant 0 : i32
    %c0_i32_1 = arith.constant 0 : i32
    return %c0_i32, %c0_i32_0 : i32, i32
  }
  func.func @transform_1(%arg0: i32) -> (i32, i32) {
    %c0_i32 = arith.constant 0 : i32
    %c0_i32_0 = arith.constant 0 : i32
    %c0_i32_1 = arith.constant 0 : i32
    return %c0_i32, %c0_i32_0 : i32, i32
  }
  func.func @transform_2(%arg0: i32) -> (i32, i32) {
    %c0_i32 = arith.constant 0 : i32
    %c0_i32_0 = arith.constant 0 : i32
    return %c0_i32, %arg0 : i32, i32
  }
  func.func @transform_3(%arg0: i32) -> (i32, i32) {
    %c0_i32 = arith.constant 0 : i32
    %c0_i32_0 = arith.constant 0 : i32
    return %c0_i32, %arg0 : i32, i32
  }
  func.func @transform_4(%arg0: i32) -> (i32, i32) {
    %c0_i32 = arith.constant 0 : i32
    %c0_i32_0 = arith.constant 0 : i32
    return %c0_i32, %arg0 : i32, i32
  }
}

module attributes {stable_mosaic.version = 11 : i64} {
  func.func @_conv_gemm_kernel(%arg0: i32, %arg1: memref<1x216xbf16, #tpu.memory_space<vmem>>, %arg2: memref<1x1xf32, #tpu.memory_space<vmem>>, %arg3: memref<216x128xbf16, #tpu.memory_space<vmem>>, %arg4: memref<1x128xf32, #tpu.memory_space<vmem>>) attributes {dimension_semantics = [#tpu.dimension_semantics<parallel>], iteration_bounds = array<i64: 1>, scalar_prefetch = 0 : i64, scratch_operands = 0 : i64, tpu.core_type = #tpu.core_type<tc>, window_params = [{pipeline_mode = #tpu.pipeline_mode<synchronous>, transform_indices = @transform_0, window_bounds = array<i64: 1, 216>}, {pipeline_mode = #tpu.pipeline_mode<synchronous>, transform_indices = @transform_1, window_bounds = array<i64: 1, 1>}, {transform_indices = @transform_2, window_bounds = array<i64: 216, 128>}, {transform_indices = @transform_3, window_bounds = array<i64: 1, 128>}]} {
    %c0 = arith.constant 0 : index
    %c0_0 = arith.constant 0 : index
    %0 = vector.load %arg1[%c0, %c0_0] : memref<1x216xbf16, #tpu.memory_space<vmem>>, vector<1x216xbf16>
    %c0_1 = arith.constant 0 : index
    %c0_2 = arith.constant 0 : index
    %1 = vector.load %arg3[%c0_1, %c0_2] : memref<216x128xbf16, #tpu.memory_space<vmem>>, vector<216x128xbf16>
    %cst = arith.constant dense<0.000000e+00> : vector<1x128xf32>
    %2 = tpu.matmul %0, %1, %cst {dimension_numbers = #tpu.dot_dimension_numbers<[1], [0], [0], [1], [0, 0, 1, 1], [], []>} : vector<1x216xbf16>, vector<216x128xbf16>, vector<1x128xf32> -> vector<1x128xf32>
    %c0_3 = arith.constant 0 : index
    %c0_4 = arith.constant 0 : index
    %3 = vector.load %arg2[%c0_3, %c0_4] : memref<1x1xf32, #tpu.memory_space<vmem>>, vector<1x1xf32>
    %4 = vector.broadcast %3 : vector<1x1xf32> to vector<1x128xf32>
    %5 = arith.addf %2, %4 : vector<1x128xf32>
    %cst_5 = arith.constant 0.000000e+00 : f32
    %6 = vector.broadcast %cst_5 : f32 to vector<1x128xf32>
    %7 = arith.maximumf %5, %6 : vector<1x128xf32>
    %c0_6 = arith.constant 0 : index
    %c0_7 = arith.constant 0 : index
    %8 = vector.load %arg4[%c0_6, %c0_7] : memref<1x128xf32, #tpu.memory_space<vmem>>, vector<1x128xf32>
    tpu.vector_store %arg4[%c0_6, %c0_7], %7 {strides = array<i32>} : memref<1x128xf32, #tpu.memory_space<vmem>>, vector<1x128xf32>,
    return
  }
  func.func @transform_0(%arg0: i32) -> (i32, i32) {
    %c0_i32 = arith.constant 0 : i32
    %c0_i32_0 = arith.constant 0 : i32
    %c0_i32_1 = arith.constant 0 : i32
    return %c0_i32, %c0_i32_0 : i32, i32
  }
  func.func @transform_1(%arg0: i32) -> (i32, i32) {
    %c0_i32 = arith.constant 0 : i32
    %c0_i32_0 = arith.constant 0 : i32
    %c0_i32_1 = arith.constant 0 : i32
    return %c0_i32, %c0_i32_0 : i32, i32
  }
  func.func @transform_2(%arg0: i32) -> (i32, i32) {
    %c0_i32 = arith.constant 0 : i32
    %c0_i32_0 = arith.constant 0 : i32
    return %c0_i32, %arg0 : i32, i32
  }
  func.func @transform_3(%arg0: i32) -> (i32, i32) {
    %c0_i32 = arith.constant 0 : i32
    %c0_i32_0 = arith.constant 0 : i32
    return %c0_i32, %arg0 : i32, i32
  }
}

module attributes {stable_mosaic.version = 11 : i64} {
  func.func @_conv_gemm_kernel(%arg0: i32, %arg1: memref<1x216xbf16, #tpu.memory_space<vmem>>, %arg2: memref<1x1xf32, #tpu.memory_space<vmem>>, %arg3: memref<216x128xbf16, #tpu.memory_space<vmem>>, %arg4: memref<1x128xf32, #tpu.memory_space<vmem>>) attributes {dimension_semantics = [#tpu.dimension_semantics<parallel>], iteration_bounds = array<i64: 1>, scalar_prefetch = 0 : i64, scratch_operands = 0 : i64, tpu.core_type = #tpu.core_type<tc>, window_params = [{pipeline_mode = #tpu.pipeline_mode<synchronous>, transform_indices = @transform_0, window_bounds = array<i64: 1, 216>}, {pipeline_mode = #tpu.pipeline_mode<synchronous>, transform_indices = @transform_1, window_bounds = array<i64: 1, 1>}, {transform_indices = @transform_2, window_bounds = array<i64: 216, 128>}, {transform_indices = @transform_3, window_bounds = array<i64: 1, 128>}]} {
    %c0 = arith.constant 0 : index
    %c0_0 = arith.constant 0 : index
    %0 = vector.load %arg1[%c0, %c0_0] : memref<1x216xbf16, #tpu.memory_space<vmem>>, vector<1x216xbf16>
    %c0_1 = arith.constant 0 : index
    %c0_2 = arith.constant 0 : index
    %1 = vector.load %arg3[%c0_1, %c0_2] : memref<216x128xbf16, #tpu.memory_space<vmem>>, vector<216x128xbf16>
    %cst = arith.constant dense<0.000000e+00> : vector<1x128xf32>
    %2 = tpu.matmul %0, %1, %cst {dimension_numbers = #tpu.dot_dimension_numbers<[1], [0], [0], [1], [0, 0, 1, 1], [], []>} : vector<1x216xbf16>, vector<216x128xbf16>, vector<1x128xf32> -> vector<1x128xf32>
    %c0_3 = arith.constant 0 : index
    %c0_4 = arith.constant 0 : index
    %3 = vector.load %arg2[%c0_3, %c0_4] : memref<1x1xf32, #tpu.memory_space<vmem>>, vector<1x1xf32>
    %4 = vector.broadcast %3 : vector<1x1xf32> to vector<1x128xf32>
    %5 = arith.addf %2, %4 : vector<1x128xf32>
    %c0_5 = arith.constant 0 : index
    %c0_6 = arith.constant 0 : index
    %6 = vector.load %arg4[%c0_5, %c0_6] : memref<1x128xf32, #tpu.memory_space<vmem>>, vector<1x128xf32>
    tpu.vector_store %arg4[%c0_5, %c0_6], %5 {strides = array<i32>} : memref<1x128xf32, #tpu.memory_space<vmem>>, vector<1x128xf32>,
    return
  }
  func.func @transform_0(%arg0: i32) -> (i32, i32) {
    %c0_i32 = arith.constant 0 : i32
    %c0_i32_0 = arith.constant 0 : i32
    %c0_i32_1 = arith.constant 0 : i32
    return %c0_i32, %c0_i32_0 : i32, i32
  }
  func.func @transform_1(%arg0: i32) -> (i32, i32) {
    %c0_i32 = arith.constant 0 : i32
    %c0_i32_0 = arith.constant 0 : i32
    %c0_i32_1 = arith.constant 0 : i32
    return %c0_i32, %c0_i32_0 : i32, i32
  }
  func.func @transform_2(%arg0: i32) -> (i32, i32) {
    %c0_i32 = arith.constant 0 : i32
    %c0_i32_0 = arith.constant 0 : i32
    return %c0_i32, %arg0 : i32, i32
  }
  func.func @transform_3(%arg0: i32) -> (i32, i32) {
    %c0_i32 = arith.constant 0 : i32
    %c0_i32_0 = arith.constant 0 : i32
    return %c0_i32, %arg0 : i32, i32
  }
}

module attributes {stable_mosaic.version = 11 : i64} {
  func.func @_conv_gemm_kernel(%arg0: i32, %arg1: memref<1x27xbf16, #tpu.memory_space<vmem>>, %arg2: memref<1x1xf32, #tpu.memory_space<vmem>>, %arg3: memref<27x128xbf16, #tpu.memory_space<vmem>>, %arg4: memref<1x128xf32, #tpu.memory_space<vmem>>, %arg5: memref<1x128xf32, #tpu.memory_space<vmem>>) attributes {dimension_semantics = [#tpu.dimension_semantics<parallel>], iteration_bounds = array<i64: 1>, scalar_prefetch = 0 : i64, scratch_operands = 0 : i64, tpu.core_type = #tpu.core_type<tc>, window_params = [{pipeline_mode = #tpu.pipeline_mode<synchronous>, transform_indices = @transform_0, window_bounds = array<i64: 1, 27>}, {pipeline_mode = #tpu.pipeline_mode<synchronous>, transform_indices = @transform_1, window_bounds = array<i64: 1, 1>}, {transform_indices = @transform_2, window_bounds = array<i64: 27, 128>}, {transform_indices = @transform_3, window_bounds = array<i64: 1, 128>}, {transform_indices = @transform_4, window_bounds = array<i64: 1, 128>}]} {
    %c0 = arith.constant 0 : index
    %c0_0 = arith.constant 0 : index
    %0 = vector.load %arg1[%c0, %c0_0] : memref<1x27xbf16, #tpu.memory_space<vmem>>, vector<1x27xbf16>
    %c0_1 = arith.constant 0 : index
    %c0_2 = arith.constant 0 : index
    %1 = vector.load %arg3[%c0_1, %c0_2] : memref<27x128xbf16, #tpu.memory_space<vmem>>, vector<27x128xbf16>
    %cst = arith.constant dense<0.000000e+00> : vector<1x128xf32>
    %2 = tpu.matmul %0, %1, %cst {dimension_numbers = #tpu.dot_dimension_numbers<[1], [0], [0], [1], [0, 0, 1, 1], [], []>} : vector<1x27xbf16>, vector<27x128xbf16>, vector<1x128xf32> -> vector<1x128xf32>
    %c0_3 = arith.constant 0 : index
    %c0_4 = arith.constant 0 : index
    %3 = vector.load %arg2[%c0_3, %c0_4] : memref<1x1xf32, #tpu.memory_space<vmem>>, vector<1x1xf32>
    %4 = vector.broadcast %3 : vector<1x1xf32> to vector<1x128xf32>
    %5 = arith.addf %2, %4 : vector<1x128xf32>
    %c0_5 = arith.constant 0 : index
    %c0_6 = arith.constant 0 : index
    %6 = vector.load %arg4[%c0_5, %c0_6] : memref<1x128xf32, #tpu.memory_space<vmem>>, vector<1x128xf32>
    %7 = arith.addf %5, %6 : vector<1x128xf32>
    %cst_7 = arith.constant 0.000000e+00 : f32
    %8 = vector.broadcast %cst_7 : f32 to vector<1x128xf32>
    %9 = arith.maximumf %7, %8 : vector<1x128xf32>
    %c0_8 = arith.constant 0 : index
    %c0_9 = arith.constant 0 : index
    %10 = vector.load %arg5[%c0_8, %c0_9] : memref<1x128xf32, #tpu.memory_space<vmem>>, vector<1x128xf32>
    tpu.vector_store %arg5[%c0_8, %c0_9], %9 {strides = array<i32>} : memref<1x128xf32, #tpu.memory_space<vmem>>, vector<1x128xf32>,
    return
  }
  func.func @transform_0(%arg0: i32) -> (i32, i32) {
    %c0_i32 = arith.constant 0 : i32
    %c0_i32_0 = arith.constant 0 : i32
    %c0_i32_1 = arith.constant 0 : i32
    return %c0_i32, %c0_i32_0 : i32, i32
  }
  func.func @transform_1(%arg0: i32) -> (i32, i32) {
    %c0_i32 = arith.constant 0 : i32
    %c0_i32_0 = arith.constant 0 : i32
    %c0_i32_1 = arith.constant 0 : i32
    return %c0_i32, %c0_i32_0 : i32, i32
  }
  func.func @transform_2(%arg0: i32) -> (i32, i32) {
    %c0_i32 = arith.constant 0 : i32
    %c0_i32_0 = arith.constant 0 : i32
    return %c0_i32, %arg0 : i32, i32
  }
  func.func @transform_3(%arg0: i32) -> (i32, i32) {
    %c0_i32 = arith.constant 0 : i32
    %c0_i32_0 = arith.constant 0 : i32
    return %c0_i32, %arg0 : i32, i32
  }
  func.func @transform_4(%arg0: i32) -> (i32, i32) {
    %c0_i32 = arith.constant 0 : i32
    %c0_i32_0 = arith.constant 0 : i32
    return %c0_i32, %arg0 : i32, i32
  }
}

module attributes {stable_mosaic.version = 11 : i64} {
  func.func @_attn_scores_kernel(%arg0: i32, %arg1: memref<1x2x16xbf16, #tpu.memory_space<vmem>>, %arg2: memref<1x16x2xbf16, #tpu.memory_space<vmem>>, %arg3: memref<1x2x2xf32, #tpu.memory_space<vmem>>, %arg4: memref<1x16x16xf32, #tpu.memory_space<vmem>>) attributes {dimension_semantics = [#tpu.dimension_semantics<parallel>], iteration_bounds = array<i64: 2>, scalar_prefetch = 0 : i64, scratch_operands = 0 : i64, tpu.core_type = #tpu.core_type<tc>, window_params = [{transform_indices = @transform_0, window_bounds = array<i64: 1, 2, 16>}, {transform_indices = @transform_1, window_bounds = array<i64: 1, 16, 2>}, {transform_indices = @transform_2, window_bounds = array<i64: 1, 2, 2>}, {transform_indices = @transform_3, window_bounds = array<i64: 1, 16, 16>}]} {
    %c0 = arith.constant 0 : index
    %c0_0 = arith.constant 0 : index
    %c0_1 = arith.constant 0 : index
    %0 = vector.load %arg1[%c0, %c0_0, %c0_1] : memref<1x2x16xbf16, #tpu.memory_space<vmem>>, vector<1x2x16xbf16>
    %1 = vector.shape_cast %0 : vector<1x2x16xbf16> to vector<2x16xbf16>
    %c0_2 = arith.constant 0 : index
    %c0_3 = arith.constant 0 : index
    %c0_4 = arith.constant 0 : index
    %2 = vector.load %arg2[%c0_2, %c0_3, %c0_4] : memref<1x16x2xbf16, #tpu.memory_space<vmem>>, vector<1x16x2xbf16>
    %3 = vector.shape_cast %2 : vector<1x16x2xbf16> to vector<16x2xbf16>
    %cst = arith.constant dense<0.000000e+00> : vector<2x2xf32>
    %4 = tpu.matmul %1, %3, %cst {dimension_numbers = #tpu.dot_dimension_numbers<[1], [0], [0], [1], [0, 0, 1, 1], [], []>} : vector<2x16xbf16>, vector<16x2xbf16>, vector<2x2xf32> -> vector<2x2xf32>
    %c0_5 = arith.constant 0 : index
    %c0_6 = arith.constant 0 : index
    %c0_7 = arith.constant 0 : index
    %5 = vector.load %arg3[%c0_5, %c0_6, %c0_7] : memref<1x2x2xf32, #tpu.memory_space<vmem>>, vector<1x2x2xf32>
    %6 = vector.shape_cast %5 : vector<1x2x2xf32> to vector<2x2xf32>
    %7 = vector.shape_cast %4 : vector<2x2xf32> to vector<1x2x2xf32>
    tpu.vector_store %arg3[%c0_5, %c0_6, %c0_7], %7 {strides = array<i32>} : memref<1x2x2xf32, #tpu.memory_space<vmem>>, vector<1x2x2xf32>,
    %cst_8 = arith.constant dense<0.000000e+00> : vector<16x16xf32>
    %8 = tpu.matmul %3, %1, %cst_8 {dimension_numbers = #tpu.dot_dimension_numbers<[1], [0], [0], [1], [0, 0, 1, 1], [], []>} : vector<16x2xbf16>, vector<2x16xbf16>, vector<16x16xf32> -> vector<16x16xf32>
    %c0_9 = arith.constant 0 : index
    %c0_10 = arith.constant 0 : index
    %c0_11 = arith.constant 0 : index
    %9 = vector.load %arg4[%c0_9, %c0_10, %c0_11] : memref<1x16x16xf32, #tpu.memory_space<vmem>>, vector<1x16x16xf32>
    %10 = vector.shape_cast %9 : vector<1x16x16xf32> to vector<16x16xf32>
    %11 = vector.shape_cast %8 : vector<16x16xf32> to vector<1x16x16xf32>
    tpu.vector_store %arg4[%c0_9, %c0_10, %c0_11], %11 {strides = array<i32>} : memref<1x16x16xf32, #tpu.memory_space<vmem>>, vector<1x16x16xf32>,
    return
  }
  func.func @transform_0(%arg0: i32) -> (i32, i32, i32) {
    %c0_i32 = arith.constant 0 : i32
    %c0_i32_0 = arith.constant 0 : i32
    %c0_i32_1 = arith.constant 0 : i32
    return %arg0, %c0_i32, %c0_i32_0 : i32, i32, i32
  }
  func.func @transform_1(%arg0: i32) -> (i32, i32, i32) {
    %c0_i32 = arith.constant 0 : i32
    %c0_i32_0 = arith.constant 0 : i32
    %c0_i32_1 = arith.constant 0 : i32
    return %arg0, %c0_i32, %c0_i32_0 : i32, i32, i32
  }
  func.func @transform_2(%arg0: i32) -> (i32, i32, i32) {
    %c0_i32 = arith.constant 0 : i32
    %c0_i32_0 = arith.constant 0 : i32
    %c0_i32_1 = arith.constant 0 : i32
    return %arg0, %c0_i32, %c0_i32_0 : i32, i32, i32
  }
  func.func @transform_3(%arg0: i32) -> (i32, i32, i32) {
    %c0_i32 = arith.constant 0 : i32
    %c0_i32_0 = arith.constant 0 : i32
    %c0_i32_1 = arith.constant 0 : i32
    return %arg0, %c0_i32, %c0_i32_0 : i32, i32, i32
  }
}

module attributes {stable_mosaic.version = 11 : i64} {
  func.func @_attn_apply_kernel(%arg0: i32, %arg1: i32, %arg2: memref<1x2x2xbf16, #tpu.memory_space<vmem>>, %arg3: memref<1x16x16xbf16, #tpu.memory_space<vmem>>, %arg4: memref<1x1x2x16xbf16, #tpu.memory_space<vmem>>, %arg5: memref<1x1x2x16xf32, #tpu.memory_space<vmem>>) attributes {dimension_semantics = [#tpu.dimension_semantics<parallel>, #tpu.dimension_semantics<parallel>], iteration_bounds = array<i64: 2, 8>, scalar_prefetch = 0 : i64, scratch_operands = 0 : i64, tpu.core_type = #tpu.core_type<tc>, window_params = [{transform_indices = @transform_0, window_bounds = array<i64: 1, 2, 2>}, {transform_indices = @transform_1, window_bounds = array<i64: 1, 16, 16>}, {transform_indices = @transform_2, window_bounds = array<i64: 1, 1, 2, 16>}, {transform_indices = @transform_3, window_bounds = array<i64: 1, 1, 2, 16>}]} {
    %c0 = arith.constant 0 : index
    %c0_0 = arith.constant 0 : index
    %c0_1 = arith.constant 0 : index
    %0 = vector.load %arg2[%c0, %c0_0, %c0_1] : memref<1x2x2xbf16, #tpu.memory_space<vmem>>, vector<1x2x2xbf16>
    %1 = vector.shape_cast %0 : vector<1x2x2xbf16> to vector<2x2xbf16>
    %c0_2 = arith.constant 0 : index
    %c0_3 = arith.constant 0 : index
    %c0_4 = arith.constant 0 : index
    %2 = vector.load %arg3[%c0_2, %c0_3, %c0_4] : memref<1x16x16xbf16, #tpu.memory_space<vmem>>, vector<1x16x16xbf16>
    %3 = vector.shape_cast %2 : vector<1x16x16xbf16> to vector<16x16xbf16>
    %c0_5 = arith.constant 0 : index
    %c0_6 = arith.constant 0 : index
    %c0_7 = arith.constant 0 : index
    %c0_8 = arith.constant 0 : index
    %4 = vector.load %arg4[%c0_5, %c0_6, %c0_7, %c0_8] : memref<1x1x2x16xbf16, #tpu.memory_space<vmem>>, vector<1x1x2x16xbf16>
    %5 = vector.shape_cast %4 : vector<1x1x2x16xbf16> to vector<2x16xbf16>
    %cst = arith.constant dense<0.000000e+00> : vector<2x16xf32>
    %6 = tpu.matmul %1, %5, %cst {dimension_numbers = #tpu.dot_dimension_numbers<[1], [0], [0], [1], [0, 0, 1, 1], [], []>} : vector<2x2xbf16>, vector<2x16xbf16>, vector<2x16xf32> -> vector<2x16xf32>
    %7 = arith.truncf %6 : vector<2x16xf32> to vector<2x16xbf16>
    %cst_9 = arith.constant dense<0.000000e+00> : vector<2x16xf32>
    %8 = tpu.matmul %7, %3, %cst_9 {dimension_numbers = #tpu.dot_dimension_numbers<[1], [0], [0], [1], [0, 0, 1, 1], [], []>} : vector<2x16xbf16>, vector<16x16xbf16>, vector<2x16xf32> -> vector<2x16xf32>
    %c0_10 = arith.constant 0 : index
    %c0_11 = arith.constant 0 : index
    %c0_12 = arith.constant 0 : index
    %c0_13 = arith.constant 0 : index
    %9 = vector.load %arg5[%c0_10, %c0_11, %c0_12, %c0_13] : memref<1x1x2x16xf32, #tpu.memory_space<vmem>>, vector<1x1x2x16xf32>
    %10 = vector.shape_cast %9 : vector<1x1x2x16xf32> to vector<2x16xf32>
    %11 = vector.shape_cast %8 : vector<2x16xf32> to vector<1x1x2x16xf32>
    tpu.vector_store %arg5[%c0_10, %c0_11, %c0_12, %c0_13], %11 {strides = array<i32>} : memref<1x1x2x16xf32, #tpu.memory_space<vmem>>, vector<1x1x2x16xf32>,
    return
  }
  func.func @transform_0(%arg0: i32, %arg1: i32) -> (i32, i32, i32) {
    %c0_i32 = arith.constant 0 : i32
    %c0_i32_0 = arith.constant 0 : i32
    %c0_i32_1 = arith.constant 0 : i32
    return %arg0, %c0_i32, %c0_i32_0 : i32, i32, i32
  }
  func.func @transform_1(%arg0: i32, %arg1: i32) -> (i32, i32, i32) {
    %c0_i32 = arith.constant 0 : i32
    %c0_i32_0 = arith.constant 0 : i32
    %c0_i32_1 = arith.constant 0 : i32
    return %arg0, %c0_i32, %c0_i32_0 : i32, i32, i32
  }
  func.func @transform_2(%arg0: i32, %arg1: i32) -> (i32, i32, i32, i32) {
    %c0_i32 = arith.constant 0 : i32
    %c0_i32_0 = arith.constant 0 : i32
    %c0_i32_1 = arith.constant 0 : i32
    return %arg1, %arg0, %c0_i32, %c0_i32_0 : i32, i32, i32, i32
  }
  func.func @transform_3(%arg0: i32, %arg1: i32) -> (i32, i32, i32, i32) {
    %c0_i32 = arith.constant 0 : i32
    %c0_i32_0 = arith.constant 0 : i32
    %c0_i32_1 = arith.constant 0 : i32
    return %arg1, %arg0, %c0_i32, %c0_i32_0 : i32, i32, i32, i32
  }
}

module attributes {stable_mosaic.version = 11 : i64} {
  func.func @_conv_gemm_kernel(%arg0: i32, %arg1: memref<4x216xbf16, #tpu.memory_space<vmem>>, %arg2: memref<4x1xf32, #tpu.memory_space<vmem>>, %arg3: memref<216x128xbf16, #tpu.memory_space<vmem>>, %arg4: memref<4x128xf32, #tpu.memory_space<vmem>>) attributes {dimension_semantics = [#tpu.dimension_semantics<parallel>], iteration_bounds = array<i64: 1>, scalar_prefetch = 0 : i64, scratch_operands = 0 : i64, tpu.core_type = #tpu.core_type<tc>, window_params = [{pipeline_mode = #tpu.pipeline_mode<synchronous>, transform_indices = @transform_0, window_bounds = array<i64: 4, 216>}, {pipeline_mode = #tpu.pipeline_mode<synchronous>, transform_indices = @transform_1, window_bounds = array<i64: 4, 1>}, {transform_indices = @transform_2, window_bounds = array<i64: 216, 128>}, {transform_indices = @transform_3, window_bounds = array<i64: 4, 128>}]} {
    %c0 = arith.constant 0 : index
    %c0_0 = arith.constant 0 : index
    %0 = vector.load %arg1[%c0, %c0_0] : memref<4x216xbf16, #tpu.memory_space<vmem>>, vector<4x216xbf16>
    %c0_1 = arith.constant 0 : index
    %c0_2 = arith.constant 0 : index
    %1 = vector.load %arg3[%c0_1, %c0_2] : memref<216x128xbf16, #tpu.memory_space<vmem>>, vector<216x128xbf16>
    %cst = arith.constant dense<0.000000e+00> : vector<4x128xf32>
    %2 = tpu.matmul %0, %1, %cst {dimension_numbers = #tpu.dot_dimension_numbers<[1], [0], [0], [1], [0, 0, 1, 1], [], []>} : vector<4x216xbf16>, vector<216x128xbf16>, vector<4x128xf32> -> vector<4x128xf32>
    %c0_3 = arith.constant 0 : index
    %c0_4 = arith.constant 0 : index
    %3 = vector.load %arg2[%c0_3, %c0_4] : memref<4x1xf32, #tpu.memory_space<vmem>>, vector<4x1xf32>
    %4 = vector.broadcast %3 : vector<4x1xf32> to vector<4x128xf32>
    %5 = arith.addf %2, %4 : vector<4x128xf32>
    %cst_5 = arith.constant 0.000000e+00 : f32
    %6 = vector.broadcast %cst_5 : f32 to vector<4x128xf32>
    %7 = arith.maximumf %5, %6 : vector<4x128xf32>
    %c0_6 = arith.constant 0 : index
    %c0_7 = arith.constant 0 : index
    %8 = vector.load %arg4[%c0_6, %c0_7] : memref<4x128xf32, #tpu.memory_space<vmem>>, vector<4x128xf32>
    tpu.vector_store %arg4[%c0_6, %c0_7], %7 {strides = array<i32>} : memref<4x128xf32, #tpu.memory_space<vmem>>, vector<4x128xf32>,
    return
  }
  func.func @transform_0(%arg0: i32) -> (i32, i32) {
    %c0_i32 = arith.constant 0 : i32
    %c0_i32_0 = arith.constant 0 : i32
    %c0_i32_1 = arith.constant 0 : i32
    return %c0_i32, %c0_i32_0 : i32, i32
  }
  func.func @transform_1(%arg0: i32) -> (i32, i32) {
    %c0_i32 = arith.constant 0 : i32
    %c0_i32_0 = arith.constant 0 : i32
    %c0_i32_1 = arith.constant 0 : i32
    return %c0_i32, %c0_i32_0 : i32, i32
  }
  func.func @transform_2(%arg0: i32) -> (i32, i32) {
    %c0_i32 = arith.constant 0 : i32
    %c0_i32_0 = arith.constant 0 : i32
    return %c0_i32, %arg0 : i32, i32
  }
  func.func @transform_3(%arg0: i32) -> (i32, i32) {
    %c0_i32 = arith.constant 0 : i32
    %c0_i32_0 = arith.constant 0 : i32
    return %c0_i32, %arg0 : i32, i32
  }
}

module attributes {stable_mosaic.version = 11 : i64} {
  func.func @_conv_gemm_kernel(%arg0: i32, %arg1: memref<4x216xbf16, #tpu.memory_space<vmem>>, %arg2: memref<4x1xf32, #tpu.memory_space<vmem>>, %arg3: memref<216x128xbf16, #tpu.memory_space<vmem>>, %arg4: memref<4x128xf32, #tpu.memory_space<vmem>>) attributes {dimension_semantics = [#tpu.dimension_semantics<parallel>], iteration_bounds = array<i64: 1>, scalar_prefetch = 0 : i64, scratch_operands = 0 : i64, tpu.core_type = #tpu.core_type<tc>, window_params = [{pipeline_mode = #tpu.pipeline_mode<synchronous>, transform_indices = @transform_0, window_bounds = array<i64: 4, 216>}, {pipeline_mode = #tpu.pipeline_mode<synchronous>, transform_indices = @transform_1, window_bounds = array<i64: 4, 1>}, {transform_indices = @transform_2, window_bounds = array<i64: 216, 128>}, {transform_indices = @transform_3, window_bounds = array<i64: 4, 128>}]} {
    %c0 = arith.constant 0 : index
    %c0_0 = arith.constant 0 : index
    %0 = vector.load %arg1[%c0, %c0_0] : memref<4x216xbf16, #tpu.memory_space<vmem>>, vector<4x216xbf16>
    %c0_1 = arith.constant 0 : index
    %c0_2 = arith.constant 0 : index
    %1 = vector.load %arg3[%c0_1, %c0_2] : memref<216x128xbf16, #tpu.memory_space<vmem>>, vector<216x128xbf16>
    %cst = arith.constant dense<0.000000e+00> : vector<4x128xf32>
    %2 = tpu.matmul %0, %1, %cst {dimension_numbers = #tpu.dot_dimension_numbers<[1], [0], [0], [1], [0, 0, 1, 1], [], []>} : vector<4x216xbf16>, vector<216x128xbf16>, vector<4x128xf32> -> vector<4x128xf32>
    %c0_3 = arith.constant 0 : index
    %c0_4 = arith.constant 0 : index
    %3 = vector.load %arg2[%c0_3, %c0_4] : memref<4x1xf32, #tpu.memory_space<vmem>>, vector<4x1xf32>
    %4 = vector.broadcast %3 : vector<4x1xf32> to vector<4x128xf32>
    %5 = arith.addf %2, %4 : vector<4x128xf32>
    %c0_5 = arith.constant 0 : index
    %c0_6 = arith.constant 0 : index
    %6 = vector.load %arg4[%c0_5, %c0_6] : memref<4x128xf32, #tpu.memory_space<vmem>>, vector<4x128xf32>
    tpu.vector_store %arg4[%c0_5, %c0_6], %5 {strides = array<i32>} : memref<4x128xf32, #tpu.memory_space<vmem>>, vector<4x128xf32>,
    return
  }
  func.func @transform_0(%arg0: i32) -> (i32, i32) {
    %c0_i32 = arith.constant 0 : i32
    %c0_i32_0 = arith.constant 0 : i32
    %c0_i32_1 = arith.constant 0 : i32
    return %c0_i32, %c0_i32_0 : i32, i32
  }
  func.func @transform_1(%arg0: i32) -> (i32, i32) {
    %c0_i32 = arith.constant 0 : i32
    %c0_i32_0 = arith.constant 0 : i32
    %c0_i32_1 = arith.constant 0 : i32
    return %c0_i32, %c0_i32_0 : i32, i32
  }
  func.func @transform_2(%arg0: i32) -> (i32, i32) {
    %c0_i32 = arith.constant 0 : i32
    %c0_i32_0 = arith.constant 0 : i32
    return %c0_i32, %arg0 : i32, i32
  }
  func.func @transform_3(%arg0: i32) -> (i32, i32) {
    %c0_i32 = arith.constant 0 : i32
    %c0_i32_0 = arith.constant 0 : i32
    return %c0_i32, %arg0 : i32, i32
  }
}

module attributes {stable_mosaic.version = 11 : i64} {
  func.func @_conv_gemm_kernel(%arg0: i32, %arg1: memref<4x108xbf16, #tpu.memory_space<vmem>>, %arg2: memref<4x1xf32, #tpu.memory_space<vmem>>, %arg3: memref<108x128xbf16, #tpu.memory_space<vmem>>, %arg4: memref<4x128xf32, #tpu.memory_space<vmem>>, %arg5: memref<4x128xf32, #tpu.memory_space<vmem>>) attributes {dimension_semantics = [#tpu.dimension_semantics<parallel>], iteration_bounds = array<i64: 1>, scalar_prefetch = 0 : i64, scratch_operands = 0 : i64, tpu.core_type = #tpu.core_type<tc>, window_params = [{pipeline_mode = #tpu.pipeline_mode<synchronous>, transform_indices = @transform_0, window_bounds = array<i64: 4, 108>}, {pipeline_mode = #tpu.pipeline_mode<synchronous>, transform_indices = @transform_1, window_bounds = array<i64: 4, 1>}, {transform_indices = @transform_2, window_bounds = array<i64: 108, 128>}, {transform_indices = @transform_3, window_bounds = array<i64: 4, 128>}, {transform_indices = @transform_4, window_bounds = array<i64: 4, 128>}]} {
    %c0 = arith.constant 0 : index
    %c0_0 = arith.constant 0 : index
    %0 = vector.load %arg1[%c0, %c0_0] : memref<4x108xbf16, #tpu.memory_space<vmem>>, vector<4x108xbf16>
    %c0_1 = arith.constant 0 : index
    %c0_2 = arith.constant 0 : index
    %1 = vector.load %arg3[%c0_1, %c0_2] : memref<108x128xbf16, #tpu.memory_space<vmem>>, vector<108x128xbf16>
    %cst = arith.constant dense<0.000000e+00> : vector<4x128xf32>
    %2 = tpu.matmul %0, %1, %cst {dimension_numbers = #tpu.dot_dimension_numbers<[1], [0], [0], [1], [0, 0, 1, 1], [], []>} : vector<4x108xbf16>, vector<108x128xbf16>, vector<4x128xf32> -> vector<4x128xf32>
    %c0_3 = arith.constant 0 : index
    %c0_4 = arith.constant 0 : index
    %3 = vector.load %arg2[%c0_3, %c0_4] : memref<4x1xf32, #tpu.memory_space<vmem>>, vector<4x1xf32>
    %4 = vector.broadcast %3 : vector<4x1xf32> to vector<4x128xf32>
    %5 = arith.addf %2, %4 : vector<4x128xf32>
    %c0_5 = arith.constant 0 : index
    %c0_6 = arith.constant 0 : index
    %6 = vector.load %arg4[%c0_5, %c0_6] : memref<4x128xf32, #tpu.memory_space<vmem>>, vector<4x128xf32>
    %7 = arith.addf %5, %6 : vector<4x128xf32>
    %cst_7 = arith.constant 0.000000e+00 : f32
    %8 = vector.broadcast %cst_7 : f32 to vector<4x128xf32>
    %9 = arith.maximumf %7, %8 : vector<4x128xf32>
    %c0_8 = arith.constant 0 : index
    %c0_9 = arith.constant 0 : index
    %10 = vector.load %arg5[%c0_8, %c0_9] : memref<4x128xf32, #tpu.memory_space<vmem>>, vector<4x128xf32>
    tpu.vector_store %arg5[%c0_8, %c0_9], %9 {strides = array<i32>} : memref<4x128xf32, #tpu.memory_space<vmem>>, vector<4x128xf32>,
    return
  }
  func.func @transform_0(%arg0: i32) -> (i32, i32) {
    %c0_i32 = arith.constant 0 : i32
    %c0_i32_0 = arith.constant 0 : i32
    %c0_i32_1 = arith.constant 0 : i32
    return %c0_i32, %c0_i32_0 : i32, i32
  }
  func.func @transform_1(%arg0: i32) -> (i32, i32) {
    %c0_i32 = arith.constant 0 : i32
    %c0_i32_0 = arith.constant 0 : i32
    %c0_i32_1 = arith.constant 0 : i32
    return %c0_i32, %c0_i32_0 : i32, i32
  }
  func.func @transform_2(%arg0: i32) -> (i32, i32) {
    %c0_i32 = arith.constant 0 : i32
    %c0_i32_0 = arith.constant 0 : i32
    return %c0_i32, %arg0 : i32, i32
  }
  func.func @transform_3(%arg0: i32) -> (i32, i32) {
    %c0_i32 = arith.constant 0 : i32
    %c0_i32_0 = arith.constant 0 : i32
    return %c0_i32, %arg0 : i32, i32
  }
  func.func @transform_4(%arg0: i32) -> (i32, i32) {
    %c0_i32 = arith.constant 0 : i32
    %c0_i32_0 = arith.constant 0 : i32
    return %c0_i32, %arg0 : i32, i32
  }
}

module attributes {stable_mosaic.version = 11 : i64} {
  func.func @_conv_gemm_kernel(%arg0: i32, %arg1: memref<1x108xbf16, #tpu.memory_space<vmem>>, %arg2: memref<1x1xf32, #tpu.memory_space<vmem>>, %arg3: memref<108x256xbf16, #tpu.memory_space<vmem>>, %arg4: memref<1x256xf32, #tpu.memory_space<vmem>>) attributes {dimension_semantics = [#tpu.dimension_semantics<parallel>], iteration_bounds = array<i64: 1>, scalar_prefetch = 0 : i64, scratch_operands = 0 : i64, tpu.core_type = #tpu.core_type<tc>, window_params = [{pipeline_mode = #tpu.pipeline_mode<synchronous>, transform_indices = @transform_0, window_bounds = array<i64: 1, 108>}, {pipeline_mode = #tpu.pipeline_mode<synchronous>, transform_indices = @transform_1, window_bounds = array<i64: 1, 1>}, {transform_indices = @transform_2, window_bounds = array<i64: 108, 256>}, {transform_indices = @transform_3, window_bounds = array<i64: 1, 256>}]} {
    %c0 = arith.constant 0 : index
    %c0_0 = arith.constant 0 : index
    %0 = vector.load %arg1[%c0, %c0_0] : memref<1x108xbf16, #tpu.memory_space<vmem>>, vector<1x108xbf16>
    %c0_1 = arith.constant 0 : index
    %c0_2 = arith.constant 0 : index
    %1 = vector.load %arg3[%c0_1, %c0_2] : memref<108x256xbf16, #tpu.memory_space<vmem>>, vector<108x256xbf16>
    %cst = arith.constant dense<0.000000e+00> : vector<1x256xf32>
    %2 = tpu.matmul %0, %1, %cst {dimension_numbers = #tpu.dot_dimension_numbers<[1], [0], [0], [1], [0, 0, 1, 1], [], []>} : vector<1x108xbf16>, vector<108x256xbf16>, vector<1x256xf32> -> vector<1x256xf32>
    %c0_3 = arith.constant 0 : index
    %c0_4 = arith.constant 0 : index
    %3 = vector.load %arg2[%c0_3, %c0_4] : memref<1x1xf32, #tpu.memory_space<vmem>>, vector<1x1xf32>
    %4 = vector.broadcast %3 : vector<1x1xf32> to vector<1x256xf32>
    %5 = arith.addf %2, %4 : vector<1x256xf32>
    %cst_5 = arith.constant 0.000000e+00 : f32
    %6 = vector.broadcast %cst_5 : f32 to vector<1x256xf32>
    %7 = arith.maximumf %5, %6 : vector<1x256xf32>
    %c0_6 = arith.constant 0 : index
    %c0_7 = arith.constant 0 : index
    %8 = vector.load %arg4[%c0_6, %c0_7] : memref<1x256xf32, #tpu.memory_space<vmem>>, vector<1x256xf32>
    tpu.vector_store %arg4[%c0_6, %c0_7], %7 {strides = array<i32>} : memref<1x256xf32, #tpu.memory_space<vmem>>, vector<1x256xf32>,
    return
  }
  func.func @transform_0(%arg0: i32) -> (i32, i32) {
    %c0_i32 = arith.constant 0 : i32
    %c0_i32_0 = arith.constant 0 : i32
    %c0_i32_1 = arith.constant 0 : i32
    return %c0_i32, %c0_i32_0 : i32, i32
  }
  func.func @transform_1(%arg0: i32) -> (i32, i32) {
    %c0_i32 = arith.constant 0 : i32
    %c0_i32_0 = arith.constant 0 : i32
    %c0_i32_1 = arith.constant 0 : i32
    return %c0_i32, %c0_i32_0 : i32, i32
  }
  func.func @transform_2(%arg0: i32) -> (i32, i32) {
    %c0_i32 = arith.constant 0 : i32
    %c0_i32_0 = arith.constant 0 : i32
    return %c0_i32, %arg0 : i32, i32
  }
  func.func @transform_3(%arg0: i32) -> (i32, i32) {
    %c0_i32 = arith.constant 0 : i32
    %c0_i32_0 = arith.constant 0 : i32
    return %c0_i32, %arg0 : i32, i32
  }
}

module attributes {stable_mosaic.version = 11 : i64} {
  func.func @_conv_gemm_kernel(%arg0: i32, %arg1: memref<1x108xbf16, #tpu.memory_space<vmem>>, %arg2: memref<1x1xf32, #tpu.memory_space<vmem>>, %arg3: memref<108x256xbf16, #tpu.memory_space<vmem>>, %arg4: memref<1x256xf32, #tpu.memory_space<vmem>>) attributes {dimension_semantics = [#tpu.dimension_semantics<parallel>], iteration_bounds = array<i64: 1>, scalar_prefetch = 0 : i64, scratch_operands = 0 : i64, tpu.core_type = #tpu.core_type<tc>, window_params = [{pipeline_mode = #tpu.pipeline_mode<synchronous>, transform_indices = @transform_0, window_bounds = array<i64: 1, 108>}, {pipeline_mode = #tpu.pipeline_mode<synchronous>, transform_indices = @transform_1, window_bounds = array<i64: 1, 1>}, {transform_indices = @transform_2, window_bounds = array<i64: 108, 256>}, {transform_indices = @transform_3, window_bounds = array<i64: 1, 256>}]} {
    %c0 = arith.constant 0 : index
    %c0_0 = arith.constant 0 : index
    %0 = vector.load %arg1[%c0, %c0_0] : memref<1x108xbf16, #tpu.memory_space<vmem>>, vector<1x108xbf16>
    %c0_1 = arith.constant 0 : index
    %c0_2 = arith.constant 0 : index
    %1 = vector.load %arg3[%c0_1, %c0_2] : memref<108x256xbf16, #tpu.memory_space<vmem>>, vector<108x256xbf16>
    %cst = arith.constant dense<0.000000e+00> : vector<1x256xf32>
    %2 = tpu.matmul %0, %1, %cst {dimension_numbers = #tpu.dot_dimension_numbers<[1], [0], [0], [1], [0, 0, 1, 1], [], []>} : vector<1x108xbf16>, vector<108x256xbf16>, vector<1x256xf32> -> vector<1x256xf32>
    %c0_3 = arith.constant 0 : index
    %c0_4 = arith.constant 0 : index
    %3 = vector.load %arg2[%c0_3, %c0_4] : memref<1x1xf32, #tpu.memory_space<vmem>>, vector<1x1xf32>
    %4 = vector.broadcast %3 : vector<1x1xf32> to vector<1x256xf32>
    %5 = arith.addf %2, %4 : vector<1x256xf32>
    %c0_5 = arith.constant 0 : index
    %c0_6 = arith.constant 0 : index
    %6 = vector.load %arg4[%c0_5, %c0_6] : memref<1x256xf32, #tpu.memory_space<vmem>>, vector<1x256xf32>
    tpu.vector_store %arg4[%c0_5, %c0_6], %5 {strides = array<i32>} : memref<1x256xf32, #tpu.memory_space<vmem>>, vector<1x256xf32>,
    return
  }
  func.func @transform_0(%arg0: i32) -> (i32, i32) {
    %c0_i32 = arith.constant 0 : i32
    %c0_i32_0 = arith.constant 0 : i32
    %c0_i32_1 = arith.constant 0 : i32
    return %c0_i32, %c0_i32_0 : i32, i32
  }
  func.func @transform_1(%arg0: i32) -> (i32, i32) {
    %c0_i32 = arith.constant 0 : i32
    %c0_i32_0 = arith.constant 0 : i32
    %c0_i32_1 = arith.constant 0 : i32
    return %c0_i32, %c0_i32_0 : i32, i32
  }
  func.func @transform_2(%arg0: i32) -> (i32, i32) {
    %c0_i32 = arith.constant 0 : i32
    %c0_i32_0 = arith.constant 0 : i32
    return %c0_i32, %arg0 : i32, i32
  }
  func.func @transform_3(%arg0: i32) -> (i32, i32) {
    %c0_i32 = arith.constant 0 : i32
    %c0_i32_0 = arith.constant 0 : i32
    return %c0_i32, %arg0 : i32, i32
  }
}

module attributes {stable_mosaic.version = 11 : i64} {
  func.func @_attn_scores_kernel(%arg0: i32, %arg1: memref<1x2x64xbf16, #tpu.memory_space<vmem>>, %arg2: memref<1x64x2xbf16, #tpu.memory_space<vmem>>, %arg3: memref<1x2x2xf32, #tpu.memory_space<vmem>>, %arg4: memref<1x64x64xf32, #tpu.memory_space<vmem>>) attributes {dimension_semantics = [#tpu.dimension_semantics<parallel>], iteration_bounds = array<i64: 2>, scalar_prefetch = 0 : i64, scratch_operands = 0 : i64, tpu.core_type = #tpu.core_type<tc>, window_params = [{transform_indices = @transform_0, window_bounds = array<i64: 1, 2, 64>}, {transform_indices = @transform_1, window_bounds = array<i64: 1, 64, 2>}, {transform_indices = @transform_2, window_bounds = array<i64: 1, 2, 2>}, {transform_indices = @transform_3, window_bounds = array<i64: 1, 64, 64>}]} {
    %c0 = arith.constant 0 : index
    %c0_0 = arith.constant 0 : index
    %c0_1 = arith.constant 0 : index
    %0 = vector.load %arg1[%c0, %c0_0, %c0_1] : memref<1x2x64xbf16, #tpu.memory_space<vmem>>, vector<1x2x64xbf16>
    %1 = vector.shape_cast %0 : vector<1x2x64xbf16> to vector<2x64xbf16>
    %c0_2 = arith.constant 0 : index
    %c0_3 = arith.constant 0 : index
    %c0_4 = arith.constant 0 : index
    %2 = vector.load %arg2[%c0_2, %c0_3, %c0_4] : memref<1x64x2xbf16, #tpu.memory_space<vmem>>, vector<1x64x2xbf16>
    %3 = vector.shape_cast %2 : vector<1x64x2xbf16> to vector<64x2xbf16>
    %cst = arith.constant dense<0.000000e+00> : vector<2x2xf32>
    %4 = tpu.matmul %1, %3, %cst {dimension_numbers = #tpu.dot_dimension_numbers<[1], [0], [0], [1], [0, 0, 1, 1], [], []>} : vector<2x64xbf16>, vector<64x2xbf16>, vector<2x2xf32> -> vector<2x2xf32>
    %c0_5 = arith.constant 0 : index
    %c0_6 = arith.constant 0 : index
    %c0_7 = arith.constant 0 : index
    %5 = vector.load %arg3[%c0_5, %c0_6, %c0_7] : memref<1x2x2xf32, #tpu.memory_space<vmem>>, vector<1x2x2xf32>
    %6 = vector.shape_cast %5 : vector<1x2x2xf32> to vector<2x2xf32>
    %7 = vector.shape_cast %4 : vector<2x2xf32> to vector<1x2x2xf32>
    tpu.vector_store %arg3[%c0_5, %c0_6, %c0_7], %7 {strides = array<i32>} : memref<1x2x2xf32, #tpu.memory_space<vmem>>, vector<1x2x2xf32>,
    %cst_8 = arith.constant dense<0.000000e+00> : vector<64x64xf32>
    %8 = tpu.matmul %3, %1, %cst_8 {dimension_numbers = #tpu.dot_dimension_numbers<[1], [0], [0], [1], [0, 0, 1, 1], [], []>} : vector<64x2xbf16>, vector<2x64xbf16>, vector<64x64xf32> -> vector<64x64xf32>
    %c0_9 = arith.constant 0 : index
    %c0_10 = arith.constant 0 : index
    %c0_11 = arith.constant 0 : index
    %9 = vector.load %arg4[%c0_9, %c0_10, %c0_11] : memref<1x64x64xf32, #tpu.memory_space<vmem>>, vector<1x64x64xf32>
    %10 = vector.shape_cast %9 : vector<1x64x64xf32> to vector<64x64xf32>
    %11 = vector.shape_cast %8 : vector<64x64xf32> to vector<1x64x64xf32>
    tpu.vector_store %arg4[%c0_9, %c0_10, %c0_11], %11 {strides = array<i32>} : memref<1x64x64xf32, #tpu.memory_space<vmem>>, vector<1x64x64xf32>,
    return
  }
  func.func @transform_0(%arg0: i32) -> (i32, i32, i32) {
    %c0_i32 = arith.constant 0 : i32
    %c0_i32_0 = arith.constant 0 : i32
    %c0_i32_1 = arith.constant 0 : i32
    return %arg0, %c0_i32, %c0_i32_0 : i32, i32, i32
  }
  func.func @transform_1(%arg0: i32) -> (i32, i32, i32) {
    %c0_i32 = arith.constant 0 : i32
    %c0_i32_0 = arith.constant 0 : i32
    %c0_i32_1 = arith.constant 0 : i32
    return %arg0, %c0_i32, %c0_i32_0 : i32, i32, i32
  }
  func.func @transform_2(%arg0: i32) -> (i32, i32, i32) {
    %c0_i32 = arith.constant 0 : i32
    %c0_i32_0 = arith.constant 0 : i32
    %c0_i32_1 = arith.constant 0 : i32
    return %arg0, %c0_i32, %c0_i32_0 : i32, i32, i32
  }
  func.func @transform_3(%arg0: i32) -> (i32, i32, i32) {
    %c0_i32 = arith.constant 0 : i32
    %c0_i32_0 = arith.constant 0 : i32
    %c0_i32_1 = arith.constant 0 : i32
    return %arg0, %c0_i32, %c0_i32_0 : i32, i32, i32
  }
}

module attributes {stable_mosaic.version = 11 : i64} {
  func.func @_conv_gemm_kernel(%arg0: i32, %arg1: memref<1x27xbf16, #tpu.memory_space<vmem>>, %arg2: memref<1x1xf32, #tpu.memory_space<vmem>>, %arg3: memref<27x256xbf16, #tpu.memory_space<vmem>>, %arg4: memref<1x256xf32, #tpu.memory_space<vmem>>, %arg5: memref<1x256xf32, #tpu.memory_space<vmem>>) attributes {dimension_semantics = [#tpu.dimension_semantics<parallel>], iteration_bounds = array<i64: 1>, scalar_prefetch = 0 : i64, scratch_operands = 0 : i64, tpu.core_type = #tpu.core_type<tc>, window_params = [{pipeline_mode = #tpu.pipeline_mode<synchronous>, transform_indices = @transform_0, window_bounds = array<i64: 1, 27>}, {pipeline_mode = #tpu.pipeline_mode<synchronous>, transform_indices = @transform_1, window_bounds = array<i64: 1, 1>}, {transform_indices = @transform_2, window_bounds = array<i64: 27, 256>}, {transform_indices = @transform_3, window_bounds = array<i64: 1, 256>}, {transform_indices = @transform_4, window_bounds = array<i64: 1, 256>}]} {
    %c0 = arith.constant 0 : index
    %c0_0 = arith.constant 0 : index
    %0 = vector.load %arg1[%c0, %c0_0] : memref<1x27xbf16, #tpu.memory_space<vmem>>, vector<1x27xbf16>
    %c0_1 = arith.constant 0 : index
    %c0_2 = arith.constant 0 : index
    %1 = vector.load %arg3[%c0_1, %c0_2] : memref<27x256xbf16, #tpu.memory_space<vmem>>, vector<27x256xbf16>
    %cst = arith.constant dense<0.000000e+00> : vector<1x256xf32>
    %2 = tpu.matmul %0, %1, %cst {dimension_numbers = #tpu.dot_dimension_numbers<[1], [0], [0], [1], [0, 0, 1, 1], [], []>} : vector<1x27xbf16>, vector<27x256xbf16>, vector<1x256xf32> -> vector<1x256xf32>
    %c0_3 = arith.constant 0 : index
    %c0_4 = arith.constant 0 : index
    %3 = vector.load %arg2[%c0_3, %c0_4] : memref<1x1xf32, #tpu.memory_space<vmem>>, vector<1x1xf32>
    %4 = vector.broadcast %3 : vector<1x1xf32> to vector<1x256xf32>
    %5 = arith.addf %2, %4 : vector<1x256xf32>
    %c0_5 = arith.constant 0 : index
    %c0_6 = arith.constant 0 : index
    %6 = vector.load %arg4[%c0_5, %c0_6] : memref<1x256xf32, #tpu.memory_space<vmem>>, vector<1x256xf32>
    %7 = arith.addf %5, %6 : vector<1x256xf32>
    %cst_7 = arith.constant 0.000000e+00 : f32
    %8 = vector.broadcast %cst_7 : f32 to vector<1x256xf32>
    %9 = arith.maximumf %7, %8 : vector<1x256xf32>
    %c0_8 = arith.constant 0 : index
    %c0_9 = arith.constant 0 : index
    %10 = vector.load %arg5[%c0_8, %c0_9] : memref<1x256xf32, #tpu.memory_space<vmem>>, vector<1x256xf32>
    tpu.vector_store %arg5[%c0_8, %c0_9], %9 {strides = array<i32>} : memref<1x256xf32, #tpu.memory_space<vmem>>, vector<1x256xf32>,
    return
  }
  func.func @transform_0(%arg0: i32) -> (i32, i32) {
    %c0_i32 = arith.constant 0 : i32
    %c0_i32_0 = arith.constant 0 : i32
    %c0_i32_1 = arith.constant 0 : i32
    return %c0_i32, %c0_i32_0 : i32, i32
  }
  func.func @transform_1(%arg0: i32) -> (i32, i32) {
    %c0_i32 = arith.constant 0 : i32
    %c0_i32_0 = arith.constant 0 : i32
    %c0_i32_1 = arith.constant 0 : i32
    return %c0_i32, %c0_i32_0 : i32, i32
  }
  func.func @transform_2(%arg0: i32) -> (i32, i32) {
    %c0_i32 = arith.constant 0 : i32
    %c0_i32_0 = arith.constant 0 : i32
    return %c0_i32, %arg0 : i32, i32
  }
  func.func @transform_3(%arg0: i32) -> (i32, i32) {
    %c0_i32 = arith.constant 0 : i32
    %c0_i32_0 = arith.constant 0 : i32
    return %c0_i32, %arg0 : i32, i32
  }
  func.func @transform_4(%arg0: i32) -> (i32, i32) {
    %c0_i32 = arith.constant 0 : i32
    %c0_i32_0 = arith.constant 0 : i32
    return %c0_i32, %arg0 : i32, i32
  }
}

module attributes {stable_mosaic.version = 11 : i64} {
  func.func @_attn_apply_kernel(%arg0: i32, %arg1: i32, %arg2: memref<1x2x2xbf16, #tpu.memory_space<vmem>>, %arg3: memref<1x64x64xbf16, #tpu.memory_space<vmem>>, %arg4: memref<1x1x2x64xbf16, #tpu.memory_space<vmem>>, %arg5: memref<1x1x2x64xf32, #tpu.memory_space<vmem>>) attributes {dimension_semantics = [#tpu.dimension_semantics<parallel>, #tpu.dimension_semantics<parallel>], iteration_bounds = array<i64: 2, 4>, scalar_prefetch = 0 : i64, scratch_operands = 0 : i64, tpu.core_type = #tpu.core_type<tc>, window_params = [{transform_indices = @transform_0, window_bounds = array<i64: 1, 2, 2>}, {transform_indices = @transform_1, window_bounds = array<i64: 1, 64, 64>}, {transform_indices = @transform_2, window_bounds = array<i64: 1, 1, 2, 64>}, {transform_indices = @transform_3, window_bounds = array<i64: 1, 1, 2, 64>}]} {
    %c0 = arith.constant 0 : index
    %c0_0 = arith.constant 0 : index
    %c0_1 = arith.constant 0 : index
    %0 = vector.load %arg2[%c0, %c0_0, %c0_1] : memref<1x2x2xbf16, #tpu.memory_space<vmem>>, vector<1x2x2xbf16>
    %1 = vector.shape_cast %0 : vector<1x2x2xbf16> to vector<2x2xbf16>
    %c0_2 = arith.constant 0 : index
    %c0_3 = arith.constant 0 : index
    %c0_4 = arith.constant 0 : index
    %2 = vector.load %arg3[%c0_2, %c0_3, %c0_4] : memref<1x64x64xbf16, #tpu.memory_space<vmem>>, vector<1x64x64xbf16>
    %3 = vector.shape_cast %2 : vector<1x64x64xbf16> to vector<64x64xbf16>
    %c0_5 = arith.constant 0 : index
    %c0_6 = arith.constant 0 : index
    %c0_7 = arith.constant 0 : index
    %c0_8 = arith.constant 0 : index
    %4 = vector.load %arg4[%c0_5, %c0_6, %c0_7, %c0_8] : memref<1x1x2x64xbf16, #tpu.memory_space<vmem>>, vector<1x1x2x64xbf16>
    %5 = vector.shape_cast %4 : vector<1x1x2x64xbf16> to vector<2x64xbf16>
    %cst = arith.constant dense<0.000000e+00> : vector<2x64xf32>
    %6 = tpu.matmul %1, %5, %cst {dimension_numbers = #tpu.dot_dimension_numbers<[1], [0], [0], [1], [0, 0, 1, 1], [], []>} : vector<2x2xbf16>, vector<2x64xbf16>, vector<2x64xf32> -> vector<2x64xf32>
    %7 = arith.truncf %6 : vector<2x64xf32> to vector<2x64xbf16>
    %cst_9 = arith.constant dense<0.000000e+00> : vector<2x64xf32>
    %8 = tpu.matmul %7, %3, %cst_9 {dimension_numbers = #tpu.dot_dimension_numbers<[1], [0], [0], [1], [0, 0, 1, 1], [], []>} : vector<2x64xbf16>, vector<64x64xbf16>, vector<2x64xf32> -> vector<2x64xf32>
    %c0_10 = arith.constant 0 : index
    %c0_11 = arith.constant 0 : index
    %c0_12 = arith.constant 0 : index
    %c0_13 = arith.constant 0 : index
    %9 = vector.load %arg5[%c0_10, %c0_11, %c0_12, %c0_13] : memref<1x1x2x64xf32, #tpu.memory_space<vmem>>, vector<1x1x2x64xf32>
    %10 = vector.shape_cast %9 : vector<1x1x2x64xf32> to vector<2x64xf32>
    %11 = vector.shape_cast %8 : vector<2x64xf32> to vector<1x1x2x64xf32>
    tpu.vector_store %arg5[%c0_10, %c0_11, %c0_12, %c0_13], %11 {strides = array<i32>} : memref<1x1x2x64xf32, #tpu.memory_space<vmem>>, vector<1x1x2x64xf32>,
    return
  }
  func.func @transform_0(%arg0: i32, %arg1: i32) -> (i32, i32, i32) {
    %c0_i32 = arith.constant 0 : i32
    %c0_i32_0 = arith.constant 0 : i32
    %c0_i32_1 = arith.constant 0 : i32
    return %arg0, %c0_i32, %c0_i32_0 : i32, i32, i32
  }
  func.func @transform_1(%arg0: i32, %arg1: i32) -> (i32, i32, i32) {
    %c0_i32 = arith.constant 0 : i32
    %c0_i32_0 = arith.constant 0 : i32
    %c0_i32_1 = arith.constant 0 : i32
    return %arg0, %c0_i32, %c0_i32_0 : i32, i32, i32
  }
  func.func @transform_2(%arg0: i32, %arg1: i32) -> (i32, i32, i32, i32) {
    %c0_i32 = arith.constant 0 : i32
    %c0_i32_0 = arith.constant 0 : i32
    %c0_i32_1 = arith.constant 0 : i32
    return %arg1, %arg0, %c0_i32, %c0_i32_0 : i32, i32, i32, i32
  }
  func.func @transform_3(%arg0: i32, %arg1: i32) -> (i32, i32, i32, i32) {
    %c0_i32 = arith.constant 0 : i32
    %c0_i32_0 = arith.constant 0 : i32
    %c0_i32_1 = arith.constant 0 : i32
    return %arg1, %arg0, %c0_i32, %c0_i32_0 : i32, i32, i32, i32
  }
}

module attributes {stable_mosaic.version = 11 : i64} {
  func.func @_conv_gemm_kernel(%arg0: i32, %arg1: memref<4x216xbf16, #tpu.memory_space<vmem>>, %arg2: memref<4x1xf32, #tpu.memory_space<vmem>>, %arg3: memref<216x256xbf16, #tpu.memory_space<vmem>>, %arg4: memref<4x256xf32, #tpu.memory_space<vmem>>) attributes {dimension_semantics = [#tpu.dimension_semantics<parallel>], iteration_bounds = array<i64: 1>, scalar_prefetch = 0 : i64, scratch_operands = 0 : i64, tpu.core_type = #tpu.core_type<tc>, window_params = [{pipeline_mode = #tpu.pipeline_mode<synchronous>, transform_indices = @transform_0, window_bounds = array<i64: 4, 216>}, {pipeline_mode = #tpu.pipeline_mode<synchronous>, transform_indices = @transform_1, window_bounds = array<i64: 4, 1>}, {transform_indices = @transform_2, window_bounds = array<i64: 216, 256>}, {transform_indices = @transform_3, window_bounds = array<i64: 4, 256>}]} {
    %c0 = arith.constant 0 : index
    %c0_0 = arith.constant 0 : index
    %0 = vector.load %arg1[%c0, %c0_0] : memref<4x216xbf16, #tpu.memory_space<vmem>>, vector<4x216xbf16>
    %c0_1 = arith.constant 0 : index
    %c0_2 = arith.constant 0 : index
    %1 = vector.load %arg3[%c0_1, %c0_2] : memref<216x256xbf16, #tpu.memory_space<vmem>>, vector<216x256xbf16>
    %cst = arith.constant dense<0.000000e+00> : vector<4x256xf32>
    %2 = tpu.matmul %0, %1, %cst {dimension_numbers = #tpu.dot_dimension_numbers<[1], [0], [0], [1], [0, 0, 1, 1], [], []>} : vector<4x216xbf16>, vector<216x256xbf16>, vector<4x256xf32> -> vector<4x256xf32>
    %c0_3 = arith.constant 0 : index
    %c0_4 = arith.constant 0 : index
    %3 = vector.load %arg2[%c0_3, %c0_4] : memref<4x1xf32, #tpu.memory_space<vmem>>, vector<4x1xf32>
    %4 = vector.broadcast %3 : vector<4x1xf32> to vector<4x256xf32>
    %5 = arith.addf %2, %4 : vector<4x256xf32>
    %cst_5 = arith.constant 0.000000e+00 : f32
    %6 = vector.broadcast %cst_5 : f32 to vector<4x256xf32>
    %7 = arith.maximumf %5, %6 : vector<4x256xf32>
    %c0_6 = arith.constant 0 : index
    %c0_7 = arith.constant 0 : index
    %8 = vector.load %arg4[%c0_6, %c0_7] : memref<4x256xf32, #tpu.memory_space<vmem>>, vector<4x256xf32>
    tpu.vector_store %arg4[%c0_6, %c0_7], %7 {strides = array<i32>} : memref<4x256xf32, #tpu.memory_space<vmem>>, vector<4x256xf32>,
    return
  }
  func.func @transform_0(%arg0: i32) -> (i32, i32) {
    %c0_i32 = arith.constant 0 : i32
    %c0_i32_0 = arith.constant 0 : i32
    %c0_i32_1 = arith.constant 0 : i32
    return %c0_i32, %c0_i32_0 : i32, i32
  }
  func.func @transform_1(%arg0: i32) -> (i32, i32) {
    %c0_i32 = arith.constant 0 : i32
    %c0_i32_0 = arith.constant 0 : i32
    %c0_i32_1 = arith.constant 0 : i32
    return %c0_i32, %c0_i32_0 : i32, i32
  }
  func.func @transform_2(%arg0: i32) -> (i32, i32) {
    %c0_i32 = arith.constant 0 : i32
    %c0_i32_0 = arith.constant 0 : i32
    return %c0_i32, %arg0 : i32, i32
  }
  func.func @transform_3(%arg0: i32) -> (i32, i32) {
    %c0_i32 = arith.constant 0 : i32
    %c0_i32_0 = arith.constant 0 : i32
    return %c0_i32, %arg0 : i32, i32
  }
}

module attributes {stable_mosaic.version = 11 : i64} {
  func.func @_conv_gemm_kernel(%arg0: i32, %arg1: memref<4x216xbf16, #tpu.memory_space<vmem>>, %arg2: memref<4x1xf32, #tpu.memory_space<vmem>>, %arg3: memref<216x256xbf16, #tpu.memory_space<vmem>>, %arg4: memref<4x256xf32, #tpu.memory_space<vmem>>) attributes {dimension_semantics = [#tpu.dimension_semantics<parallel>], iteration_bounds = array<i64: 1>, scalar_prefetch = 0 : i64, scratch_operands = 0 : i64, tpu.core_type = #tpu.core_type<tc>, window_params = [{pipeline_mode = #tpu.pipeline_mode<synchronous>, transform_indices = @transform_0, window_bounds = array<i64: 4, 216>}, {pipeline_mode = #tpu.pipeline_mode<synchronous>, transform_indices = @transform_1, window_bounds = array<i64: 4, 1>}, {transform_indices = @transform_2, window_bounds = array<i64: 216, 256>}, {transform_indices = @transform_3, window_bounds = array<i64: 4, 256>}]} {
    %c0 = arith.constant 0 : index
    %c0_0 = arith.constant 0 : index
    %0 = vector.load %arg1[%c0, %c0_0] : memref<4x216xbf16, #tpu.memory_space<vmem>>, vector<4x216xbf16>
    %c0_1 = arith.constant 0 : index
    %c0_2 = arith.constant 0 : index
    %1 = vector.load %arg3[%c0_1, %c0_2] : memref<216x256xbf16, #tpu.memory_space<vmem>>, vector<216x256xbf16>
    %cst = arith.constant dense<0.000000e+00> : vector<4x256xf32>
    %2 = tpu.matmul %0, %1, %cst {dimension_numbers = #tpu.dot_dimension_numbers<[1], [0], [0], [1], [0, 0, 1, 1], [], []>} : vector<4x216xbf16>, vector<216x256xbf16>, vector<4x256xf32> -> vector<4x256xf32>
    %c0_3 = arith.constant 0 : index
    %c0_4 = arith.constant 0 : index
    %3 = vector.load %arg2[%c0_3, %c0_4] : memref<4x1xf32, #tpu.memory_space<vmem>>, vector<4x1xf32>
    %4 = vector.broadcast %3 : vector<4x1xf32> to vector<4x256xf32>
    %5 = arith.addf %2, %4 : vector<4x256xf32>
    %c0_5 = arith.constant 0 : index
    %c0_6 = arith.constant 0 : index
    %6 = vector.load %arg4[%c0_5, %c0_6] : memref<4x256xf32, #tpu.memory_space<vmem>>, vector<4x256xf32>
    tpu.vector_store %arg4[%c0_5, %c0_6], %5 {strides = array<i32>} : memref<4x256xf32, #tpu.memory_space<vmem>>, vector<4x256xf32>,
    return
  }
  func.func @transform_0(%arg0: i32) -> (i32, i32) {
    %c0_i32 = arith.constant 0 : i32
    %c0_i32_0 = arith.constant 0 : i32
    %c0_i32_1 = arith.constant 0 : i32
    return %c0_i32, %c0_i32_0 : i32, i32
  }
  func.func @transform_1(%arg0: i32) -> (i32, i32) {
    %c0_i32 = arith.constant 0 : i32
    %c0_i32_0 = arith.constant 0 : i32
    %c0_i32_1 = arith.constant 0 : i32
    return %c0_i32, %c0_i32_0 : i32, i32
  }
  func.func @transform_2(%arg0: i32) -> (i32, i32) {
    %c0_i32 = arith.constant 0 : i32
    %c0_i32_0 = arith.constant 0 : i32
    return %c0_i32, %arg0 : i32, i32
  }
  func.func @transform_3(%arg0: i32) -> (i32, i32) {
    %c0_i32 = arith.constant 0 : i32
    %c0_i32_0 = arith.constant 0 : i32
    return %c0_i32, %arg0 : i32, i32
  }
}

module attributes {stable_mosaic.version = 11 : i64} {
  func.func @_conv_gemm_kernel(%arg0: i32, %arg1: memref<4x108xbf16, #tpu.memory_space<vmem>>, %arg2: memref<4x1xf32, #tpu.memory_space<vmem>>, %arg3: memref<108x256xbf16, #tpu.memory_space<vmem>>, %arg4: memref<4x256xf32, #tpu.memory_space<vmem>>, %arg5: memref<4x256xf32, #tpu.memory_space<vmem>>) attributes {dimension_semantics = [#tpu.dimension_semantics<parallel>], iteration_bounds = array<i64: 1>, scalar_prefetch = 0 : i64, scratch_operands = 0 : i64, tpu.core_type = #tpu.core_type<tc>, window_params = [{pipeline_mode = #tpu.pipeline_mode<synchronous>, transform_indices = @transform_0, window_bounds = array<i64: 4, 108>}, {pipeline_mode = #tpu.pipeline_mode<synchronous>, transform_indices = @transform_1, window_bounds = array<i64: 4, 1>}, {transform_indices = @transform_2, window_bounds = array<i64: 108, 256>}, {transform_indices = @transform_3, window_bounds = array<i64: 4, 256>}, {transform_indices = @transform_4, window_bounds = array<i64: 4, 256>}]} {
    %c0 = arith.constant 0 : index
    %c0_0 = arith.constant 0 : index
    %0 = vector.load %arg1[%c0, %c0_0] : memref<4x108xbf16, #tpu.memory_space<vmem>>, vector<4x108xbf16>
    %c0_1 = arith.constant 0 : index
    %c0_2 = arith.constant 0 : index
    %1 = vector.load %arg3[%c0_1, %c0_2] : memref<108x256xbf16, #tpu.memory_space<vmem>>, vector<108x256xbf16>
    %cst = arith.constant dense<0.000000e+00> : vector<4x256xf32>
    %2 = tpu.matmul %0, %1, %cst {dimension_numbers = #tpu.dot_dimension_numbers<[1], [0], [0], [1], [0, 0, 1, 1], [], []>} : vector<4x108xbf16>, vector<108x256xbf16>, vector<4x256xf32> -> vector<4x256xf32>
    %c0_3 = arith.constant 0 : index
    %c0_4 = arith.constant 0 : index
    %3 = vector.load %arg2[%c0_3, %c0_4] : memref<4x1xf32, #tpu.memory_space<vmem>>, vector<4x1xf32>
    %4 = vector.broadcast %3 : vector<4x1xf32> to vector<4x256xf32>
    %5 = arith.addf %2, %4 : vector<4x256xf32>
    %c0_5 = arith.constant 0 : index
    %c0_6 = arith.constant 0 : index
    %6 = vector.load %arg4[%c0_5, %c0_6] : memref<4x256xf32, #tpu.memory_space<vmem>>, vector<4x256xf32>
    %7 = arith.addf %5, %6 : vector<4x256xf32>
    %cst_7 = arith.constant 0.000000e+00 : f32
    %8 = vector.broadcast %cst_7 : f32 to vector<4x256xf32>
    %9 = arith.maximumf %7, %8 : vector<4x256xf32>
    %c0_8 = arith.constant 0 : index
    %c0_9 = arith.constant 0 : index
    %10 = vector.load %arg5[%c0_8, %c0_9] : memref<4x256xf32, #tpu.memory_space<vmem>>, vector<4x256xf32>
    tpu.vector_store %arg5[%c0_8, %c0_9], %9 {strides = array<i32>} : memref<4x256xf32, #tpu.memory_space<vmem>>, vector<4x256xf32>,
    return
  }
  func.func @transform_0(%arg0: i32) -> (i32, i32) {
    %c0_i32 = arith.constant 0 : i32
    %c0_i32_0 = arith.constant 0 : i32
    %c0_i32_1 = arith.constant 0 : i32
    return %c0_i32, %c0_i32_0 : i32, i32
  }
  func.func @transform_1(%arg0: i32) -> (i32, i32) {
    %c0_i32 = arith.constant 0 : i32
    %c0_i32_0 = arith.constant 0 : i32
    %c0_i32_1 = arith.constant 0 : i32
    return %c0_i32, %c0_i32_0 : i32, i32
  }
  func.func @transform_2(%arg0: i32) -> (i32, i32) {
    %c0_i32 = arith.constant 0 : i32
    %c0_i32_0 = arith.constant 0 : i32
    return %c0_i32, %arg0 : i32, i32
  }
  func.func @transform_3(%arg0: i32) -> (i32, i32) {
    %c0_i32 = arith.constant 0 : i32
    %c0_i32_0 = arith.constant 0 : i32
    return %c0_i32, %arg0 : i32, i32
  }
  func.func @transform_4(%arg0: i32) -> (i32, i32) {
    %c0_i32 = arith.constant 0 : i32
    %c0_i32_0 = arith.constant 0 : i32
    return %c0_i32, %arg0 : i32, i32
  }
}

module attributes {stable_mosaic.version = 11 : i64} {
  func.func @_conv_gemm_kernel(%arg0: i32, %arg1: memref<4x108xbf16, #tpu.memory_space<vmem>>, %arg2: memref<4x1xf32, #tpu.memory_space<vmem>>, %arg3: memref<108x256xbf16, #tpu.memory_space<vmem>>, %arg4: memref<4x256xf32, #tpu.memory_space<vmem>>) attributes {dimension_semantics = [#tpu.dimension_semantics<parallel>], iteration_bounds = array<i64: 1>, scalar_prefetch = 0 : i64, scratch_operands = 0 : i64, tpu.core_type = #tpu.core_type<tc>, window_params = [{pipeline_mode = #tpu.pipeline_mode<synchronous>, transform_indices = @transform_0, window_bounds = array<i64: 4, 108>}, {pipeline_mode = #tpu.pipeline_mode<synchronous>, transform_indices = @transform_1, window_bounds = array<i64: 4, 1>}, {transform_indices = @transform_2, window_bounds = array<i64: 108, 256>}, {transform_indices = @transform_3, window_bounds = array<i64: 4, 256>}]} {
    %c0 = arith.constant 0 : index
    %c0_0 = arith.constant 0 : index
    %0 = vector.load %arg1[%c0, %c0_0] : memref<4x108xbf16, #tpu.memory_space<vmem>>, vector<4x108xbf16>
    %c0_1 = arith.constant 0 : index
    %c0_2 = arith.constant 0 : index
    %1 = vector.load %arg3[%c0_1, %c0_2] : memref<108x256xbf16, #tpu.memory_space<vmem>>, vector<108x256xbf16>
    %cst = arith.constant dense<0.000000e+00> : vector<4x256xf32>
    %2 = tpu.matmul %0, %1, %cst {dimension_numbers = #tpu.dot_dimension_numbers<[1], [0], [0], [1], [0, 0, 1, 1], [], []>} : vector<4x108xbf16>, vector<108x256xbf16>, vector<4x256xf32> -> vector<4x256xf32>
    %c0_3 = arith.constant 0 : index
    %c0_4 = arith.constant 0 : index
    %3 = vector.load %arg2[%c0_3, %c0_4] : memref<4x1xf32, #tpu.memory_space<vmem>>, vector<4x1xf32>
    %4 = vector.broadcast %3 : vector<4x1xf32> to vector<4x256xf32>
    %5 = arith.addf %2, %4 : vector<4x256xf32>
    %cst_5 = arith.constant 0.000000e+00 : f32
    %6 = vector.broadcast %cst_5 : f32 to vector<4x256xf32>
    %7 = arith.maximumf %5, %6 : vector<4x256xf32>
    %c0_6 = arith.constant 0 : index
    %c0_7 = arith.constant 0 : index
    %8 = vector.load %arg4[%c0_6, %c0_7] : memref<4x256xf32, #tpu.memory_space<vmem>>, vector<4x256xf32>
    tpu.vector_store %arg4[%c0_6, %c0_7], %7 {strides = array<i32>} : memref<4x256xf32, #tpu.memory_space<vmem>>, vector<4x256xf32>,
    return
  }
  func.func @transform_0(%arg0: i32) -> (i32, i32) {
    %c0_i32 = arith.constant 0 : i32
    %c0_i32_0 = arith.constant 0 : i32
    %c0_i32_1 = arith.constant 0 : i32
    return %c0_i32, %c0_i32_0 : i32, i32
  }
  func.func @transform_1(%arg0: i32) -> (i32, i32) {
    %c0_i32 = arith.constant 0 : i32
    %c0_i32_0 = arith.constant 0 : i32
    %c0_i32_1 = arith.constant 0 : i32
    return %c0_i32, %c0_i32_0 : i32, i32
  }
  func.func @transform_2(%arg0: i32) -> (i32, i32) {
    %c0_i32 = arith.constant 0 : i32
    %c0_i32_0 = arith.constant 0 : i32
    return %c0_i32, %arg0 : i32, i32
  }
  func.func @transform_3(%arg0: i32) -> (i32, i32) {
    %c0_i32 = arith.constant 0 : i32
    %c0_i32_0 = arith.constant 0 : i32
    return %c0_i32, %arg0 : i32, i32
  }
}

module attributes {stable_mosaic.version = 11 : i64} {
  func.func @_conv_gemm_kernel(%arg0: i32, %arg1: memref<4x108xbf16, #tpu.memory_space<vmem>>, %arg2: memref<4x1xf32, #tpu.memory_space<vmem>>, %arg3: memref<108x256xbf16, #tpu.memory_space<vmem>>, %arg4: memref<4x256xf32, #tpu.memory_space<vmem>>) attributes {dimension_semantics = [#tpu.dimension_semantics<parallel>], iteration_bounds = array<i64: 1>, scalar_prefetch = 0 : i64, scratch_operands = 0 : i64, tpu.core_type = #tpu.core_type<tc>, window_params = [{pipeline_mode = #tpu.pipeline_mode<synchronous>, transform_indices = @transform_0, window_bounds = array<i64: 4, 108>}, {pipeline_mode = #tpu.pipeline_mode<synchronous>, transform_indices = @transform_1, window_bounds = array<i64: 4, 1>}, {transform_indices = @transform_2, window_bounds = array<i64: 108, 256>}, {transform_indices = @transform_3, window_bounds = array<i64: 4, 256>}]} {
    %c0 = arith.constant 0 : index
    %c0_0 = arith.constant 0 : index
    %0 = vector.load %arg1[%c0, %c0_0] : memref<4x108xbf16, #tpu.memory_space<vmem>>, vector<4x108xbf16>
    %c0_1 = arith.constant 0 : index
    %c0_2 = arith.constant 0 : index
    %1 = vector.load %arg3[%c0_1, %c0_2] : memref<108x256xbf16, #tpu.memory_space<vmem>>, vector<108x256xbf16>
    %cst = arith.constant dense<0.000000e+00> : vector<4x256xf32>
    %2 = tpu.matmul %0, %1, %cst {dimension_numbers = #tpu.dot_dimension_numbers<[1], [0], [0], [1], [0, 0, 1, 1], [], []>} : vector<4x108xbf16>, vector<108x256xbf16>, vector<4x256xf32> -> vector<4x256xf32>
    %c0_3 = arith.constant 0 : index
    %c0_4 = arith.constant 0 : index
    %3 = vector.load %arg2[%c0_3, %c0_4] : memref<4x1xf32, #tpu.memory_space<vmem>>, vector<4x1xf32>
    %4 = vector.broadcast %3 : vector<4x1xf32> to vector<4x256xf32>
    %5 = arith.addf %2, %4 : vector<4x256xf32>
    %c0_5 = arith.constant 0 : index
    %c0_6 = arith.constant 0 : index
    %6 = vector.load %arg4[%c0_5, %c0_6] : memref<4x256xf32, #tpu.memory_space<vmem>>, vector<4x256xf32>
    tpu.vector_store %arg4[%c0_5, %c0_6], %5 {strides = array<i32>} : memref<4x256xf32, #tpu.memory_space<vmem>>, vector<4x256xf32>,
    return
  }
  func.func @transform_0(%arg0: i32) -> (i32, i32) {
    %c0_i32 = arith.constant 0 : i32
    %c0_i32_0 = arith.constant 0 : i32
    %c0_i32_1 = arith.constant 0 : i32
    return %c0_i32, %c0_i32_0 : i32, i32
  }
  func.func @transform_1(%arg0: i32) -> (i32, i32) {
    %c0_i32 = arith.constant 0 : i32
    %c0_i32_0 = arith.constant 0 : i32
    %c0_i32_1 = arith.constant 0 : i32
    return %c0_i32, %c0_i32_0 : i32, i32
  }
  func.func @transform_2(%arg0: i32) -> (i32, i32) {
    %c0_i32 = arith.constant 0 : i32
    %c0_i32_0 = arith.constant 0 : i32
    return %c0_i32, %arg0 : i32, i32
  }
  func.func @transform_3(%arg0: i32) -> (i32, i32) {
    %c0_i32 = arith.constant 0 : i32
    %c0_i32_0 = arith.constant 0 : i32
    return %c0_i32, %arg0 : i32, i32
  }
}

</mosaic_0001>

<llo_original>
// kernel: temporal_decoder2_forward.35
$region0: #{temporal_decoder2_forward.35}
  #allocation0 [shape = 'u32[]', space=smem, size = 0x4, offset = 0x4, fixed_abs, tag = 'smem constant byte address 0x4 - core index']
  #allocation1 [shape = 'u32[144,128]{1,0:T(1,128)}', space=vmem, size = 0x12000, scoped, tag = 'internal scratch']
  %s0 = inlined_call_operand.vmem [shape: bf16[16,864], index: 0, kind: input, shape index: {}]
  %s1 = inlined_call_operand.vmem [shape: f32[16,1], index: 1, kind: input, shape index: {}]
  %s2 = inlined_call_operand.vmem [shape: bf16[864,128], index: 2, kind: input, shape index: {}]
  %s3 = inlined_call_operand.vmem [shape: f32[16,128], index: 3, kind: output, shape index: {}]
  %s4 = sld [smem:[#allocation0]]
  $region22: #{temporal_decoder2_forward.35} parent=0
    _
  %s6 = ssub.s32 1, %s4
  %s7 = scalar_select 0, %s6, %s4
  // Predicated region
  $region2: #{temporal_decoder2_forward.35} parent=0 // pred_check
    _
  $region3: #{temporal_decoder2_forward.35} parent=0 // pred_check_branch
    %9 = sbr.rel (0) target = $region5
  $region4: #{temporal_decoder2_forward.35} parent=0 // pred_region
    _
  $region5: #{temporal_decoder2_forward.35} parent=0 // pred_fallthru
    _
  // Predicated region
  $region6: #{temporal_decoder2_forward.35} parent=0 // pred_check
    _
  $region7: #{temporal_decoder2_forward.35} parent=0 // pred_check_branch
    %11 = sbr.rel (0) target = $region9
  $region8: #{temporal_decoder2_forward.35} parent=0 // pred_region
    _
  $region9: #{temporal_decoder2_forward.35} parent=0 // pred_fallthru
    _
  // Predicated region
  $region10: #{temporal_decoder2_forward.35} parent=0 // pred_check
    _
  $region11: #{temporal_decoder2_forward.35} parent=0 // pred_check_branch
    %13 = sbr.rel (0) target = $region13
  $region12: #{temporal_decoder2_forward.35} parent=0 // pred_region
    _
  $region13: #{temporal_decoder2_forward.35} parent=0 // pred_fallthru
    _
  %v15 = vld [vmem:[%s0] sm:$0xff]
  %v16 = vld [vmem:[%s0 + $0x8] sm:$0xff]
  %v17 = vld [vmem:[%s0 + $0x10] sm:$0xff]
  %v18 = vld [vmem:[%s0 + $0x18] sm:$0xf]
  %v19 = vld [vmem:[%s0 + $0x1c] sm:$0xff]
  %v20 = vld [vmem:[%s0 + $0x24] sm:$0xff]
  %v21 = vld [vmem:[%s0 + $0x2c] sm:$0xff]
  %v22 = vld [vmem:[%s0 + $0x34] sm:$0xf]
  %v23 = vld [vmem:[%s2] sm:$0xf]
  %v24 = vld [vmem:[%s2 + $0x4] sm:$0xf]
  %v25 = vld [vmem:[%s2 + $0x8] sm:$0xf]
  %v26 = vld [vmem:[%s2 + $0xc] sm:$0xf]
  %v27 = vld [vmem:[%s2 + $0x10] sm:$0xf]
  %v28 = vld [vmem:[%s2 + $0x14] sm:$0xf]
  %v29 = vld [vmem:[%s2 + $0x18] sm:$0xf]
  %v30 = vld [vmem:[%s2 + $0x1c] sm:$0xf]
  %v31 = vld [vmem:[%s2 + $0x20] sm:$0xf]
  %v32 = vld [vmem:[%s2 + $0x24] sm:$0xf]
  %v33 = vld [vmem:[%s2 + $0x28] sm:$0xf]
  %v34 = vld [vmem:[%s2 + $0x2c] sm:$0xf]
  %v35 = vld [vmem:[%s2 + $0x30] sm:$0xf]
  %v36 = vld [vmem:[%s2 + $0x34] sm:$0xf]
  %v37 = vld [vmem:[%s2 + $0x38] sm:$0xf]
  %v38 = vld [vmem:[%s2 + $0x3c] sm:$0xf]
  %v39 = vld [vmem:[%s2 + $0x40] sm:$0xf]
  %v40 = vld [vmem:[%s2 + $0x44] sm:$0xf]
  %v41 = vld [vmem:[%s2 + $0x48] sm:$0xf]
  %v42 = vld [vmem:[%s2 + $0x4c] sm:$0xf]
  %v43 = vld [vmem:[%s2 + $0x50] sm:$0xf]
  %v44 = vld [vmem:[%s2 + $0x54] sm:$0xf]
  %v45 = vld [vmem:[%s2 + $0x58] sm:$0xf]
  %v46 = vld [vmem:[%s2 + $0x5c] sm:$0xf]
  %v47 = vld [vmem:[%s2 + $0x60] sm:$0xf]
  %v48 = vld [vmem:[%s2 + $0x64] sm:$0xf]
  %v49 = vld [vmem:[%s2 + $0x68] sm:$0xf]
  %v50 = vld [vmem:[%s2 + $0x6c] sm:$0xf]
  %v51 = vld [vmem:[%s2 + $0x70] sm:$0xf]
  %v52 = vld [vmem:[%s2 + $0x74] sm:$0xf]
  %v53 = vld [vmem:[%s2 + $0x78] sm:$0xf]
  %v54 = vld [vmem:[%s2 + $0x7c] sm:$0xf]
  %v55 = vld [vmem:[%s2 + $0x80] sm:$0xf]
  %v56 = vld [vmem:[%s2 + $0x84] sm:$0xf]
  %v57 = vld [vmem:[%s2 + $0x88] sm:$0xf]
  %v58 = vld [vmem:[%s2 + $0x8c] sm:$0xf]
  %v59 = vld [vmem:[%s2 + $0x90] sm:$0xf]
  %v60 = vld [vmem:[%s2 + $0x94] sm:$0xf]
  %v61 = vld [vmem:[%s2 + $0x98] sm:$0xf]
  %v62 = vld [vmem:[%s2 + $0x9c] sm:$0xf]
  %v63 = vld [vmem:[%s2 + $0xa0] sm:$0xf]
  %v64 = vld [vmem:[%s2 + $0xa4] sm:$0xf]
  %v65 = vld [vmem:[%s2 + $0xa8] sm:$0xf]
  %v66 = vld [vmem:[%s2 + $0xac] sm:$0xf]
  %v67 = vld [vmem:[%s2 + $0xb0] sm:$0xf]
  %v68 = vld [vmem:[%s2 + $0xb4] sm:$0xf]
  %v69 = vld [vmem:[%s2 + $0xb8] sm:$0xf]
  %v70 = vld [vmem:[%s2 + $0xbc] sm:$0xf]
  %v71 = vld [vmem:[%s2 + $0xc0] sm:$0xf]
  %v72 = vld [vmem:[%s2 + $0xc4] sm:$0xf]
  %v73 = vld [vmem:[%s2 + $0xc8] sm:$0xf]
  %v74 = vld [vmem:[%s2 + $0xcc] sm:$0xf]
  %v75 = vld [vmem:[%s2 + $0xd0] sm:$0xf]
  %v76 = vld [vmem:[%s2 + $0xd4] sm:$0xf]
  %v77 = vld [vmem:[%s2 + $0xd8] sm:$0xf]
  %v78 = vld [vmem:[%s2 + $0xdc] sm:$0xf]
  %v79 = vld [vmem:[%s2 + $0xe0] sm:$0xf]
  %v80 = vld [vmem:[%s2 + $0xe4] sm:$0xf]
  %v81 = vld [vmem:[%s2 + $0xe8] sm:$0xf]
  %v82 = vld [vmem:[%s2 + $0xec] sm:$0xf]
  %v83 = vld [vmem:[%s2 + $0xf0] sm:$0xf]
  %v84 = vld [vmem:[%s2 + $0xf4] sm:$0xf]
  %v85 = vld [vmem:[%s2 + $0xf8] sm:$0xf]
  %v86 = vld [vmem:[%s2 + $0xfc] sm:$0xf]
  %v87 = vld [vmem:[%s2 + $0x100] sm:$0xf]
  %v88 = vld [vmem:[%s2 + $0x104] sm:$0xf]
  %v89 = vld [vmem:[%s2 + $0x108] sm:$0xf]
  %v90 = vld [vmem:[%s2 + $0x10c] sm:$0xf]
  %v91 = vld [vmem:[%s2 + $0x110] sm:$0xf]
  %v92 = vld [vmem:[%s2 + $0x114] sm:$0xf]
  %v93 = vld [vmem:[%s2 + $0x118] sm:$0xf]
  %v94 = vld [vmem:[%s2 + $0x11c] sm:$0xf]
  %v95 = vld [vmem:[%s2 + $0x120] sm:$0xf]
  %v96 = vld [vmem:[%s2 + $0x124] sm:$0xf]
  %v97 = vld [vmem:[%s2 + $0x128] sm:$0xf]
  %v98 = vld [vmem:[%s2 + $0x12c] sm:$0xf]
  %v99 = vld [vmem:[%s2 + $0x130] sm:$0xf]
  %v100 = vld [vmem:[%s2 + $0x134] sm:$0xf]
  %v101 = vld [vmem:[%s2 + $0x138] sm:$0xf]
  %v102 = vld [vmem:[%s2 + $0x13c] sm:$0xf]
  %v103 = vld [vmem:[%s2 + $0x140] sm:$0xf]
  %v104 = vld [vmem:[%s2 + $0x144] sm:$0xf]
  %v105 = vld [vmem:[%s2 + $0x148] sm:$0xf]
  %v106 = vld [vmem:[%s2 + $0x14c] sm:$0xf]
  %v107 = vld [vmem:[%s2 + $0x150] sm:$0xf]
  %v108 = vld [vmem:[%s2 + $0x154] sm:$0xf]
  %v109 = vld [vmem:[%s2 + $0x158] sm:$0xf]
  %v110 = vld [vmem:[%s2 + $0x15c] sm:$0xf]
  %v111 = vld [vmem:[%s2 + $0x160] sm:$0xf]
  %v112 = vld [vmem:[%s2 + $0x164] sm:$0xf]
  %v113 = vld [vmem:[%s2 + $0x168] sm:$0xf]
  %v114 = vld [vmem:[%s2 + $0x16c] sm:$0xf]
  %v115 = vld [vmem:[%s2 + $0x170] sm:$0xf]
  %v116 = vld [vmem:[%s2 + $0x174] sm:$0xf]
  %v117 = vld [vmem:[%s2 + $0x178] sm:$0xf]
  %v118 = vld [vmem:[%s2 + $0x17c] sm:$0xf]
  %v119 = vld [vmem:[%s2 + $0x180] sm:$0xf]
  %v120 = vld [vmem:[%s2 + $0x184] sm:$0xf]
  %v121 = vld [vmem:[%s2 + $0x188] sm:$0xf]
  %v122 = vld [vmem:[%s2 + $0x18c] sm:$0xf]
  %v123 = vld [vmem:[%s2 + $0x190] sm:$0xf]
  %v124 = vld [vmem:[%s2 + $0x194] sm:$0xf]
  %v125 = vld [vmem:[%s2 + $0x198] sm:$0xf]
  %v126 = vld [vmem:[%s2 + $0x19c] sm:$0xf]
  %v127 = vld [vmem:[%s2 + $0x1a0] sm:$0xf]
  %v128 = vld [vmem:[%s2 + $0x1a4] sm:$0xf]
  %v129 = vld [vmem:[%s2 + $0x1a8] sm:$0xf]
  %v130 = vld [vmem:[%s2 + $0x1ac] sm:$0xf]
  %v131 = vld [vmem:[%s1] sm:$0xff]
  %v132 = vld [vmem:[%s1 + $0x8] sm:$0xff]
  %134 = vset.pattern.permute.xlu0 0
  %135 = vperm.xlu0 %134, %v131
  %v136 = vpop.permute.xlu0 %135
  %139 = vset.pattern.permute.xlu0 0
  %140 = vperm.xlu0 %139, %v132
  %v141 = vpop.permute.xlu0 %140
  %v151 = vunpack.c.l.b16 %v15
  %v152 = vunpack.c.h.b16 %v15
  %v153 = vunpack.c.l.b16 %v16
  %v154 = vunpack.c.h.b16 %v16
  %v155 = vunpack.c.l.b16 %v17
  %v156 = vunpack.c.h.b16 %v17
  %v157 = vunpack.c.l.b16 %v18
  %v158 = vunpack.c.l.b16 %v19
  %v159 = vunpack.c.h.b16 %v19
  %v160 = vunpack.c.l.b16 %v20
  %v161 = vunpack.c.h.b16 %v20
  %v162 = vunpack.c.l.b16 %v21
  %v163 = vunpack.c.h.b16 %v21
  %v164 = vunpack.c.l.b16 %v22
  %v165 = vpack.c.b16 %v158, %v151
  %v166 = vpack.c.b16 %v159, %v152
  %v167 = vpack.c.b16 %v160, %v153
  %v168 = vpack.c.b16 %v161, %v154
  %v169 = vpack.c.b16 %v162, %v155
  %v170 = vpack.c.b16 %v163, %v156
  %v171 = vpack.c.b16 %v164, %v157
  %v286 = vunpack.c.l.b16 %v23
  %v287 = vunpack.c.l.b16 %v24
  %v288 = vunpack.c.l.b16 %v25
  %v289 = vunpack.c.l.b16 %v26
  %v290 = vunpack.c.l.b16 %v27
  %v291 = vunpack.c.l.b16 %v28
  %v292 = vunpack.c.l.b16 %v29
  %v293 = vunpack.c.l.b16 %v30
  %v294 = vunpack.c.l.b16 %v31
  %v295 = vunpack.c.l.b16 %v32
  %v296 = vunpack.c.l.b16 %v33
  %v297 = vunpack.c.l.b16 %v34
  %v298 = vunpack.c.l.b16 %v35
  %v299 = vunpack.c.l.b16 %v36
  %v300 = vunpack.c.l.b16 %v37
  %v301 = vunpack.c.l.b16 %v38
  %v302 = vunpack.c.l.b16 %v39
  %v303 = vunpack.c.l.b16 %v40
  %v304 = vunpack.c.l.b16 %v41
  %v305 = vunpack.c.l.b16 %v42
  %v306 = vunpack.c.l.b16 %v43
  %v307 = vunpack.c.l.b16 %v44
  %v308 = vunpack.c.l.b16 %v45
  %v309 = vunpack.c.l.b16 %v46
  %v310 = vunpack.c.l.b16 %v47
  %v311 = vunpack.c.l.b16 %v48
  %v312 = vunpack.c.l.b16 %v49
  %v313 = vunpack.c.l.b16 %v50
  %v314 = vunpack.c.l.b16 %v51
  %v315 = vunpack.c.l.b16 %v52
  %v316 = vunpack.c.l.b16 %v53
  %v317 = vunpack.c.l.b16 %v54
  %v318 = vunpack.c.l.b16 %v55
  %v319 = vunpack.c.l.b16 %v56
  %v320 = vunpack.c.l.b16 %v57
  %v321 = vunpack.c.l.b16 %v58
  %v322 = vunpack.c.l.b16 %v59
  %v323 = vunpack.c.l.b16 %v60
  %v324 = vunpack.c.l.b16 %v61
  %v325 = vunpack.c.l.b16 %v62
  %v326 = vunpack.c.l.b16 %v63
  %v327 = vunpack.c.l.b16 %v64
  %v328 = vunpack.c.l.b16 %v65
  %v329 = vunpack.c.l.b16 %v66
  %v330 = vunpack.c.l.b16 %v67
  %v331 = vunpack.c.l.b16 %v68
  %v332 = vunpack.c.l.b16 %v69
  %v333 = vunpack.c.l.b16 %v70
  %v334 = vunpack.c.l.b16 %v71
  %v335 = vunpack.c.l.b16 %v72
  %v336 = vunpack.c.l.b16 %v73
  %v337 = vunpack.c.l.b16 %v74
  %v338 = vunpack.c.l.b16 %v75
  %v339 = vunpack.c.l.b16 %v76
  %v340 = vunpack.c.l.b16 %v77
  %v341 = vunpack.c.l.b16 %v78
  %v342 = vunpack.c.l.b16 %v79
  %v343 = vunpack.c.l.b16 %v80
  %v344 = vunpack.c.l.b16 %v81
  %v345 = vunpack.c.l.b16 %v82
  %v346 = vunpack.c.l.b16 %v83
  %v347 = vunpack.c.l.b16 %v84
  %v348 = vunpack.c.l.b16 %v85
  %v349 = vunpack.c.l.b16 %v86
  %v350 = vunpack.c.l.b16 %v87
  %v351 = vunpack.c.l.b16 %v88
  %v352 = vunpack.c.l.b16 %v89
  %v353 = vunpack.c.l.b16 %v90
  %v354 = vunpack.c.l.b16 %v91
  %v355 = vunpack.c.l.b16 %v92
  %v356 = vunpack.c.l.b16 %v93
  %v357 = vunpack.c.l.b16 %v94
  %v358 = vunpack.c.l.b16 %v95
  %v359 = vunpack.c.l.b16 %v96
  %v360 = vunpack.c.l.b16 %v97
  %v361 = vunpack.c.l.b16 %v98
  %v362 = vunpack.c.l.b16 %v99
  %v363 = vunpack.c.l.b16 %v100
  %v364 = vunpack.c.l.b16 %v101
  %v365 = vunpack.c.l.b16 %v102
  %v366 = vunpack.c.l.b16 %v103
  %v367 = vunpack.c.l.b16 %v104
  %v368 = vunpack.c.l.b16 %v105
  %v369 = vunpack.c.l.b16 %v106
  %v370 = vunpack.c.l.b16 %v107
  %v371 = vunpack.c.l.b16 %v108
  %v372 = vunpack.c.l.b16 %v109
  %v373 = vunpack.c.l.b16 %v110
  %v374 = vunpack.c.l.b16 %v111
  %v375 = vunpack.c.l.b16 %v112
  %v376 = vunpack.c.l.b16 %v113
  %v377 = vunpack.c.l.b16 %v114
  %v378 = vunpack.c.l.b16 %v115
  %v379 = vunpack.c.l.b16 %v116
  %v380 = vunpack.c.l.b16 %v117
  %v381 = vunpack.c.l.b16 %v118
  %v382 = vunpack.c.l.b16 %v119
  %v383 = vunpack.c.l.b16 %v120
  %v384 = vunpack.c.l.b16 %v121
  %v385 = vunpack.c.l.b16 %v122
  %v386 = vunpack.c.l.b16 %v123
  %v387 = vunpack.c.l.b16 %v124
  %v388 = vunpack.c.l.b16 %v125
  %v389 = vunpack.c.l.b16 %v126
  %v390 = vunpack.c.l.b16 %v127
  %v391 = vunpack.c.l.b16 %v128
  %v392 = vunpack.c.l.b16 %v129
  %v393 = vunpack.c.l.b16 %v130
  %v394 = vpack.c.b16 %v287, %v286
  %v395 = vpack.c.b16 %v289, %v288
  %v396 = vpack.c.b16 %v291, %v290
  %v397 = vpack.c.b16 %v293, %v292
  %v398 = vpack.c.b16 %v295, %v294
  %v399 = vpack.c.b16 %v297, %v296
  %v400 = vpack.c.b16 %v299, %v298
  %v401 = vpack.c.b16 %v301, %v300
  %v402 = vpack.c.b16 %v303, %v302
  %v403 = vpack.c.b16 %v305, %v304
  %v404 = vpack.c.b16 %v307, %v306
  %v405 = vpack.c.b16 %v309, %v308
  %v406 = vpack.c.b16 %v311, %v310
  %v407 = vpack.c.b16 %v313, %v312
  %v408 = vpack.c.b16 %v315, %v314
  %v409 = vpack.c.b16 %v317, %v316
  %v410 = vpack.c.b16 %v319, %v318
  %v411 = vpack.c.b16 %v321, %v320
  %v412 = vpack.c.b16 %v323, %v322
  %v413 = vpack.c.b16 %v325, %v324
  %v414 = vpack.c.b16 %v327, %v326
  %v415 = vpack.c.b16 %v329, %v328
  %v416 = vpack.c.b16 %v331, %v330
  %v417 = vpack.c.b16 %v333, %v332
  %v418 = vpack.c.b16 %v335, %v334
  %v419 = vpack.c.b16 %v337, %v336
  %v420 = vpack.c.b16 %v339, %v338
  %v421 = vpack.c.b16 %v341, %v340
  %v422 = vpack.c.b16 %v343, %v342
  %v423 = vpack.c.b16 %v345, %v344
  %v424 = vpack.c.b16 %v347, %v346
  %v425 = vpack.c.b16 %v349, %v348
  %v426 = vpack.c.b16 %v351, %v350
  %v427 = vpack.c.b16 %v353, %v352
  %v428 = vpack.c.b16 %v355, %v354
  %v429 = vpack.c.b16 %v357, %v356
  %v430 = vpack.c.b16 %v359, %v358
  %v431 = vpack.c.b16 %v361, %v360
  %v432 = vpack.c.b16 %v363, %v362
  %v433 = vpack.c.b16 %v365, %v364
  %v434 = vpack.c.b16 %v367, %v366
  %v435 = vpack.c.b16 %v369, %v368
  %v436 = vpack.c.b16 %v371, %v370
  %v437 = vpack.c.b16 %v373, %v372
  %v438 = vpack.c.b16 %v375, %v374
  %v439 = vpack.c.b16 %v377, %v376
  %v440 = vpack.c.b16 %v379, %v378
  %v441 = vpack.c.b16 %v381, %v380
  %v442 = vpack.c.b16 %v383, %v382
  %v443 = vpack.c.b16 %v385, %v384
  %v444 = vpack.c.b16 %v387, %v386
  %v445 = vpack.c.b16 %v389, %v388
  %v446 = vpack.c.b16 %v391, %v390
  %v447 = vpack.c.b16 %v393, %v392
  %vm502 = vcmask 785408
  %v504 = vsel %vm502, %v171, 0
  %506 = vmatprep.subr.bf16.mxu0 0
  %507 = vmatpush1.bf16.msra.mxu0 %v401
  %508 = vmatprep.subr.bf16.mxu0 0
  %509 = vmatpush1.bf16.msra.mxu0 %v400
  %510 = vmatprep.subr.bf16.mxu0 0
  %511 = vmatpush1.bf16.msra.mxu0 %v399
  %512 = vmatprep.subr.bf16.mxu0 0
  %513 = vmatpush1.bf16.msra.mxu0 %v398
  %514 = vmatprep.subr.bf16.mxu0 0
  %515 = vmatpush1.bf16.msra.mxu0 %v397
  %516 = vmatprep.subr.bf16.mxu0 0
  %517 = vmatpush1.bf16.msra.mxu0 %v396
  %518 = vmatprep.subr.bf16.mxu0 0
  %519 = vmatpush1.bf16.msra.mxu0 %v395
  %520 = vmatprep.subr.bf16.mxu0 0
  %521 = vmatpush1.bf16.msra.mxu0 %v394
  %522 = vmatprep.subr.bf16.mxu0 0
  %523 = vmatpush2.bf16.msra.mxu0 %v409
  %524 = vmatprep.subr.bf16.mxu0 0
  %525 = vmatpush2.bf16.msra.mxu0 %v408
  %526 = vmatprep.subr.bf16.mxu0 0
  %527 = vmatpush2.bf16.msra.mxu0 %v407
  %528 = vmatprep.subr.bf16.mxu0 0
  %529 = vmatpush2.bf16.msra.mxu0 %v406
  %530 = vmatprep.subr.bf16.mxu0 0
  %531 = vmatpush2.bf16.msra.mxu0 %v405
  %532 = vmatprep.subr.bf16.mxu0 0
  %533 = vmatpush2.bf16.msra.mxu0 %v404
  %534 = vmatprep.subr.bf16.mxu0 0
  %535 = vmatpush2.bf16.msra.mxu0 %v403
  %536 = vmatprep.subr.bf16.mxu0 0
  %537 = vmatpush2.bf16.msra.mxu0 %v402
  %538 = vmatprep.mubr.bf16.mxu0 %v166
  %539 = vmatmul.mubr.bf16.gmra.mxu0 %v165
  %v540 = vpop.f32.mrf.mxu0
  %v541 = vadd.f32 %v136, %v540
  %v542 = vpop.f32.mrf.mxu0
  %v543 = vpop.f32.mrf.mxu0
  %v544 = vadd.f32 %v141, %v543
  %v545 = vpop.f32.mrf.mxu0
  %546 = vdwg.mxu0
  %547 = vmatprep.subr.bf16.mxu0 0
  %548 = vmatpush1.bf16.msra.mxu0 %v417
  %549 = vmatprep.subr.bf16.mxu0 0
  %550 = vmatpush1.bf16.msra.mxu0 %v416
  %551 = vmatprep.subr.bf16.mxu0 0
  %552 = vmatpush1.bf16.msra.mxu0 %v415
  %553 = vmatprep.subr.bf16.mxu0 0
  %554 = vmatpush1.bf16.msra.mxu0 %v414
  %555 = vmatprep.subr.bf16.mxu0 0
  %556 = vmatpush1.bf16.msra.mxu0 %v413
  %557 = vmatprep.subr.bf16.mxu0 0
  %558 = vmatpush1.bf16.msra.mxu0 %v412
  %559 = vmatprep.subr.bf16.mxu0 0
  %560 = vmatpush1.bf16.msra.mxu0 %v411
  %561 = vmatprep.subr.bf16.mxu0 0
  %562 = vmatpush1.bf16.msra.mxu0 %v410
  %563 = vmatprep.subr.bf16.mxu0 0
  %564 = vmatpush2.bf16.msra.mxu0 %v425
  %565 = vmatprep.subr.bf16.mxu0 0
  %566 = vmatpush2.bf16.msra.mxu0 %v424
  %567 = vmatprep.subr.bf16.mxu0 0
  %568 = vmatpush2.bf16.msra.mxu0 %v423
  %569 = vmatprep.subr.bf16.mxu0 0
  %570 = vmatpush2.bf16.msra.mxu0 %v422
  %571 = vmatprep.subr.bf16.mxu0 0
  %572 = vmatpush2.bf16.msra.mxu0 %v421
  %573 = vmatprep.subr.bf16.mxu0 0
  %574 = vmatpush2.bf16.msra.mxu0 %v420
  %575 = vmatprep.subr.bf16.mxu0 0
  %576 = vmatpush2.bf16.msra.mxu0 %v419
  %577 = vmatprep.subr.bf16.mxu0 0
  %578 = vmatpush2.bf16.msra.mxu0 %v418
  %579 = vmatprep.mubr.bf16.mxu0 %v168
  %580 = vmatmul.mubr.bf16.gmra.mxu0 %v167
  %v581 = vpop.f32.mrf.mxu0
  %v582 = vadd.f32 %v541, %v581
  %v583 = vpop.f32.mrf.mxu0
  %v584 = vpop.f32.mrf.mxu0
  %v585 = vadd.f32 %v544, %v584
  %v586 = vpop.f32.mrf.mxu0
  %587 = vdwg.mxu0
  %588 = vmatprep.subr.bf16.mxu0 0
  %589 = vmatpush1.bf16.msra.mxu0 %v433
  %590 = vmatprep.subr.bf16.mxu0 0
  %591 = vmatpush1.bf16.msra.mxu0 %v432
  %592 = vmatprep.subr.bf16.mxu0 0
  %593 = vmatpush1.bf16.msra.mxu0 %v431
  %594 = vmatprep.subr.bf16.mxu0 0
  %595 = vmatpush1.bf16.msra.mxu0 %v430
  %596 = vmatprep.subr.bf16.mxu0 0
  %597 = vmatpush1.bf16.msra.mxu0 %v429
  %598 = vmatprep.subr.bf16.mxu0 0
  %599 = vmatpush1.bf16.msra.mxu0 %v428
  %600 = vmatprep.subr.bf16.mxu0 0
  %601 = vmatpush1.bf16.msra.mxu0 %v427
  %602 = vmatprep.subr.bf16.mxu0 0
  %603 = vmatpush1.bf16.msra.mxu0 %v426
  %604 = vmatprep.subr.bf16.mxu0 0
  %605 = vmatpush2.bf16.msra.mxu0 %v441
  %606 = vmatprep.subr.bf16.mxu0 0
  %607 = vmatpush2.bf16.msra.mxu0 %v440
  %608 = vmatprep.subr.bf16.mxu0 0
  %609 = vmatpush2.bf16.msra.mxu0 %v439
  %610 = vmatprep.subr.bf16.mxu0 0
  %611 = vmatpush2.bf16.msra.mxu0 %v438
  %612 = vmatprep.subr.bf16.mxu0 0
  %613 = vmatpush2.bf16.msra.mxu0 %v437
  %614 = vmatprep.subr.bf16.mxu0 0
  %615 = vmatpush2.bf16.msra.mxu0 %v436
  %616 = vmatprep.subr.bf16.mxu0 0
  %617 = vmatpush2.bf16.msra.mxu0 %v435
  %618 = vmatprep.subr.bf16.mxu0 0
  %619 = vmatpush2.bf16.msra.mxu0 %v434
  %620 = vmatprep.mubr.bf16.mxu0 %v170
  %621 = vmatmul.mubr.bf16.gmra.mxu0 %v169
  %v622 = vpop.f32.mrf.mxu0
  %v623 = vadd.f32 %v582, %v622
  %v624 = vpop.f32.mrf.mxu0
  %v625 = vpop.f32.mrf.mxu0
  %v626 = vadd.f32 %v585, %v625
  %v627 = vpop.f32.mrf.mxu0
  %628 = vdwg.mxu0
  %629 = vmatprep.subr.bf16.mxu0 0
  %630 = vmatpush1.bf16.msra.mxu0 0
  %631 = vmatprep.subr.bf16.mxu0 0
  %632 = vmatpush1.bf16.msra.mxu0 0
  %633 = vmatprep.subr.bf16.mxu0 0
  %634 = vmatpush1.bf16.msra.mxu0 %v447
  %635 = vmatprep.subr.bf16.mxu0 0
  %636 = vmatpush1.bf16.msra.mxu0 %v446
  %637 = vmatprep.subr.bf16.mxu0 0
  %638 = vmatpush1.bf16.msra.mxu0 %v445
  %639 = vmatprep.subr.bf16.mxu0 0
  %640 = vmatpush1.bf16.msra.mxu0 %v444
  %641 = vmatprep.subr.bf16.mxu0 0
  %642 = vmatpush1.bf16.msra.mxu0 %v443
  %643 = vmatprep.subr.bf16.mxu0 0
  %644 = vmatpush1.bf16.msra.mxu0 %v442
  %645 = vmatprep.subr.bf16.mxu0 0
  %646 = vmatpush2.bf16.msra.mxu0 0
  %647 = vmatprep.subr.bf16.mxu0 0
  %648 = vmatpush2.bf16.msra.mxu0 0
  %649 = vmatprep.subr.bf16.mxu0 0
  %650 = vmatpush2.bf16.msra.mxu0 0
  %651 = vmatprep.subr.bf16.mxu0 0
  %652 = vmatpush2.bf16.msra.mxu0 0
  %653 = vmatprep.subr.bf16.mxu0 0
  %654 = vmatpush2.bf16.msra.mxu0 0
  %655 = vmatprep.subr.bf16.mxu0 0
  %656 = vmatpush2.bf16.msra.mxu0 0
  %657 = vmatprep.subr.bf16.mxu0 0
  %658 = vmatpush2.bf16.msra.mxu0 0
  %659 = vmatprep.subr.bf16.mxu0 0
  %660 = vmatpush2.bf16.msra.mxu0 0
  %661 = vmatprep.mubr.bf16.mxu0 0
  %662 = vmatmul.mubr.bf16.gmra.mxu0 %v504
  %v663 = vpop.f32.mrf.mxu0
  %v664 = vadd.f32 %v623, %v663
  %v665 = vpop.f32.mrf.mxu0
  %v666 = vpop.f32.mrf.mxu0
  %v667 = vadd.f32 %v626, %v666
  %v668 = vpop.f32.mrf.mxu0
  %669 = vdwg.mxu0
  %v670 = vmax.f32 %v664, 0.0
  %v671 = vmax.f32 %v667, 0.0
  %672 = vst [vmem:[%s3] sm:$0xff] %v670
  %673 = vst [vmem:[%s3 + $0x8] sm:$0xff] %v671
  // Predicated region
  $region14: #{temporal_decoder2_forward.35} parent=0 // pred_check
    _
  $region15: #{temporal_decoder2_forward.35} parent=0 // pred_check_branch
    %675 = sbr.rel (0) target = $region17
  $region16: #{temporal_decoder2_forward.35} parent=0 // pred_region
    _
  $region17: #{temporal_decoder2_forward.35} parent=0 // pred_fallthru
    _
  // Predicated region
  $region18: #{temporal_decoder2_forward.35} parent=0 // pred_check
    _
  $region19: #{temporal_decoder2_forward.35} parent=0 // pred_check_branch
    %677 = sbr.rel (0) target = $region21
  $region20: #{temporal_decoder2_forward.35} parent=0 // pred_region
    _
  $region21: #{temporal_decoder2_forward.35} parent=0 // pred_fallthru
    _

// kernel: temporal_decoder2_forward.34
$region0: #{temporal_decoder2_forward.34}
  #allocation0 [shape = 'u32[]', space=smem, size = 0x4, offset = 0x4, fixed_abs, tag = 'smem constant byte address 0x4 - core index']
  #allocation1 [shape = 'u32[144,128]{1,0:T(1,128)}', space=vmem, size = 0x12000, scoped, tag = 'internal scratch']
  %s0 = inlined_call_operand.vmem [shape: bf16[16,864], index: 0, kind: input, shape index: {}]
  %s1 = inlined_call_operand.vmem [shape: f32[16,1], index: 1, kind: input, shape index: {}]
  %s2 = inlined_call_operand.vmem [shape: bf16[864,128], index: 2, kind: input, shape index: {}]
  %s3 = inlined_call_operand.vmem [shape: f32[16,128], index: 3, kind: output, shape index: {}]
  %s4 = sld [smem:[#allocation0]]
  $region22: #{temporal_decoder2_forward.34} parent=0
    _
  %s6 = ssub.s32 1, %s4
  %s7 = scalar_select 0, %s6, %s4
  // Predicated region
  $region2: #{temporal_decoder2_forward.34} parent=0 // pred_check
    _
  $region3: #{temporal_decoder2_forward.34} parent=0 // pred_check_branch
    %9 = sbr.rel (0) target = $region5
  $region4: #{temporal_decoder2_forward.34} parent=0 // pred_region
    _
  $region5: #{temporal_decoder2_forward.34} parent=0 // pred_fallthru
    _
  // Predicated region
  $region6: #{temporal_decoder2_forward.34} parent=0 // pred_check
    _
  $region7: #{temporal_decoder2_forward.34} parent=0 // pred_check_branch
    %11 = sbr.rel (0) target = $region9
  $region8: #{temporal_decoder2_forward.34} parent=0 // pred_region
    _
  $region9: #{temporal_decoder2_forward.34} parent=0 // pred_fallthru
    _
  // Predicated region
  $region10: #{temporal_decoder2_forward.34} parent=0 // pred_check
    _
  $region11: #{temporal_decoder2_forward.34} parent=0 // pred_check_branch
    %13 = sbr.rel (0) target = $region13
  $region12: #{temporal_decoder2_forward.34} parent=0 // pred_region
    _
  $region13: #{temporal_decoder2_forward.34} parent=0 // pred_fallthru
    _
  %v15 = vld [vmem:[%s0] sm:$0xff]
  %v16 = vld [vmem:[%s0 + $0x8] sm:$0xff]
  %v17 = vld [vmem:[%s0 + $0x10] sm:$0xff]
  %v18 = vld [vmem:[%s0 + $0x18] sm:$0xf]
  %v19 = vld [vmem:[%s0 + $0x1c] sm:$0xff]
  %v20 = vld [vmem:[%s0 + $0x24] sm:$0xff]
  %v21 = vld [vmem:[%s0 + $0x2c] sm:$0xff]
  %v22 = vld [vmem:[%s0 + $0x34] sm:$0xf]
  %v23 = vld [vmem:[%s2] sm:$0xf]
  %v24 = vld [vmem:[%s2 + $0x4] sm:$0xf]
  %v25 = vld [vmem:[%s2 + $0x8] sm:$0xf]
  %v26 = vld [vmem:[%s2 + $0xc] sm:$0xf]
  %v27 = vld [vmem:[%s2 + $0x10] sm:$0xf]
  %v28 = vld [vmem:[%s2 + $0x14] sm:$0xf]
  %v29 = vld [vmem:[%s2 + $0x18] sm:$0xf]
  %v30 = vld [vmem:[%s2 + $0x1c] sm:$0xf]
  %v31 = vld [vmem:[%s2 + $0x20] sm:$0xf]
  %v32 = vld [vmem:[%s2 + $0x24] sm:$0xf]
  %v33 = vld [vmem:[%s2 + $0x28] sm:$0xf]
  %v34 = vld [vmem:[%s2 + $0x2c] sm:$0xf]
  %v35 = vld [vmem:[%s2 + $0x30] sm:$0xf]
  %v36 = vld [vmem:[%s2 + $0x34] sm:$0xf]
  %v37 = vld [vmem:[%s2 + $0x38] sm:$0xf]
  %v38 = vld [vmem:[%s2 + $0x3c] sm:$0xf]
  %v39 = vld [vmem:[%s2 + $0x40] sm:$0xf]
  %v40 = vld [vmem:[%s2 + $0x44] sm:$0xf]
  %v41 = vld [vmem:[%s2 + $0x48] sm:$0xf]
  %v42 = vld [vmem:[%s2 + $0x4c] sm:$0xf]
  %v43 = vld [vmem:[%s2 + $0x50] sm:$0xf]
  %v44 = vld [vmem:[%s2 + $0x54] sm:$0xf]
  %v45 = vld [vmem:[%s2 + $0x58] sm:$0xf]
  %v46 = vld [vmem:[%s2 + $0x5c] sm:$0xf]
  %v47 = vld [vmem:[%s2 + $0x60] sm:$0xf]
  %v48 = vld [vmem:[%s2 + $0x64] sm:$0xf]
  %v49 = vld [vmem:[%s2 + $0x68] sm:$0xf]
  %v50 = vld [vmem:[%s2 + $0x6c] sm:$0xf]
  %v51 = vld [vmem:[%s2 + $0x70] sm:$0xf]
  %v52 = vld [vmem:[%s2 + $0x74] sm:$0xf]
  %v53 = vld [vmem:[%s2 + $0x78] sm:$0xf]
  %v54 = vld [vmem:[%s2 + $0x7c] sm:$0xf]
  %v55 = vld [vmem:[%s2 + $0x80] sm:$0xf]
  %v56 = vld [vmem:[%s2 + $0x84] sm:$0xf]
  %v57 = vld [vmem:[%s2 + $0x88] sm:$0xf]
  %v58 = vld [vmem:[%s2 + $0x8c] sm:$0xf]
  %v59 = vld [vmem:[%s2 + $0x90] sm:$0xf]
  %v60 = vld [vmem:[%s2 + $0x94] sm:$0xf]
  %v61 = vld [vmem:[%s2 + $0x98] sm:$0xf]
  %v62 = vld [vmem:[%s2 + $0x9c] sm:$0xf]
  %v63 = vld [vmem:[%s2 + $0xa0] sm:$0xf]
  %v64 = vld [vmem:[%s2 + $0xa4] sm:$0xf]
  %v65 = vld [vmem:[%s2 + $0xa8] sm:$0xf]
  %v66 = vld [vmem:[%s2 + $0xac] sm:$0xf]
  %v67 = vld [vmem:[%s2 + $0xb0] sm:$0xf]
  %v68 = vld [vmem:[%s2 + $0xb4] sm:$0xf]
  %v69 = vld [vmem:[%s2 + $0xb8] sm:$0xf]
  %v70 = vld [vmem:[%s2 + $0xbc] sm:$0xf]
  %v71 = vld [vmem:[%s2 + $0xc0] sm:$0xf]
  %v72 = vld [vmem:[%s2 + $0xc4] sm:$0xf]
  %v73 = vld [vmem:[%s2 + $0xc8] sm:$0xf]
  %v74 = vld [vmem:[%s2 + $0xcc] sm:$0xf]
  %v75 = vld [vmem:[%s2 + $0xd0] sm:$0xf]
  %v76 = vld [vmem:[%s2 + $0xd4] sm:$0xf]
  %v77 = vld [vmem:[%s2 + $0xd8] sm:$0xf]
  %v78 = vld [vmem:[%s2 + $0xdc] sm:$0xf]
  %v79 = vld [vmem:[%s2 + $0xe0] sm:$0xf]
  %v80 = vld [vmem:[%s2 + $0xe4] sm:$0xf]
  %v81 = vld [vmem:[%s2 + $0xe8] sm:$0xf]
  %v82 = vld [vmem:[%s2 + $0xec] sm:$0xf]
  %v83 = vld [vmem:[%s2 + $0xf0] sm:$0xf]
  %v84 = vld [vmem:[%s2 + $0xf4] sm:$0xf]
  %v85 = vld [vmem:[%s2 + $0xf8] sm:$0xf]
  %v86 = vld [vmem:[%s2 + $0xfc] sm:$0xf]
  %v87 = vld [vmem:[%s2 + $0x100] sm:$0xf]
  %v88 = vld [vmem:[%s2 + $0x104] sm:$0xf]
  %v89 = vld [vmem:[%s2 + $0x108] sm:$0xf]
  %v90 = vld [vmem:[%s2 + $0x10c] sm:$0xf]
  %v91 = vld [vmem:[%s2 + $0x110] sm:$0xf]
  %v92 = vld [vmem:[%s2 + $0x114] sm:$0xf]
  %v93 = vld [vmem:[%s2 + $0x118] sm:$0xf]
  %v94 = vld [vmem:[%s2 + $0x11c] sm:$0xf]
  %v95 = vld [vmem:[%s2 + $0x120] sm:$0xf]
  %v96 = vld [vmem:[%s2 + $0x124] sm:$0xf]
  %v97 = vld [vmem:[%s2 + $0x128] sm:$0xf]
  %v98 = vld [vmem:[%s2 + $0x12c] sm:$0xf]
  %v99 = vld [vmem:[%s2 + $0x130] sm:$0xf]
  %v100 = vld [vmem:[%s2 + $0x134] sm:$0xf]
  %v101 = vld [vmem:[%s2 + $0x138] sm:$0xf]
  %v102 = vld [vmem:[%s2 + $0x13c] sm:$0xf]
  %v103 = vld [vmem:[%s2 + $0x140] sm:$0xf]
  %v104 = vld [vmem:[%s2 + $0x144] sm:$0xf]
  %v105 = vld [vmem:[%s2 + $0x148] sm:$0xf]
  %v106 = vld [vmem:[%s2 + $0x14c] sm:$0xf]
  %v107 = vld [vmem:[%s2 + $0x150] sm:$0xf]
  %v108 = vld [vmem:[%s2 + $0x154] sm:$0xf]
  %v109 = vld [vmem:[%s2 + $0x158] sm:$0xf]
  %v110 = vld [vmem:[%s2 + $0x15c] sm:$0xf]
  %v111 = vld [vmem:[%s2 + $0x160] sm:$0xf]
  %v112 = vld [vmem:[%s2 + $0x164] sm:$0xf]
  %v113 = vld [vmem:[%s2 + $0x168] sm:$0xf]
  %v114 = vld [vmem:[%s2 + $0x16c] sm:$0xf]
  %v115 = vld [vmem:[%s2 + $0x170] sm:$0xf]
  %v116 = vld [vmem:[%s2 + $0x174] sm:$0xf]
  %v117 = vld [vmem:[%s2 + $0x178] sm:$0xf]
  %v118 = vld [vmem:[%s2 + $0x17c] sm:$0xf]
  %v119 = vld [vmem:[%s2 + $0x180] sm:$0xf]
  %v120 = vld [vmem:[%s2 + $0x184] sm:$0xf]
  %v121 = vld [vmem:[%s2 + $0x188] sm:$0xf]
  %v122 = vld [vmem:[%s2 + $0x18c] sm:$0xf]
  %v123 = vld [vmem:[%s2 + $0x190] sm:$0xf]
  %v124 = vld [vmem:[%s2 + $0x194] sm:$0xf]
  %v125 = vld [vmem:[%s2 + $0x198] sm:$0xf]
  %v126 = vld [vmem:[%s2 + $0x19c] sm:$0xf]
  %v127 = vld [vmem:[%s2 + $0x1a0] sm:$0xf]
  %v128 = vld [vmem:[%s2 + $0x1a4] sm:$0xf]
  %v129 = vld [vmem:[%s2 + $0x1a8] sm:$0xf]
  %v130 = vld [vmem:[%s2 + $0x1ac] sm:$0xf]
  %v131 = vld [vmem:[%s1] sm:$0xff]
  %v132 = vld [vmem:[%s1 + $0x8] sm:$0xff]
  %134 = vset.pattern.permute.xlu0 0
  %135 = vperm.xlu0 %134, %v131
  %v136 = vpop.permute.xlu0 %135
  %139 = vset.pattern.permute.xlu0 0
  %140 = vperm.xlu0 %139, %v132
  %v141 = vpop.permute.xlu0 %140
  %v151 = vunpack.c.l.b16 %v15
  %v152 = vunpack.c.h.b16 %v15
  %v153 = vunpack.c.l.b16 %v16
  %v154 = vunpack.c.h.b16 %v16
  %v155 = vunpack.c.l.b16 %v17
  %v156 = vunpack.c.h.b16 %v17
  %v157 = vunpack.c.l.b16 %v18
  %v158 = vunpack.c.l.b16 %v19
  %v159 = vunpack.c.h.b16 %v19
  %v160 = vunpack.c.l.b16 %v20
  %v161 = vunpack.c.h.b16 %v20
  %v162 = vunpack.c.l.b16 %v21
  %v163 = vunpack.c.h.b16 %v21
  %v164 = vunpack.c.l.b16 %v22
  %v165 = vpack.c.b16 %v158, %v151
  %v166 = vpack.c.b16 %v159, %v152
  %v167 = vpack.c.b16 %v160, %v153
  %v168 = vpack.c.b16 %v161, %v154
  %v169 = vpack.c.b16 %v162, %v155
  %v170 = vpack.c.b16 %v163, %v156
  %v171 = vpack.c.b16 %v164, %v157
  %v286 = vunpack.c.l.b16 %v23
  %v287 = vunpack.c.l.b16 %v24
  %v288 = vunpack.c.l.b16 %v25
  %v289 = vunpack.c.l.b16 %v26
  %v290 = vunpack.c.l.b16 %v27
  %v291 = vunpack.c.l.b16 %v28
  %v292 = vunpack.c.l.b16 %v29
  %v293 = vunpack.c.l.b16 %v30
  %v294 = vunpack.c.l.b16 %v31
  %v295 = vunpack.c.l.b16 %v32
  %v296 = vunpack.c.l.b16 %v33
  %v297 = vunpack.c.l.b16 %v34
  %v298 = vunpack.c.l.b16 %v35
  %v299 = vunpack.c.l.b16 %v36
  %v300 = vunpack.c.l.b16 %v37
  %v301 = vunpack.c.l.b16 %v38
  %v302 = vunpack.c.l.b16 %v39
  %v303 = vunpack.c.l.b16 %v40
  %v304 = vunpack.c.l.b16 %v41
  %v305 = vunpack.c.l.b16 %v42
  %v306 = vunpack.c.l.b16 %v43
  %v307 = vunpack.c.l.b16 %v44
  %v308 = vunpack.c.l.b16 %v45
  %v309 = vunpack.c.l.b16 %v46
  %v310 = vunpack.c.l.b16 %v47
  %v311 = vunpack.c.l.b16 %v48
  %v312 = vunpack.c.l.b16 %v49
  %v313 = vunpack.c.l.b16 %v50
  %v314 = vunpack.c.l.b16 %v51
  %v315 = vunpack.c.l.b16 %v52
  %v316 = vunpack.c.l.b16 %v53
  %v317 = vunpack.c.l.b16 %v54
  %v318 = vunpack.c.l.b16 %v55
  %v319 = vunpack.c.l.b16 %v56
  %v320 = vunpack.c.l.b16 %v57
  %v321 = vunpack.c.l.b16 %v58
  %v322 = vunpack.c.l.b16 %v59
  %v323 = vunpack.c.l.b16 %v60
  %v324 = vunpack.c.l.b16 %v61
  %v325 = vunpack.c.l.b16 %v62
  %v326 = vunpack.c.l.b16 %v63
  %v327 = vunpack.c.l.b16 %v64
  %v328 = vunpack.c.l.b16 %v65
  %v329 = vunpack.c.l.b16 %v66
  %v330 = vunpack.c.l.b16 %v67
  %v331 = vunpack.c.l.b16 %v68
  %v332 = vunpack.c.l.b16 %v69
  %v333 = vunpack.c.l.b16 %v70
  %v334 = vunpack.c.l.b16 %v71
  %v335 = vunpack.c.l.b16 %v72
  %v336 = vunpack.c.l.b16 %v73
  %v337 = vunpack.c.l.b16 %v74
  %v338 = vunpack.c.l.b16 %v75
  %v339 = vunpack.c.l.b16 %v76
  %v340 = vunpack.c.l.b16 %v77
  %v341 = vunpack.c.l.b16 %v78
  %v342 = vunpack.c.l.b16 %v79
  %v343 = vunpack.c.l.b16 %v80
  %v344 = vunpack.c.l.b16 %v81
  %v345 = vunpack.c.l.b16 %v82
  %v346 = vunpack.c.l.b16 %v83
  %v347 = vunpack.c.l.b16 %v84
  %v348 = vunpack.c.l.b16 %v85
  %v349 = vunpack.c.l.b16 %v86
  %v350 = vunpack.c.l.b16 %v87
  %v351 = vunpack.c.l.b16 %v88
  %v352 = vunpack.c.l.b16 %v89
  %v353 = vunpack.c.l.b16 %v90
  %v354 = vunpack.c.l.b16 %v91
  %v355 = vunpack.c.l.b16 %v92
  %v356 = vunpack.c.l.b16 %v93
  %v357 = vunpack.c.l.b16 %v94
  %v358 = vunpack.c.l.b16 %v95
  %v359 = vunpack.c.l.b16 %v96
  %v360 = vunpack.c.l.b16 %v97
  %v361 = vunpack.c.l.b16 %v98
  %v362 = vunpack.c.l.b16 %v99
  %v363 = vunpack.c.l.b16 %v100
  %v364 = vunpack.c.l.b16 %v101
  %v365 = vunpack.c.l.b16 %v102
  %v366 = vunpack.c.l.b16 %v103
  %v367 = vunpack.c.l.b16 %v104
  %v368 = vunpack.c.l.b16 %v105
  %v369 = vunpack.c.l.b16 %v106
  %v370 = vunpack.c.l.b16 %v107
  %v371 = vunpack.c.l.b16 %v108
  %v372 = vunpack.c.l.b16 %v109
  %v373 = vunpack.c.l.b16 %v110
  %v374 = vunpack.c.l.b16 %v111
  %v375 = vunpack.c.l.b16 %v112
  %v376 = vunpack.c.l.b16 %v113
  %v377 = vunpack.c.l.b16 %v114
  %v378 = vunpack.c.l.b16 %v115
  %v379 = vunpack.c.l.b16 %v116
  %v380 = vunpack.c.l.b16 %v117
  %v381 = vunpack.c.l.b16 %v118
  %v382 = vunpack.c.l.b16 %v119
  %v383 = vunpack.c.l.b16 %v120
  %v384 = vunpack.c.l.b16 %v121
  %v385 = vunpack.c.l.b16 %v122
  %v386 = vunpack.c.l.b16 %v123
  %v387 = vunpack.c.l.b16 %v124
  %v388 = vunpack.c.l.b16 %v125
  %v389 = vunpack.c.l.b16 %v126
  %v390 = vunpack.c.l.b16 %v127
  %v391 = vunpack.c.l.b16 %v128
  %v392 = vunpack.c.l.b16 %v129
  %v393 = vunpack.c.l.b16 %v130
  %v394 = vpack.c.b16 %v287, %v286
  %v395 = vpack.c.b16 %v289, %v288
  %v396 = vpack.c.b16 %v291, %v290
  %v397 = vpack.c.b16 %v293, %v292
  %v398 = vpack.c.b16 %v295, %v294
  %v399 = vpack.c.b16 %v297, %v296
  %v400 = vpack.c.b16 %v299, %v298
  %v401 = vpack.c.b16 %v301, %v300
  %v402 = vpack.c.b16 %v303, %v302
  %v403 = vpack.c.b16 %v305, %v304
  %v404 = vpack.c.b16 %v307, %v306
  %v405 = vpack.c.b16 %v309, %v308
  %v406 = vpack.c.b16 %v311, %v310
  %v407 = vpack.c.b16 %v313, %v312
  %v408 = vpack.c.b16 %v315, %v314
  %v409 = vpack.c.b16 %v317, %v316
  %v410 = vpack.c.b16 %v319, %v318
  %v411 = vpack.c.b16 %v321, %v320
  %v412 = vpack.c.b16 %v323, %v322
  %v413 = vpack.c.b16 %v325, %v324
  %v414 = vpack.c.b16 %v327, %v326
  %v415 = vpack.c.b16 %v329, %v328
  %v416 = vpack.c.b16 %v331, %v330
  %v417 = vpack.c.b16 %v333, %v332
  %v418 = vpack.c.b16 %v335, %v334
  %v419 = vpack.c.b16 %v337, %v336
  %v420 = vpack.c.b16 %v339, %v338
  %v421 = vpack.c.b16 %v341, %v340
  %v422 = vpack.c.b16 %v343, %v342
  %v423 = vpack.c.b16 %v345, %v344
  %v424 = vpack.c.b16 %v347, %v346
  %v425 = vpack.c.b16 %v349, %v348
  %v426 = vpack.c.b16 %v351, %v350
  %v427 = vpack.c.b16 %v353, %v352
  %v428 = vpack.c.b16 %v355, %v354
  %v429 = vpack.c.b16 %v357, %v356
  %v430 = vpack.c.b16 %v359, %v358
  %v431 = vpack.c.b16 %v361, %v360
  %v432 = vpack.c.b16 %v363, %v362
  %v433 = vpack.c.b16 %v365, %v364
  %v434 = vpack.c.b16 %v367, %v366
  %v435 = vpack.c.b16 %v369, %v368
  %v436 = vpack.c.b16 %v371, %v370
  %v437 = vpack.c.b16 %v373, %v372
  %v438 = vpack.c.b16 %v375, %v374
  %v439 = vpack.c.b16 %v377, %v376
  %v440 = vpack.c.b16 %v379, %v378
  %v441 = vpack.c.b16 %v381, %v380
  %v442 = vpack.c.b16 %v383, %v382
  %v443 = vpack.c.b16 %v385, %v384
  %v444 = vpack.c.b16 %v387, %v386
  %v445 = vpack.c.b16 %v389, %v388
  %v446 = vpack.c.b16 %v391, %v390
  %v447 = vpack.c.b16 %v393, %v392
  %vm502 = vcmask 785408
  %v504 = vsel %vm502, %v171, 0
  %506 = vmatprep.subr.bf16.mxu0 0
  %507 = vmatpush1.bf16.msra.mxu0 %v401
  %508 = vmatprep.subr.bf16.mxu0 0
  %509 = vmatpush1.bf16.msra.mxu0 %v400
  %510 = vmatprep.subr.bf16.mxu0 0
  %511 = vmatpush1.bf16.msra.mxu0 %v399
  %512 = vmatprep.subr.bf16.mxu0 0
  %513 = vmatpush1.bf16.msra.mxu0 %v398
  %514 = vmatprep.subr.bf16.mxu0 0
  %515 = vmatpush1.bf16.msra.mxu0 %v397
  %516 = vmatprep.subr.bf16.mxu0 0
  %517 = vmatpush1.bf16.msra.mxu0 %v396
  %518 = vmatprep.subr.bf16.mxu0 0
  %519 = vmatpush1.bf16.msra.mxu0 %v395
  %520 = vmatprep.subr.bf16.mxu0 0
  %521 = vmatpush1.bf16.msra.mxu0 %v394
  %522 = vmatprep.subr.bf16.mxu0 0
  %523 = vmatpush2.bf16.msra.mxu0 %v409
  %524 = vmatprep.subr.bf16.mxu0 0
  %525 = vmatpush2.bf16.msra.mxu0 %v408
  %526 = vmatprep.subr.bf16.mxu0 0
  %527 = vmatpush2.bf16.msra.mxu0 %v407
  %528 = vmatprep.subr.bf16.mxu0 0
  %529 = vmatpush2.bf16.msra.mxu0 %v406
  %530 = vmatprep.subr.bf16.mxu0 0
  %531 = vmatpush2.bf16.msra.mxu0 %v405
  %532 = vmatprep.subr.bf16.mxu0 0
  %533 = vmatpush2.bf16.msra.mxu0 %v404
  %534 = vmatprep.subr.bf16.mxu0 0
  %535 = vmatpush2.bf16.msra.mxu0 %v403
  %536 = vmatprep.subr.bf16.mxu0 0
  %537 = vmatpush2.bf16.msra.mxu0 %v402
  %538 = vmatprep.mubr.bf16.mxu0 %v166
  %539 = vmatmul.mubr.bf16.gmra.mxu0 %v165
  %v540 = vpop.f32.mrf.mxu0
  %v541 = vadd.f32 %v136, %v540
  %v542 = vpop.f32.mrf.mxu0
  %v543 = vpop.f32.mrf.mxu0
  %v544 = vadd.f32 %v141, %v543
  %v545 = vpop.f32.mrf.mxu0
  %546 = vdwg.mxu0
  %547 = vmatprep.subr.bf16.mxu0 0
  %548 = vmatpush1.bf16.msra.mxu0 %v417
  %549 = vmatprep.subr.bf16.mxu0 0
  %550 = vmatpush1.bf16.msra.mxu0 %v416
  %551 = vmatprep.subr.bf16.mxu0 0
  %552 = vmatpush1.bf16.msra.mxu0 %v415
  %553 = vmatprep.subr.bf16.mxu0 0
  %554 = vmatpush1.bf16.msra.mxu0 %v414
  %555 = vmatprep.subr.bf16.mxu0 0
  %556 = vmatpush1.bf16.msra.mxu0 %v413
  %557 = vmatprep.subr.bf16.mxu0 0
  %558 = vmatpush1.bf16.msra.mxu0 %v412
  %559 = vmatprep.subr.bf16.mxu0 0
  %560 = vmatpush1.bf16.msra.mxu0 %v411
  %561 = vmatprep.subr.bf16.mxu0 0
  %562 = vmatpush1.bf16.msra.mxu0 %v410
  %563 = vmatprep.subr.bf16.mxu0 0
  %564 = vmatpush2.bf16.msra.mxu0 %v425
  %565 = vmatprep.subr.bf16.mxu0 0
  %566 = vmatpush2.bf16.msra.mxu0 %v424
  %567 = vmatprep.subr.bf16.mxu0 0
  %568 = vmatpush2.bf16.msra.mxu0 %v423
  %569 = vmatprep.subr.bf16.mxu0 0
  %570 = vmatpush2.bf16.msra.mxu0 %v422
  %571 = vmatprep.subr.bf16.mxu0 0
  %572 = vmatpush2.bf16.msra.mxu0 %v421
  %573 = vmatprep.subr.bf16.mxu0 0
  %574 = vmatpush2.bf16.msra.mxu0 %v420
  %575 = vmatprep.subr.bf16.mxu0 0
  %576 = vmatpush2.bf16.msra.mxu0 %v419
  %577 = vmatprep.subr.bf16.mxu0 0
  %578 = vmatpush2.bf16.msra.mxu0 %v418
  %579 = vmatprep.mubr.bf16.mxu0 %v168
  %580 = vmatmul.mubr.bf16.gmra.mxu0 %v167
  %v581 = vpop.f32.mrf.mxu0
  %v582 = vadd.f32 %v541, %v581
  %v583 = vpop.f32.mrf.mxu0
  %v584 = vpop.f32.mrf.mxu0
  %v585 = vadd.f32 %v544, %v584
  %v586 = vpop.f32.mrf.mxu0
  %587 = vdwg.mxu0
  %588 = vmatprep.subr.bf16.mxu0 0
  %589 = vmatpush1.bf16.msra.mxu0 %v433
  %590 = vmatprep.subr.bf16.mxu0 0
  %591 = vmatpush1.bf16.msra.mxu0 %v432
  %592 = vmatprep.subr.bf16.mxu0 0
  %593 = vmatpush1.bf16.msra.mxu0 %v431
  %594 = vmatprep.subr.bf16.mxu0 0
  %595 = vmatpush1.bf16.msra.mxu0 %v430
  %596 = vmatprep.subr.bf16.mxu0 0
  %597 = vmatpush1.bf16.msra.mxu0 %v429
  %598 = vmatprep.subr.bf16.mxu0 0
  %599 = vmatpush1.bf16.msra.mxu0 %v428
  %600 = vmatprep.subr.bf16.mxu0 0
  %601 = vmatpush1.bf16.msra.mxu0 %v427
  %602 = vmatprep.subr.bf16.mxu0 0
  %603 = vmatpush1.bf16.msra.mxu0 %v426
  %604 = vmatprep.subr.bf16.mxu0 0
  %605 = vmatpush2.bf16.msra.mxu0 %v441
  %606 = vmatprep.subr.bf16.mxu0 0
  %607 = vmatpush2.bf16.msra.mxu0 %v440
  %608 = vmatprep.subr.bf16.mxu0 0
  %609 = vmatpush2.bf16.msra.mxu0 %v439
  %610 = vmatprep.subr.bf16.mxu0 0
  %611 = vmatpush2.bf16.msra.mxu0 %v438
  %612 = vmatprep.subr.bf16.mxu0 0
  %613 = vmatpush2.bf16.msra.mxu0 %v437
  %614 = vmatprep.subr.bf16.mxu0 0
  %615 = vmatpush2.bf16.msra.mxu0 %v436
  %616 = vmatprep.subr.bf16.mxu0 0
  %617 = vmatpush2.bf16.msra.mxu0 %v435
  %618 = vmatprep.subr.bf16.mxu0 0
  %619 = vmatpush2.bf16.msra.mxu0 %v434
  %620 = vmatprep.mubr.bf16.mxu0 %v170
  %621 = vmatmul.mubr.bf16.gmra.mxu0 %v169
  %v622 = vpop.f32.mrf.mxu0
  %v623 = vadd.f32 %v582, %v622
  %v624 = vpop.f32.mrf.mxu0
  %v625 = vpop.f32.mrf.mxu0
  %v626 = vadd.f32 %v585, %v625
  %v627 = vpop.f32.mrf.mxu0
  %628 = vdwg.mxu0
  %629 = vmatprep.subr.bf16.mxu0 0
  %630 = vmatpush1.bf16.msra.mxu0 0
  %631 = vmatprep.subr.bf16.mxu0 0
  %632 = vmatpush1.bf16.msra.mxu0 0
  %633 = vmatprep.subr.bf16.mxu0 0
  %634 = vmatpush1.bf16.msra.mxu0 %v447
  %635 = vmatprep.subr.bf16.mxu0 0
  %636 = vmatpush1.bf16.msra.mxu0 %v446
  %637 = vmatprep.subr.bf16.mxu0 0
  %638 = vmatpush1.bf16.msra.mxu0 %v445
  %639 = vmatprep.subr.bf16.mxu0 0
  %640 = vmatpush1.bf16.msra.mxu0 %v444
  %641 = vmatprep.subr.bf16.mxu0 0
  %642 = vmatpush1.bf16.msra.mxu0 %v443
  %643 = vmatprep.subr.bf16.mxu0 0
  %644 = vmatpush1.bf16.msra.mxu0 %v442
  %645 = vmatprep.subr.bf16.mxu0 0
  %646 = vmatpush2.bf16.msra.mxu0 0
  %647 = vmatprep.subr.bf16.mxu0 0
  %648 = vmatpush2.bf16.msra.mxu0 0
  %649 = vmatprep.subr.bf16.mxu0 0
  %650 = vmatpush2.bf16.msra.mxu0 0
  %651 = vmatprep.subr.bf16.mxu0 0
  %652 = vmatpush2.bf16.msra.mxu0 0
  %653 = vmatprep.subr.bf16.mxu0 0
  %654 = vmatpush2.bf16.msra.mxu0 0
  %655 = vmatprep.subr.bf16.mxu0 0
  %656 = vmatpush2.bf16.msra.mxu0 0
  %657 = vmatprep.subr.bf16.mxu0 0
  %658 = vmatpush2.bf16.msra.mxu0 0
  %659 = vmatprep.subr.bf16.mxu0 0
  %660 = vmatpush2.bf16.msra.mxu0 0
  %661 = vmatprep.mubr.bf16.mxu0 0
  %662 = vmatmul.mubr.bf16.gmra.mxu0 %v504
  %v663 = vpop.f32.mrf.mxu0
  %v664 = vadd.f32 %v623, %v663
  %v665 = vpop.f32.mrf.mxu0
  %v666 = vpop.f32.mrf.mxu0
  %v667 = vadd.f32 %v626, %v666
  %v668 = vpop.f32.mrf.mxu0
  %669 = vdwg.mxu0
  %670 = vst [vmem:[%s3] sm:$0xff] %v664
  %671 = vst [vmem:[%s3 + $0x8] sm:$0xff] %v667
  // Predicated region
  $region14: #{temporal_decoder2_forward.34} parent=0 // pred_check
    _
  $region15: #{temporal_decoder2_forward.34} parent=0 // pred_check_branch
    %673 = sbr.rel (0) target = $region17
  $region16: #{temporal_decoder2_forward.34} parent=0 // pred_region
    _
  $region17: #{temporal_decoder2_forward.34} parent=0 // pred_fallthru
    _
  // Predicated region
  $region18: #{temporal_decoder2_forward.34} parent=0 // pred_check
    _
  $region19: #{temporal_decoder2_forward.34} parent=0 // pred_check_branch
    %675 = sbr.rel (0) target = $region21
  $region20: #{temporal_decoder2_forward.34} parent=0 // pred_region
    _
  $region21: #{temporal_decoder2_forward.34} parent=0 // pred_fallthru
    _

// kernel: temporal_decoder2_forward.36
$region0: #{temporal_decoder2_forward.36}
  #allocation0 [shape = 'u32[]', space=smem, size = 0x4, offset = 0x4, fixed_abs, tag = 'smem constant byte address 0x4 - core index']
  #allocation1 [shape = 'u32[144,128]{1,0:T(1,128)}', space=vmem, size = 0x12000, scoped, tag = 'internal scratch']
  %s0 = inlined_call_operand.vmem [shape: bf16[16,432], index: 0, kind: input, shape index: {}]
  %s1 = inlined_call_operand.vmem [shape: f32[16,1], index: 1, kind: input, shape index: {}]
  %s2 = inlined_call_operand.vmem [shape: bf16[432,128], index: 2, kind: input, shape index: {}]
  %s3 = inlined_call_operand.vmem [shape: f32[16,128], index: 3, kind: input, shape index: {}]
  %s4 = inlined_call_operand.vmem [shape: f32[16,128], index: 4, kind: output, shape index: {}]
  %s5 = sld [smem:[#allocation0]]
  $region26: #{temporal_decoder2_forward.36} parent=0
    _
  %s7 = ssub.s32 1, %s5
  %s8 = scalar_select 0, %s7, %s5
  // Predicated region
  $region2: #{temporal_decoder2_forward.36} parent=0 // pred_check
    _
  $region3: #{temporal_decoder2_forward.36} parent=0 // pred_check_branch
    %10 = sbr.rel (0) target = $region5
  $region4: #{temporal_decoder2_forward.36} parent=0 // pred_region
    _
  $region5: #{temporal_decoder2_forward.36} parent=0 // pred_fallthru
    _
  // Predicated region
  $region6: #{temporal_decoder2_forward.36} parent=0 // pred_check
    _
  $region7: #{temporal_decoder2_forward.36} parent=0 // pred_check_branch
    %12 = sbr.rel (0) target = $region9
  $region8: #{temporal_decoder2_forward.36} parent=0 // pred_region
    _
  $region9: #{temporal_decoder2_forward.36} parent=0 // pred_fallthru
    _
  // Predicated region
  $region10: #{temporal_decoder2_forward.36} parent=0 // pred_check
    _
  $region11: #{temporal_decoder2_forward.36} parent=0 // pred_check_branch
    %14 = sbr.rel (0) target = $region13
  $region12: #{temporal_decoder2_forward.36} parent=0 // pred_region
    _
  $region13: #{temporal_decoder2_forward.36} parent=0 // pred_fallthru
    _
  // Predicated region
  $region14: #{temporal_decoder2_forward.36} parent=0 // pred_check
    _
  $region15: #{temporal_decoder2_forward.36} parent=0 // pred_check_branch
    %16 = sbr.rel (0) target = $region17
  $region16: #{temporal_decoder2_forward.36} parent=0 // pred_region
    _
  $region17: #{temporal_decoder2_forward.36} parent=0 // pred_fallthru
    _
  %v18 = vld [vmem:[%s0] sm:$0xff]
  %v19 = vld [vmem:[%s0 + $0x8] sm:$0xff]
  %v20 = vld [vmem:[%s0 + $0x10] sm:$0xff]
  %v21 = vld [vmem:[%s0 + $0x18] sm:$0xff]
  %v22 = vld [vmem:[%s2] sm:$0xf]
  %v23 = vld [vmem:[%s2 + $0x4] sm:$0xf]
  %v24 = vld [vmem:[%s2 + $0x8] sm:$0xf]
  %v25 = vld [vmem:[%s2 + $0xc] sm:$0xf]
  %v26 = vld [vmem:[%s2 + $0x10] sm:$0xf]
  %v27 = vld [vmem:[%s2 + $0x14] sm:$0xf]
  %v28 = vld [vmem:[%s2 + $0x18] sm:$0xf]
  %v29 = vld [vmem:[%s2 + $0x1c] sm:$0xf]
  %v30 = vld [vmem:[%s2 + $0x20] sm:$0xf]
  %v31 = vld [vmem:[%s2 + $0x24] sm:$0xf]
  %v32 = vld [vmem:[%s2 + $0x28] sm:$0xf]
  %v33 = vld [vmem:[%s2 + $0x2c] sm:$0xf]
  %v34 = vld [vmem:[%s2 + $0x30] sm:$0xf]
  %v35 = vld [vmem:[%s2 + $0x34] sm:$0xf]
  %v36 = vld [vmem:[%s2 + $0x38] sm:$0xf]
  %v37 = vld [vmem:[%s2 + $0x3c] sm:$0xf]
  %v38 = vld [vmem:[%s2 + $0x40] sm:$0xf]
  %v39 = vld [vmem:[%s2 + $0x44] sm:$0xf]
  %v40 = vld [vmem:[%s2 + $0x48] sm:$0xf]
  %v41 = vld [vmem:[%s2 + $0x4c] sm:$0xf]
  %v42 = vld [vmem:[%s2 + $0x50] sm:$0xf]
  %v43 = vld [vmem:[%s2 + $0x54] sm:$0xf]
  %v44 = vld [vmem:[%s2 + $0x58] sm:$0xf]
  %v45 = vld [vmem:[%s2 + $0x5c] sm:$0xf]
  %v46 = vld [vmem:[%s2 + $0x60] sm:$0xf]
  %v47 = vld [vmem:[%s2 + $0x64] sm:$0xf]
  %v48 = vld [vmem:[%s2 + $0x68] sm:$0xf]
  %v49 = vld [vmem:[%s2 + $0x6c] sm:$0xf]
  %v50 = vld [vmem:[%s2 + $0x70] sm:$0xf]
  %v51 = vld [vmem:[%s2 + $0x74] sm:$0xf]
  %v52 = vld [vmem:[%s2 + $0x78] sm:$0xf]
  %v53 = vld [vmem:[%s2 + $0x7c] sm:$0xf]
  %v54 = vld [vmem:[%s2 + $0x80] sm:$0xf]
  %v55 = vld [vmem:[%s2 + $0x84] sm:$0xf]
  %v56 = vld [vmem:[%s2 + $0x88] sm:$0xf]
  %v57 = vld [vmem:[%s2 + $0x8c] sm:$0xf]
  %v58 = vld [vmem:[%s2 + $0x90] sm:$0xf]
  %v59 = vld [vmem:[%s2 + $0x94] sm:$0xf]
  %v60 = vld [vmem:[%s2 + $0x98] sm:$0xf]
  %v61 = vld [vmem:[%s2 + $0x9c] sm:$0xf]
  %v62 = vld [vmem:[%s2 + $0xa0] sm:$0xf]
  %v63 = vld [vmem:[%s2 + $0xa4] sm:$0xf]
  %v64 = vld [vmem:[%s2 + $0xa8] sm:$0xf]
  %v65 = vld [vmem:[%s2 + $0xac] sm:$0xf]
  %v66 = vld [vmem:[%s2 + $0xb0] sm:$0xf]
  %v67 = vld [vmem:[%s2 + $0xb4] sm:$0xf]
  %v68 = vld [vmem:[%s2 + $0xb8] sm:$0xf]
  %v69 = vld [vmem:[%s2 + $0xbc] sm:$0xf]
  %v70 = vld [vmem:[%s2 + $0xc0] sm:$0xf]
  %v71 = vld [vmem:[%s2 + $0xc4] sm:$0xf]
  %v72 = vld [vmem:[%s2 + $0xc8] sm:$0xf]
  %v73 = vld [vmem:[%s2 + $0xcc] sm:$0xf]
  %v74 = vld [vmem:[%s2 + $0xd0] sm:$0xf]
  %v75 = vld [vmem:[%s2 + $0xd4] sm:$0xf]
  %v76 = vld [vmem:[%s1] sm:$0xff]
  %v77 = vld [vmem:[%s1 + $0x8] sm:$0xff]
  %79 = vset.pattern.permute.xlu0 0
  %80 = vperm.xlu0 %79, %v76
  %v81 = vpop.permute.xlu0 %80
  %84 = vset.pattern.permute.xlu0 0
  %85 = vperm.xlu0 %84, %v77
  %v86 = vpop.permute.xlu0 %85
  %v92 = vunpack.c.l.b16 %v18
  %v93 = vunpack.c.h.b16 %v18
  %v94 = vunpack.c.l.b16 %v19
  %v95 = vunpack.c.h.b16 %v19
  %v96 = vunpack.c.l.b16 %v20
  %v97 = vunpack.c.h.b16 %v20
  %v98 = vunpack.c.l.b16 %v21
  %v99 = vunpack.c.h.b16 %v21
  %v100 = vpack.c.b16 %v96, %v92
  %v101 = vpack.c.b16 %v97, %v93
  %v102 = vpack.c.b16 %v98, %v94
  %v103 = vpack.c.b16 %v99, %v95
  %v161 = vunpack.c.l.b16 %v22
  %v162 = vunpack.c.l.b16 %v23
  %v163 = vunpack.c.l.b16 %v24
  %v164 = vunpack.c.l.b16 %v25
  %v165 = vunpack.c.l.b16 %v26
  %v166 = vunpack.c.l.b16 %v27
  %v167 = vunpack.c.l.b16 %v28
  %v168 = vunpack.c.l.b16 %v29
  %v169 = vunpack.c.l.b16 %v30
  %v170 = vunpack.c.l.b16 %v31
  %v171 = vunpack.c.l.b16 %v32
  %v172 = vunpack.c.l.b16 %v33
  %v173 = vunpack.c.l.b16 %v34
  %v174 = vunpack.c.l.b16 %v35
  %v175 = vunpack.c.l.b16 %v36
  %v176 = vunpack.c.l.b16 %v37
  %v177 = vunpack.c.l.b16 %v38
  %v178 = vunpack.c.l.b16 %v39
  %v179 = vunpack.c.l.b16 %v40
  %v180 = vunpack.c.l.b16 %v41
  %v181 = vunpack.c.l.b16 %v42
  %v182 = vunpack.c.l.b16 %v43
  %v183 = vunpack.c.l.b16 %v44
  %v184 = vunpack.c.l.b16 %v45
  %v185 = vunpack.c.l.b16 %v46
  %v186 = vunpack.c.l.b16 %v47
  %v187 = vunpack.c.l.b16 %v48
  %v188 = vunpack.c.l.b16 %v49
  %v189 = vunpack.c.l.b16 %v50
  %v190 = vunpack.c.l.b16 %v51
  %v191 = vunpack.c.l.b16 %v52
  %v192 = vunpack.c.l.b16 %v53
  %v193 = vunpack.c.l.b16 %v54
  %v194 = vunpack.c.l.b16 %v55
  %v195 = vunpack.c.l.b16 %v56
  %v196 = vunpack.c.l.b16 %v57
  %v197 = vunpack.c.l.b16 %v58
  %v198 = vunpack.c.l.b16 %v59
  %v199 = vunpack.c.l.b16 %v60
  %v200 = vunpack.c.l.b16 %v61
  %v201 = vunpack.c.l.b16 %v62
  %v202 = vunpack.c.l.b16 %v63
  %v203 = vunpack.c.l.b16 %v64
  %v204 = vunpack.c.l.b16 %v65
  %v205 = vunpack.c.l.b16 %v66
  %v206 = vunpack.c.l.b16 %v67
  %v207 = vunpack.c.l.b16 %v68
  %v208 = vunpack.c.l.b16 %v69
  %v209 = vunpack.c.l.b16 %v70
  %v210 = vunpack.c.l.b16 %v71
  %v211 = vunpack.c.l.b16 %v72
  %v212 = vunpack.c.l.b16 %v73
  %v213 = vunpack.c.l.b16 %v74
  %v214 = vunpack.c.l.b16 %v75
  %v215 = vpack.c.b16 %v162, %v161
  %v216 = vpack.c.b16 %v164, %v163
  %v217 = vpack.c.b16 %v166, %v165
  %v218 = vpack.c.b16 %v168, %v167
  %v219 = vpack.c.b16 %v170, %v169
  %v220 = vpack.c.b16 %v172, %v171
  %v221 = vpack.c.b16 %v174, %v173
  %v222 = vpack.c.b16 %v176, %v175
  %v223 = vpack.c.b16 %v178, %v177
  %v224 = vpack.c.b16 %v180, %v179
  %v225 = vpack.c.b16 %v182, %v181
  %v226 = vpack.c.b16 %v184, %v183
  %v227 = vpack.c.b16 %v186, %v185
  %v228 = vpack.c.b16 %v188, %v187
  %v229 = vpack.c.b16 %v190, %v189
  %v230 = vpack.c.b16 %v192, %v191
  %v231 = vpack.c.b16 %v194, %v193
  %v232 = vpack.c.b16 %v196, %v195
  %v233 = vpack.c.b16 %v198, %v197
  %v234 = vpack.c.b16 %v200, %v199
  %v235 = vpack.c.b16 %v202, %v201
  %v236 = vpack.c.b16 %v204, %v203
  %v237 = vpack.c.b16 %v206, %v205
  %v238 = vpack.c.b16 %v208, %v207
  %v239 = vpack.c.b16 %v210, %v209
  %v240 = vpack.c.b16 %v212, %v211
  %v241 = vpack.c.b16 %v214, %v213
  %vm269 = vcmask 392192
  %v271 = vsel %vm269, %v103, 0
  %273 = vmatprep.subr.bf16.mxu0 0
  %274 = vmatpush1.bf16.msra.mxu0 %v222
  %275 = vmatprep.subr.bf16.mxu0 0
  %276 = vmatpush1.bf16.msra.mxu0 %v221
  %277 = vmatprep.subr.bf16.mxu0 0
  %278 = vmatpush1.bf16.msra.mxu0 %v220
  %279 = vmatprep.subr.bf16.mxu0 0
  %280 = vmatpush1.bf16.msra.mxu0 %v219
  %281 = vmatprep.subr.bf16.mxu0 0
  %282 = vmatpush1.bf16.msra.mxu0 %v218
  %283 = vmatprep.subr.bf16.mxu0 0
  %284 = vmatpush1.bf16.msra.mxu0 %v217
  %285 = vmatprep.subr.bf16.mxu0 0
  %286 = vmatpush1.bf16.msra.mxu0 %v216
  %287 = vmatprep.subr.bf16.mxu0 0
  %288 = vmatpush1.bf16.msra.mxu0 %v215
  %289 = vmatprep.subr.bf16.mxu0 0
  %290 = vmatpush2.bf16.msra.mxu0 %v230
  %291 = vmatprep.subr.bf16.mxu0 0
  %292 = vmatpush2.bf16.msra.mxu0 %v229
  %293 = vmatprep.subr.bf16.mxu0 0
  %294 = vmatpush2.bf16.msra.mxu0 %v228
  %295 = vmatprep.subr.bf16.mxu0 0
  %296 = vmatpush2.bf16.msra.mxu0 %v227
  %297 = vmatprep.subr.bf16.mxu0 0
  %298 = vmatpush2.bf16.msra.mxu0 %v226
  %299 = vmatprep.subr.bf16.mxu0 0
  %300 = vmatpush2.bf16.msra.mxu0 %v225
  %301 = vmatprep.subr.bf16.mxu0 0
  %302 = vmatpush2.bf16.msra.mxu0 %v224
  %303 = vmatprep.subr.bf16.mxu0 0
  %304 = vmatpush2.bf16.msra.mxu0 %v223
  %305 = vmatprep.mubr.bf16.mxu0 %v101
  %306 = vmatmul.mubr.bf16.gmra.mxu0 %v100
  %v307 = vpop.f32.mrf.mxu0
  %v308 = vadd.f32 %v81, %v307
  %v309 = vpop.f32.mrf.mxu0
  %v310 = vpop.f32.mrf.mxu0
  %v311 = vadd.f32 %v86, %v310
  %v312 = vpop.f32.mrf.mxu0
  %313 = vdwg.mxu0
  %314 = vmatprep.subr.bf16.mxu0 0
  %315 = vmatpush1.bf16.msra.mxu0 %v238
  %316 = vmatprep.subr.bf16.mxu0 0
  %317 = vmatpush1.bf16.msra.mxu0 %v237
  %318 = vmatprep.subr.bf16.mxu0 0
  %319 = vmatpush1.bf16.msra.mxu0 %v236
  %320 = vmatprep.subr.bf16.mxu0 0
  %321 = vmatpush1.bf16.msra.mxu0 %v235
  %322 = vmatprep.subr.bf16.mxu0 0
  %323 = vmatpush1.bf16.msra.mxu0 %v234
  %324 = vmatprep.subr.bf16.mxu0 0
  %325 = vmatpush1.bf16.msra.mxu0 %v233
  %326 = vmatprep.subr.bf16.mxu0 0
  %327 = vmatpush1.bf16.msra.mxu0 %v232
  %328 = vmatprep.subr.bf16.mxu0 0
  %329 = vmatpush1.bf16.msra.mxu0 %v231
  %330 = vmatprep.subr.bf16.mxu0 0
  %331 = vmatpush2.bf16.msra.mxu0 0
  %332 = vmatprep.subr.bf16.mxu0 0
  %333 = vmatpush2.bf16.msra.mxu0 0
  %334 = vmatprep.subr.bf16.mxu0 0
  %335 = vmatpush2.bf16.msra.mxu0 0
  %336 = vmatprep.subr.bf16.mxu0 0
  %337 = vmatpush2.bf16.msra.mxu0 0
  %338 = vmatprep.subr.bf16.mxu0 0
  %339 = vmatpush2.bf16.msra.mxu0 0
  %340 = vmatprep.subr.bf16.mxu0 0
  %341 = vmatpush2.bf16.msra.mxu0 %v241
  %342 = vmatprep.subr.bf16.mxu0 0
  %343 = vmatpush2.bf16.msra.mxu0 %v240
  %344 = vmatprep.subr.bf16.mxu0 0
  %345 = vmatpush2.bf16.msra.mxu0 %v239
  %346 = vmatprep.mubr.bf16.mxu0 %v271
  %347 = vmatmul.mubr.bf16.gmra.mxu0 %v102
  %v348 = vpop.f32.mrf.mxu0
  %v349 = vadd.f32 %v308, %v348
  %v350 = vpop.f32.mrf.mxu0
  %v351 = vpop.f32.mrf.mxu0
  %v352 = vadd.f32 %v311, %v351
  %v353 = vpop.f32.mrf.mxu0
  %354 = vdwg.mxu0
  %v355 = vld [vmem:[%s3] sm:$0xff]
  %v356 = vld [vmem:[%s3 + $0x8] sm:$0xff]
  %v357 = vadd.f32 %v349, %v355
  %v358 = vadd.f32 %v352, %v356
  %v359 = vmax.f32 %v357, 0.0
  %v360 = vmax.f32 %v358, 0.0
  %361 = vst [vmem:[%s4] sm:$0xff] %v359
  %362 = vst [vmem:[%s4 + $0x8] sm:$0xff] %v360
  // Predicated region
  $region18: #{temporal_decoder2_forward.36} parent=0 // pred_check
    _
  $region19: #{temporal_decoder2_forward.36} parent=0 // pred_check_branch
    %364 = sbr.rel (0) target = $region21
  $region20: #{temporal_decoder2_forward.36} parent=0 // pred_region
    _
  $region21: #{temporal_decoder2_forward.36} parent=0 // pred_fallthru
    _
  // Predicated region
  $region22: #{temporal_decoder2_forward.36} parent=0 // pred_check
    _
  $region23: #{temporal_decoder2_forward.36} parent=0 // pred_check_branch
    %366 = sbr.rel (0) target = $region25
  $region24: #{temporal_decoder2_forward.36} parent=0 // pred_region
    _
  $region25: #{temporal_decoder2_forward.36} parent=0 // pred_fallthru
    _

// kernel: temporal_decoder2_forward.38
$region0: #{temporal_decoder2_forward.38}
  #allocation0 [shape = 'u32[]', space=smem, size = 0x4, offset = 0x4, fixed_abs, tag = 'smem constant byte address 0x4 - core index']
  #allocation1 [shape = 'u32[144,128]{1,0:T(1,128)}', space=vmem, size = 0x12000, scoped, tag = 'internal scratch']
  %s0 = inlined_call_operand.vmem [shape: bf16[8,432], index: 0, kind: input, shape index: {}]
  %s1 = inlined_call_operand.vmem [shape: f32[8,1], index: 1, kind: input, shape index: {}]
  %s2 = inlined_call_operand.vmem [shape: bf16[432,128], index: 2, kind: input, shape index: {}]
  %s3 = inlined_call_operand.vmem [shape: f32[8,128], index: 3, kind: output, shape index: {}]
  %s4 = sld [smem:[#allocation0]]
  $region22: #{temporal_decoder2_forward.38} parent=0
    _
  %s6 = ssub.s32 1, %s4
  %s7 = scalar_select 0, %s6, %s4
  // Predicated region
  $region2: #{temporal_decoder2_forward.38} parent=0 // pred_check
    _
  $region3: #{temporal_decoder2_forward.38} parent=0 // pred_check_branch
    %9 = sbr.rel (0) target = $region5
  $region4: #{temporal_decoder2_forward.38} parent=0 // pred_region
    _
  $region5: #{temporal_decoder2_forward.38} parent=0 // pred_fallthru
    _
  // Predicated region
  $region6: #{temporal_decoder2_forward.38} parent=0 // pred_check
    _
  $region7: #{temporal_decoder2_forward.38} parent=0 // pred_check_branch
    %11 = sbr.rel (0) target = $region9
  $region8: #{temporal_decoder2_forward.38} parent=0 // pred_region
    _
  $region9: #{temporal_decoder2_forward.38} parent=0 // pred_fallthru
    _
  // Predicated region
  $region10: #{temporal_decoder2_forward.38} parent=0 // pred_check
    _
  $region11: #{temporal_decoder2_forward.38} parent=0 // pred_check_branch
    %13 = sbr.rel (0) target = $region13
  $region12: #{temporal_decoder2_forward.38} parent=0 // pred_region
    _
  $region13: #{temporal_decoder2_forward.38} parent=0 // pred_fallthru
    _
  %v15 = vld [vmem:[%s0] sm:$0xff]
  %v16 = vld [vmem:[%s0 + $0x8] sm:$0xff]
  %v17 = vld [vmem:[%s2] sm:$0xf]
  %v18 = vld [vmem:[%s2 + $0x4] sm:$0xf]
  %v19 = vld [vmem:[%s2 + $0x8] sm:$0xf]
  %v20 = vld [vmem:[%s2 + $0xc] sm:$0xf]
  %v21 = vld [vmem:[%s2 + $0x10] sm:$0xf]
  %v22 = vld [vmem:[%s2 + $0x14] sm:$0xf]
  %v23 = vld [vmem:[%s2 + $0x18] sm:$0xf]
  %v24 = vld [vmem:[%s2 + $0x1c] sm:$0xf]
  %v25 = vld [vmem:[%s2 + $0x20] sm:$0xf]
  %v26 = vld [vmem:[%s2 + $0x24] sm:$0xf]
  %v27 = vld [vmem:[%s2 + $0x28] sm:$0xf]
  %v28 = vld [vmem:[%s2 + $0x2c] sm:$0xf]
  %v29 = vld [vmem:[%s2 + $0x30] sm:$0xf]
  %v30 = vld [vmem:[%s2 + $0x34] sm:$0xf]
  %v31 = vld [vmem:[%s2 + $0x38] sm:$0xf]
  %v32 = vld [vmem:[%s2 + $0x3c] sm:$0xf]
  %v33 = vld [vmem:[%s2 + $0x40] sm:$0xf]
  %v34 = vld [vmem:[%s2 + $0x44] sm:$0xf]
  %v35 = vld [vmem:[%s2 + $0x48] sm:$0xf]
  %v36 = vld [vmem:[%s2 + $0x4c] sm:$0xf]
  %v37 = vld [vmem:[%s2 + $0x50] sm:$0xf]
  %v38 = vld [vmem:[%s2 + $0x54] sm:$0xf]
  %v39 = vld [vmem:[%s2 + $0x58] sm:$0xf]
  %v40 = vld [vmem:[%s2 + $0x5c] sm:$0xf]
  %v41 = vld [vmem:[%s2 + $0x60] sm:$0xf]
  %v42 = vld [vmem:[%s2 + $0x64] sm:$0xf]
  %v43 = vld [vmem:[%s2 + $0x68] sm:$0xf]
  %v44 = vld [vmem:[%s2 + $0x6c] sm:$0xf]
  %v45 = vld [vmem:[%s2 + $0x70] sm:$0xf]
  %v46 = vld [vmem:[%s2 + $0x74] sm:$0xf]
  %v47 = vld [vmem:[%s2 + $0x78] sm:$0xf]
  %v48 = vld [vmem:[%s2 + $0x7c] sm:$0xf]
  %v49 = vld [vmem:[%s2 + $0x80] sm:$0xf]
  %v50 = vld [vmem:[%s2 + $0x84] sm:$0xf]
  %v51 = vld [vmem:[%s2 + $0x88] sm:$0xf]
  %v52 = vld [vmem:[%s2 + $0x8c] sm:$0xf]
  %v53 = vld [vmem:[%s2 + $0x90] sm:$0xf]
  %v54 = vld [vmem:[%s2 + $0x94] sm:$0xf]
  %v55 = vld [vmem:[%s2 + $0x98] sm:$0xf]
  %v56 = vld [vmem:[%s2 + $0x9c] sm:$0xf]
  %v57 = vld [vmem:[%s2 + $0xa0] sm:$0xf]
  %v58 = vld [vmem:[%s2 + $0xa4] sm:$0xf]
  %v59 = vld [vmem:[%s2 + $0xa8] sm:$0xf]
  %v60 = vld [vmem:[%s2 + $0xac] sm:$0xf]
  %v61 = vld [vmem:[%s2 + $0xb0] sm:$0xf]
  %v62 = vld [vmem:[%s2 + $0xb4] sm:$0xf]
  %v63 = vld [vmem:[%s2 + $0xb8] sm:$0xf]
  %v64 = vld [vmem:[%s2 + $0xbc] sm:$0xf]
  %v65 = vld [vmem:[%s2 + $0xc0] sm:$0xf]
  %v66 = vld [vmem:[%s2 + $0xc4] sm:$0xf]
  %v67 = vld [vmem:[%s2 + $0xc8] sm:$0xf]
  %v68 = vld [vmem:[%s2 + $0xcc] sm:$0xf]
  %v69 = vld [vmem:[%s2 + $0xd0] sm:$0xf]
  %v70 = vld [vmem:[%s2 + $0xd4] sm:$0xf]
  %v71 = vld [vmem:[%s1] sm:$0xff]
  %73 = vset.pattern.permute.xlu0 0
  %74 = vperm.xlu0 %73, %v71
  %v75 = vpop.permute.xlu0 %74
  %v79 = vunpack.c.l.b16 %v15
  %v80 = vunpack.c.h.b16 %v15
  %v81 = vunpack.c.l.b16 %v16
  %v82 = vunpack.c.h.b16 %v16
  %v83 = vpack.c.b16 %v79, %v79
  %v84 = vpack.c.b16 %v80, %v80
  %v85 = vpack.c.b16 %v81, %v81
  %v86 = vpack.c.b16 %v82, %v82
  %v144 = vunpack.c.l.b16 %v17
  %v145 = vunpack.c.l.b16 %v18
  %v146 = vunpack.c.l.b16 %v19
  %v147 = vunpack.c.l.b16 %v20
  %v148 = vunpack.c.l.b16 %v21
  %v149 = vunpack.c.l.b16 %v22
  %v150 = vunpack.c.l.b16 %v23
  %v151 = vunpack.c.l.b16 %v24
  %v152 = vunpack.c.l.b16 %v25
  %v153 = vunpack.c.l.b16 %v26
  %v154 = vunpack.c.l.b16 %v27
  %v155 = vunpack.c.l.b16 %v28
  %v156 = vunpack.c.l.b16 %v29
  %v157 = vunpack.c.l.b16 %v30
  %v158 = vunpack.c.l.b16 %v31
  %v159 = vunpack.c.l.b16 %v32
  %v160 = vunpack.c.l.b16 %v33
  %v161 = vunpack.c.l.b16 %v34
  %v162 = vunpack.c.l.b16 %v35
  %v163 = vunpack.c.l.b16 %v36
  %v164 = vunpack.c.l.b16 %v37
  %v165 = vunpack.c.l.b16 %v38
  %v166 = vunpack.c.l.b16 %v39
  %v167 = vunpack.c.l.b16 %v40
  %v168 = vunpack.c.l.b16 %v41
  %v169 = vunpack.c.l.b16 %v42
  %v170 = vunpack.c.l.b16 %v43
  %v171 = vunpack.c.l.b16 %v44
  %v172 = vunpack.c.l.b16 %v45
  %v173 = vunpack.c.l.b16 %v46
  %v174 = vunpack.c.l.b16 %v47
  %v175 = vunpack.c.l.b16 %v48
  %v176 = vunpack.c.l.b16 %v49
  %v177 = vunpack.c.l.b16 %v50
  %v178 = vunpack.c.l.b16 %v51
  %v179 = vunpack.c.l.b16 %v52
  %v180 = vunpack.c.l.b16 %v53
  %v181 = vunpack.c.l.b16 %v54
  %v182 = vunpack.c.l.b16 %v55
  %v183 = vunpack.c.l.b16 %v56
  %v184 = vunpack.c.l.b16 %v57
  %v185 = vunpack.c.l.b16 %v58
  %v186 = vunpack.c.l.b16 %v59
  %v187 = vunpack.c.l.b16 %v60
  %v188 = vunpack.c.l.b16 %v61
  %v189 = vunpack.c.l.b16 %v62
  %v190 = vunpack.c.l.b16 %v63
  %v191 = vunpack.c.l.b16 %v64
  %v192 = vunpack.c.l.b16 %v65
  %v193 = vunpack.c.l.b16 %v66
  %v194 = vunpack.c.l.b16 %v67
  %v195 = vunpack.c.l.b16 %v68
  %v196 = vunpack.c.l.b16 %v69
  %v197 = vunpack.c.l.b16 %v70
  %v198 = vpack.c.b16 %v145, %v144
  %v199 = vpack.c.b16 %v147, %v146
  %v200 = vpack.c.b16 %v149, %v148
  %v201 = vpack.c.b16 %v151, %v150
  %v202 = vpack.c.b16 %v153, %v152
  %v203 = vpack.c.b16 %v155, %v154
  %v204 = vpack.c.b16 %v157, %v156
  %v205 = vpack.c.b16 %v159, %v158
  %v206 = vpack.c.b16 %v161, %v160
  %v207 = vpack.c.b16 %v163, %v162
  %v208 = vpack.c.b16 %v165, %v164
  %v209 = vpack.c.b16 %v167, %v166
  %v210 = vpack.c.b16 %v169, %v168
  %v211 = vpack.c.b16 %v171, %v170
  %v212 = vpack.c.b16 %v173, %v172
  %v213 = vpack.c.b16 %v175, %v174
  %v214 = vpack.c.b16 %v177, %v176
  %v215 = vpack.c.b16 %v179, %v178
  %v216 = vpack.c.b16 %v181, %v180
  %v217 = vpack.c.b16 %v183, %v182
  %v218 = vpack.c.b16 %v185, %v184
  %v219 = vpack.c.b16 %v187, %v186
  %v220 = vpack.c.b16 %v189, %v188
  %v221 = vpack.c.b16 %v191, %v190
  %v222 = vpack.c.b16 %v193, %v192
  %v223 = vpack.c.b16 %v195, %v194
  %v224 = vpack.c.b16 %v197, %v196
  %vm252 = vcmask 392192
  %v254 = vsel %vm252, %v86, 0
  %256 = vmatprep.subr.bf16.mxu0 0
  %257 = vmatpush1.bf16.msra.mxu0 %v205
  %258 = vmatprep.subr.bf16.mxu0 0
  %259 = vmatpush1.bf16.msra.mxu0 %v204
  %260 = vmatprep.subr.bf16.mxu0 0
  %261 = vmatpush1.bf16.msra.mxu0 %v203
  %262 = vmatprep.subr.bf16.mxu0 0
  %263 = vmatpush1.bf16.msra.mxu0 %v202
  %264 = vmatprep.subr.bf16.mxu0 0
  %265 = vmatpush1.bf16.msra.mxu0 %v201
  %266 = vmatprep.subr.bf16.mxu0 0
  %267 = vmatpush1.bf16.msra.mxu0 %v200
  %268 = vmatprep.subr.bf16.mxu0 0
  %269 = vmatpush1.bf16.msra.mxu0 %v199
  %270 = vmatprep.subr.bf16.mxu0 0
  %271 = vmatpush1.bf16.msra.mxu0 %v198
  %272 = vmatprep.subr.bf16.mxu0 0
  %273 = vmatpush2.bf16.msra.mxu0 %v213
  %274 = vmatprep.subr.bf16.mxu0 0
  %275 = vmatpush2.bf16.msra.mxu0 %v212
  %276 = vmatprep.subr.bf16.mxu0 0
  %277 = vmatpush2.bf16.msra.mxu0 %v211
  %278 = vmatprep.subr.bf16.mxu0 0
  %279 = vmatpush2.bf16.msra.mxu0 %v210
  %280 = vmatprep.subr.bf16.mxu0 0
  %281 = vmatpush2.bf16.msra.mxu0 %v209
  %282 = vmatprep.subr.bf16.mxu0 0
  %283 = vmatpush2.bf16.msra.mxu0 %v208
  %284 = vmatprep.subr.bf16.mxu0 0
  %285 = vmatpush2.bf16.msra.mxu0 %v207
  %286 = vmatprep.subr.bf16.mxu0 0
  %287 = vmatpush2.bf16.msra.mxu0 %v206
  %288 = vmatprep.mubr.bf16.mxu0 %v84
  %289 = vmatmul.mubr.bf16.gmra.mxu0 %v83
  %v290 = vpop.f32.mrf.mxu0
  %v291 = vadd.f32 %v75, %v290
  %v292 = vpop.f32.mrf.mxu0
  %v293 = vpop.f32.mrf.mxu0
  %v294 = vpop.f32.mrf.mxu0
  %295 = vdwg.mxu0
  %296 = vmatprep.subr.bf16.mxu0 0
  %297 = vmatpush1.bf16.msra.mxu0 %v221
  %298 = vmatprep.subr.bf16.mxu0 0
  %299 = vmatpush1.bf16.msra.mxu0 %v220
  %300 = vmatprep.subr.bf16.mxu0 0
  %301 = vmatpush1.bf16.msra.mxu0 %v219
  %302 = vmatprep.subr.bf16.mxu0 0
  %303 = vmatpush1.bf16.msra.mxu0 %v218
  %304 = vmatprep.subr.bf16.mxu0 0
  %305 = vmatpush1.bf16.msra.mxu0 %v217
  %306 = vmatprep.subr.bf16.mxu0 0
  %307 = vmatpush1.bf16.msra.mxu0 %v216
  %308 = vmatprep.subr.bf16.mxu0 0
  %309 = vmatpush1.bf16.msra.mxu0 %v215
  %310 = vmatprep.subr.bf16.mxu0 0
  %311 = vmatpush1.bf16.msra.mxu0 %v214
  %312 = vmatprep.subr.bf16.mxu0 0
  %313 = vmatpush2.bf16.msra.mxu0 0
  %314 = vmatprep.subr.bf16.mxu0 0
  %315 = vmatpush2.bf16.msra.mxu0 0
  %316 = vmatprep.subr.bf16.mxu0 0
  %317 = vmatpush2.bf16.msra.mxu0 0
  %318 = vmatprep.subr.bf16.mxu0 0
  %319 = vmatpush2.bf16.msra.mxu0 0
  %320 = vmatprep.subr.bf16.mxu0 0
  %321 = vmatpush2.bf16.msra.mxu0 0
  %322 = vmatprep.subr.bf16.mxu0 0
  %323 = vmatpush2.bf16.msra.mxu0 %v224
  %324 = vmatprep.subr.bf16.mxu0 0
  %325 = vmatpush2.bf16.msra.mxu0 %v223
  %326 = vmatprep.subr.bf16.mxu0 0
  %327 = vmatpush2.bf16.msra.mxu0 %v222
  %328 = vmatprep.mubr.bf16.mxu0 %v254
  %329 = vmatmul.mubr.bf16.gmra.mxu0 %v85
  %v330 = vpop.f32.mrf.mxu0
  %v331 = vadd.f32 %v291, %v330
  %v332 = vpop.f32.mrf.mxu0
  %v333 = vpop.f32.mrf.mxu0
  %v334 = vpop.f32.mrf.mxu0
  %335 = vdwg.mxu0
  %v336 = vmax.f32 %v331, 0.0
  %337 = vst [vmem:[%s3] sm:$0xff] %v336
  // Predicated region
  $region14: #{temporal_decoder2_forward.38} parent=0 // pred_check
    _
  $region15: #{temporal_decoder2_forward.38} parent=0 // pred_check_branch
    %339 = sbr.rel (0) target = $region17
  $region16: #{temporal_decoder2_forward.38} parent=0 // pred_region
    _
  $region17: #{temporal_decoder2_forward.38} parent=0 // pred_fallthru
    _
  // Predicated region
  $region18: #{temporal_decoder2_forward.38} parent=0 // pred_check
    _
  $region19: #{temporal_decoder2_forward.38} parent=0 // pred_check_branch
    %341 = sbr.rel (0) target = $region21
  $region20: #{temporal_decoder2_forward.38} parent=0 // pred_region
    _
  $region21: #{temporal_decoder2_forward.38} parent=0 // pred_fallthru
    _

// kernel: temporal_decoder2_forward.37
$region0: #{temporal_decoder2_forward.37}
  #allocation0 [shape = 'u32[]', space=smem, size = 0x4, offset = 0x4, fixed_abs, tag = 'smem constant byte address 0x4 - core index']
  #allocation1 [shape = 'u32[144,128]{1,0:T(1,128)}', space=vmem, size = 0x12000, scoped, tag = 'internal scratch']
  %s0 = inlined_call_operand.vmem [shape: bf16[8,432], index: 0, kind: input, shape index: {}]
  %s1 = inlined_call_operand.vmem [shape: f32[8,1], index: 1, kind: input, shape index: {}]
  %s2 = inlined_call_operand.vmem [shape: bf16[432,128], index: 2, kind: input, shape index: {}]
  %s3 = inlined_call_operand.vmem [shape: f32[8,128], index: 3, kind: output, shape index: {}]
  %s4 = sld [smem:[#allocation0]]
  $region22: #{temporal_decoder2_forward.37} parent=0
    _
  %s6 = ssub.s32 1, %s4
  %s7 = scalar_select 0, %s6, %s4
  // Predicated region
  $region2: #{temporal_decoder2_forward.37} parent=0 // pred_check
    _
  $region3: #{temporal_decoder2_forward.37} parent=0 // pred_check_branch
    %9 = sbr.rel (0) target = $region5
  $region4: #{temporal_decoder2_forward.37} parent=0 // pred_region
    _
  $region5: #{temporal_decoder2_forward.37} parent=0 // pred_fallthru
    _
  // Predicated region
  $region6: #{temporal_decoder2_forward.37} parent=0 // pred_check
    _
  $region7: #{temporal_decoder2_forward.37} parent=0 // pred_check_branch
    %11 = sbr.rel (0) target = $region9
  $region8: #{temporal_decoder2_forward.37} parent=0 // pred_region
    _
  $region9: #{temporal_decoder2_forward.37} parent=0 // pred_fallthru
    _
  // Predicated region
  $region10: #{temporal_decoder2_forward.37} parent=0 // pred_check
    _
  $region11: #{temporal_decoder2_forward.37} parent=0 // pred_check_branch
    %13 = sbr.rel (0) target = $region13
  $region12: #{temporal_decoder2_forward.37} parent=0 // pred_region
    _
  $region13: #{temporal_decoder2_forward.37} parent=0 // pred_fallthru
    _
  %v15 = vld [vmem:[%s0] sm:$0xff]
  %v16 = vld [vmem:[%s0 + $0x8] sm:$0xff]
  %v17 = vld [vmem:[%s2] sm:$0xf]
  %v18 = vld [vmem:[%s2 + $0x4] sm:$0xf]
  %v19 = vld [vmem:[%s2 + $0x8] sm:$0xf]
  %v20 = vld [vmem:[%s2 + $0xc] sm:$0xf]
  %v21 = vld [vmem:[%s2 + $0x10] sm:$0xf]
  %v22 = vld [vmem:[%s2 + $0x14] sm:$0xf]
  %v23 = vld [vmem:[%s2 + $0x18] sm:$0xf]
  %v24 = vld [vmem:[%s2 + $0x1c] sm:$0xf]
  %v25 = vld [vmem:[%s2 + $0x20] sm:$0xf]
  %v26 = vld [vmem:[%s2 + $0x24] sm:$0xf]
  %v27 = vld [vmem:[%s2 + $0x28] sm:$0xf]
  %v28 = vld [vmem:[%s2 + $0x2c] sm:$0xf]
  %v29 = vld [vmem:[%s2 + $0x30] sm:$0xf]
  %v30 = vld [vmem:[%s2 + $0x34] sm:$0xf]
  %v31 = vld [vmem:[%s2 + $0x38] sm:$0xf]
  %v32 = vld [vmem:[%s2 + $0x3c] sm:$0xf]
  %v33 = vld [vmem:[%s2 + $0x40] sm:$0xf]
  %v34 = vld [vmem:[%s2 + $0x44] sm:$0xf]
  %v35 = vld [vmem:[%s2 + $0x48] sm:$0xf]
  %v36 = vld [vmem:[%s2 + $0x4c] sm:$0xf]
  %v37 = vld [vmem:[%s2 + $0x50] sm:$0xf]
  %v38 = vld [vmem:[%s2 + $0x54] sm:$0xf]
  %v39 = vld [vmem:[%s2 + $0x58] sm:$0xf]
  %v40 = vld [vmem:[%s2 + $0x5c] sm:$0xf]
  %v41 = vld [vmem:[%s2 + $0x60] sm:$0xf]
  %v42 = vld [vmem:[%s2 + $0x64] sm:$0xf]
  %v43 = vld [vmem:[%s2 + $0x68] sm:$0xf]
  %v44 = vld [vmem:[%s2 + $0x6c] sm:$0xf]
  %v45 = vld [vmem:[%s2 + $0x70] sm:$0xf]
  %v46 = vld [vmem:[%s2 + $0x74] sm:$0xf]
  %v47 = vld [vmem:[%s2 + $0x78] sm:$0xf]
  %v48 = vld [vmem:[%s2 + $0x7c] sm:$0xf]
  %v49 = vld [vmem:[%s2 + $0x80] sm:$0xf]
  %v50 = vld [vmem:[%s2 + $0x84] sm:$0xf]
  %v51 = vld [vmem:[%s2 + $0x88] sm:$0xf]
  %v52 = vld [vmem:[%s2 + $0x8c] sm:$0xf]
  %v53 = vld [vmem:[%s2 + $0x90] sm:$0xf]
  %v54 = vld [vmem:[%s2 + $0x94] sm:$0xf]
  %v55 = vld [vmem:[%s2 + $0x98] sm:$0xf]
  %v56 = vld [vmem:[%s2 + $0x9c] sm:$0xf]
  %v57 = vld [vmem:[%s2 + $0xa0] sm:$0xf]
  %v58 = vld [vmem:[%s2 + $0xa4] sm:$0xf]
  %v59 = vld [vmem:[%s2 + $0xa8] sm:$0xf]
  %v60 = vld [vmem:[%s2 + $0xac] sm:$0xf]
  %v61 = vld [vmem:[%s2 + $0xb0] sm:$0xf]
  %v62 = vld [vmem:[%s2 + $0xb4] sm:$0xf]
  %v63 = vld [vmem:[%s2 + $0xb8] sm:$0xf]
  %v64 = vld [vmem:[%s2 + $0xbc] sm:$0xf]
  %v65 = vld [vmem:[%s2 + $0xc0] sm:$0xf]
  %v66 = vld [vmem:[%s2 + $0xc4] sm:$0xf]
  %v67 = vld [vmem:[%s2 + $0xc8] sm:$0xf]
  %v68 = vld [vmem:[%s2 + $0xcc] sm:$0xf]
  %v69 = vld [vmem:[%s2 + $0xd0] sm:$0xf]
  %v70 = vld [vmem:[%s2 + $0xd4] sm:$0xf]
  %v71 = vld [vmem:[%s1] sm:$0xff]
  %73 = vset.pattern.permute.xlu0 0
  %74 = vperm.xlu0 %73, %v71
  %v75 = vpop.permute.xlu0 %74
  %v79 = vunpack.c.l.b16 %v15
  %v80 = vunpack.c.h.b16 %v15
  %v81 = vunpack.c.l.b16 %v16
  %v82 = vunpack.c.h.b16 %v16
  %v83 = vpack.c.b16 %v79, %v79
  %v84 = vpack.c.b16 %v80, %v80
  %v85 = vpack.c.b16 %v81, %v81
  %v86 = vpack.c.b16 %v82, %v82
  %v144 = vunpack.c.l.b16 %v17
  %v145 = vunpack.c.l.b16 %v18
  %v146 = vunpack.c.l.b16 %v19
  %v147 = vunpack.c.l.b16 %v20
  %v148 = vunpack.c.l.b16 %v21
  %v149 = vunpack.c.l.b16 %v22
  %v150 = vunpack.c.l.b16 %v23
  %v151 = vunpack.c.l.b16 %v24
  %v152 = vunpack.c.l.b16 %v25
  %v153 = vunpack.c.l.b16 %v26
  %v154 = vunpack.c.l.b16 %v27
  %v155 = vunpack.c.l.b16 %v28
  %v156 = vunpack.c.l.b16 %v29
  %v157 = vunpack.c.l.b16 %v30
  %v158 = vunpack.c.l.b16 %v31
  %v159 = vunpack.c.l.b16 %v32
  %v160 = vunpack.c.l.b16 %v33
  %v161 = vunpack.c.l.b16 %v34
  %v162 = vunpack.c.l.b16 %v35
  %v163 = vunpack.c.l.b16 %v36
  %v164 = vunpack.c.l.b16 %v37
  %v165 = vunpack.c.l.b16 %v38
  %v166 = vunpack.c.l.b16 %v39
  %v167 = vunpack.c.l.b16 %v40
  %v168 = vunpack.c.l.b16 %v41
  %v169 = vunpack.c.l.b16 %v42
  %v170 = vunpack.c.l.b16 %v43
  %v171 = vunpack.c.l.b16 %v44
  %v172 = vunpack.c.l.b16 %v45
  %v173 = vunpack.c.l.b16 %v46
  %v174 = vunpack.c.l.b16 %v47
  %v175 = vunpack.c.l.b16 %v48
  %v176 = vunpack.c.l.b16 %v49
  %v177 = vunpack.c.l.b16 %v50
  %v178 = vunpack.c.l.b16 %v51
  %v179 = vunpack.c.l.b16 %v52
  %v180 = vunpack.c.l.b16 %v53
  %v181 = vunpack.c.l.b16 %v54
  %v182 = vunpack.c.l.b16 %v55
  %v183 = vunpack.c.l.b16 %v56
  %v184 = vunpack.c.l.b16 %v57
  %v185 = vunpack.c.l.b16 %v58
  %v186 = vunpack.c.l.b16 %v59
  %v187 = vunpack.c.l.b16 %v60
  %v188 = vunpack.c.l.b16 %v61
  %v189 = vunpack.c.l.b16 %v62
  %v190 = vunpack.c.l.b16 %v63
  %v191 = vunpack.c.l.b16 %v64
  %v192 = vunpack.c.l.b16 %v65
  %v193 = vunpack.c.l.b16 %v66
  %v194 = vunpack.c.l.b16 %v67
  %v195 = vunpack.c.l.b16 %v68
  %v196 = vunpack.c.l.b16 %v69
  %v197 = vunpack.c.l.b16 %v70
  %v198 = vpack.c.b16 %v145, %v144
  %v199 = vpack.c.b16 %v147, %v146
  %v200 = vpack.c.b16 %v149, %v148
  %v201 = vpack.c.b16 %v151, %v150
  %v202 = vpack.c.b16 %v153, %v152
  %v203 = vpack.c.b16 %v155, %v154
  %v204 = vpack.c.b16 %v157, %v156
  %v205 = vpack.c.b16 %v159, %v158
  %v206 = vpack.c.b16 %v161, %v160
  %v207 = vpack.c.b16 %v163, %v162
  %v208 = vpack.c.b16 %v165, %v164
  %v209 = vpack.c.b16 %v167, %v166
  %v210 = vpack.c.b16 %v169, %v168
  %v211 = vpack.c.b16 %v171, %v170
  %v212 = vpack.c.b16 %v173, %v172
  %v213 = vpack.c.b16 %v175, %v174
  %v214 = vpack.c.b16 %v177, %v176
  %v215 = vpack.c.b16 %v179, %v178
  %v216 = vpack.c.b16 %v181, %v180
  %v217 = vpack.c.b16 %v183, %v182
  %v218 = vpack.c.b16 %v185, %v184
  %v219 = vpack.c.b16 %v187, %v186
  %v220 = vpack.c.b16 %v189, %v188
  %v221 = vpack.c.b16 %v191, %v190
  %v222 = vpack.c.b16 %v193, %v192
  %v223 = vpack.c.b16 %v195, %v194
  %v224 = vpack.c.b16 %v197, %v196
  %vm252 = vcmask 392192
  %v254 = vsel %vm252, %v86, 0
  %256 = vmatprep.subr.bf16.mxu0 0
  %257 = vmatpush1.bf16.msra.mxu0 %v205
  %258 = vmatprep.subr.bf16.mxu0 0
  %259 = vmatpush1.bf16.msra.mxu0 %v204
  %260 = vmatprep.subr.bf16.mxu0 0
  %261 = vmatpush1.bf16.msra.mxu0 %v203
  %262 = vmatprep.subr.bf16.mxu0 0
  %263 = vmatpush1.bf16.msra.mxu0 %v202
  %264 = vmatprep.subr.bf16.mxu0 0
  %265 = vmatpush1.bf16.msra.mxu0 %v201
  %266 = vmatprep.subr.bf16.mxu0 0
  %267 = vmatpush1.bf16.msra.mxu0 %v200
  %268 = vmatprep.subr.bf16.mxu0 0
  %269 = vmatpush1.bf16.msra.mxu0 %v199
  %270 = vmatprep.subr.bf16.mxu0 0
  %271 = vmatpush1.bf16.msra.mxu0 %v198
  %272 = vmatprep.subr.bf16.mxu0 0
  %273 = vmatpush2.bf16.msra.mxu0 %v213
  %274 = vmatprep.subr.bf16.mxu0 0
  %275 = vmatpush2.bf16.msra.mxu0 %v212
  %276 = vmatprep.subr.bf16.mxu0 0
  %277 = vmatpush2.bf16.msra.mxu0 %v211
  %278 = vmatprep.subr.bf16.mxu0 0
  %279 = vmatpush2.bf16.msra.mxu0 %v210
  %280 = vmatprep.subr.bf16.mxu0 0
  %281 = vmatpush2.bf16.msra.mxu0 %v209
  %282 = vmatprep.subr.bf16.mxu0 0
  %283 = vmatpush2.bf16.msra.mxu0 %v208
  %284 = vmatprep.subr.bf16.mxu0 0
  %285 = vmatpush2.bf16.msra.mxu0 %v207
  %286 = vmatprep.subr.bf16.mxu0 0
  %287 = vmatpush2.bf16.msra.mxu0 %v206
  %288 = vmatprep.mubr.bf16.mxu0 %v84
  %289 = vmatmul.mubr.bf16.gmra.mxu0 %v83
  %v290 = vpop.f32.mrf.mxu0
  %v291 = vadd.f32 %v75, %v290
  %v292 = vpop.f32.mrf.mxu0
  %v293 = vpop.f32.mrf.mxu0
  %v294 = vpop.f32.mrf.mxu0
  %295 = vdwg.mxu0
  %296 = vmatprep.subr.bf16.mxu0 0
  %297 = vmatpush1.bf16.msra.mxu0 %v221
  %298 = vmatprep.subr.bf16.mxu0 0
  %299 = vmatpush1.bf16.msra.mxu0 %v220
  %300 = vmatprep.subr.bf16.mxu0 0
  %301 = vmatpush1.bf16.msra.mxu0 %v219
  %302 = vmatprep.subr.bf16.mxu0 0
  %303 = vmatpush1.bf16.msra.mxu0 %v218
  %304 = vmatprep.subr.bf16.mxu0 0
  %305 = vmatpush1.bf16.msra.mxu0 %v217
  %306 = vmatprep.subr.bf16.mxu0 0
  %307 = vmatpush1.bf16.msra.mxu0 %v216
  %308 = vmatprep.subr.bf16.mxu0 0
  %309 = vmatpush1.bf16.msra.mxu0 %v215
  %310 = vmatprep.subr.bf16.mxu0 0
  %311 = vmatpush1.bf16.msra.mxu0 %v214
  %312 = vmatprep.subr.bf16.mxu0 0
  %313 = vmatpush2.bf16.msra.mxu0 0
  %314 = vmatprep.subr.bf16.mxu0 0
  %315 = vmatpush2.bf16.msra.mxu0 0
  %316 = vmatprep.subr.bf16.mxu0 0
  %317 = vmatpush2.bf16.msra.mxu0 0
  %318 = vmatprep.subr.bf16.mxu0 0
  %319 = vmatpush2.bf16.msra.mxu0 0
  %320 = vmatprep.subr.bf16.mxu0 0
  %321 = vmatpush2.bf16.msra.mxu0 0
  %322 = vmatprep.subr.bf16.mxu0 0
  %323 = vmatpush2.bf16.msra.mxu0 %v224
  %324 = vmatprep.subr.bf16.mxu0 0
  %325 = vmatpush2.bf16.msra.mxu0 %v223
  %326 = vmatprep.subr.bf16.mxu0 0
  %327 = vmatpush2.bf16.msra.mxu0 %v222
  %328 = vmatprep.mubr.bf16.mxu0 %v254
  %329 = vmatmul.mubr.bf16.gmra.mxu0 %v85
  %v330 = vpop.f32.mrf.mxu0
  %v331 = vadd.f32 %v291, %v330
  %v332 = vpop.f32.mrf.mxu0
  %v333 = vpop.f32.mrf.mxu0
  %v334 = vpop.f32.mrf.mxu0
  %335 = vdwg.mxu0
  %336 = vst [vmem:[%s3] sm:$0xff] %v331
  // Predicated region
  $region14: #{temporal_decoder2_forward.37} parent=0 // pred_check
    _
  $region15: #{temporal_decoder2_forward.37} parent=0 // pred_check_branch
    %338 = sbr.rel (0) target = $region17
  $region16: #{temporal_decoder2_forward.37} parent=0 // pred_region
    _
  $region17: #{temporal_decoder2_forward.37} parent=0 // pred_fallthru
    _
  // Predicated region
  $region18: #{temporal_decoder2_forward.37} parent=0 // pred_check
    _
  $region19: #{temporal_decoder2_forward.37} parent=0 // pred_check_branch
    %340 = sbr.rel (0) target = $region21
  $region20: #{temporal_decoder2_forward.37} parent=0 // pred_region
    _
  $region21: #{temporal_decoder2_forward.37} parent=0 // pred_fallthru
    _

// kernel: temporal_decoder2_forward.39
$region0: #{temporal_decoder2_forward.39}
  #allocation0 [shape = 'u32[]', space=smem, size = 0x4, offset = 0x4, fixed_abs, tag = 'smem constant byte address 0x4 - core index']
  #allocation1 [shape = 'u32[144,128]{1,0:T(1,128)}', space=vmem, size = 0x12000, scoped, tag = 'internal scratch']
  %s0 = inlined_call_operand.vmem [shape: bf16[8,216], index: 0, kind: input, shape index: {}]
  %s1 = inlined_call_operand.vmem [shape: f32[8,1], index: 1, kind: input, shape index: {}]
  %s2 = inlined_call_operand.vmem [shape: bf16[216,128], index: 2, kind: input, shape index: {}]
  %s3 = inlined_call_operand.vmem [shape: f32[8,128], index: 3, kind: input, shape index: {}]
  %s4 = inlined_call_operand.vmem [shape: f32[8,128], index: 4, kind: output, shape index: {}]
  %s5 = sld [smem:[#allocation0]]
  $region26: #{temporal_decoder2_forward.39} parent=0
    _
  %s7 = ssub.s32 1, %s5
  %s8 = scalar_select 0, %s7, %s5
  // Predicated region
  $region2: #{temporal_decoder2_forward.39} parent=0 // pred_check
    _
  $region3: #{temporal_decoder2_forward.39} parent=0 // pred_check_branch
    %10 = sbr.rel (0) target = $region5
  $region4: #{temporal_decoder2_forward.39} parent=0 // pred_region
    _
  $region5: #{temporal_decoder2_forward.39} parent=0 // pred_fallthru
    _
  // Predicated region
  $region6: #{temporal_decoder2_forward.39} parent=0 // pred_check
    _
  $region7: #{temporal_decoder2_forward.39} parent=0 // pred_check_branch
    %12 = sbr.rel (0) target = $region9
  $region8: #{temporal_decoder2_forward.39} parent=0 // pred_region
    _
  $region9: #{temporal_decoder2_forward.39} parent=0 // pred_fallthru
    _
  // Predicated region
  $region10: #{temporal_decoder2_forward.39} parent=0 // pred_check
    _
  $region11: #{temporal_decoder2_forward.39} parent=0 // pred_check_branch
    %14 = sbr.rel (0) target = $region13
  $region12: #{temporal_decoder2_forward.39} parent=0 // pred_region
    _
  $region13: #{temporal_decoder2_forward.39} parent=0 // pred_fallthru
    _
  // Predicated region
  $region14: #{temporal_decoder2_forward.39} parent=0 // pred_check
    _
  $region15: #{temporal_decoder2_forward.39} parent=0 // pred_check_branch
    %16 = sbr.rel (0) target = $region17
  $region16: #{temporal_decoder2_forward.39} parent=0 // pred_region
    _
  $region17: #{temporal_decoder2_forward.39} parent=0 // pred_fallthru
    _
  %v18 = vld [vmem:[%s0] sm:$0xff]
  %v19 = vld [vmem:[%s2] sm:$0xf]
  %v20 = vld [vmem:[%s2 + $0x4] sm:$0xf]
  %v21 = vld [vmem:[%s2 + $0x8] sm:$0xf]
  %v22 = vld [vmem:[%s2 + $0xc] sm:$0xf]
  %v23 = vld [vmem:[%s2 + $0x10] sm:$0xf]
  %v24 = vld [vmem:[%s2 + $0x14] sm:$0xf]
  %v25 = vld [vmem:[%s2 + $0x18] sm:$0xf]
  %v26 = vld [vmem:[%s2 + $0x1c] sm:$0xf]
  %v27 = vld [vmem:[%s2 + $0x20] sm:$0xf]
  %v28 = vld [vmem:[%s2 + $0x24] sm:$0xf]
  %v29 = vld [vmem:[%s2 + $0x28] sm:$0xf]
  %v30 = vld [vmem:[%s2 + $0x2c] sm:$0xf]
  %v31 = vld [vmem:[%s2 + $0x30] sm:$0xf]
  %v32 = vld [vmem:[%s2 + $0x34] sm:$0xf]
  %v33 = vld [vmem:[%s2 + $0x38] sm:$0xf]
  %v34 = vld [vmem:[%s2 + $0x3c] sm:$0xf]
  %v35 = vld [vmem:[%s2 + $0x40] sm:$0xf]
  %v36 = vld [vmem:[%s2 + $0x44] sm:$0xf]
  %v37 = vld [vmem:[%s2 + $0x48] sm:$0xf]
  %v38 = vld [vmem:[%s2 + $0x4c] sm:$0xf]
  %v39 = vld [vmem:[%s2 + $0x50] sm:$0xf]
  %v40 = vld [vmem:[%s2 + $0x54] sm:$0xf]
  %v41 = vld [vmem:[%s2 + $0x58] sm:$0xf]
  %v42 = vld [vmem:[%s2 + $0x5c] sm:$0xf]
  %v43 = vld [vmem:[%s2 + $0x60] sm:$0xf]
  %v44 = vld [vmem:[%s2 + $0x64] sm:$0xf]
  %v45 = vld [vmem:[%s2 + $0x68] sm:$0xf]
  %v46 = vld [vmem:[%s1] sm:$0xff]
  %48 = vset.pattern.permute.xlu0 0
  %49 = vperm.xlu0 %48, %v46
  %v50 = vpop.permute.xlu0 %49
  %v53 = vunpack.c.l.b16 %v18
  %v54 = vunpack.c.h.b16 %v18
  %v55 = vpack.c.b16 %v53, %v53
  %v56 = vpack.c.b16 %v54, %v54
  %v85 = vunpack.c.l.b16 %v19
  %v86 = vunpack.c.l.b16 %v20
  %v87 = vunpack.c.l.b16 %v21
  %v88 = vunpack.c.l.b16 %v22
  %v89 = vunpack.c.l.b16 %v23
  %v90 = vunpack.c.l.b16 %v24
  %v91 = vunpack.c.l.b16 %v25
  %v92 = vunpack.c.l.b16 %v26
  %v93 = vunpack.c.l.b16 %v27
  %v94 = vunpack.c.l.b16 %v28
  %v95 = vunpack.c.l.b16 %v29
  %v96 = vunpack.c.l.b16 %v30
  %v97 = vunpack.c.l.b16 %v31
  %v98 = vunpack.c.l.b16 %v32
  %v99 = vunpack.c.l.b16 %v33
  %v100 = vunpack.c.l.b16 %v34
  %v101 = vunpack.c.l.b16 %v35
  %v102 = vunpack.c.l.b16 %v36
  %v103 = vunpack.c.l.b16 %v37
  %v104 = vunpack.c.l.b16 %v38
  %v105 = vunpack.c.l.b16 %v39
  %v106 = vunpack.c.l.b16 %v40
  %v107 = vunpack.c.l.b16 %v41
  %v108 = vunpack.c.l.b16 %v42
  %v109 = vunpack.c.l.b16 %v43
  %v110 = vunpack.c.l.b16 %v44
  %v111 = vunpack.c.l.b16 %v45
  %v112 = vpack.c.b16 %v86, %v85
  %v113 = vpack.c.b16 %v88, %v87
  %v114 = vpack.c.b16 %v90, %v89
  %v115 = vpack.c.b16 %v92, %v91
  %v116 = vpack.c.b16 %v94, %v93
  %v117 = vpack.c.b16 %v96, %v95
  %v118 = vpack.c.b16 %v98, %v97
  %v119 = vpack.c.b16 %v100, %v99
  %v120 = vpack.c.b16 %v102, %v101
  %v121 = vpack.c.b16 %v104, %v103
  %v122 = vpack.c.b16 %v106, %v105
  %v123 = vpack.c.b16 %v108, %v107
  %v124 = vpack.c.b16 %v110, %v109
  %v125 = vpack.c.b16 %v111, %v111
  %vm139 = vcmask 719872
  %v141 = vsel %vm139, %v56, 0
  %vm143 = vcmask 1043456
  %v145 = vsel %vm143, %v125, 0
  %147 = vmatprep.subr.bf16.mxu0 0
  %148 = vmatpush1.bf16.msra.mxu0 %v119
  %149 = vmatprep.subr.bf16.mxu0 0
  %150 = vmatpush1.bf16.msra.mxu0 %v118
  %151 = vmatprep.subr.bf16.mxu0 0
  %152 = vmatpush1.bf16.msra.mxu0 %v117
  %153 = vmatprep.subr.bf16.mxu0 0
  %154 = vmatpush1.bf16.msra.mxu0 %v116
  %155 = vmatprep.subr.bf16.mxu0 0
  %156 = vmatpush1.bf16.msra.mxu0 %v115
  %157 = vmatprep.subr.bf16.mxu0 0
  %158 = vmatpush1.bf16.msra.mxu0 %v114
  %159 = vmatprep.subr.bf16.mxu0 0
  %160 = vmatpush1.bf16.msra.mxu0 %v113
  %161 = vmatprep.subr.bf16.mxu0 0
  %162 = vmatpush1.bf16.msra.mxu0 %v112
  %163 = vmatprep.subr.bf16.mxu0 0
  %164 = vmatpush2.bf16.msra.mxu0 0
  %165 = vmatprep.subr.bf16.mxu0 0
  %166 = vmatpush2.bf16.msra.mxu0 0
  %167 = vmatprep.subr.bf16.mxu0 0
  %168 = vmatpush2.bf16.msra.mxu0 %v145
  %169 = vmatprep.subr.bf16.mxu0 0
  %170 = vmatpush2.bf16.msra.mxu0 %v124
  %171 = vmatprep.subr.bf16.mxu0 0
  %172 = vmatpush2.bf16.msra.mxu0 %v123
  %173 = vmatprep.subr.bf16.mxu0 0
  %174 = vmatpush2.bf16.msra.mxu0 %v122
  %175 = vmatprep.subr.bf16.mxu0 0
  %176 = vmatpush2.bf16.msra.mxu0 %v121
  %177 = vmatprep.subr.bf16.mxu0 0
  %178 = vmatpush2.bf16.msra.mxu0 %v120
  %179 = vmatprep.mubr.bf16.mxu0 %v141
  %180 = vmatmul.mubr.bf16.gmra.mxu0 %v55
  %v181 = vpop.f32.mrf.mxu0
  %v182 = vadd.f32 %v50, %v181
  %v183 = vpop.f32.mrf.mxu0
  %v184 = vpop.f32.mrf.mxu0
  %v185 = vpop.f32.mrf.mxu0
  %186 = vdwg.mxu0
  %v187 = vld [vmem:[%s3] sm:$0xff]
  %v188 = vadd.f32 %v182, %v187
  %v189 = vmax.f32 %v188, 0.0
  %190 = vst [vmem:[%s4] sm:$0xff] %v189
  // Predicated region
  $region18: #{temporal_decoder2_forward.39} parent=0 // pred_check
    _
  $region19: #{temporal_decoder2_forward.39} parent=0 // pred_check_branch
    %192 = sbr.rel (0) target = $region21
  $region20: #{temporal_decoder2_forward.39} parent=0 // pred_region
    _
  $region21: #{temporal_decoder2_forward.39} parent=0 // pred_fallthru
    _
  // Predicated region
  $region22: #{temporal_decoder2_forward.39} parent=0 // pred_check
    _
  $region23: #{temporal_decoder2_forward.39} parent=0 // pred_check_branch
    %194 = sbr.rel (0) target = $region25
  $region24: #{temporal_decoder2_forward.39} parent=0 // pred_region
    _
  $region25: #{temporal_decoder2_forward.39} parent=0 // pred_fallthru
    _

// kernel: temporal_decoder2_forward.41
$region0: #{temporal_decoder2_forward.41}
  #allocation0 [shape = 'u32[]', space=smem, size = 0x4, offset = 0x4, fixed_abs, tag = 'smem constant byte address 0x4 - core index']
  #allocation1 [shape = 'u32[144,128]{1,0:T(1,128)}', space=vmem, size = 0x12000, scoped, tag = 'internal scratch']
  #allocation2 [shape = 'f32[1,1]{1,0:T(1,128)S(1)}', space=vmem, size = 0x200, scoped, tag = 'scoped memory for temporal_decoder2_forward.41']
  %s0 = inlined_call_operand.vmem [shape: bf16[1,216], index: 0, kind: input, shape index: {}]
  %s1 = inlined_call_operand.<no memory space> [shape: f32[1,1], index: 1, kind: input, shape index: {}]
  %s2 = inlined_call_operand.vmem [shape: bf16[216,128], index: 2, kind: input, shape index: {}]
  %s3 = inlined_call_operand.vmem [shape: f32[1,128], index: 3, kind: output, shape index: {}]
  %s4 = sld [smem:[#allocation0]]
  $region22: #{temporal_decoder2_forward.41} parent=0
    _
  %s6 = ssub.s32 1, %s4
  %s7 = scalar_select 0, %s6, %s4
  %v8 = vstv %s1
  %9 = vst [vmem:[#allocation2] sm:$0x1] %v8
  // Predicated region
  $region2: #{temporal_decoder2_forward.41} parent=0 // pred_check
    _
  $region3: #{temporal_decoder2_forward.41} parent=0 // pred_check_branch
    %11 = sbr.rel (0) target = $region5
  $region4: #{temporal_decoder2_forward.41} parent=0 // pred_region
    _
  $region5: #{temporal_decoder2_forward.41} parent=0 // pred_fallthru
    _
  // Predicated region
  $region6: #{temporal_decoder2_forward.41} parent=0 // pred_check
    _
  $region7: #{temporal_decoder2_forward.41} parent=0 // pred_check_branch
    %13 = sbr.rel (0) target = $region9
  $region8: #{temporal_decoder2_forward.41} parent=0 // pred_region
    _
  $region9: #{temporal_decoder2_forward.41} parent=0 // pred_fallthru
    _
  // Predicated region
  $region10: #{temporal_decoder2_forward.41} parent=0 // pred_check
    _
  $region11: #{temporal_decoder2_forward.41} parent=0 // pred_check_branch
    %15 = sbr.rel (0) target = $region13
  $region12: #{temporal_decoder2_forward.41} parent=0 // pred_region
    _
  $region13: #{temporal_decoder2_forward.41} parent=0 // pred_fallthru
    _
  %v17 = vld [vmem:[%s0] sm:$0x3]
  %v18 = vld [vmem:[%s2] sm:$0xf]
  %v19 = vld [vmem:[%s2 + $0x4] sm:$0xf]
  %v20 = vld [vmem:[%s2 + $0x8] sm:$0xf]
  %v21 = vld [vmem:[%s2 + $0xc] sm:$0xf]
  %v22 = vld [vmem:[%s2 + $0x10] sm:$0xf]
  %v23 = vld [vmem:[%s2 + $0x14] sm:$0xf]
  %v24 = vld [vmem:[%s2 + $0x18] sm:$0xf]
  %v25 = vld [vmem:[%s2 + $0x1c] sm:$0xf]
  %v26 = vld [vmem:[%s2 + $0x20] sm:$0xf]
  %v27 = vld [vmem:[%s2 + $0x24] sm:$0xf]
  %v28 = vld [vmem:[%s2 + $0x28] sm:$0xf]
  %v29 = vld [vmem:[%s2 + $0x2c] sm:$0xf]
  %v30 = vld [vmem:[%s2 + $0x30] sm:$0xf]
  %v31 = vld [vmem:[%s2 + $0x34] sm:$0xf]
  %v32 = vld [vmem:[%s2 + $0x38] sm:$0xf]
  %v33 = vld [vmem:[%s2 + $0x3c] sm:$0xf]
  %v34 = vld [vmem:[%s2 + $0x40] sm:$0xf]
  %v35 = vld [vmem:[%s2 + $0x44] sm:$0xf]
  %v36 = vld [vmem:[%s2 + $0x48] sm:$0xf]
  %v37 = vld [vmem:[%s2 + $0x4c] sm:$0xf]
  %v38 = vld [vmem:[%s2 + $0x50] sm:$0xf]
  %v39 = vld [vmem:[%s2 + $0x54] sm:$0xf]
  %v40 = vld [vmem:[%s2 + $0x58] sm:$0xf]
  %v41 = vld [vmem:[%s2 + $0x5c] sm:$0xf]
  %v42 = vld [vmem:[%s2 + $0x60] sm:$0xf]
  %v43 = vld [vmem:[%s2 + $0x64] sm:$0xf]
  %v44 = vld [vmem:[%s2 + $0x68] sm:$0xf]
  %v45 = vld [vmem:[#allocation2] sm:$0x1]
  %47 = vset.pattern.permute.xlu0 0
  %48 = vperm.xlu0 %47, %v45
  %v49 = vpop.permute.xlu0 %48
  %v51 = vlaneseq
  %v52 = vshrl.u32 %v51, 7
  %v53 = vsub.s32 0, %v52
  %v54 = vrot.slane %v49, %v53
  %v57 = vunpack.c.l.s4 1966171168
  %v58 = vunpack.c.0.s8 %v57
  %v59 = vlaneseq
  %v60 = vshrl.u32 %v59, 7
  %v61 = vsub.s32 %v58, %v60
  %v62 = vrot.slane %v17, %v61
  %v63 = vcombine.high %v62, %v62
  %v65 = vunpack.c.l.s4 1966171168
  %v66 = vunpack.c.0.s8 %v65
  %v67 = vlaneseq
  %v68 = vshrl.u32 %v67, 7
  %v69 = vsub.s32 %v66, %v68
  %v70 = vrot.slane %v62, %v69
  %v72 = vunpack.c.l.s4 1966171168
  %v73 = vunpack.c.0.s8 %v72
  %v74 = vlaneseq
  %v75 = vshrl.u32 %v74, 7
  %v76 = vsub.s32 %v73, %v75
  %v77 = vrot.slane %v63, %v76
  %v106 = vunpack.c.l.b16 %v18
  %v107 = vunpack.c.l.b16 %v19
  %v108 = vunpack.c.l.b16 %v20
  %v109 = vunpack.c.l.b16 %v21
  %v110 = vunpack.c.l.b16 %v22
  %v111 = vunpack.c.l.b16 %v23
  %v112 = vunpack.c.l.b16 %v24
  %v113 = vunpack.c.l.b16 %v25
  %v114 = vunpack.c.l.b16 %v26
  %v115 = vunpack.c.l.b16 %v27
  %v116 = vunpack.c.l.b16 %v28
  %v117 = vunpack.c.l.b16 %v29
  %v118 = vunpack.c.l.b16 %v30
  %v119 = vunpack.c.l.b16 %v31
  %v120 = vunpack.c.l.b16 %v32
  %v121 = vunpack.c.l.b16 %v33
  %v122 = vunpack.c.l.b16 %v34
  %v123 = vunpack.c.l.b16 %v35
  %v124 = vunpack.c.l.b16 %v36
  %v125 = vunpack.c.l.b16 %v37
  %v126 = vunpack.c.l.b16 %v38
  %v127 = vunpack.c.l.b16 %v39
  %v128 = vunpack.c.l.b16 %v40
  %v129 = vunpack.c.l.b16 %v41
  %v130 = vunpack.c.l.b16 %v42
  %v131 = vunpack.c.l.b16 %v43
  %v132 = vunpack.c.l.b16 %v44
  %v133 = vpack.c.b16 %v107, %v106
  %v134 = vpack.c.b16 %v109, %v108
  %v135 = vpack.c.b16 %v111, %v110
  %v136 = vpack.c.b16 %v113, %v112
  %v137 = vpack.c.b16 %v115, %v114
  %v138 = vpack.c.b16 %v117, %v116
  %v139 = vpack.c.b16 %v119, %v118
  %v140 = vpack.c.b16 %v121, %v120
  %v141 = vpack.c.b16 %v123, %v122
  %v142 = vpack.c.b16 %v125, %v124
  %v143 = vpack.c.b16 %v127, %v126
  %v144 = vpack.c.b16 %v129, %v128
  %v145 = vpack.c.b16 %v131, %v130
  %v146 = vpack.c.b16 %v132, %v132
  %vm160 = vcmask 719872
  %v162 = vsel %vm160, %v77, 0
  %vm164 = vcmask 1043456
  %v166 = vsel %vm164, %v146, 0
  %168 = vmatprep.subr.bf16.mxu0 0
  %169 = vmatpush1.bf16.msra.mxu0 %v140
  %170 = vmatprep.subr.bf16.mxu0 0
  %171 = vmatpush1.bf16.msra.mxu0 %v139
  %172 = vmatprep.subr.bf16.mxu0 0
  %173 = vmatpush1.bf16.msra.mxu0 %v138
  %174 = vmatprep.subr.bf16.mxu0 0
  %175 = vmatpush1.bf16.msra.mxu0 %v137
  %176 = vmatprep.subr.bf16.mxu0 0
  %177 = vmatpush1.bf16.msra.mxu0 %v136
  %178 = vmatprep.subr.bf16.mxu0 0
  %179 = vmatpush1.bf16.msra.mxu0 %v135
  %180 = vmatprep.subr.bf16.mxu0 0
  %181 = vmatpush1.bf16.msra.mxu0 %v134
  %182 = vmatprep.subr.bf16.mxu0 0
  %183 = vmatpush1.bf16.msra.mxu0 %v133
  %184 = vmatprep.subr.bf16.mxu0 0
  %185 = vmatpush2.bf16.msra.mxu0 0
  %186 = vmatprep.subr.bf16.mxu0 0
  %187 = vmatpush2.bf16.msra.mxu0 0
  %188 = vmatprep.subr.bf16.mxu0 0
  %189 = vmatpush2.bf16.msra.mxu0 %v166
  %190 = vmatprep.subr.bf16.mxu0 0
  %191 = vmatpush2.bf16.msra.mxu0 %v145
  %192 = vmatprep.subr.bf16.mxu0 0
  %193 = vmatpush2.bf16.msra.mxu0 %v144
  %194 = vmatprep.subr.bf16.mxu0 0
  %195 = vmatpush2.bf16.msra.mxu0 %v143
  %196 = vmatprep.subr.bf16.mxu0 0
  %197 = vmatpush2.bf16.msra.mxu0 %v142
  %198 = vmatprep.subr.bf16.mxu0 0
  %199 = vmatpush2.bf16.msra.mxu0 %v141
  %200 = vmatprep.mubr.bf16.mxu0 %v162
  %201 = vmatmul.mubr.bf16.gmra.mxu0 %v70
  %v202 = vpop.f32.mrf.mxu0
  %v203 = vadd.f32 %v54, %v202
  %v204 = vpop.f32.mrf.mxu0
  %v205 = vpop.f32.mrf.mxu0
  %v206 = vpop.f32.mrf.mxu0
  %207 = vdwg.mxu0
  %v208 = vmax.f32 %v203, 0.0
  %209 = vst [vmem:[%s3] sm:$0x1] %v208
  // Predicated region
  $region14: #{temporal_decoder2_forward.41} parent=0 // pred_check
    _
  $region15: #{temporal_decoder2_forward.41} parent=0 // pred_check_branch
    %211 = sbr.rel (0) target = $region17
  $region16: #{temporal_decoder2_forward.41} parent=0 // pred_region
    _
  $region17: #{temporal_decoder2_forward.41} parent=0 // pred_fallthru
    _
  // Predicated region
  $region18: #{temporal_decoder2_forward.41} parent=0 // pred_check
    _
  $region19: #{temporal_decoder2_forward.41} parent=0 // pred_check_branch
    %213 = sbr.rel (0) target = $region21
  $region20: #{temporal_decoder2_forward.41} parent=0 // pred_region
    _
  $region21: #{temporal_decoder2_forward.41} parent=0 // pred_fallthru
    _

// kernel: temporal_decoder2_forward.42
$region0: #{temporal_decoder2_forward.42}
  #allocation0 [shape = 'u32[]', space=smem, size = 0x4, offset = 0x4, fixed_abs, tag = 'smem constant byte address 0x4 - core index']
  #allocation1 [shape = 'u32[144,128]{1,0:T(1,128)}', space=vmem, size = 0x12000, scoped, tag = 'internal scratch']
  #allocation2 [shape = 'f32[1,1]{1,0:T(1,128)S(1)}', space=vmem, size = 0x200, scoped, tag = 'scoped memory for temporal_decoder2_forward.42']
  %s0 = inlined_call_operand.vmem [shape: bf16[1,27], index: 0, kind: input, shape index: {}]
  %s1 = inlined_call_operand.<no memory space> [shape: f32[1,1], index: 1, kind: input, shape index: {}]
  %s2 = inlined_call_operand.vmem [shape: bf16[27,128], index: 2, kind: input, shape index: {}]
  %s3 = inlined_call_operand.vmem [shape: f32[1,128], index: 3, kind: input, shape index: {}]
  %s4 = inlined_call_operand.vmem [shape: f32[1,128], index: 4, kind: output, shape index: {}]
  %s5 = sld [smem:[#allocation0]]
  $region26: #{temporal_decoder2_forward.42} parent=0
    _
  %s7 = ssub.s32 1, %s5
  %s8 = scalar_select 0, %s7, %s5
  %v9 = vstv %s1
  %10 = vst [vmem:[#allocation2] sm:$0x1] %v9
  // Predicated region
  $region2: #{temporal_decoder2_forward.42} parent=0 // pred_check
    _
  $region3: #{temporal_decoder2_forward.42} parent=0 // pred_check_branch
    %12 = sbr.rel (0) target = $region5
  $region4: #{temporal_decoder2_forward.42} parent=0 // pred_region
    _
  $region5: #{temporal_decoder2_forward.42} parent=0 // pred_fallthru
    _
  // Predicated region
  $region6: #{temporal_decoder2_forward.42} parent=0 // pred_check
    _
  $region7: #{temporal_decoder2_forward.42} parent=0 // pred_check_branch
    %14 = sbr.rel (0) target = $region9
  $region8: #{temporal_decoder2_forward.42} parent=0 // pred_region
    _
  $region9: #{temporal_decoder2_forward.42} parent=0 // pred_fallthru
    _
  // Predicated region
  $region10: #{temporal_decoder2_forward.42} parent=0 // pred_check
    _
  $region11: #{temporal_decoder2_forward.42} parent=0 // pred_check_branch
    %16 = sbr.rel (0) target = $region13
  $region12: #{temporal_decoder2_forward.42} parent=0 // pred_region
    _
  $region13: #{temporal_decoder2_forward.42} parent=0 // pred_fallthru
    _
  // Predicated region
  $region14: #{temporal_decoder2_forward.42} parent=0 // pred_check
    _
  $region15: #{temporal_decoder2_forward.42} parent=0 // pred_check_branch
    %18 = sbr.rel (0) target = $region17
  $region16: #{temporal_decoder2_forward.42} parent=0 // pred_region
    _
  $region17: #{temporal_decoder2_forward.42} parent=0 // pred_fallthru
    _
  %v20 = vld [vmem:[%s0] sm:$0x1]
  %v21 = vld [vmem:[%s2] sm:$0xf]
  %v22 = vld [vmem:[%s2 + $0x4] sm:$0xf]
  %v23 = vld [vmem:[%s2 + $0x8] sm:$0xf]
  %v24 = vld [vmem:[%s2 + $0xc] sm:$0x3]
  %v25 = vld [vmem:[#allocation2] sm:$0x1]
  %27 = vset.pattern.permute.xlu0 0
  %28 = vperm.xlu0 %27, %v25
  %v29 = vpop.permute.xlu0 %28
  %v31 = vlaneseq
  %v32 = vshrl.u32 %v31, 7
  %v33 = vsub.s32 0, %v32
  %v34 = vrot.slane %v29, %v33
  %v39 = vunpack.c.l.b16 %v21
  %v40 = vunpack.c.l.b16 %v22
  %v41 = vunpack.c.l.b16 %v23
  %v42 = vunpack.c.l.b16 %v24
  %v43 = vpack.c.b16 %v40, %v39
  %v44 = vpack.c.b16 %v42, %v41
  %vm46 = vcmask 220160
  %v48 = vsel %vm46, %v20, 0
  %vm50 = vcmask 1044480
  %vm51 = vcmask 1045504
  %v52 = vsel %vm50, 4294967295, 65535
  %v53 = vsel %vm51, %v52, 0
  %v55 = vand.u32 %v44, %v53
  %57 = vmatprep.subr.bf16.mxu0 0
  %58 = vmatpush1.bf16.msra.mxu0 0
  %59 = vmatprep.subr.bf16.mxu0 0
  %60 = vmatpush1.bf16.msra.mxu0 0
  %61 = vmatprep.subr.bf16.mxu0 0
  %62 = vmatpush1.bf16.msra.mxu0 0
  %63 = vmatprep.subr.bf16.mxu0 0
  %64 = vmatpush1.bf16.msra.mxu0 0
  %65 = vmatprep.subr.bf16.mxu0 0
  %66 = vmatpush1.bf16.msra.mxu0 0
  %67 = vmatprep.subr.bf16.mxu0 0
  %68 = vmatpush1.bf16.msra.mxu0 0
  %69 = vmatprep.subr.bf16.mxu0 0
  %70 = vmatpush1.bf16.msra.mxu0 %v55
  %71 = vmatprep.subr.bf16.mxu0 0
  %72 = vmatpush1.bf16.msra.mxu0 %v43
  %73 = vmatprep.subr.bf16.mxu0 0
  %74 = vmatpush2.bf16.msra.mxu0 0
  %75 = vmatprep.subr.bf16.mxu0 0
  %76 = vmatpush2.bf16.msra.mxu0 0
  %77 = vmatprep.subr.bf16.mxu0 0
  %78 = vmatpush2.bf16.msra.mxu0 0
  %79 = vmatprep.subr.bf16.mxu0 0
  %80 = vmatpush2.bf16.msra.mxu0 0
  %81 = vmatprep.subr.bf16.mxu0 0
  %82 = vmatpush2.bf16.msra.mxu0 0
  %83 = vmatprep.subr.bf16.mxu0 0
  %84 = vmatpush2.bf16.msra.mxu0 0
  %85 = vmatprep.subr.bf16.mxu0 0
  %86 = vmatpush2.bf16.msra.mxu0 0
  %87 = vmatprep.subr.bf16.mxu0 0
  %88 = vmatpush2.bf16.msra.mxu0 0
  %89 = vmatprep.mubr.bf16.mxu0 0
  %90 = vmatmul.mubr.bf16.gmra.mxu0 %v48
  %v91 = vpop.f32.mrf.mxu0
  %v92 = vadd.f32 %v34, %v91
  %v93 = vpop.f32.mrf.mxu0
  %v94 = vpop.f32.mrf.mxu0
  %v95 = vpop.f32.mrf.mxu0
  %96 = vdwg.mxu0
  %v97 = vld [vmem:[%s3] sm:$0x1]
  %v98 = vadd.f32 %v92, %v97
  %v99 = vmax.f32 %v98, 0.0
  %100 = vst [vmem:[%s4] sm:$0x1] %v99
  // Predicated region
  $region18: #{temporal_decoder2_forward.42} parent=0 // pred_check
    _
  $region19: #{temporal_decoder2_forward.42} parent=0 // pred_check_branch
    %102 = sbr.rel (0) target = $region21
  $region20: #{temporal_decoder2_forward.42} parent=0 // pred_region
    _
  $region21: #{temporal_decoder2_forward.42} parent=0 // pred_fallthru
    _
  // Predicated region
  $region22: #{temporal_decoder2_forward.42} parent=0 // pred_check
    _
  $region23: #{temporal_decoder2_forward.42} parent=0 // pred_check_branch
    %104 = sbr.rel (0) target = $region25
  $region24: #{temporal_decoder2_forward.42} parent=0 // pred_region
    _
  $region25: #{temporal_decoder2_forward.42} parent=0 // pred_fallthru
    _

// kernel: temporal_decoder2_forward.40
$region0: #{temporal_decoder2_forward.40}
  #allocation0 [shape = 'u32[]', space=smem, size = 0x4, offset = 0x4, fixed_abs, tag = 'smem constant byte address 0x4 - core index']
  #allocation1 [shape = 'u32[144,128]{1,0:T(1,128)}', space=vmem, size = 0x12000, scoped, tag = 'internal scratch']
  #allocation2 [shape = 'f32[1,1]{1,0:T(1,128)S(1)}', space=vmem, size = 0x200, scoped, tag = 'scoped memory for temporal_decoder2_forward.40']
  %s0 = inlined_call_operand.vmem [shape: bf16[1,216], index: 0, kind: input, shape index: {}]
  %s1 = inlined_call_operand.<no memory space> [shape: f32[1,1], index: 1, kind: input, shape index: {}]
  %s2 = inlined_call_operand.vmem [shape: bf16[216,128], index: 2, kind: input, shape index: {}]
  %s3 = inlined_call_operand.vmem [shape: f32[1,128], index: 3, kind: output, shape index: {}]
  %s4 = sld [smem:[#allocation0]]
  $region22: #{temporal_decoder2_forward.40} parent=0
    _
  %s6 = ssub.s32 1, %s4
  %s7 = scalar_select 0, %s6, %s4
  %v8 = vstv %s1
  %9 = vst [vmem:[#allocation2] sm:$0x1] %v8
  // Predicated region
  $region2: #{temporal_decoder2_forward.40} parent=0 // pred_check
    _
  $region3: #{temporal_decoder2_forward.40} parent=0 // pred_check_branch
    %11 = sbr.rel (0) target = $region5
  $region4: #{temporal_decoder2_forward.40} parent=0 // pred_region
    _
  $region5: #{temporal_decoder2_forward.40} parent=0 // pred_fallthru
    _
  // Predicated region
  $region6: #{temporal_decoder2_forward.40} parent=0 // pred_check
    _
  $region7: #{temporal_decoder2_forward.40} parent=0 // pred_check_branch
    %13 = sbr.rel (0) target = $region9
  $region8: #{temporal_decoder2_forward.40} parent=0 // pred_region
    _
  $region9: #{temporal_decoder2_forward.40} parent=0 // pred_fallthru
    _
  // Predicated region
  $region10: #{temporal_decoder2_forward.40} parent=0 // pred_check
    _
  $region11: #{temporal_decoder2_forward.40} parent=0 // pred_check_branch
    %15 = sbr.rel (0) target = $region13
  $region12: #{temporal_decoder2_forward.40} parent=0 // pred_region
    _
  $region13: #{temporal_decoder2_forward.40} parent=0 // pred_fallthru
    _
  %v17 = vld [vmem:[%s0] sm:$0x3]
  %v18 = vld [vmem:[%s2] sm:$0xf]
  %v19 = vld [vmem:[%s2 + $0x4] sm:$0xf]
  %v20 = vld [vmem:[%s2 + $0x8] sm:$0xf]
  %v21 = vld [vmem:[%s2 + $0xc] sm:$0xf]
  %v22 = vld [vmem:[%s2 + $0x10] sm:$0xf]
  %v23 = vld [vmem:[%s2 + $0x14] sm:$0xf]
  %v24 = vld [vmem:[%s2 + $0x18] sm:$0xf]
  %v25 = vld [vmem:[%s2 + $0x1c] sm:$0xf]
  %v26 = vld [vmem:[%s2 + $0x20] sm:$0xf]
  %v27 = vld [vmem:[%s2 + $0x24] sm:$0xf]
  %v28 = vld [vmem:[%s2 + $0x28] sm:$0xf]
  %v29 = vld [vmem:[%s2 + $0x2c] sm:$0xf]
  %v30 = vld [vmem:[%s2 + $0x30] sm:$0xf]
  %v31 = vld [vmem:[%s2 + $0x34] sm:$0xf]
  %v32 = vld [vmem:[%s2 + $0x38] sm:$0xf]
  %v33 = vld [vmem:[%s2 + $0x3c] sm:$0xf]
  %v34 = vld [vmem:[%s2 + $0x40] sm:$0xf]
  %v35 = vld [vmem:[%s2 + $0x44] sm:$0xf]
  %v36 = vld [vmem:[%s2 + $0x48] sm:$0xf]
  %v37 = vld [vmem:[%s2 + $0x4c] sm:$0xf]
  %v38 = vld [vmem:[%s2 + $0x50] sm:$0xf]
  %v39 = vld [vmem:[%s2 + $0x54] sm:$0xf]
  %v40 = vld [vmem:[%s2 + $0x58] sm:$0xf]
  %v41 = vld [vmem:[%s2 + $0x5c] sm:$0xf]
  %v42 = vld [vmem:[%s2 + $0x60] sm:$0xf]
  %v43 = vld [vmem:[%s2 + $0x64] sm:$0xf]
  %v44 = vld [vmem:[%s2 + $0x68] sm:$0xf]
  %v45 = vld [vmem:[#allocation2] sm:$0x1]
  %47 = vset.pattern.permute.xlu0 0
  %48 = vperm.xlu0 %47, %v45
  %v49 = vpop.permute.xlu0 %48
  %v51 = vlaneseq
  %v52 = vshrl.u32 %v51, 7
  %v53 = vsub.s32 0, %v52
  %v54 = vrot.slane %v49, %v53
  %v57 = vunpack.c.l.s4 1966171168
  %v58 = vunpack.c.0.s8 %v57
  %v59 = vlaneseq
  %v60 = vshrl.u32 %v59, 7
  %v61 = vsub.s32 %v58, %v60
  %v62 = vrot.slane %v17, %v61
  %v63 = vcombine.high %v62, %v62
  %v65 = vunpack.c.l.s4 1966171168
  %v66 = vunpack.c.0.s8 %v65
  %v67 = vlaneseq
  %v68 = vshrl.u32 %v67, 7
  %v69 = vsub.s32 %v66, %v68
  %v70 = vrot.slane %v62, %v69
  %v72 = vunpack.c.l.s4 1966171168
  %v73 = vunpack.c.0.s8 %v72
  %v74 = vlaneseq
  %v75 = vshrl.u32 %v74, 7
  %v76 = vsub.s32 %v73, %v75
  %v77 = vrot.slane %v63, %v76
  %v106 = vunpack.c.l.b16 %v18
  %v107 = vunpack.c.l.b16 %v19
  %v108 = vunpack.c.l.b16 %v20
  %v109 = vunpack.c.l.b16 %v21
  %v110 = vunpack.c.l.b16 %v22
  %v111 = vunpack.c.l.b16 %v23
  %v112 = vunpack.c.l.b16 %v24
  %v113 = vunpack.c.l.b16 %v25
  %v114 = vunpack.c.l.b16 %v26
  %v115 = vunpack.c.l.b16 %v27
  %v116 = vunpack.c.l.b16 %v28
  %v117 = vunpack.c.l.b16 %v29
  %v118 = vunpack.c.l.b16 %v30
  %v119 = vunpack.c.l.b16 %v31
  %v120 = vunpack.c.l.b16 %v32
  %v121 = vunpack.c.l.b16 %v33
  %v122 = vunpack.c.l.b16 %v34
  %v123 = vunpack.c.l.b16 %v35
  %v124 = vunpack.c.l.b16 %v36
  %v125 = vunpack.c.l.b16 %v37
  %v126 = vunpack.c.l.b16 %v38
  %v127 = vunpack.c.l.b16 %v39
  %v128 = vunpack.c.l.b16 %v40
  %v129 = vunpack.c.l.b16 %v41
  %v130 = vunpack.c.l.b16 %v42
  %v131 = vunpack.c.l.b16 %v43
  %v132 = vunpack.c.l.b16 %v44
  %v133 = vpack.c.b16 %v107, %v106
  %v134 = vpack.c.b16 %v109, %v108
  %v135 = vpack.c.b16 %v111, %v110
  %v136 = vpack.c.b16 %v113, %v112
  %v137 = vpack.c.b16 %v115, %v114
  %v138 = vpack.c.b16 %v117, %v116
  %v139 = vpack.c.b16 %v119, %v118
  %v140 = vpack.c.b16 %v121, %v120
  %v141 = vpack.c.b16 %v123, %v122
  %v142 = vpack.c.b16 %v125, %v124
  %v143 = vpack.c.b16 %v127, %v126
  %v144 = vpack.c.b16 %v129, %v128
  %v145 = vpack.c.b16 %v131, %v130
  %v146 = vpack.c.b16 %v132, %v132
  %vm160 = vcmask 719872
  %v162 = vsel %vm160, %v77, 0
  %vm164 = vcmask 1043456
  %v166 = vsel %vm164, %v146, 0
  %168 = vmatprep.subr.bf16.mxu0 0
  %169 = vmatpush1.bf16.msra.mxu0 %v140
  %170 = vmatprep.subr.bf16.mxu0 0
  %171 = vmatpush1.bf16.msra.mxu0 %v139
  %172 = vmatprep.subr.bf16.mxu0 0
  %173 = vmatpush1.bf16.msra.mxu0 %v138
  %174 = vmatprep.subr.bf16.mxu0 0
  %175 = vmatpush1.bf16.msra.mxu0 %v137
  %176 = vmatprep.subr.bf16.mxu0 0
  %177 = vmatpush1.bf16.msra.mxu0 %v136
  %178 = vmatprep.subr.bf16.mxu0 0
  %179 = vmatpush1.bf16.msra.mxu0 %v135
  %180 = vmatprep.subr.bf16.mxu0 0
  %181 = vmatpush1.bf16.msra.mxu0 %v134
  %182 = vmatprep.subr.bf16.mxu0 0
  %183 = vmatpush1.bf16.msra.mxu0 %v133
  %184 = vmatprep.subr.bf16.mxu0 0
  %185 = vmatpush2.bf16.msra.mxu0 0
  %186 = vmatprep.subr.bf16.mxu0 0
  %187 = vmatpush2.bf16.msra.mxu0 0
  %188 = vmatprep.subr.bf16.mxu0 0
  %189 = vmatpush2.bf16.msra.mxu0 %v166
  %190 = vmatprep.subr.bf16.mxu0 0
  %191 = vmatpush2.bf16.msra.mxu0 %v145
  %192 = vmatprep.subr.bf16.mxu0 0
  %193 = vmatpush2.bf16.msra.mxu0 %v144
  %194 = vmatprep.subr.bf16.mxu0 0
  %195 = vmatpush2.bf16.msra.mxu0 %v143
  %196 = vmatprep.subr.bf16.mxu0 0
  %197 = vmatpush2.bf16.msra.mxu0 %v142
  %198 = vmatprep.subr.bf16.mxu0 0
  %199 = vmatpush2.bf16.msra.mxu0 %v141
  %200 = vmatprep.mubr.bf16.mxu0 %v162
  %201 = vmatmul.mubr.bf16.gmra.mxu0 %v70
  %v202 = vpop.f32.mrf.mxu0
  %v203 = vadd.f32 %v54, %v202
  %v204 = vpop.f32.mrf.mxu0
  %v205 = vpop.f32.mrf.mxu0
  %v206 = vpop.f32.mrf.mxu0
  %207 = vdwg.mxu0
  %208 = vst [vmem:[%s3] sm:$0x1] %v203
  // Predicated region
  $region14: #{temporal_decoder2_forward.40} parent=0 // pred_check
    _
  $region15: #{temporal_decoder2_forward.40} parent=0 // pred_check_branch
    %210 = sbr.rel (0) target = $region17
  $region16: #{temporal_decoder2_forward.40} parent=0 // pred_region
    _
  $region17: #{temporal_decoder2_forward.40} parent=0 // pred_fallthru
    _
  // Predicated region
  $region18: #{temporal_decoder2_forward.40} parent=0 // pred_check
    _
  $region19: #{temporal_decoder2_forward.40} parent=0 // pred_check_branch
    %212 = sbr.rel (0) target = $region21
  $region20: #{temporal_decoder2_forward.40} parent=0 // pred_region
    _
  $region21: #{temporal_decoder2_forward.40} parent=0 // pred_fallthru
    _

// kernel: temporal_decoder2_forward.46
$region0: #{temporal_decoder2_forward.46}
  #allocation0 [shape = 'u32[]', space=smem, size = 0x4, offset = 0x4, fixed_abs, tag = 'smem constant byte address 0x4 - core index']
  #allocation1 [shape = 'u32[144,128]{1,0:T(1,128)}', space=vmem, size = 0x12000, scoped, tag = 'internal scratch']
  %s0 = inlined_call_operand.vmem [shape: bf16[2,2,16], index: 0, kind: input, shape index: {}]
  %s1 = inlined_call_operand.vmem [shape: bf16[2,16,2], index: 1, kind: input, shape index: {}]
  %s2 = inlined_call_operand.vmem [shape: f32[2,2,2], index: 2, kind: output, shape index: {0}]
  %s3 = inlined_call_operand.vmem [shape: f32[2,16,16], index: 3, kind: output, shape index: {1}]
  %4 = xla_tuple %s2, %s3
  %s5 = sld [smem:[#allocation0]]
  $region49: #{temporal_decoder2_forward.46} parent=0
    _
  %s7 = ssub.s32 1, %s5
  %s8 = scalar_select 0, %s7, %s5
  loop: start=0, step=1, limit=4
  $region2: #{temporal_decoder2_forward.46} parent=0 // loop_pre_header
    _
  $region3: #{temporal_decoder2_forward.46} parent=0 // loop_header
    %s10 = sphi 0, %s14
    %p11 = scmp.ge.s32.totalorder %s10, 4
    %s20 = sphi 0, %s22
    %s23 = sphi 0, %s20
    %s24 = sphi 0, %s23
    %s40 = sphi 0, %s24
    %s46 = sphi 0, %s48
    %s49 = sphi 0, %s46
    %s50 = sphi 0, %s49
    %s66 = sphi 0, %s50
    %s72 = sphi 0, %s74
    %s75 = sphi 0, %s72
    %s76 = sphi 0, %s75
    %s92 = sphi 0, %s76
    %s98 = sphi 0, %s100
    %s101 = sphi 0, %s98
    %s102 = sphi 0, %s101
    %s118 = sphi 0, %s102
  $region4: #{temporal_decoder2_forward.46} parent=0 // loop_header_branch
    %13 = sbr.rel (%p11) target = $region8
  $region5: #{temporal_decoder2_forward.46} parent=0 // loop_body
    %s15 = ssub.s32 %s10, 1
    %s16 = ssub.s32 %s10, 2
    %s17 = sadd.s32 %s10, 1
    %s18 = ssub.s32 %s10, %s17
    %p19 = scmp.eq.s32.totalorder %s18, 0
    %s21 = sadd.s32 %s20, 1
    %s22 = scalar_select %p19, %s20, %s21
    %p25 = pneg %p19
    %p26 = scmp.eq.s32.totalorder %s10, 1
    %p27 = por %p25, %p26
    %p28 = scmp.ne.s32.totalorder %s20, %s23
    %p29 = scmp.eq.s32.totalorder %s10, 0
    %p30 = por %p28, %p29
    %p31 = scmp.ne.s32.totalorder %s20, %s23
    %p32 = scmp.eq.s32.totalorder %s15, 1
    %p33 = por %p31, %p32
    %p34 = scmp.ne.s32.totalorder %s23, %s24
    %p35 = scmp.eq.s32.totalorder %s15, 0
    %p36 = por %p34, %p35
    %p37 = scmp.ne.s32.totalorder %s23, %s24
    %p38 = scmp.eq.s32.totalorder %s16, 1
    %p39 = por %p37, %p38
    %p41 = scmp.ne.s32.totalorder %s24, %s40
    %p42 = scmp.eq.s32.totalorder %s16, 0
    %p43 = por %p41, %p42
    %s44 = ssub.s32 %s10, %s17
    %p45 = scmp.eq.s32.totalorder %s44, 0
    %s47 = sadd.s32 %s46, 1
    %s48 = scalar_select %p45, %s46, %s47
    %p51 = pneg %p45
    %p52 = scmp.eq.s32.totalorder %s10, 1
    %p53 = por %p51, %p52
    %p54 = scmp.ne.s32.totalorder %s46, %s49
    %p55 = scmp.eq.s32.totalorder %s10, 0
    %p56 = por %p54, %p55
    %p57 = scmp.ne.s32.totalorder %s46, %s49
    %p58 = scmp.eq.s32.totalorder %s15, 1
    %p59 = por %p57, %p58
    %p60 = scmp.ne.s32.totalorder %s49, %s50
    %p61 = scmp.eq.s32.totalorder %s15, 0
    %p62 = por %p60, %p61
    %p63 = scmp.ne.s32.totalorder %s49, %s50
    %p64 = scmp.eq.s32.totalorder %s16, 1
    %p65 = por %p63, %p64
    %p67 = scmp.ne.s32.totalorder %s50, %s66
    %p68 = scmp.eq.s32.totalorder %s16, 0
    %p69 = por %p67, %p68
    %s70 = ssub.s32 %s10, %s17
    %p71 = scmp.eq.s32.totalorder %s70, 0
    %s73 = sadd.s32 %s72, 1
    %s74 = scalar_select %p71, %s72, %s73
    %p77 = pneg %p71
    %p78 = scmp.eq.s32.totalorder %s10, 1
    %p79 = por %p77, %p78
    %p80 = scmp.ne.s32.totalorder %s72, %s75
    %p81 = scmp.eq.s32.totalorder %s10, 0
    %p82 = por %p80, %p81
    %p83 = scmp.ne.s32.totalorder %s72, %s75
    %p84 = scmp.eq.s32.totalorder %s15, 1
    %p85 = por %p83, %p84
    %p86 = scmp.ne.s32.totalorder %s75, %s76
    %p87 = scmp.eq.s32.totalorder %s15, 0
    %p88 = por %p86, %p87
    %p89 = scmp.ne.s32.totalorder %s75, %s76
    %p90 = scmp.eq.s32.totalorder %s16, 1
    %p91 = por %p89, %p90
    %p93 = scmp.ne.s32.totalorder %s76, %s92
    %p94 = scmp.eq.s32.totalorder %s16, 0
    %p95 = por %p93, %p94
    %s96 = ssub.s32 %s10, %s17
    %p97 = scmp.eq.s32.totalorder %s96, 0
    %s99 = sadd.s32 %s98, 1
    %s100 = scalar_select %p97, %s98, %s99
    %p103 = pneg %p97
    %p104 = scmp.eq.s32.totalorder %s10, 1
    %p105 = por %p103, %p104
    %p106 = scmp.ne.s32.totalorder %s98, %s101
    %p107 = scmp.eq.s32.totalorder %s10, 0
    %p108 = por %p106, %p107
    %p109 = scmp.ne.s32.totalorder %s98, %s101
    %p110 = scmp.eq.s32.totalorder %s15, 1
    %p111 = por %p109, %p110
    %p112 = scmp.ne.s32.totalorder %s101, %s102
    %p113 = scmp.eq.s32.totalorder %s15, 0
    %p114 = por %p112, %p113
    %p115 = scmp.ne.s32.totalorder %s101, %s102
    %p116 = scmp.eq.s32.totalorder %s16, 1
    %p117 = por %p115, %p116
    %p119 = scmp.ne.s32.totalorder %s102, %s118
    %p120 = scmp.eq.s32.totalorder %s16, 0
    %p121 = por %p119, %p120
    %p122 = scmp.le.s32.totalorder 1, %s10
    %p123 = scmp.lt.s32.totalorder %s10, 3
    %p124 = pnand %p122, %p123
    %p125 = pneg %p124
    // Predicated region
    $region9: #{temporal_decoder2_forward.46} parent=5 // pred_check
      _
    $region10: #{temporal_decoder2_forward.46} parent=5 // pred_check_branch
      %127 = sbr.rel (%p124) target = $region12
    $region11: #{temporal_decoder2_forward.46} parent=5 // pred_region
      %s128 = ssub.s32 %s10, 1
    $region12: #{temporal_decoder2_forward.46} parent=5 // pred_fallthru
      _
    %p129 = scmp.lt.s32.totalorder %s10, 2
    // Predicated region
    $region13: #{temporal_decoder2_forward.46} parent=5 // pred_check
      %p130 = pneg %p129
    $region14: #{temporal_decoder2_forward.46} parent=5 // pred_check_branch
      %132 = sbr.rel (%p130) target = $region16
    $region15: #{temporal_decoder2_forward.46} parent=5 // pred_region
      // Predicated region
      $region17: #{temporal_decoder2_forward.46} parent=15 // pred_check
        %p133 = pneg %p30
      $region18: #{temporal_decoder2_forward.46} parent=15 // pred_check_branch
        %135 = sbr.rel (%p133) target = $region20
      $region19: #{temporal_decoder2_forward.46} parent=15 // pred_region
        %p136 = scmp.lt.s32.totalorder %s10, 1
        %s137 = scalar_select %p136, %s10, 1
        %s138 = scalar_lea.vmem %s0, %s137
      $region20: #{temporal_decoder2_forward.46} parent=15 // pred_fallthru
        _
      // Predicated region
      $region21: #{temporal_decoder2_forward.46} parent=15 // pred_check
        %p139 = pneg %p56
      $region22: #{temporal_decoder2_forward.46} parent=15 // pred_check_branch
        %141 = sbr.rel (%p139) target = $region24
      $region23: #{temporal_decoder2_forward.46} parent=15 // pred_region
        %p142 = scmp.lt.s32.totalorder %s10, 1
        %s143 = scalar_select %p142, %s10, 1
        %s144 = smul.addr %s143, 2
        %s145 = smul.addr %s144, 4
        %s146 = scalar_lea.vmem %s1, %s145
      $region24: #{temporal_decoder2_forward.46} parent=15 // pred_fallthru
        _
    $region16: #{temporal_decoder2_forward.46} parent=5 // pred_fallthru
      _
    %p147 = scmp.le.s32.totalorder 1, %s10
    %p148 = scmp.lt.s32.totalorder %s10, 3
    %p149 = pnand %p147, %p148
    %p150 = pneg %p149
    // Predicated region
    $region25: #{temporal_decoder2_forward.46} parent=5 // pred_check
      _
    $region26: #{temporal_decoder2_forward.46} parent=5 // pred_check_branch
      %152 = sbr.rel (%p149) target = $region28
    $region27: #{temporal_decoder2_forward.46} parent=5 // pred_region
      %s153 = ssub.s32 %s10, 1
      %p154 = scmp.lt.s32.totalorder %s15, 1
      %s155 = scalar_select %p154, %s15, 1
      %s156 = scalar_lea.vmem %s0, %s155
      %p157 = pneg %p36
      %p158 = pneg %p33
      %p159 = scmp.lt.s32.totalorder %s15, 1
      %s160 = scalar_select %p159, %s15, 1
      %s161 = smul.addr %s160, 2
      %s162 = smul.addr %s161, 4
      %s163 = scalar_lea.vmem %s1, %s162
      %p164 = pneg %p62
      %p165 = pneg %p59
      %p166 = pneg %p88
      %p167 = pneg %p85
      %p168 = scmp.lt.s32.totalorder %s15, 1
      %s169 = scalar_select %p168, %s15, 1
      %s170 = smul.addr %s169, 2
      %s171 = scalar_lea.vmem %s2, %s170
      %p172 = pneg %p114
      %p173 = pneg %p111
      %p174 = scmp.lt.s32.totalorder %s15, 1
      %s175 = scalar_select %p174, %s15, 1
      %s176 = smul.addr %s175, 2
      %s177 = smul.addr %s176, 8
      %s178 = scalar_lea.vmem %s3, %s177
      %p179 = scmp.lt.s32.totalorder %s15, 1
      %s180 = scalar_select %p179, %s15, 1
      %s181 = scalar_lea.vmem %s0, %s180
      %p182 = scmp.lt.s32.totalorder %s15, 1
      %s183 = scalar_select %p182, %s15, 1
      %s184 = smul.addr %s183, 2
      %s185 = smul.addr %s184, 4
      %s186 = scalar_lea.vmem %s1, %s185
      %p187 = scmp.lt.s32.totalorder %s15, 1
      %s188 = scalar_select %p187, %s15, 1
      %s189 = smul.addr %s188, 2
      %s190 = scalar_lea.vmem %s2, %s189
      %p191 = scmp.lt.s32.totalorder %s15, 1
      %s192 = scalar_select %p191, %s15, 1
      %s193 = smul.addr %s192, 2
      %s194 = smul.addr %s193, 8
      %s195 = scalar_lea.vmem %s3, %s194
      %v197 = vld [vmem:[%s181] sm:$0x1]
      %v198 = vld [vmem:[%s186] sm:$0xf]
      %v199 = vld [vmem:[%s186 + $0x4] sm:$0xf]
      %v202 = vunpack.c.l.b16 %v198
      %v203 = vunpack.c.l.b16 %v199
      %v204 = vpack.c.b16 %v203, %v202
      %vm206 = vcmask 130048
      %v208 = vsel %vm206, %v197, 0
      %210 = vmatprep.subr.bf16.mxu0 0
      %211 = vmatpush1.bf16.msra.mxu0 0
      %212 = vmatprep.subr.bf16.mxu0 0
      %213 = vmatpush1.bf16.msra.mxu0 0
      %214 = vmatprep.subr.bf16.mxu0 0
      %215 = vmatpush1.bf16.msra.mxu0 0
      %216 = vmatprep.subr.bf16.mxu0 0
      %217 = vmatpush1.bf16.msra.mxu0 0
      %218 = vmatprep.subr.bf16.mxu0 0
      %219 = vmatpush1.bf16.msra.mxu0 0
      %220 = vmatprep.subr.bf16.mxu0 0
      %221 = vmatpush1.bf16.msra.mxu0 0
      %222 = vmatprep.subr.bf16.mxu0 0
      %223 = vmatpush1.bf16.msra.mxu0 0
      %224 = vmatprep.subr.bf16.mxu0 0
      %225 = vmatpush1.bf16.msra.mxu0 %v204
      %226 = vmatprep.subr.bf16.mxu0 0
      %227 = vmatpush2.bf16.msra.mxu0 0
      %228 = vmatprep.subr.bf16.mxu0 0
      %229 = vmatpush2.bf16.msra.mxu0 0
      %230 = vmatprep.subr.bf16.mxu0 0
      %231 = vmatpush2.bf16.msra.mxu0 0
      %232 = vmatprep.subr.bf16.mxu0 0
      %233 = vmatpush2.bf16.msra.mxu0 0
      %234 = vmatprep.subr.bf16.mxu0 0
      %235 = vmatpush2.bf16.msra.mxu0 0
      %236 = vmatprep.subr.bf16.mxu0 0
      %237 = vmatpush2.bf16.msra.mxu0 0
      %238 = vmatprep.subr.bf16.mxu0 0
      %239 = vmatpush2.bf16.msra.mxu0 0
      %240 = vmatprep.subr.bf16.mxu0 0
      %241 = vmatpush2.bf16.msra.mxu0 0
      %242 = vmatprep.mubr.bf16.mxu0 0
      %243 = vmatmul.mubr.bf16.gmra.mxu0 %v208
      %v244 = vpop.f32.mrf.mxu0
      %v245 = vadd.f32 0.0, %v244
      %v246 = vpop.f32.mrf.mxu0
      %v247 = vpop.f32.mrf.mxu0
      %v248 = vpop.f32.mrf.mxu0
      %249 = vdwg.mxu0
      %vm250 = vcmask 9216
      %251 = vst.msk [vmem:[%s190] sm:$0x3] %vm250, %v245
      %vm252 = vcmask 15360
      %v254 = vsel %vm252, %v204, 0
      %vm256 = vcmask 1040384
      %v257 = vsel %vm256, %v197, 0
      %259 = vmatprep.subr.bf16.mxu0 0
      %260 = vmatpush1.bf16.msra.mxu0 0
      %261 = vmatprep.subr.bf16.mxu0 0
      %262 = vmatpush1.bf16.msra.mxu0 0
      %263 = vmatprep.subr.bf16.mxu0 0
      %264 = vmatpush1.bf16.msra.mxu0 0
      %265 = vmatprep.subr.bf16.mxu0 0
      %266 = vmatpush1.bf16.msra.mxu0 0
      %267 = vmatprep.subr.bf16.mxu0 0
      %268 = vmatpush1.bf16.msra.mxu0 0
      %269 = vmatprep.subr.bf16.mxu0 0
      %270 = vmatpush1.bf16.msra.mxu0 0
      %271 = vmatprep.subr.bf16.mxu0 0
      %272 = vmatpush1.bf16.msra.mxu0 0
      %273 = vmatprep.subr.bf16.mxu0 0
      %274 = vmatpush1.bf16.msra.mxu0 %v257
      %275 = vmatprep.subr.bf16.mxu0 0
      %276 = vmatpush2.bf16.msra.mxu0 0
      %277 = vmatprep.subr.bf16.mxu0 0
      %278 = vmatpush2.bf16.msra.mxu0 0
      %279 = vmatprep.subr.bf16.mxu0 0
      %280 = vmatpush2.bf16.msra.mxu0 0
      %281 = vmatprep.subr.bf16.mxu0 0
      %282 = vmatpush2.bf16.msra.mxu0 0
      %283 = vmatprep.subr.bf16.mxu0 0
      %284 = vmatpush2.bf16.msra.mxu0 0
      %285 = vmatprep.subr.bf16.mxu0 0
      %286 = vmatpush2.bf16.msra.mxu0 0
      %287 = vmatprep.subr.bf16.mxu0 0
      %288 = vmatpush2.bf16.msra.mxu0 0
      %289 = vmatprep.subr.bf16.mxu0 0
      %290 = vmatpush2.bf16.msra.mxu0 0
      %291 = vmatprep.mubr.bf16.mxu0 0
      %292 = vmatmul.mubr.bf16.gmra.mxu0 %v254
      %v293 = vpop.f32.mrf.mxu0
      %v294 = vadd.f32 0.0, %v293
      %v295 = vpop.f32.mrf.mxu0
      %v296 = vpop.f32.mrf.mxu0
      %v297 = vadd.f32 0.0, %v296
      %v298 = vpop.f32.mrf.mxu0
      %299 = vdwg.mxu0
      %300 = vst.msk [vmem:[%s195] sm:$0xff] %vm206, %v294
      %301 = vst.msk [vmem:[%s195 + $0x8] sm:$0xff] %vm206, %v297
      %p302 = scmp.lt.s32.totalorder %s15, 1
      %s303 = scalar_select %p302, %s15, 1
      %s304 = smul.addr %s303, 2
      %s305 = scalar_lea.vmem %s2, %s304
      %p306 = scmp.lt.s32.totalorder %s15, 1
      %s307 = scalar_select %p306, %s15, 1
      %s308 = smul.addr %s307, 2
      %s309 = smul.addr %s308, 8
      %s310 = scalar_lea.vmem %s3, %s309
      // Predicated region
      $region29: #{temporal_decoder2_forward.46} parent=27 // pred_check
        %p311 = pneg %p85
      $region30: #{temporal_decoder2_forward.46} parent=27 // pred_check_branch
        %313 = sbr.rel (%p311) target = $region32
      $region31: #{temporal_decoder2_forward.46} parent=27 // pred_region
        _
      $region32: #{temporal_decoder2_forward.46} parent=27 // pred_fallthru
        _
      // Predicated region
      $region33: #{temporal_decoder2_forward.46} parent=27 // pred_check
        %p314 = pneg %p111
      $region34: #{temporal_decoder2_forward.46} parent=27 // pred_check_branch
        %316 = sbr.rel (%p314) target = $region36
      $region35: #{temporal_decoder2_forward.46} parent=27 // pred_region
        _
      $region36: #{temporal_decoder2_forward.46} parent=27 // pred_fallthru
        _
    $region28: #{temporal_decoder2_forward.46} parent=5 // pred_fallthru
      _
    %p317 = scmp.le.s32.totalorder 2, %s10
    // Predicated region
    $region37: #{temporal_decoder2_forward.46} parent=5 // pred_check
      %p318 = pneg %p317
    $region38: #{temporal_decoder2_forward.46} parent=5 // pred_check_branch
      %320 = sbr.rel (%p318) target = $region40
    $region39: #{temporal_decoder2_forward.46} parent=5 // pred_region
      %s321 = ssub.s32 %s10, 2
      // Predicated region
      $region41: #{temporal_decoder2_forward.46} parent=39 // pred_check
        %p322 = pneg %p91
      $region42: #{temporal_decoder2_forward.46} parent=39 // pred_check_branch
        %324 = sbr.rel (%p322) target = $region44
      $region43: #{temporal_decoder2_forward.46} parent=39 // pred_region
        %p325 = scmp.lt.s32.totalorder %s16, 1
        %s326 = scalar_select %p325, %s16, 1
        %s327 = smul.addr %s326, 2
        %s328 = scalar_lea.vmem %s2, %s327
      $region44: #{temporal_decoder2_forward.46} parent=39 // pred_fallthru
        _
      // Predicated region
      $region45: #{temporal_decoder2_forward.46} parent=39 // pred_check
        %p329 = pneg %p117
      $region46: #{temporal_decoder2_forward.46} parent=39 // pred_check_branch
        %331 = sbr.rel (%p329) target = $region48
      $region47: #{temporal_decoder2_forward.46} parent=39 // pred_region
        %p332 = scmp.lt.s32.totalorder %s16, 1
        %s333 = scalar_select %p332, %s16, 1
        %s334 = smul.addr %s333, 2
        %s335 = smul.addr %s334, 8
        %s336 = scalar_lea.vmem %s3, %s335
      $region48: #{temporal_decoder2_forward.46} parent=39 // pred_fallthru
        _
    $region40: #{temporal_decoder2_forward.46} parent=5 // pred_fallthru
      _
  $region6: #{temporal_decoder2_forward.46} parent=0 // loop_footer
    %s14 = sadd.s32 1, %s10
  $region7: #{temporal_decoder2_forward.46} parent=0 // loop_footer_branch
    %9 = sbr.rel target = $region3
  $region8: #{temporal_decoder2_forward.46} parent=0 // loop_exit
    _

// kernel: temporal_decoder2_forward.47
$region0: #{temporal_decoder2_forward.47}
  #allocation0 [shape = 'u32[]', space=smem, size = 0x4, offset = 0x4, fixed_abs, tag = 'smem constant byte address 0x4 - core index']
  #allocation1 [shape = 'u32[144,128]{1,0:T(1,128)}', space=vmem, size = 0x12000, scoped, tag = 'internal scratch']
  %s0 = inlined_call_operand.vmem [shape: bf16[2,2,2], index: 0, kind: input, shape index: {}]
  %s1 = inlined_call_operand.vmem [shape: bf16[2,16,16], index: 1, kind: input, shape index: {}]
  %s2 = inlined_call_operand.vmem [shape: bf16[8,2,2,16], index: 2, kind: input, shape index: {}]
  %s3 = inlined_call_operand.vmem [shape: f32[8,2,2,16], index: 3, kind: output, shape index: {}]
  %s4 = sld [smem:[#allocation0]]
  $region45: #{temporal_decoder2_forward.47} parent=0
    _
  %s6 = ssub.s32 1, %s4
  %s7 = scalar_select 0, %s6, %s4
  loop: start=0, step=1, limit=18
  $region2: #{temporal_decoder2_forward.47} parent=0 // loop_pre_header
    _
  $region3: #{temporal_decoder2_forward.47} parent=0 // loop_header
    %s9 = sphi 0, %s13
    %p10 = scmp.ge.s32.totalorder %s9, 18
    %s16 = sphi 0, %s28
    %s17 = sphi 0, %s24
    %s18 = sphi 0, %s16
    %s19 = sphi 0, %s17
    %s20 = sphi 0, %s18
    %s21 = sphi 0, %s19
    %s31 = sphi 0, %s33
    %s34 = sphi 0, %s31
    %s35 = sphi 0, %s34
    %s51 = sphi 0, %s35
    %s57 = sphi 0, %s59
    %s60 = sphi 0, %s57
    %s61 = sphi 0, %s60
    %s77 = sphi 0, %s61
    %s85 = sphi 0, %s87
    %s88 = sphi 0, %s85
    %s89 = sphi 0, %s88
    %s105 = sphi 0, %s89
    %s113 = sphi 0, %s115
    %s116 = sphi 0, %s113
    %s117 = sphi 0, %s116
    %s133 = sphi 0, %s117
  $region4: #{temporal_decoder2_forward.47} parent=0 // loop_header_branch
    %12 = sbr.rel (%p10) target = $region8
  $region5: #{temporal_decoder2_forward.47} parent=0 // loop_body
    %s14 = ssub.s32 %s9, 1
    %s15 = ssub.s32 %s9, 2
    %s22 = sadd.s32 1, %s17
    %p23 = scmp.ge.s32.totalorder %s22, 8
    %s24 = scalar_select %p23, 0, %s22
    %s25 = sadd.s32 1, %s16
    %s26 = scalar_select %p23, %s25, %s16
    %p27 = scmp.ge.s32.totalorder %s26, 2
    %s28 = scalar_select %p27, 0, %s26
    %s29 = ssub.s32 %s16, %s28
    %p30 = scmp.eq.s32.totalorder %s29, 0
    %s32 = sadd.s32 %s31, 1
    %s33 = scalar_select %p30, %s31, %s32
    %p36 = pneg %p30
    %p37 = scmp.eq.s32.totalorder %s9, 15
    %p38 = por %p36, %p37
    %p39 = scmp.ne.s32.totalorder %s31, %s34
    %p40 = scmp.eq.s32.totalorder %s9, 0
    %p41 = por %p39, %p40
    %p42 = scmp.ne.s32.totalorder %s31, %s34
    %p43 = scmp.eq.s32.totalorder %s14, 15
    %p44 = por %p42, %p43
    %p45 = scmp.ne.s32.totalorder %s34, %s35
    %p46 = scmp.eq.s32.totalorder %s14, 0
    %p47 = por %p45, %p46
    %p48 = scmp.ne.s32.totalorder %s34, %s35
    %p49 = scmp.eq.s32.totalorder %s15, 15
    %p50 = por %p48, %p49
    %p52 = scmp.ne.s32.totalorder %s35, %s51
    %p53 = scmp.eq.s32.totalorder %s15, 0
    %p54 = por %p52, %p53
    %s55 = ssub.s32 %s16, %s28
    %p56 = scmp.eq.s32.totalorder %s55, 0
    %s58 = sadd.s32 %s57, 1
    %s59 = scalar_select %p56, %s57, %s58
    %p62 = pneg %p56
    %p63 = scmp.eq.s32.totalorder %s9, 15
    %p64 = por %p62, %p63
    %p65 = scmp.ne.s32.totalorder %s57, %s60
    %p66 = scmp.eq.s32.totalorder %s9, 0
    %p67 = por %p65, %p66
    %p68 = scmp.ne.s32.totalorder %s57, %s60
    %p69 = scmp.eq.s32.totalorder %s14, 15
    %p70 = por %p68, %p69
    %p71 = scmp.ne.s32.totalorder %s60, %s61
    %p72 = scmp.eq.s32.totalorder %s14, 0
    %p73 = por %p71, %p72
    %p74 = scmp.ne.s32.totalorder %s60, %s61
    %p75 = scmp.eq.s32.totalorder %s15, 15
    %p76 = por %p74, %p75
    %p78 = scmp.ne.s32.totalorder %s61, %s77
    %p79 = scmp.eq.s32.totalorder %s15, 0
    %p80 = por %p78, %p79
    %s81 = ssub.s32 %s17, %s24
    %s82 = ssub.s32 %s16, %s28
    %s83 = sor.u32 %s81, %s82
    %p84 = scmp.eq.s32.totalorder %s83, 0
    %s86 = sadd.s32 %s85, 1
    %s87 = scalar_select %p84, %s85, %s86
    %p90 = pneg %p84
    %p91 = scmp.eq.s32.totalorder %s9, 15
    %p92 = por %p90, %p91
    %p93 = scmp.ne.s32.totalorder %s85, %s88
    %p94 = scmp.eq.s32.totalorder %s9, 0
    %p95 = por %p93, %p94
    %p96 = scmp.ne.s32.totalorder %s85, %s88
    %p97 = scmp.eq.s32.totalorder %s14, 15
    %p98 = por %p96, %p97
    %p99 = scmp.ne.s32.totalorder %s88, %s89
    %p100 = scmp.eq.s32.totalorder %s14, 0
    %p101 = por %p99, %p100
    %p102 = scmp.ne.s32.totalorder %s88, %s89
    %p103 = scmp.eq.s32.totalorder %s15, 15
    %p104 = por %p102, %p103
    %p106 = scmp.ne.s32.totalorder %s89, %s105
    %p107 = scmp.eq.s32.totalorder %s15, 0
    %p108 = por %p106, %p107
    %s109 = ssub.s32 %s17, %s24
    %s110 = ssub.s32 %s16, %s28
    %s111 = sor.u32 %s109, %s110
    %p112 = scmp.eq.s32.totalorder %s111, 0
    %s114 = sadd.s32 %s113, 1
    %s115 = scalar_select %p112, %s113, %s114
    %p118 = pneg %p112
    %p119 = scmp.eq.s32.totalorder %s9, 15
    %p120 = por %p118, %p119
    %p121 = scmp.ne.s32.totalorder %s113, %s116
    %p122 = scmp.eq.s32.totalorder %s9, 0
    %p123 = por %p121, %p122
    %p124 = scmp.ne.s32.totalorder %s113, %s116
    %p125 = scmp.eq.s32.totalorder %s14, 15
    %p126 = por %p124, %p125
    %p127 = scmp.ne.s32.totalorder %s116, %s117
    %p128 = scmp.eq.s32.totalorder %s14, 0
    %p129 = por %p127, %p128
    %p130 = scmp.ne.s32.totalorder %s116, %s117
    %p131 = scmp.eq.s32.totalorder %s15, 15
    %p132 = por %p130, %p131
    %p134 = scmp.ne.s32.totalorder %s117, %s133
    %p135 = scmp.eq.s32.totalorder %s15, 0
    %p136 = por %p134, %p135
    %p137 = scmp.le.s32.totalorder 1, %s9
    %p138 = scmp.lt.s32.totalorder %s9, 17
    %p139 = pnand %p137, %p138
    %p140 = pneg %p139
    // Predicated region
    $region9: #{temporal_decoder2_forward.47} parent=5 // pred_check
      _
    $region10: #{temporal_decoder2_forward.47} parent=5 // pred_check_branch
      %142 = sbr.rel (%p139) target = $region12
    $region11: #{temporal_decoder2_forward.47} parent=5 // pred_region
      %s143 = ssub.s32 %s9, 1
    $region12: #{temporal_decoder2_forward.47} parent=5 // pred_fallthru
      _
    %p144 = scmp.lt.s32.totalorder %s9, 16
    // Predicated region
    $region13: #{temporal_decoder2_forward.47} parent=5 // pred_check
      %p145 = pneg %p144
    $region14: #{temporal_decoder2_forward.47} parent=5 // pred_check_branch
      %147 = sbr.rel (%p145) target = $region16
    $region15: #{temporal_decoder2_forward.47} parent=5 // pred_region
      // Predicated region
      $region17: #{temporal_decoder2_forward.47} parent=15 // pred_check
        %p148 = pneg %p41
      $region18: #{temporal_decoder2_forward.47} parent=15 // pred_check_branch
        %150 = sbr.rel (%p148) target = $region20
      $region19: #{temporal_decoder2_forward.47} parent=15 // pred_region
        %p151 = scmp.lt.s32.totalorder %s16, 1
        %s152 = scalar_select %p151, %s16, 1
        %s153 = scalar_lea.vmem %s0, %s152
      $region20: #{temporal_decoder2_forward.47} parent=15 // pred_fallthru
        _
      // Predicated region
      $region21: #{temporal_decoder2_forward.47} parent=15 // pred_check
        %p154 = pneg %p67
      $region22: #{temporal_decoder2_forward.47} parent=15 // pred_check_branch
        %156 = sbr.rel (%p154) target = $region24
      $region23: #{temporal_decoder2_forward.47} parent=15 // pred_region
        %p157 = scmp.lt.s32.totalorder %s16, 1
        %s158 = scalar_select %p157, %s16, 1
        %s159 = smul.addr %s158, 2
        %s160 = smul.addr %s159, 4
        %s161 = scalar_lea.vmem %s1, %s160
      $region24: #{temporal_decoder2_forward.47} parent=15 // pred_fallthru
        _
      // Predicated region
      $region25: #{temporal_decoder2_forward.47} parent=15 // pred_check
        %p162 = pneg %p95
      $region26: #{temporal_decoder2_forward.47} parent=15 // pred_check_branch
        %164 = sbr.rel (%p162) target = $region28
      $region27: #{temporal_decoder2_forward.47} parent=15 // pred_region
        %p165 = scmp.lt.s32.totalorder %s17, 7
        %s166 = scalar_select %p165, %s17, 7
        %p167 = scmp.lt.s32.totalorder %s16, 1
        %s168 = scalar_select %p167, %s16, 1
        %s169 = smul.addr %s166, 2
        %s170 = sadd.s32 %s168, %s169
        %s171 = scalar_lea.vmem %s2, %s170
      $region28: #{temporal_decoder2_forward.47} parent=15 // pred_fallthru
        _
    $region16: #{temporal_decoder2_forward.47} parent=5 // pred_fallthru
      _
    %p172 = scmp.le.s32.totalorder 1, %s9
    %p173 = scmp.lt.s32.totalorder %s9, 17
    %p174 = pnand %p172, %p173
    %p175 = pneg %p174
    // Predicated region
    $region29: #{temporal_decoder2_forward.47} parent=5 // pred_check
      _
    $region30: #{temporal_decoder2_forward.47} parent=5 // pred_check_branch
      %177 = sbr.rel (%p174) target = $region32
    $region31: #{temporal_decoder2_forward.47} parent=5 // pred_region
      %s178 = ssub.s32 %s9, 1
      %p179 = scmp.lt.s32.totalorder %s18, 1
      %s180 = scalar_select %p179, %s18, 1
      %s181 = scalar_lea.vmem %s0, %s180
      %p182 = pneg %p47
      %p183 = pneg %p44
      %p184 = scmp.lt.s32.totalorder %s18, 1
      %s185 = scalar_select %p184, %s18, 1
      %s186 = smul.addr %s185, 2
      %s187 = smul.addr %s186, 4
      %s188 = scalar_lea.vmem %s1, %s187
      %p189 = pneg %p73
      %p190 = pneg %p70
      %p191 = scmp.lt.s32.totalorder %s19, 7
      %s192 = scalar_select %p191, %s19, 7
      %p193 = scmp.lt.s32.totalorder %s18, 1
      %s194 = scalar_select %p193, %s18, 1
      %s195 = smul.addr %s192, 2
      %s196 = sadd.s32 %s194, %s195
      %s197 = scalar_lea.vmem %s2, %s196
      %p198 = pneg %p101
      %p199 = pneg %p98
      %p200 = pneg %p129
      %p201 = pneg %p126
      %p202 = scmp.lt.s32.totalorder %s19, 7
      %s203 = scalar_select %p202, %s19, 7
      %p204 = scmp.lt.s32.totalorder %s18, 1
      %s205 = scalar_select %p204, %s18, 1
      %s206 = smul.addr %s203, 2
      %s207 = sadd.s32 %s205, %s206
      %s208 = smul.addr %s207, 2
      %s209 = scalar_lea.vmem %s3, %s208
      %p210 = scmp.lt.s32.totalorder %s18, 1
      %s211 = scalar_select %p210, %s18, 1
      %s212 = scalar_lea.vmem %s0, %s211
      %p213 = scmp.lt.s32.totalorder %s18, 1
      %s214 = scalar_select %p213, %s18, 1
      %s215 = smul.addr %s214, 2
      %s216 = smul.addr %s215, 4
      %s217 = scalar_lea.vmem %s1, %s216
      %p218 = scmp.lt.s32.totalorder %s19, 7
      %s219 = scalar_select %p218, %s19, 7
      %p220 = scmp.lt.s32.totalorder %s18, 1
      %s221 = scalar_select %p220, %s18, 1
      %s222 = smul.addr %s219, 2
      %s223 = sadd.s32 %s221, %s222
      %s224 = scalar_lea.vmem %s2, %s223
      %p225 = scmp.lt.s32.totalorder %s19, 7
      %s226 = scalar_select %p225, %s19, 7
      %p227 = scmp.lt.s32.totalorder %s18, 1
      %s228 = scalar_select %p227, %s18, 1
      %s229 = smul.addr %s226, 2
      %s230 = sadd.s32 %s228, %s229
      %s231 = smul.addr %s230, 2
      %s232 = scalar_lea.vmem %s3, %s231
      %v234 = vld [vmem:[%s212] sm:$0x1]
      %v235 = vld [vmem:[%s217] sm:$0xf]
      %v236 = vld [vmem:[%s217 + $0x4] sm:$0xf]
      %v237 = vld [vmem:[%s224] sm:$0x1]
      %vm238 = vcmask 15360
      %v240 = vsel %vm238, %v234, 0
      %vm242 = vcmask 1040384
      %v244 = vsel %vm242, %v237, 0
      %246 = vmatprep.subr.bf16.mxu0 0
      %247 = vmatpush1.bf16.msra.mxu0 0
      %248 = vmatprep.subr.bf16.mxu0 0
      %249 = vmatpush1.bf16.msra.mxu0 0
      %250 = vmatprep.subr.bf16.mxu0 0
      %251 = vmatpush1.bf16.msra.mxu0 0
      %252 = vmatprep.subr.bf16.mxu0 0
      %253 = vmatpush1.bf16.msra.mxu0 0
      %254 = vmatprep.subr.bf16.mxu0 0
      %255 = vmatpush1.bf16.msra.mxu0 0
      %256 = vmatprep.subr.bf16.mxu0 0
      %257 = vmatpush1.bf16.msra.mxu0 0
      %258 = vmatprep.subr.bf16.mxu0 0
      %259 = vmatpush1.bf16.msra.mxu0 0
      %260 = vmatprep.subr.bf16.mxu0 0
      %261 = vmatpush1.bf16.msra.mxu0 %v244
      %262 = vmatprep.subr.bf16.mxu0 0
      %263 = vmatpush2.bf16.msra.mxu0 0
      %264 = vmatprep.subr.bf16.mxu0 0
      %265 = vmatpush2.bf16.msra.mxu0 0
      %266 = vmatprep.subr.bf16.mxu0 0
      %267 = vmatpush2.bf16.msra.mxu0 0
      %268 = vmatprep.subr.bf16.mxu0 0
      %269 = vmatpush2.bf16.msra.mxu0 0
      %270 = vmatprep.subr.bf16.mxu0 0
      %271 = vmatpush2.bf16.msra.mxu0 0
      %272 = vmatprep.subr.bf16.mxu0 0
      %273 = vmatpush2.bf16.msra.mxu0 0
      %274 = vmatprep.subr.bf16.mxu0 0
      %275 = vmatpush2.bf16.msra.mxu0 0
      %276 = vmatprep.subr.bf16.mxu0 0
      %277 = vmatpush2.bf16.msra.mxu0 0
      %278 = vmatprep.mubr.bf16.mxu0 0
      %279 = vmatmul.mubr.bf16.gmra.mxu0 %v240
      %v280 = vpop.f32.mrf.mxu0
      %v281 = vadd.f32 0.0, %v280
      %v282 = vpop.f32.mrf.mxu0
      %v283 = vpop.f32.mrf.mxu0
      %v284 = vpop.f32.mrf.mxu0
      %285 = vdwg.mxu0
      %v286 = vpack.c.bf16 %v281, %v281
      %v289 = vunpack.c.l.b16 %v235
      %v290 = vunpack.c.l.b16 %v236
      %v291 = vpack.c.b16 %v290, %v289
      %vm293 = vcmask 130048
      %v295 = vsel %vm293, %v286, 0
      %297 = vmatprep.subr.bf16.mxu0 0
      %298 = vmatpush1.bf16.msra.mxu0 0
      %299 = vmatprep.subr.bf16.mxu0 0
      %300 = vmatpush1.bf16.msra.mxu0 0
      %301 = vmatprep.subr.bf16.mxu0 0
      %302 = vmatpush1.bf16.msra.mxu0 0
      %303 = vmatprep.subr.bf16.mxu0 0
      %304 = vmatpush1.bf16.msra.mxu0 0
      %305 = vmatprep.subr.bf16.mxu0 0
      %306 = vmatpush1.bf16.msra.mxu0 0
      %307 = vmatprep.subr.bf16.mxu0 0
      %308 = vmatpush1.bf16.msra.mxu0 0
      %309 = vmatprep.subr.bf16.mxu0 0
      %310 = vmatpush1.bf16.msra.mxu0 0
      %311 = vmatprep.subr.bf16.mxu0 0
      %312 = vmatpush1.bf16.msra.mxu0 %v291
      %313 = vmatprep.subr.bf16.mxu0 0
      %314 = vmatpush2.bf16.msra.mxu0 0
      %315 = vmatprep.subr.bf16.mxu0 0
      %316 = vmatpush2.bf16.msra.mxu0 0
      %317 = vmatprep.subr.bf16.mxu0 0
      %318 = vmatpush2.bf16.msra.mxu0 0
      %319 = vmatprep.subr.bf16.mxu0 0
      %320 = vmatpush2.bf16.msra.mxu0 0
      %321 = vmatprep.subr.bf16.mxu0 0
      %322 = vmatpush2.bf16.msra.mxu0 0
      %323 = vmatprep.subr.bf16.mxu0 0
      %324 = vmatpush2.bf16.msra.mxu0 0
      %325 = vmatprep.subr.bf16.mxu0 0
      %326 = vmatpush2.bf16.msra.mxu0 0
      %327 = vmatprep.subr.bf16.mxu0 0
      %328 = vmatpush2.bf16.msra.mxu0 0
      %329 = vmatprep.mubr.bf16.mxu0 0
      %330 = vmatmul.mubr.bf16.gmra.mxu0 %v295
      %v331 = vpop.f32.mrf.mxu0
      %v332 = vadd.f32 0.0, %v331
      %v333 = vpop.f32.mrf.mxu0
      %v334 = vpop.f32.mrf.mxu0
      %v335 = vpop.f32.mrf.mxu0
      %336 = vdwg.mxu0
      %vm337 = vcmask 123904
      %338 = vst.msk [vmem:[%s232] sm:$0x3] %vm337, %v332
      %p339 = scmp.lt.s32.totalorder %s19, 7
      %s340 = scalar_select %p339, %s19, 7
      %p341 = scmp.lt.s32.totalorder %s18, 1
      %s342 = scalar_select %p341, %s18, 1
      %s343 = smul.addr %s340, 2
      %s344 = sadd.s32 %s342, %s343
      %s345 = smul.addr %s344, 2
      %s346 = scalar_lea.vmem %s3, %s345
      // Predicated region
      $region33: #{temporal_decoder2_forward.47} parent=31 // pred_check
        %p347 = pneg %p126
      $region34: #{temporal_decoder2_forward.47} parent=31 // pred_check_branch
        %349 = sbr.rel (%p347) target = $region36
      $region35: #{temporal_decoder2_forward.47} parent=31 // pred_region
        _
      $region36: #{temporal_decoder2_forward.47} parent=31 // pred_fallthru
        _
    $region32: #{temporal_decoder2_forward.47} parent=5 // pred_fallthru
      _
    %p350 = scmp.le.s32.totalorder 2, %s9
    // Predicated region
    $region37: #{temporal_decoder2_forward.47} parent=5 // pred_check
      %p351 = pneg %p350
    $region38: #{temporal_decoder2_forward.47} parent=5 // pred_check_branch
      %353 = sbr.rel (%p351) target = $region40
    $region39: #{temporal_decoder2_forward.47} parent=5 // pred_region
      %s354 = ssub.s32 %s9, 2
      // Predicated region
      $region41: #{temporal_decoder2_forward.47} parent=39 // pred_check
        %p355 = pneg %p132
      $region42: #{temporal_decoder2_forward.47} parent=39 // pred_check_branch
        %357 = sbr.rel (%p355) target = $region44
      $region43: #{temporal_decoder2_forward.47} parent=39 // pred_region
        %p358 = scmp.lt.s32.totalorder %s21, 7
        %s359 = scalar_select %p358, %s21, 7
        %p360 = scmp.lt.s32.totalorder %s20, 1
        %s361 = scalar_select %p360, %s20, 1
        %s362 = smul.addr %s359, 2
        %s363 = sadd.s32 %s361, %s362
        %s364 = smul.addr %s363, 2
        %s365 = scalar_lea.vmem %s3, %s364
      $region44: #{temporal_decoder2_forward.47} parent=39 // pred_fallthru
        _
    $region40: #{temporal_decoder2_forward.47} parent=5 // pred_fallthru
      _
  $region6: #{temporal_decoder2_forward.47} parent=0 // loop_footer
    %s13 = sadd.s32 1, %s9
  $region7: #{temporal_decoder2_forward.47} parent=0 // loop_footer_branch
    %8 = sbr.rel target = $region3
  $region8: #{temporal_decoder2_forward.47} parent=0 // loop_exit
    _

// kernel: temporal_decoder2_forward.52
$region0: #{temporal_decoder2_forward.52}
  #allocation0 [shape = 'u32[]', space=smem, size = 0x4, offset = 0x4, fixed_abs, tag = 'smem constant byte address 0x4 - core index']
  #allocation1 [shape = 'u32[144,128]{1,0:T(1,128)}', space=vmem, size = 0x12000, scoped, tag = 'internal scratch']
  %s0 = inlined_call_operand.vmem [shape: bf16[4,216], index: 0, kind: input, shape index: {}]
  %s1 = inlined_call_operand.vmem [shape: f32[4,1], index: 1, kind: input, shape index: {}]
  %s2 = inlined_call_operand.vmem [shape: bf16[216,128], index: 2, kind: input, shape index: {}]
  %s3 = inlined_call_operand.vmem [shape: f32[4,128], index: 3, kind: output, shape index: {}]
  %s4 = sld [smem:[#allocation0]]
  $region22: #{temporal_decoder2_forward.52} parent=0
    _
  %s6 = ssub.s32 1, %s4
  %s7 = scalar_select 0, %s6, %s4
  // Predicated region
  $region2: #{temporal_decoder2_forward.52} parent=0 // pred_check
    _
  $region3: #{temporal_decoder2_forward.52} parent=0 // pred_check_branch
    %9 = sbr.rel (0) target = $region5
  $region4: #{temporal_decoder2_forward.52} parent=0 // pred_region
    _
  $region5: #{temporal_decoder2_forward.52} parent=0 // pred_fallthru
    _
  // Predicated region
  $region6: #{temporal_decoder2_forward.52} parent=0 // pred_check
    _
  $region7: #{temporal_decoder2_forward.52} parent=0 // pred_check_branch
    %11 = sbr.rel (0) target = $region9
  $region8: #{temporal_decoder2_forward.52} parent=0 // pred_region
    _
  $region9: #{temporal_decoder2_forward.52} parent=0 // pred_fallthru
    _
  // Predicated region
  $region10: #{temporal_decoder2_forward.52} parent=0 // pred_check
    _
  $region11: #{temporal_decoder2_forward.52} parent=0 // pred_check_branch
    %13 = sbr.rel (0) target = $region13
  $region12: #{temporal_decoder2_forward.52} parent=0 // pred_region
    _
  $region13: #{temporal_decoder2_forward.52} parent=0 // pred_fallthru
    _
  %v15 = vld [vmem:[%s0] sm:$0xf]
  %v16 = vld [vmem:[%s2] sm:$0xf]
  %v17 = vld [vmem:[%s2 + $0x4] sm:$0xf]
  %v18 = vld [vmem:[%s2 + $0x8] sm:$0xf]
  %v19 = vld [vmem:[%s2 + $0xc] sm:$0xf]
  %v20 = vld [vmem:[%s2 + $0x10] sm:$0xf]
  %v21 = vld [vmem:[%s2 + $0x14] sm:$0xf]
  %v22 = vld [vmem:[%s2 + $0x18] sm:$0xf]
  %v23 = vld [vmem:[%s2 + $0x1c] sm:$0xf]
  %v24 = vld [vmem:[%s2 + $0x20] sm:$0xf]
  %v25 = vld [vmem:[%s2 + $0x24] sm:$0xf]
  %v26 = vld [vmem:[%s2 + $0x28] sm:$0xf]
  %v27 = vld [vmem:[%s2 + $0x2c] sm:$0xf]
  %v28 = vld [vmem:[%s2 + $0x30] sm:$0xf]
  %v29 = vld [vmem:[%s2 + $0x34] sm:$0xf]
  %v30 = vld [vmem:[%s2 + $0x38] sm:$0xf]
  %v31 = vld [vmem:[%s2 + $0x3c] sm:$0xf]
  %v32 = vld [vmem:[%s2 + $0x40] sm:$0xf]
  %v33 = vld [vmem:[%s2 + $0x44] sm:$0xf]
  %v34 = vld [vmem:[%s2 + $0x48] sm:$0xf]
  %v35 = vld [vmem:[%s2 + $0x4c] sm:$0xf]
  %v36 = vld [vmem:[%s2 + $0x50] sm:$0xf]
  %v37 = vld [vmem:[%s2 + $0x54] sm:$0xf]
  %v38 = vld [vmem:[%s2 + $0x58] sm:$0xf]
  %v39 = vld [vmem:[%s2 + $0x5c] sm:$0xf]
  %v40 = vld [vmem:[%s2 + $0x60] sm:$0xf]
  %v41 = vld [vmem:[%s2 + $0x64] sm:$0xf]
  %v42 = vld [vmem:[%s2 + $0x68] sm:$0xf]
  %v43 = vld [vmem:[%s1] sm:$0xf]
  %45 = vset.pattern.permute.xlu0 0
  %46 = vperm.xlu0 %45, %v43
  %v47 = vpop.permute.xlu0 %46
  %v51 = vunpack.c.l.s4 1983009808
  %v52 = vunpack.c.0.s8 %v51
  %v53 = vlaneseq
  %v54 = vshrl.u32 %v53, 7
  %v55 = vsub.s32 %v52, %v54
  %v56 = vrot.slane %v15, %v55
  %v57 = vcombine.high %v56, %v56
  %v86 = vunpack.c.l.b16 %v16
  %v87 = vunpack.c.l.b16 %v17
  %v88 = vunpack.c.l.b16 %v18
  %v89 = vunpack.c.l.b16 %v19
  %v90 = vunpack.c.l.b16 %v20
  %v91 = vunpack.c.l.b16 %v21
  %v92 = vunpack.c.l.b16 %v22
  %v93 = vunpack.c.l.b16 %v23
  %v94 = vunpack.c.l.b16 %v24
  %v95 = vunpack.c.l.b16 %v25
  %v96 = vunpack.c.l.b16 %v26
  %v97 = vunpack.c.l.b16 %v27
  %v98 = vunpack.c.l.b16 %v28
  %v99 = vunpack.c.l.b16 %v29
  %v100 = vunpack.c.l.b16 %v30
  %v101 = vunpack.c.l.b16 %v31
  %v102 = vunpack.c.l.b16 %v32
  %v103 = vunpack.c.l.b16 %v33
  %v104 = vunpack.c.l.b16 %v34
  %v105 = vunpack.c.l.b16 %v35
  %v106 = vunpack.c.l.b16 %v36
  %v107 = vunpack.c.l.b16 %v37
  %v108 = vunpack.c.l.b16 %v38
  %v109 = vunpack.c.l.b16 %v39
  %v110 = vunpack.c.l.b16 %v40
  %v111 = vunpack.c.l.b16 %v41
  %v112 = vunpack.c.l.b16 %v42
  %v113 = vpack.c.b16 %v87, %v86
  %v114 = vpack.c.b16 %v89, %v88
  %v115 = vpack.c.b16 %v91, %v90
  %v116 = vpack.c.b16 %v93, %v92
  %v117 = vpack.c.b16 %v95, %v94
  %v118 = vpack.c.b16 %v97, %v96
  %v119 = vpack.c.b16 %v99, %v98
  %v120 = vpack.c.b16 %v101, %v100
  %v121 = vpack.c.b16 %v103, %v102
  %v122 = vpack.c.b16 %v105, %v104
  %v123 = vpack.c.b16 %v107, %v106
  %v124 = vpack.c.b16 %v109, %v108
  %v125 = vpack.c.b16 %v111, %v110
  %v126 = vpack.c.b16 %v112, %v112
  %vm140 = vcmask 719872
  %v142 = vsel %vm140, %v57, 0
  %vm144 = vcmask 1043456
  %v146 = vsel %vm144, %v126, 0
  %148 = vmatprep.subr.bf16.mxu0 0
  %149 = vmatpush1.bf16.msra.mxu0 %v120
  %150 = vmatprep.subr.bf16.mxu0 0
  %151 = vmatpush1.bf16.msra.mxu0 %v119
  %152 = vmatprep.subr.bf16.mxu0 0
  %153 = vmatpush1.bf16.msra.mxu0 %v118
  %154 = vmatprep.subr.bf16.mxu0 0
  %155 = vmatpush1.bf16.msra.mxu0 %v117
  %156 = vmatprep.subr.bf16.mxu0 0
  %157 = vmatpush1.bf16.msra.mxu0 %v116
  %158 = vmatprep.subr.bf16.mxu0 0
  %159 = vmatpush1.bf16.msra.mxu0 %v115
  %160 = vmatprep.subr.bf16.mxu0 0
  %161 = vmatpush1.bf16.msra.mxu0 %v114
  %162 = vmatprep.subr.bf16.mxu0 0
  %163 = vmatpush1.bf16.msra.mxu0 %v113
  %164 = vmatprep.subr.bf16.mxu0 0
  %165 = vmatpush2.bf16.msra.mxu0 0
  %166 = vmatprep.subr.bf16.mxu0 0
  %167 = vmatpush2.bf16.msra.mxu0 0
  %168 = vmatprep.subr.bf16.mxu0 0
  %169 = vmatpush2.bf16.msra.mxu0 %v146
  %170 = vmatprep.subr.bf16.mxu0 0
  %171 = vmatpush2.bf16.msra.mxu0 %v125
  %172 = vmatprep.subr.bf16.mxu0 0
  %173 = vmatpush2.bf16.msra.mxu0 %v124
  %174 = vmatprep.subr.bf16.mxu0 0
  %175 = vmatpush2.bf16.msra.mxu0 %v123
  %176 = vmatprep.subr.bf16.mxu0 0
  %177 = vmatpush2.bf16.msra.mxu0 %v122
  %178 = vmatprep.subr.bf16.mxu0 0
  %179 = vmatpush2.bf16.msra.mxu0 %v121
  %180 = vmatprep.mubr.bf16.mxu0 %v142
  %181 = vmatmul.mubr.bf16.gmra.mxu0 %v56
  %v182 = vpop.f32.mrf.mxu0
  %v183 = vadd.f32 %v47, %v182
  %v184 = vpop.f32.mrf.mxu0
  %v185 = vpop.f32.mrf.mxu0
  %v186 = vpop.f32.mrf.mxu0
  %187 = vdwg.mxu0
  %v188 = vmax.f32 %v183, 0.0
  %189 = vst [vmem:[%s3] sm:$0xf] %v188
  // Predicated region
  $region14: #{temporal_decoder2_forward.52} parent=0 // pred_check
    _
  $region15: #{temporal_decoder2_forward.52} parent=0 // pred_check_branch
    %191 = sbr.rel (0) target = $region17
  $region16: #{temporal_decoder2_forward.52} parent=0 // pred_region
    _
  $region17: #{temporal_decoder2_forward.52} parent=0 // pred_fallthru
    _
  // Predicated region
  $region18: #{temporal_decoder2_forward.52} parent=0 // pred_check
    _
  $region19: #{temporal_decoder2_forward.52} parent=0 // pred_check_branch
    %193 = sbr.rel (0) target = $region21
  $region20: #{temporal_decoder2_forward.52} parent=0 // pred_region
    _
  $region21: #{temporal_decoder2_forward.52} parent=0 // pred_fallthru
    _

// kernel: temporal_decoder2_forward.51
$region0: #{temporal_decoder2_forward.51}
  #allocation0 [shape = 'u32[]', space=smem, size = 0x4, offset = 0x4, fixed_abs, tag = 'smem constant byte address 0x4 - core index']
  #allocation1 [shape = 'u32[144,128]{1,0:T(1,128)}', space=vmem, size = 0x12000, scoped, tag = 'internal scratch']
  %s0 = inlined_call_operand.vmem [shape: bf16[4,216], index: 0, kind: input, shape index: {}]
  %s1 = inlined_call_operand.vmem [shape: f32[4,1], index: 1, kind: input, shape index: {}]
  %s2 = inlined_call_operand.vmem [shape: bf16[216,128], index: 2, kind: input, shape index: {}]
  %s3 = inlined_call_operand.vmem [shape: f32[4,128], index: 3, kind: output, shape index: {}]
  %s4 = sld [smem:[#allocation0]]
  $region22: #{temporal_decoder2_forward.51} parent=0
    _
  %s6 = ssub.s32 1, %s4
  %s7 = scalar_select 0, %s6, %s4
  // Predicated region
  $region2: #{temporal_decoder2_forward.51} parent=0 // pred_check
    _
  $region3: #{temporal_decoder2_forward.51} parent=0 // pred_check_branch
    %9 = sbr.rel (0) target = $region5
  $region4: #{temporal_decoder2_forward.51} parent=0 // pred_region
    _
  $region5: #{temporal_decoder2_forward.51} parent=0 // pred_fallthru
    _
  // Predicated region
  $region6: #{temporal_decoder2_forward.51} parent=0 // pred_check
    _
  $region7: #{temporal_decoder2_forward.51} parent=0 // pred_check_branch
    %11 = sbr.rel (0) target = $region9
  $region8: #{temporal_decoder2_forward.51} parent=0 // pred_region
    _
  $region9: #{temporal_decoder2_forward.51} parent=0 // pred_fallthru
    _
  // Predicated region
  $region10: #{temporal_decoder2_forward.51} parent=0 // pred_check
    _
  $region11: #{temporal_decoder2_forward.51} parent=0 // pred_check_branch
    %13 = sbr.rel (0) target = $region13
  $region12: #{temporal_decoder2_forward.51} parent=0 // pred_region
    _
  $region13: #{temporal_decoder2_forward.51} parent=0 // pred_fallthru
    _
  %v15 = vld [vmem:[%s0] sm:$0xf]
  %v16 = vld [vmem:[%s2] sm:$0xf]
  %v17 = vld [vmem:[%s2 + $0x4] sm:$0xf]
  %v18 = vld [vmem:[%s2 + $0x8] sm:$0xf]
  %v19 = vld [vmem:[%s2 + $0xc] sm:$0xf]
  %v20 = vld [vmem:[%s2 + $0x10] sm:$0xf]
  %v21 = vld [vmem:[%s2 + $0x14] sm:$0xf]
  %v22 = vld [vmem:[%s2 + $0x18] sm:$0xf]
  %v23 = vld [vmem:[%s2 + $0x1c] sm:$0xf]
  %v24 = vld [vmem:[%s2 + $0x20] sm:$0xf]
  %v25 = vld [vmem:[%s2 + $0x24] sm:$0xf]
  %v26 = vld [vmem:[%s2 + $0x28] sm:$0xf]
  %v27 = vld [vmem:[%s2 + $0x2c] sm:$0xf]
  %v28 = vld [vmem:[%s2 + $0x30] sm:$0xf]
  %v29 = vld [vmem:[%s2 + $0x34] sm:$0xf]
  %v30 = vld [vmem:[%s2 + $0x38] sm:$0xf]
  %v31 = vld [vmem:[%s2 + $0x3c] sm:$0xf]
  %v32 = vld [vmem:[%s2 + $0x40] sm:$0xf]
  %v33 = vld [vmem:[%s2 + $0x44] sm:$0xf]
  %v34 = vld [vmem:[%s2 + $0x48] sm:$0xf]
  %v35 = vld [vmem:[%s2 + $0x4c] sm:$0xf]
  %v36 = vld [vmem:[%s2 + $0x50] sm:$0xf]
  %v37 = vld [vmem:[%s2 + $0x54] sm:$0xf]
  %v38 = vld [vmem:[%s2 + $0x58] sm:$0xf]
  %v39 = vld [vmem:[%s2 + $0x5c] sm:$0xf]
  %v40 = vld [vmem:[%s2 + $0x60] sm:$0xf]
  %v41 = vld [vmem:[%s2 + $0x64] sm:$0xf]
  %v42 = vld [vmem:[%s2 + $0x68] sm:$0xf]
  %v43 = vld [vmem:[%s1] sm:$0xf]
  %45 = vset.pattern.permute.xlu0 0
  %46 = vperm.xlu0 %45, %v43
  %v47 = vpop.permute.xlu0 %46
  %v51 = vunpack.c.l.s4 1983009808
  %v52 = vunpack.c.0.s8 %v51
  %v53 = vlaneseq
  %v54 = vshrl.u32 %v53, 7
  %v55 = vsub.s32 %v52, %v54
  %v56 = vrot.slane %v15, %v55
  %v57 = vcombine.high %v56, %v56
  %v86 = vunpack.c.l.b16 %v16
  %v87 = vunpack.c.l.b16 %v17
  %v88 = vunpack.c.l.b16 %v18
  %v89 = vunpack.c.l.b16 %v19
  %v90 = vunpack.c.l.b16 %v20
  %v91 = vunpack.c.l.b16 %v21
  %v92 = vunpack.c.l.b16 %v22
  %v93 = vunpack.c.l.b16 %v23
  %v94 = vunpack.c.l.b16 %v24
  %v95 = vunpack.c.l.b16 %v25
  %v96 = vunpack.c.l.b16 %v26
  %v97 = vunpack.c.l.b16 %v27
  %v98 = vunpack.c.l.b16 %v28
  %v99 = vunpack.c.l.b16 %v29
  %v100 = vunpack.c.l.b16 %v30
  %v101 = vunpack.c.l.b16 %v31
  %v102 = vunpack.c.l.b16 %v32
  %v103 = vunpack.c.l.b16 %v33
  %v104 = vunpack.c.l.b16 %v34
  %v105 = vunpack.c.l.b16 %v35
  %v106 = vunpack.c.l.b16 %v36
  %v107 = vunpack.c.l.b16 %v37
  %v108 = vunpack.c.l.b16 %v38
  %v109 = vunpack.c.l.b16 %v39
  %v110 = vunpack.c.l.b16 %v40
  %v111 = vunpack.c.l.b16 %v41
  %v112 = vunpack.c.l.b16 %v42
  %v113 = vpack.c.b16 %v87, %v86
  %v114 = vpack.c.b16 %v89, %v88
  %v115 = vpack.c.b16 %v91, %v90
  %v116 = vpack.c.b16 %v93, %v92
  %v117 = vpack.c.b16 %v95, %v94
  %v118 = vpack.c.b16 %v97, %v96
  %v119 = vpack.c.b16 %v99, %v98
  %v120 = vpack.c.b16 %v101, %v100
  %v121 = vpack.c.b16 %v103, %v102
  %v122 = vpack.c.b16 %v105, %v104
  %v123 = vpack.c.b16 %v107, %v106
  %v124 = vpack.c.b16 %v109, %v108
  %v125 = vpack.c.b16 %v111, %v110
  %v126 = vpack.c.b16 %v112, %v112
  %vm140 = vcmask 719872
  %v142 = vsel %vm140, %v57, 0
  %vm144 = vcmask 1043456
  %v146 = vsel %vm144, %v126, 0
  %148 = vmatprep.subr.bf16.mxu0 0
  %149 = vmatpush1.bf16.msra.mxu0 %v120
  %150 = vmatprep.subr.bf16.mxu0 0
  %151 = vmatpush1.bf16.msra.mxu0 %v119
  %152 = vmatprep.subr.bf16.mxu0 0
  %153 = vmatpush1.bf16.msra.mxu0 %v118
  %154 = vmatprep.subr.bf16.mxu0 0
  %155 = vmatpush1.bf16.msra.mxu0 %v117
  %156 = vmatprep.subr.bf16.mxu0 0
  %157 = vmatpush1.bf16.msra.mxu0 %v116
  %158 = vmatprep.subr.bf16.mxu0 0
  %159 = vmatpush1.bf16.msra.mxu0 %v115
  %160 = vmatprep.subr.bf16.mxu0 0
  %161 = vmatpush1.bf16.msra.mxu0 %v114
  %162 = vmatprep.subr.bf16.mxu0 0
  %163 = vmatpush1.bf16.msra.mxu0 %v113
  %164 = vmatprep.subr.bf16.mxu0 0
  %165 = vmatpush2.bf16.msra.mxu0 0
  %166 = vmatprep.subr.bf16.mxu0 0
  %167 = vmatpush2.bf16.msra.mxu0 0
  %168 = vmatprep.subr.bf16.mxu0 0
  %169 = vmatpush2.bf16.msra.mxu0 %v146
  %170 = vmatprep.subr.bf16.mxu0 0
  %171 = vmatpush2.bf16.msra.mxu0 %v125
  %172 = vmatprep.subr.bf16.mxu0 0
  %173 = vmatpush2.bf16.msra.mxu0 %v124
  %174 = vmatprep.subr.bf16.mxu0 0
  %175 = vmatpush2.bf16.msra.mxu0 %v123
  %176 = vmatprep.subr.bf16.mxu0 0
  %177 = vmatpush2.bf16.msra.mxu0 %v122
  %178 = vmatprep.subr.bf16.mxu0 0
  %179 = vmatpush2.bf16.msra.mxu0 %v121
  %180 = vmatprep.mubr.bf16.mxu0 %v142
  %181 = vmatmul.mubr.bf16.gmra.mxu0 %v56
  %v182 = vpop.f32.mrf.mxu0
  %v183 = vadd.f32 %v47, %v182
  %v184 = vpop.f32.mrf.mxu0
  %v185 = vpop.f32.mrf.mxu0
  %v186 = vpop.f32.mrf.mxu0
  %187 = vdwg.mxu0
  %188 = vst [vmem:[%s3] sm:$0xf] %v183
  // Predicated region
  $region14: #{temporal_decoder2_forward.51} parent=0 // pred_check
    _
  $region15: #{temporal_decoder2_forward.51} parent=0 // pred_check_branch
    %190 = sbr.rel (0) target = $region17
  $region16: #{temporal_decoder2_forward.51} parent=0 // pred_region
    _
  $region17: #{temporal_decoder2_forward.51} parent=0 // pred_fallthru
    _
  // Predicated region
  $region18: #{temporal_decoder2_forward.51} parent=0 // pred_check
    _
  $region19: #{temporal_decoder2_forward.51} parent=0 // pred_check_branch
    %192 = sbr.rel (0) target = $region21
  $region20: #{temporal_decoder2_forward.51} parent=0 // pred_region
    _
  $region21: #{temporal_decoder2_forward.51} parent=0 // pred_fallthru
    _

// kernel: temporal_decoder2_forward.53
$region0: #{temporal_decoder2_forward.53}
  #allocation0 [shape = 'u32[]', space=smem, size = 0x4, offset = 0x4, fixed_abs, tag = 'smem constant byte address 0x4 - core index']
  #allocation1 [shape = 'u32[144,128]{1,0:T(1,128)}', space=vmem, size = 0x12000, scoped, tag = 'internal scratch']
  %s0 = inlined_call_operand.vmem [shape: bf16[4,108], index: 0, kind: input, shape index: {}]
  %s1 = inlined_call_operand.vmem [shape: f32[4,1], index: 1, kind: input, shape index: {}]
  %s2 = inlined_call_operand.vmem [shape: bf16[108,128], index: 2, kind: input, shape index: {}]
  %s3 = inlined_call_operand.vmem [shape: f32[4,128], index: 3, kind: input, shape index: {}]
  %s4 = inlined_call_operand.vmem [shape: f32[4,128], index: 4, kind: output, shape index: {}]
  %s5 = sld [smem:[#allocation0]]
  $region26: #{temporal_decoder2_forward.53} parent=0
    _
  %s7 = ssub.s32 1, %s5
  %s8 = scalar_select 0, %s7, %s5
  // Predicated region
  $region2: #{temporal_decoder2_forward.53} parent=0 // pred_check
    _
  $region3: #{temporal_decoder2_forward.53} parent=0 // pred_check_branch
    %10 = sbr.rel (0) target = $region5
  $region4: #{temporal_decoder2_forward.53} parent=0 // pred_region
    _
  $region5: #{temporal_decoder2_forward.53} parent=0 // pred_fallthru
    _
  // Predicated region
  $region6: #{temporal_decoder2_forward.53} parent=0 // pred_check
    _
  $region7: #{temporal_decoder2_forward.53} parent=0 // pred_check_branch
    %12 = sbr.rel (0) target = $region9
  $region8: #{temporal_decoder2_forward.53} parent=0 // pred_region
    _
  $region9: #{temporal_decoder2_forward.53} parent=0 // pred_fallthru
    _
  // Predicated region
  $region10: #{temporal_decoder2_forward.53} parent=0 // pred_check
    _
  $region11: #{temporal_decoder2_forward.53} parent=0 // pred_check_branch
    %14 = sbr.rel (0) target = $region13
  $region12: #{temporal_decoder2_forward.53} parent=0 // pred_region
    _
  $region13: #{temporal_decoder2_forward.53} parent=0 // pred_fallthru
    _
  // Predicated region
  $region14: #{temporal_decoder2_forward.53} parent=0 // pred_check
    _
  $region15: #{temporal_decoder2_forward.53} parent=0 // pred_check_branch
    %16 = sbr.rel (0) target = $region17
  $region16: #{temporal_decoder2_forward.53} parent=0 // pred_region
    _
  $region17: #{temporal_decoder2_forward.53} parent=0 // pred_fallthru
    _
  %v18 = vld [vmem:[%s0] sm:$0x3]
  %v19 = vld [vmem:[%s2] sm:$0xf]
  %v20 = vld [vmem:[%s2 + $0x4] sm:$0xf]
  %v21 = vld [vmem:[%s2 + $0x8] sm:$0xf]
  %v22 = vld [vmem:[%s2 + $0xc] sm:$0xf]
  %v23 = vld [vmem:[%s2 + $0x10] sm:$0xf]
  %v24 = vld [vmem:[%s2 + $0x14] sm:$0xf]
  %v25 = vld [vmem:[%s2 + $0x18] sm:$0xf]
  %v26 = vld [vmem:[%s2 + $0x1c] sm:$0xf]
  %v27 = vld [vmem:[%s2 + $0x20] sm:$0xf]
  %v28 = vld [vmem:[%s2 + $0x24] sm:$0xf]
  %v29 = vld [vmem:[%s2 + $0x28] sm:$0xf]
  %v30 = vld [vmem:[%s2 + $0x2c] sm:$0xf]
  %v31 = vld [vmem:[%s2 + $0x30] sm:$0xf]
  %v32 = vld [vmem:[%s2 + $0x34] sm:$0x3]
  %v33 = vld [vmem:[%s1] sm:$0xf]
  %35 = vset.pattern.permute.xlu0 0
  %36 = vperm.xlu0 %35, %v33
  %v37 = vpop.permute.xlu0 %36
  %v53 = vunpack.c.l.b16 %v19
  %v54 = vunpack.c.l.b16 %v20
  %v55 = vunpack.c.l.b16 %v21
  %v56 = vunpack.c.l.b16 %v22
  %v57 = vunpack.c.l.b16 %v23
  %v58 = vunpack.c.l.b16 %v24
  %v59 = vunpack.c.l.b16 %v25
  %v60 = vunpack.c.l.b16 %v26
  %v61 = vunpack.c.l.b16 %v27
  %v62 = vunpack.c.l.b16 %v28
  %v63 = vunpack.c.l.b16 %v29
  %v64 = vunpack.c.l.b16 %v30
  %v65 = vunpack.c.l.b16 %v31
  %v66 = vunpack.c.l.b16 %v32
  %v67 = vpack.c.b16 %v54, %v53
  %v68 = vpack.c.b16 %v56, %v55
  %v69 = vpack.c.b16 %v58, %v57
  %v70 = vpack.c.b16 %v60, %v59
  %v71 = vpack.c.b16 %v62, %v61
  %v72 = vpack.c.b16 %v64, %v63
  %v73 = vpack.c.b16 %v66, %v65
  %vm80 = vcmask 883712
  %v82 = vsel %vm80, %v18, 0
  %vm84 = vcmask 1045504
  %v86 = vsel %vm84, %v73, 0
  %88 = vmatprep.subr.bf16.mxu0 0
  %89 = vmatpush1.bf16.msra.mxu0 0
  %90 = vmatprep.subr.bf16.mxu0 0
  %91 = vmatpush1.bf16.msra.mxu0 %v86
  %92 = vmatprep.subr.bf16.mxu0 0
  %93 = vmatpush1.bf16.msra.mxu0 %v72
  %94 = vmatprep.subr.bf16.mxu0 0
  %95 = vmatpush1.bf16.msra.mxu0 %v71
  %96 = vmatprep.subr.bf16.mxu0 0
  %97 = vmatpush1.bf16.msra.mxu0 %v70
  %98 = vmatprep.subr.bf16.mxu0 0
  %99 = vmatpush1.bf16.msra.mxu0 %v69
  %100 = vmatprep.subr.bf16.mxu0 0
  %101 = vmatpush1.bf16.msra.mxu0 %v68
  %102 = vmatprep.subr.bf16.mxu0 0
  %103 = vmatpush1.bf16.msra.mxu0 %v67
  %104 = vmatprep.subr.bf16.mxu0 0
  %105 = vmatpush2.bf16.msra.mxu0 0
  %106 = vmatprep.subr.bf16.mxu0 0
  %107 = vmatpush2.bf16.msra.mxu0 0
  %108 = vmatprep.subr.bf16.mxu0 0
  %109 = vmatpush2.bf16.msra.mxu0 0
  %110 = vmatprep.subr.bf16.mxu0 0
  %111 = vmatpush2.bf16.msra.mxu0 0
  %112 = vmatprep.subr.bf16.mxu0 0
  %113 = vmatpush2.bf16.msra.mxu0 0
  %114 = vmatprep.subr.bf16.mxu0 0
  %115 = vmatpush2.bf16.msra.mxu0 0
  %116 = vmatprep.subr.bf16.mxu0 0
  %117 = vmatpush2.bf16.msra.mxu0 0
  %118 = vmatprep.subr.bf16.mxu0 0
  %119 = vmatpush2.bf16.msra.mxu0 0
  %120 = vmatprep.mubr.bf16.mxu0 0
  %121 = vmatmul.mubr.bf16.gmra.mxu0 %v82
  %v122 = vpop.f32.mrf.mxu0
  %v123 = vadd.f32 %v37, %v122
  %v124 = vpop.f32.mrf.mxu0
  %v125 = vpop.f32.mrf.mxu0
  %v126 = vpop.f32.mrf.mxu0
  %127 = vdwg.mxu0
  %v128 = vld [vmem:[%s3] sm:$0xf]
  %v129 = vadd.f32 %v123, %v128
  %v130 = vmax.f32 %v129, 0.0
  %131 = vst [vmem:[%s4] sm:$0xf] %v130
  // Predicated region
  $region18: #{temporal_decoder2_forward.53} parent=0 // pred_check
    _
  $region19: #{temporal_decoder2_forward.53} parent=0 // pred_check_branch
    %133 = sbr.rel (0) target = $region21
  $region20: #{temporal_decoder2_forward.53} parent=0 // pred_region
    _
  $region21: #{temporal_decoder2_forward.53} parent=0 // pred_fallthru
    _
  // Predicated region
  $region22: #{temporal_decoder2_forward.53} parent=0 // pred_check
    _
  $region23: #{temporal_decoder2_forward.53} parent=0 // pred_check_branch
    %135 = sbr.rel (0) target = $region25
  $region24: #{temporal_decoder2_forward.53} parent=0 // pred_region
    _
  $region25: #{temporal_decoder2_forward.53} parent=0 // pred_fallthru
    _

// kernel: temporal_decoder2_forward.55
$region0: #{temporal_decoder2_forward.55}
  #allocation0 [shape = 'u32[]', space=smem, size = 0x4, offset = 0x4, fixed_abs, tag = 'smem constant byte address 0x4 - core index']
  #allocation1 [shape = 'u32[144,128]{1,0:T(1,128)}', space=vmem, size = 0x12000, scoped, tag = 'internal scratch']
  #allocation2 [shape = 'f32[1,1]{1,0:T(1,128)S(1)}', space=vmem, size = 0x200, scoped, tag = 'scoped memory for temporal_decoder2_forward.55']
  %s0 = inlined_call_operand.vmem [shape: bf16[1,108], index: 0, kind: input, shape index: {}]
  %s1 = inlined_call_operand.<no memory space> [shape: f32[1,1], index: 1, kind: input, shape index: {}]
  %s2 = inlined_call_operand.vmem [shape: bf16[108,256], index: 2, kind: input, shape index: {}]
  %s3 = inlined_call_operand.vmem [shape: f32[1,256], index: 3, kind: output, shape index: {}]
  %s4 = sld [smem:[#allocation0]]
  $region22: #{temporal_decoder2_forward.55} parent=0
    _
  %s6 = ssub.s32 1, %s4
  %s7 = scalar_select 0, %s6, %s4
  %v8 = vstv %s1
  %9 = vst [vmem:[#allocation2] sm:$0x1] %v8
  // Predicated region
  $region2: #{temporal_decoder2_forward.55} parent=0 // pred_check
    _
  $region3: #{temporal_decoder2_forward.55} parent=0 // pred_check_branch
    %11 = sbr.rel (0) target = $region5
  $region4: #{temporal_decoder2_forward.55} parent=0 // pred_region
    _
  $region5: #{temporal_decoder2_forward.55} parent=0 // pred_fallthru
    _
  // Predicated region
  $region6: #{temporal_decoder2_forward.55} parent=0 // pred_check
    _
  $region7: #{temporal_decoder2_forward.55} parent=0 // pred_check_branch
    %13 = sbr.rel (0) target = $region9
  $region8: #{temporal_decoder2_forward.55} parent=0 // pred_region
    _
  $region9: #{temporal_decoder2_forward.55} parent=0 // pred_fallthru
    _
  // Predicated region
  $region10: #{temporal_decoder2_forward.55} parent=0 // pred_check
    _
  $region11: #{temporal_decoder2_forward.55} parent=0 // pred_check_branch
    %15 = sbr.rel (0) target = $region13
  $region12: #{temporal_decoder2_forward.55} parent=0 // pred_region
    _
  $region13: #{temporal_decoder2_forward.55} parent=0 // pred_fallthru
    _
  %v17 = vld [vmem:[%s0] sm:$0x1]
  %v18 = vld [vmem:[%s2] sm:$0xff]
  %v19 = vld [vmem:[%s2 + $0x8] sm:$0xff]
  %v20 = vld [vmem:[%s2 + $0x10] sm:$0xff]
  %v21 = vld [vmem:[%s2 + $0x18] sm:$0xff]
  %v22 = vld [vmem:[%s2 + $0x20] sm:$0xff]
  %v23 = vld [vmem:[%s2 + $0x28] sm:$0xff]
  %v24 = vld [vmem:[%s2 + $0x30] sm:$0xff]
  %v25 = vld [vmem:[%s2 + $0x38] sm:$0xff]
  %v26 = vld [vmem:[%s2 + $0x40] sm:$0xff]
  %v27 = vld [vmem:[%s2 + $0x48] sm:$0xff]
  %v28 = vld [vmem:[%s2 + $0x50] sm:$0xff]
  %v29 = vld [vmem:[%s2 + $0x58] sm:$0xff]
  %v30 = vld [vmem:[%s2 + $0x60] sm:$0xff]
  %v31 = vld [vmem:[%s2 + $0x68] sm:$0x33]
  %v32 = vld [vmem:[#allocation2] sm:$0x1]
  %34 = vset.pattern.permute.xlu0 0
  %35 = vperm.xlu0 %34, %v32
  %v36 = vpop.permute.xlu0 %35
  %v38 = vlaneseq
  %v39 = vshrl.u32 %v38, 7
  %v40 = vsub.s32 0, %v39
  %v41 = vrot.slane %v36, %v40
  %v56 = vunpack.c.l.b16 %v18
  %v57 = vunpack.c.h.b16 %v18
  %v58 = vunpack.c.l.b16 %v19
  %v59 = vunpack.c.h.b16 %v19
  %v60 = vunpack.c.l.b16 %v20
  %v61 = vunpack.c.h.b16 %v20
  %v62 = vunpack.c.l.b16 %v21
  %v63 = vunpack.c.h.b16 %v21
  %v64 = vunpack.c.l.b16 %v22
  %v65 = vunpack.c.h.b16 %v22
  %v66 = vunpack.c.l.b16 %v23
  %v67 = vunpack.c.h.b16 %v23
  %v68 = vunpack.c.l.b16 %v24
  %v69 = vunpack.c.h.b16 %v24
  %v70 = vunpack.c.l.b16 %v25
  %v71 = vunpack.c.h.b16 %v25
  %v72 = vunpack.c.l.b16 %v26
  %v73 = vunpack.c.h.b16 %v26
  %v74 = vunpack.c.l.b16 %v27
  %v75 = vunpack.c.h.b16 %v27
  %v76 = vunpack.c.l.b16 %v28
  %v77 = vunpack.c.h.b16 %v28
  %v78 = vunpack.c.l.b16 %v29
  %v79 = vunpack.c.h.b16 %v29
  %v80 = vunpack.c.l.b16 %v30
  %v81 = vunpack.c.h.b16 %v30
  %v82 = vunpack.c.l.b16 %v31
  %v83 = vunpack.c.h.b16 %v31
  %v84 = vpack.c.b16 %v58, %v56
  %v85 = vpack.c.b16 %v59, %v57
  %v86 = vpack.c.b16 %v62, %v60
  %v87 = vpack.c.b16 %v63, %v61
  %v88 = vpack.c.b16 %v66, %v64
  %v89 = vpack.c.b16 %v67, %v65
  %v90 = vpack.c.b16 %v70, %v68
  %v91 = vpack.c.b16 %v71, %v69
  %v92 = vpack.c.b16 %v74, %v72
  %v93 = vpack.c.b16 %v75, %v73
  %v94 = vpack.c.b16 %v78, %v76
  %v95 = vpack.c.b16 %v79, %v77
  %v96 = vpack.c.b16 %v82, %v80
  %v97 = vpack.c.b16 %v83, %v81
  %vm110 = vcmask 883712
  %v112 = vsel %vm110, %v17, 0
  %vm114 = vcmask 1045504
  %v116 = vsel %vm114, %v96, 0
  %v119 = vsel %vm114, %v97, 0
  %121 = vmatprep.subr.bf16.mxu0 0
  %122 = vmatpush1.bf16.msra.mxu0 0
  %123 = vmatprep.subr.bf16.mxu0 %v119
  %124 = vmatpush1.bf16.msra.mxu0 %v116
  %125 = vmatprep.subr.bf16.mxu0 %v95
  %126 = vmatpush1.bf16.msra.mxu0 %v94
  %127 = vmatprep.subr.bf16.mxu0 %v93
  %128 = vmatpush1.bf16.msra.mxu0 %v92
  %129 = vmatprep.subr.bf16.mxu0 %v91
  %130 = vmatpush1.bf16.msra.mxu0 %v90
  %131 = vmatprep.subr.bf16.mxu0 %v89
  %132 = vmatpush1.bf16.msra.mxu0 %v88
  %133 = vmatprep.subr.bf16.mxu0 %v87
  %134 = vmatpush1.bf16.msra.mxu0 %v86
  %135 = vmatprep.subr.bf16.mxu0 %v85
  %136 = vmatpush1.bf16.msra.mxu0 %v84
  %137 = vmatprep.subr.bf16.mxu0 0
  %138 = vmatpush2.bf16.msra.mxu0 0
  %139 = vmatprep.subr.bf16.mxu0 0
  %140 = vmatpush2.bf16.msra.mxu0 0
  %141 = vmatprep.subr.bf16.mxu0 0
  %142 = vmatpush2.bf16.msra.mxu0 0
  %143 = vmatprep.subr.bf16.mxu0 0
  %144 = vmatpush2.bf16.msra.mxu0 0
  %145 = vmatprep.subr.bf16.mxu0 0
  %146 = vmatpush2.bf16.msra.mxu0 0
  %147 = vmatprep.subr.bf16.mxu0 0
  %148 = vmatpush2.bf16.msra.mxu0 0
  %149 = vmatprep.subr.bf16.mxu0 0
  %150 = vmatpush2.bf16.msra.mxu0 0
  %151 = vmatprep.subr.bf16.mxu0 0
  %152 = vmatpush2.bf16.msra.mxu0 0
  %153 = vmatprep.mubr.bf16.mxu0 0
  %154 = vmatmul.mubr.bf16.gmra.mxu0 %v112
  %v155 = vpop.f32.mrf.mxu0
  %v156 = vadd.f32 %v41, %v155
  %v157 = vpop.f32.mrf.mxu0
  %v158 = vadd.f32 %v41, %v157
  %v159 = vpop.f32.mrf.mxu0
  %v160 = vpop.f32.mrf.mxu0
  %161 = vdwg.mxu0
  %v162 = vmax.f32 %v156, 0.0
  %v163 = vmax.f32 %v158, 0.0
  %v166 = vcombine.low %v162, %v163
  %v168 = vunpack.c.l.s4 1966171168
  %v169 = vunpack.c.0.s8 %v168
  %v170 = vlaneseq
  %v171 = vshrl.u32 %v170, 7
  %v172 = vsub.s32 %v169, %v171
  %v173 = vrot.slane %v166, %v172
  %v175 = vunpack.c.l.s4 1966171168
  %v176 = vunpack.c.0.s8 %v175
  %v177 = vlaneseq
  %v178 = vshrl.u32 %v177, 7
  %v179 = vsub.s32 %v176, %v178
  %v180 = vrot.slane %v173, %v179
  %v182 = vlaneseq
  %vm183 = vcmp.ge.s32.totalorder %v182, 0
  %vm184 = vcmp.lt.s32.totalorder %v182, 256
  %vm185 = vmand %vm183, %vm184
  %186 = vst.msk [vmem:[%s3] sm:$0x3] %vm185, %v180
  // Predicated region
  $region14: #{temporal_decoder2_forward.55} parent=0 // pred_check
    _
  $region15: #{temporal_decoder2_forward.55} parent=0 // pred_check_branch
    %188 = sbr.rel (0) target = $region17
  $region16: #{temporal_decoder2_forward.55} parent=0 // pred_region
    _
  $region17: #{temporal_decoder2_forward.55} parent=0 // pred_fallthru
    _
  // Predicated region
  $region18: #{temporal_decoder2_forward.55} parent=0 // pred_check
    _
  $region19: #{temporal_decoder2_forward.55} parent=0 // pred_check_branch
    %190 = sbr.rel (0) target = $region21
  $region20: #{temporal_decoder2_forward.55} parent=0 // pred_region
    _
  $region21: #{temporal_decoder2_forward.55} parent=0 // pred_fallthru
    _

// kernel: temporal_decoder2_forward.54
$region0: #{temporal_decoder2_forward.54}
  #allocation0 [shape = 'u32[]', space=smem, size = 0x4, offset = 0x4, fixed_abs, tag = 'smem constant byte address 0x4 - core index']
  #allocation1 [shape = 'u32[144,128]{1,0:T(1,128)}', space=vmem, size = 0x12000, scoped, tag = 'internal scratch']
  #allocation2 [shape = 'f32[1,1]{1,0:T(1,128)S(1)}', space=vmem, size = 0x200, scoped, tag = 'scoped memory for temporal_decoder2_forward.54']
  %s0 = inlined_call_operand.vmem [shape: bf16[1,108], index: 0, kind: input, shape index: {}]
  %s1 = inlined_call_operand.<no memory space> [shape: f32[1,1], index: 1, kind: input, shape index: {}]
  %s2 = inlined_call_operand.vmem [shape: bf16[108,256], index: 2, kind: input, shape index: {}]
  %s3 = inlined_call_operand.vmem [shape: f32[1,256], index: 3, kind: output, shape index: {}]
  %s4 = sld [smem:[#allocation0]]
  $region22: #{temporal_decoder2_forward.54} parent=0
    _
  %s6 = ssub.s32 1, %s4
  %s7 = scalar_select 0, %s6, %s4
  %v8 = vstv %s1
  %9 = vst [vmem:[#allocation2] sm:$0x1] %v8
  // Predicated region
  $region2: #{temporal_decoder2_forward.54} parent=0 // pred_check
    _
  $region3: #{temporal_decoder2_forward.54} parent=0 // pred_check_branch
    %11 = sbr.rel (0) target = $region5
  $region4: #{temporal_decoder2_forward.54} parent=0 // pred_region
    _
  $region5: #{temporal_decoder2_forward.54} parent=0 // pred_fallthru
    _
  // Predicated region
  $region6: #{temporal_decoder2_forward.54} parent=0 // pred_check
    _
  $region7: #{temporal_decoder2_forward.54} parent=0 // pred_check_branch
    %13 = sbr.rel (0) target = $region9
  $region8: #{temporal_decoder2_forward.54} parent=0 // pred_region
    _
  $region9: #{temporal_decoder2_forward.54} parent=0 // pred_fallthru
    _
  // Predicated region
  $region10: #{temporal_decoder2_forward.54} parent=0 // pred_check
    _
  $region11: #{temporal_decoder2_forward.54} parent=0 // pred_check_branch
    %15 = sbr.rel (0) target = $region13
  $region12: #{temporal_decoder2_forward.54} parent=0 // pred_region
    _
  $region13: #{temporal_decoder2_forward.54} parent=0 // pred_fallthru
    _
  %v17 = vld [vmem:[%s0] sm:$0x1]
  %v18 = vld [vmem:[%s2] sm:$0xff]
  %v19 = vld [vmem:[%s2 + $0x8] sm:$0xff]
  %v20 = vld [vmem:[%s2 + $0x10] sm:$0xff]
  %v21 = vld [vmem:[%s2 + $0x18] sm:$0xff]
  %v22 = vld [vmem:[%s2 + $0x20] sm:$0xff]
  %v23 = vld [vmem:[%s2 + $0x28] sm:$0xff]
  %v24 = vld [vmem:[%s2 + $0x30] sm:$0xff]
  %v25 = vld [vmem:[%s2 + $0x38] sm:$0xff]
  %v26 = vld [vmem:[%s2 + $0x40] sm:$0xff]
  %v27 = vld [vmem:[%s2 + $0x48] sm:$0xff]
  %v28 = vld [vmem:[%s2 + $0x50] sm:$0xff]
  %v29 = vld [vmem:[%s2 + $0x58] sm:$0xff]
  %v30 = vld [vmem:[%s2 + $0x60] sm:$0xff]
  %v31 = vld [vmem:[%s2 + $0x68] sm:$0x33]
  %v32 = vld [vmem:[#allocation2] sm:$0x1]
  %34 = vset.pattern.permute.xlu0 0
  %35 = vperm.xlu0 %34, %v32
  %v36 = vpop.permute.xlu0 %35
  %v38 = vlaneseq
  %v39 = vshrl.u32 %v38, 7
  %v40 = vsub.s32 0, %v39
  %v41 = vrot.slane %v36, %v40
  %v56 = vunpack.c.l.b16 %v18
  %v57 = vunpack.c.h.b16 %v18
  %v58 = vunpack.c.l.b16 %v19
  %v59 = vunpack.c.h.b16 %v19
  %v60 = vunpack.c.l.b16 %v20
  %v61 = vunpack.c.h.b16 %v20
  %v62 = vunpack.c.l.b16 %v21
  %v63 = vunpack.c.h.b16 %v21
  %v64 = vunpack.c.l.b16 %v22
  %v65 = vunpack.c.h.b16 %v22
  %v66 = vunpack.c.l.b16 %v23
  %v67 = vunpack.c.h.b16 %v23
  %v68 = vunpack.c.l.b16 %v24
  %v69 = vunpack.c.h.b16 %v24
  %v70 = vunpack.c.l.b16 %v25
  %v71 = vunpack.c.h.b16 %v25
  %v72 = vunpack.c.l.b16 %v26
  %v73 = vunpack.c.h.b16 %v26
  %v74 = vunpack.c.l.b16 %v27
  %v75 = vunpack.c.h.b16 %v27
  %v76 = vunpack.c.l.b16 %v28
  %v77 = vunpack.c.h.b16 %v28
  %v78 = vunpack.c.l.b16 %v29
  %v79 = vunpack.c.h.b16 %v29
  %v80 = vunpack.c.l.b16 %v30
  %v81 = vunpack.c.h.b16 %v30
  %v82 = vunpack.c.l.b16 %v31
  %v83 = vunpack.c.h.b16 %v31
  %v84 = vpack.c.b16 %v58, %v56
  %v85 = vpack.c.b16 %v59, %v57
  %v86 = vpack.c.b16 %v62, %v60
  %v87 = vpack.c.b16 %v63, %v61
  %v88 = vpack.c.b16 %v66, %v64
  %v89 = vpack.c.b16 %v67, %v65
  %v90 = vpack.c.b16 %v70, %v68
  %v91 = vpack.c.b16 %v71, %v69
  %v92 = vpack.c.b16 %v74, %v72
  %v93 = vpack.c.b16 %v75, %v73
  %v94 = vpack.c.b16 %v78, %v76
  %v95 = vpack.c.b16 %v79, %v77
  %v96 = vpack.c.b16 %v82, %v80
  %v97 = vpack.c.b16 %v83, %v81
  %vm110 = vcmask 883712
  %v112 = vsel %vm110, %v17, 0
  %vm114 = vcmask 1045504
  %v116 = vsel %vm114, %v96, 0
  %v119 = vsel %vm114, %v97, 0
  %121 = vmatprep.subr.bf16.mxu0 0
  %122 = vmatpush1.bf16.msra.mxu0 0
  %123 = vmatprep.subr.bf16.mxu0 %v119
  %124 = vmatpush1.bf16.msra.mxu0 %v116
  %125 = vmatprep.subr.bf16.mxu0 %v95
  %126 = vmatpush1.bf16.msra.mxu0 %v94
  %127 = vmatprep.subr.bf16.mxu0 %v93
  %128 = vmatpush1.bf16.msra.mxu0 %v92
  %129 = vmatprep.subr.bf16.mxu0 %v91
  %130 = vmatpush1.bf16.msra.mxu0 %v90
  %131 = vmatprep.subr.bf16.mxu0 %v89
  %132 = vmatpush1.bf16.msra.mxu0 %v88
  %133 = vmatprep.subr.bf16.mxu0 %v87
  %134 = vmatpush1.bf16.msra.mxu0 %v86
  %135 = vmatprep.subr.bf16.mxu0 %v85
  %136 = vmatpush1.bf16.msra.mxu0 %v84
  %137 = vmatprep.subr.bf16.mxu0 0
  %138 = vmatpush2.bf16.msra.mxu0 0
  %139 = vmatprep.subr.bf16.mxu0 0
  %140 = vmatpush2.bf16.msra.mxu0 0
  %141 = vmatprep.subr.bf16.mxu0 0
  %142 = vmatpush2.bf16.msra.mxu0 0
  %143 = vmatprep.subr.bf16.mxu0 0
  %144 = vmatpush2.bf16.msra.mxu0 0
  %145 = vmatprep.subr.bf16.mxu0 0
  %146 = vmatpush2.bf16.msra.mxu0 0
  %147 = vmatprep.subr.bf16.mxu0 0
  %148 = vmatpush2.bf16.msra.mxu0 0
  %149 = vmatprep.subr.bf16.mxu0 0
  %150 = vmatpush2.bf16.msra.mxu0 0
  %151 = vmatprep.subr.bf16.mxu0 0
  %152 = vmatpush2.bf16.msra.mxu0 0
  %153 = vmatprep.mubr.bf16.mxu0 0
  %154 = vmatmul.mubr.bf16.gmra.mxu0 %v112
  %v155 = vpop.f32.mrf.mxu0
  %v156 = vadd.f32 %v41, %v155
  %v157 = vpop.f32.mrf.mxu0
  %v158 = vadd.f32 %v41, %v157
  %v159 = vpop.f32.mrf.mxu0
  %v160 = vpop.f32.mrf.mxu0
  %161 = vdwg.mxu0
  %v164 = vcombine.low %v156, %v158
  %v166 = vunpack.c.l.s4 1966171168
  %v167 = vunpack.c.0.s8 %v166
  %v168 = vlaneseq
  %v169 = vshrl.u32 %v168, 7
  %v170 = vsub.s32 %v167, %v169
  %v171 = vrot.slane %v164, %v170
  %v173 = vunpack.c.l.s4 1966171168
  %v174 = vunpack.c.0.s8 %v173
  %v175 = vlaneseq
  %v176 = vshrl.u32 %v175, 7
  %v177 = vsub.s32 %v174, %v176
  %v178 = vrot.slane %v171, %v177
  %v180 = vlaneseq
  %vm181 = vcmp.ge.s32.totalorder %v180, 0
  %vm182 = vcmp.lt.s32.totalorder %v180, 256
  %vm183 = vmand %vm181, %vm182
  %184 = vst.msk [vmem:[%s3] sm:$0x3] %vm183, %v178
  // Predicated region
  $region14: #{temporal_decoder2_forward.54} parent=0 // pred_check
    _
  $region15: #{temporal_decoder2_forward.54} parent=0 // pred_check_branch
    %186 = sbr.rel (0) target = $region17
  $region16: #{temporal_decoder2_forward.54} parent=0 // pred_region
    _
  $region17: #{temporal_decoder2_forward.54} parent=0 // pred_fallthru
    _
  // Predicated region
  $region18: #{temporal_decoder2_forward.54} parent=0 // pred_check
    _
  $region19: #{temporal_decoder2_forward.54} parent=0 // pred_check_branch
    %188 = sbr.rel (0) target = $region21
  $region20: #{temporal_decoder2_forward.54} parent=0 // pred_region
    _
  $region21: #{temporal_decoder2_forward.54} parent=0 // pred_fallthru
    _

// kernel: temporal_decoder2_forward.60
$region0: #{temporal_decoder2_forward.60}
  #allocation0 [shape = 'u32[]', space=smem, size = 0x4, offset = 0x4, fixed_abs, tag = 'smem constant byte address 0x4 - core index']
  #allocation1 [shape = 'u32[144,128]{1,0:T(1,128)}', space=vmem, size = 0x12000, scoped, tag = 'internal scratch']
  %s0 = inlined_call_operand.vmem [shape: bf16[2,2,64], index: 0, kind: input, shape index: {}]
  %s1 = inlined_call_operand.vmem [shape: bf16[2,64,2], index: 1, kind: input, shape index: {}]
  %s2 = inlined_call_operand.vmem [shape: f32[2,2,2], index: 2, kind: output, shape index: {0}]
  %s3 = inlined_call_operand.vmem [shape: f32[2,64,64], index: 3, kind: output, shape index: {1}]
  %4 = xla_tuple %s2, %s3
  %s5 = sld [smem:[#allocation0]]
  $region49: #{temporal_decoder2_forward.60} parent=0
    _
  %s7 = ssub.s32 1, %s5
  %s8 = scalar_select 0, %s7, %s5
  loop: start=0, step=1, limit=4
  $region2: #{temporal_decoder2_forward.60} parent=0 // loop_pre_header
    _
  $region3: #{temporal_decoder2_forward.60} parent=0 // loop_header
    %s10 = sphi 0, %s14
    %p11 = scmp.ge.s32.totalorder %s10, 4
    %s20 = sphi 0, %s22
    %s23 = sphi 0, %s20
    %s24 = sphi 0, %s23
    %s40 = sphi 0, %s24
    %s46 = sphi 0, %s48
    %s49 = sphi 0, %s46
    %s50 = sphi 0, %s49
    %s66 = sphi 0, %s50
    %s72 = sphi 0, %s74
    %s75 = sphi 0, %s72
    %s76 = sphi 0, %s75
    %s92 = sphi 0, %s76
    %s98 = sphi 0, %s100
    %s101 = sphi 0, %s98
    %s102 = sphi 0, %s101
    %s118 = sphi 0, %s102
  $region4: #{temporal_decoder2_forward.60} parent=0 // loop_header_branch
    %13 = sbr.rel (%p11) target = $region8
  $region5: #{temporal_decoder2_forward.60} parent=0 // loop_body
    %s15 = ssub.s32 %s10, 1
    %s16 = ssub.s32 %s10, 2
    %s17 = sadd.s32 %s10, 1
    %s18 = ssub.s32 %s10, %s17
    %p19 = scmp.eq.s32.totalorder %s18, 0
    %s21 = sadd.s32 %s20, 1
    %s22 = scalar_select %p19, %s20, %s21
    %p25 = pneg %p19
    %p26 = scmp.eq.s32.totalorder %s10, 1
    %p27 = por %p25, %p26
    %p28 = scmp.ne.s32.totalorder %s20, %s23
    %p29 = scmp.eq.s32.totalorder %s10, 0
    %p30 = por %p28, %p29
    %p31 = scmp.ne.s32.totalorder %s20, %s23
    %p32 = scmp.eq.s32.totalorder %s15, 1
    %p33 = por %p31, %p32
    %p34 = scmp.ne.s32.totalorder %s23, %s24
    %p35 = scmp.eq.s32.totalorder %s15, 0
    %p36 = por %p34, %p35
    %p37 = scmp.ne.s32.totalorder %s23, %s24
    %p38 = scmp.eq.s32.totalorder %s16, 1
    %p39 = por %p37, %p38
    %p41 = scmp.ne.s32.totalorder %s24, %s40
    %p42 = scmp.eq.s32.totalorder %s16, 0
    %p43 = por %p41, %p42
    %s44 = ssub.s32 %s10, %s17
    %p45 = scmp.eq.s32.totalorder %s44, 0
    %s47 = sadd.s32 %s46, 1
    %s48 = scalar_select %p45, %s46, %s47
    %p51 = pneg %p45
    %p52 = scmp.eq.s32.totalorder %s10, 1
    %p53 = por %p51, %p52
    %p54 = scmp.ne.s32.totalorder %s46, %s49
    %p55 = scmp.eq.s32.totalorder %s10, 0
    %p56 = por %p54, %p55
    %p57 = scmp.ne.s32.totalorder %s46, %s49
    %p58 = scmp.eq.s32.totalorder %s15, 1
    %p59 = por %p57, %p58
    %p60 = scmp.ne.s32.totalorder %s49, %s50
    %p61 = scmp.eq.s32.totalorder %s15, 0
    %p62 = por %p60, %p61
    %p63 = scmp.ne.s32.totalorder %s49, %s50
    %p64 = scmp.eq.s32.totalorder %s16, 1
    %p65 = por %p63, %p64
    %p67 = scmp.ne.s32.totalorder %s50, %s66
    %p68 = scmp.eq.s32.totalorder %s16, 0
    %p69 = por %p67, %p68
    %s70 = ssub.s32 %s10, %s17
    %p71 = scmp.eq.s32.totalorder %s70, 0
    %s73 = sadd.s32 %s72, 1
    %s74 = scalar_select %p71, %s72, %s73
    %p77 = pneg %p71
    %p78 = scmp.eq.s32.totalorder %s10, 1
    %p79 = por %p77, %p78
    %p80 = scmp.ne.s32.totalorder %s72, %s75
    %p81 = scmp.eq.s32.totalorder %s10, 0
    %p82 = por %p80, %p81
    %p83 = scmp.ne.s32.totalorder %s72, %s75
    %p84 = scmp.eq.s32.totalorder %s15, 1
    %p85 = por %p83, %p84
    %p86 = scmp.ne.s32.totalorder %s75, %s76
    %p87 = scmp.eq.s32.totalorder %s15, 0
    %p88 = por %p86, %p87
    %p89 = scmp.ne.s32.totalorder %s75, %s76
    %p90 = scmp.eq.s32.totalorder %s16, 1
    %p91 = por %p89, %p90
    %p93 = scmp.ne.s32.totalorder %s76, %s92
    %p94 = scmp.eq.s32.totalorder %s16, 0
    %p95 = por %p93, %p94
    %s96 = ssub.s32 %s10, %s17
    %p97 = scmp.eq.s32.totalorder %s96, 0
    %s99 = sadd.s32 %s98, 1
    %s100 = scalar_select %p97, %s98, %s99
    %p103 = pneg %p97
    %p104 = scmp.eq.s32.totalorder %s10, 1
    %p105 = por %p103, %p104
    %p106 = scmp.ne.s32.totalorder %s98, %s101
    %p107 = scmp.eq.s32.totalorder %s10, 0
    %p108 = por %p106, %p107
    %p109 = scmp.ne.s32.totalorder %s98, %s101
    %p110 = scmp.eq.s32.totalorder %s15, 1
    %p111 = por %p109, %p110
    %p112 = scmp.ne.s32.totalorder %s101, %s102
    %p113 = scmp.eq.s32.totalorder %s15, 0
    %p114 = por %p112, %p113
    %p115 = scmp.ne.s32.totalorder %s101, %s102
    %p116 = scmp.eq.s32.totalorder %s16, 1
    %p117 = por %p115, %p116
    %p119 = scmp.ne.s32.totalorder %s102, %s118
    %p120 = scmp.eq.s32.totalorder %s16, 0
    %p121 = por %p119, %p120
    %p122 = scmp.le.s32.totalorder 1, %s10
    %p123 = scmp.lt.s32.totalorder %s10, 3
    %p124 = pnand %p122, %p123
    %p125 = pneg %p124
    // Predicated region
    $region9: #{temporal_decoder2_forward.60} parent=5 // pred_check
      _
    $region10: #{temporal_decoder2_forward.60} parent=5 // pred_check_branch
      %127 = sbr.rel (%p124) target = $region12
    $region11: #{temporal_decoder2_forward.60} parent=5 // pred_region
      %s128 = ssub.s32 %s10, 1
    $region12: #{temporal_decoder2_forward.60} parent=5 // pred_fallthru
      _
    %p129 = scmp.lt.s32.totalorder %s10, 2
    // Predicated region
    $region13: #{temporal_decoder2_forward.60} parent=5 // pred_check
      %p130 = pneg %p129
    $region14: #{temporal_decoder2_forward.60} parent=5 // pred_check_branch
      %132 = sbr.rel (%p130) target = $region16
    $region15: #{temporal_decoder2_forward.60} parent=5 // pred_region
      // Predicated region
      $region17: #{temporal_decoder2_forward.60} parent=15 // pred_check
        %p133 = pneg %p30
      $region18: #{temporal_decoder2_forward.60} parent=15 // pred_check_branch
        %135 = sbr.rel (%p133) target = $region20
      $region19: #{temporal_decoder2_forward.60} parent=15 // pred_region
        %p136 = scmp.lt.s32.totalorder %s10, 1
        %s137 = scalar_select %p136, %s10, 1
        %s138 = scalar_lea.vmem %s0, %s137
      $region20: #{temporal_decoder2_forward.60} parent=15 // pred_fallthru
        _
      // Predicated region
      $region21: #{temporal_decoder2_forward.60} parent=15 // pred_check
        %p139 = pneg %p56
      $region22: #{temporal_decoder2_forward.60} parent=15 // pred_check_branch
        %141 = sbr.rel (%p139) target = $region24
      $region23: #{temporal_decoder2_forward.60} parent=15 // pred_region
        %p142 = scmp.lt.s32.totalorder %s10, 1
        %s143 = scalar_select %p142, %s10, 1
        %s144 = smul.addr %s143, 8
        %s145 = smul.addr %s144, 4
        %s146 = scalar_lea.vmem %s1, %s145
      $region24: #{temporal_decoder2_forward.60} parent=15 // pred_fallthru
        _
    $region16: #{temporal_decoder2_forward.60} parent=5 // pred_fallthru
      _
    %p147 = scmp.le.s32.totalorder 1, %s10
    %p148 = scmp.lt.s32.totalorder %s10, 3
    %p149 = pnand %p147, %p148
    %p150 = pneg %p149
    // Predicated region
    $region25: #{temporal_decoder2_forward.60} parent=5 // pred_check
      _
    $region26: #{temporal_decoder2_forward.60} parent=5 // pred_check_branch
      %152 = sbr.rel (%p149) target = $region28
    $region27: #{temporal_decoder2_forward.60} parent=5 // pred_region
      %s153 = ssub.s32 %s10, 1
      %p154 = scmp.lt.s32.totalorder %s15, 1
      %s155 = scalar_select %p154, %s15, 1
      %s156 = scalar_lea.vmem %s0, %s155
      %p157 = pneg %p36
      %p158 = pneg %p33
      %p159 = scmp.lt.s32.totalorder %s15, 1
      %s160 = scalar_select %p159, %s15, 1
      %s161 = smul.addr %s160, 8
      %s162 = smul.addr %s161, 4
      %s163 = scalar_lea.vmem %s1, %s162
      %p164 = pneg %p62
      %p165 = pneg %p59
      %p166 = pneg %p88
      %p167 = pneg %p85
      %p168 = scmp.lt.s32.totalorder %s15, 1
      %s169 = scalar_select %p168, %s15, 1
      %s170 = smul.addr %s169, 2
      %s171 = scalar_lea.vmem %s2, %s170
      %p172 = pneg %p114
      %p173 = pneg %p111
      %p174 = scmp.lt.s32.totalorder %s15, 1
      %s175 = scalar_select %p174, %s15, 1
      %s176 = smul.addr %s175, 8
      %s177 = smul.addr %s176, 8
      %s178 = scalar_lea.vmem %s3, %s177
      %p179 = scmp.lt.s32.totalorder %s15, 1
      %s180 = scalar_select %p179, %s15, 1
      %s181 = scalar_lea.vmem %s0, %s180
      %p182 = scmp.lt.s32.totalorder %s15, 1
      %s183 = scalar_select %p182, %s15, 1
      %s184 = smul.addr %s183, 8
      %s185 = smul.addr %s184, 4
      %s186 = scalar_lea.vmem %s1, %s185
      %p187 = scmp.lt.s32.totalorder %s15, 1
      %s188 = scalar_select %p187, %s15, 1
      %s189 = smul.addr %s188, 2
      %s190 = scalar_lea.vmem %s2, %s189
      %p191 = scmp.lt.s32.totalorder %s15, 1
      %s192 = scalar_select %p191, %s15, 1
      %s193 = smul.addr %s192, 8
      %s194 = smul.addr %s193, 8
      %s195 = scalar_lea.vmem %s3, %s194
      %v197 = vld [vmem:[%s181] sm:$0x1]
      %v198 = vld [vmem:[%s186] sm:$0xf]
      %v199 = vld [vmem:[%s186 + $0x4] sm:$0xf]
      %v200 = vld [vmem:[%s186 + $0x8] sm:$0xf]
      %v201 = vld [vmem:[%s186 + $0xc] sm:$0xf]
      %v202 = vld [vmem:[%s186 + $0x10] sm:$0xf]
      %v203 = vld [vmem:[%s186 + $0x14] sm:$0xf]
      %v204 = vld [vmem:[%s186 + $0x18] sm:$0xf]
      %v205 = vld [vmem:[%s186 + $0x1c] sm:$0xf]
      %v214 = vunpack.c.l.b16 %v198
      %v215 = vunpack.c.l.b16 %v199
      %v216 = vunpack.c.l.b16 %v200
      %v217 = vunpack.c.l.b16 %v201
      %v218 = vunpack.c.l.b16 %v202
      %v219 = vunpack.c.l.b16 %v203
      %v220 = vunpack.c.l.b16 %v204
      %v221 = vunpack.c.l.b16 %v205
      %v222 = vpack.c.b16 %v215, %v214
      %v223 = vpack.c.b16 %v217, %v216
      %v224 = vpack.c.b16 %v219, %v218
      %v225 = vpack.c.b16 %v221, %v220
      %vm230 = vcmask 523264
      %v232 = vsel %vm230, %v197, 0
      %234 = vmatprep.subr.bf16.mxu0 0
      %235 = vmatpush1.bf16.msra.mxu0 0
      %236 = vmatprep.subr.bf16.mxu0 0
      %237 = vmatpush1.bf16.msra.mxu0 0
      %238 = vmatprep.subr.bf16.mxu0 0
      %239 = vmatpush1.bf16.msra.mxu0 0
      %240 = vmatprep.subr.bf16.mxu0 0
      %241 = vmatpush1.bf16.msra.mxu0 0
      %242 = vmatprep.subr.bf16.mxu0 0
      %243 = vmatpush1.bf16.msra.mxu0 %v225
      %244 = vmatprep.subr.bf16.mxu0 0
      %245 = vmatpush1.bf16.msra.mxu0 %v224
      %246 = vmatprep.subr.bf16.mxu0 0
      %247 = vmatpush1.bf16.msra.mxu0 %v223
      %248 = vmatprep.subr.bf16.mxu0 0
      %249 = vmatpush1.bf16.msra.mxu0 %v222
      %250 = vmatprep.subr.bf16.mxu0 0
      %251 = vmatpush2.bf16.msra.mxu0 0
      %252 = vmatprep.subr.bf16.mxu0 0
      %253 = vmatpush2.bf16.msra.mxu0 0
      %254 = vmatprep.subr.bf16.mxu0 0
      %255 = vmatpush2.bf16.msra.mxu0 0
      %256 = vmatprep.subr.bf16.mxu0 0
      %257 = vmatpush2.bf16.msra.mxu0 0
      %258 = vmatprep.subr.bf16.mxu0 0
      %259 = vmatpush2.bf16.msra.mxu0 0
      %260 = vmatprep.subr.bf16.mxu0 0
      %261 = vmatpush2.bf16.msra.mxu0 0
      %262 = vmatprep.subr.bf16.mxu0 0
      %263 = vmatpush2.bf16.msra.mxu0 0
      %264 = vmatprep.subr.bf16.mxu0 0
      %265 = vmatpush2.bf16.msra.mxu0 0
      %266 = vmatprep.mubr.bf16.mxu0 0
      %267 = vmatmul.mubr.bf16.gmra.mxu0 %v232
      %v268 = vpop.f32.mrf.mxu0
      %v269 = vadd.f32 0.0, %v268
      %v270 = vpop.f32.mrf.mxu0
      %v271 = vpop.f32.mrf.mxu0
      %v272 = vpop.f32.mrf.mxu0
      %273 = vdwg.mxu0
      %vm274 = vcmask 9216
      %275 = vst.msk [vmem:[%s190] sm:$0x3] %vm274, %v269
      %vm276 = vcmask 15360
      %v278 = vsel %vm276, %v222, 0
      %v281 = vsel %vm276, %v223, 0
      %v284 = vsel %vm276, %v224, 0
      %v287 = vsel %vm276, %v225, 0
      %vm289 = vcmask 1040384
      %v290 = vsel %vm289, %v197, 0
      %292 = vmatprep.subr.bf16.mxu0 0
      %293 = vmatpush1.bf16.msra.mxu0 0
      %294 = vmatprep.subr.bf16.mxu0 0
      %295 = vmatpush1.bf16.msra.mxu0 0
      %296 = vmatprep.subr.bf16.mxu0 0
      %297 = vmatpush1.bf16.msra.mxu0 0
      %298 = vmatprep.subr.bf16.mxu0 0
      %299 = vmatpush1.bf16.msra.mxu0 0
      %300 = vmatprep.subr.bf16.mxu0 0
      %301 = vmatpush1.bf16.msra.mxu0 0
      %302 = vmatprep.subr.bf16.mxu0 0
      %303 = vmatpush1.bf16.msra.mxu0 0
      %304 = vmatprep.subr.bf16.mxu0 0
      %305 = vmatpush1.bf16.msra.mxu0 0
      %306 = vmatprep.subr.bf16.mxu0 0
      %307 = vmatpush1.bf16.msra.mxu0 %v290
      %308 = vmatprep.subr.bf16.mxu0 0
      %309 = vmatpush2.bf16.msra.mxu0 0
      %310 = vmatprep.subr.bf16.mxu0 0
      %311 = vmatpush2.bf16.msra.mxu0 0
      %312 = vmatprep.subr.bf16.mxu0 0
      %313 = vmatpush2.bf16.msra.mxu0 0
      %314 = vmatprep.subr.bf16.mxu0 0
      %315 = vmatpush2.bf16.msra.mxu0 0
      %316 = vmatprep.subr.bf16.mxu0 0
      %317 = vmatpush2.bf16.msra.mxu0 0
      %318 = vmatprep.subr.bf16.mxu0 0
      %319 = vmatpush2.bf16.msra.mxu0 0
      %320 = vmatprep.subr.bf16.mxu0 0
      %321 = vmatpush2.bf16.msra.mxu0 0
      %322 = vmatprep.subr.bf16.mxu0 0
      %323 = vmatpush2.bf16.msra.mxu0 0
      %324 = vmatprep.mubr.bf16.mxu0 0
      %325 = vmatmul.mubr.bf16.gmra.mxu0 %v278
      %v326 = vpop.f32.mrf.mxu0
      %v327 = vadd.f32 0.0, %v326
      %v328 = vpop.f32.mrf.mxu0
      %v329 = vpop.f32.mrf.mxu0
      %v330 = vadd.f32 0.0, %v329
      %v331 = vpop.f32.mrf.mxu0
      %332 = vmatprep.mubr.bf16.mxu0 0
      %333 = vmatmul.mubr.bf16.gmra.mxu0 %v281
      %v334 = vpop.f32.mrf.mxu0
      %v335 = vadd.f32 0.0, %v334
      %v336 = vpop.f32.mrf.mxu0
      %v337 = vpop.f32.mrf.mxu0
      %v338 = vadd.f32 0.0, %v337
      %v339 = vpop.f32.mrf.mxu0
      %340 = vmatprep.mubr.bf16.mxu0 0
      %341 = vmatmul.mubr.bf16.gmra.mxu0 %v284
      %v342 = vpop.f32.mrf.mxu0
      %v343 = vadd.f32 0.0, %v342
      %v344 = vpop.f32.mrf.mxu0
      %v345 = vpop.f32.mrf.mxu0
      %v346 = vadd.f32 0.0, %v345
      %v347 = vpop.f32.mrf.mxu0
      %348 = vmatprep.mubr.bf16.mxu0 0
      %349 = vmatmul.mubr.bf16.gmra.mxu0 %v287
      %v350 = vpop.f32.mrf.mxu0
      %v351 = vadd.f32 0.0, %v350
      %v352 = vpop.f32.mrf.mxu0
      %v353 = vpop.f32.mrf.mxu0
      %v354 = vadd.f32 0.0, %v353
      %v355 = vpop.f32.mrf.mxu0
      %356 = vdwg.mxu0
      %357 = vst.msk [vmem:[%s195] sm:$0xff] %vm230, %v327
      %358 = vst.msk [vmem:[%s195 + $0x8] sm:$0xff] %vm230, %v330
      %359 = vst.msk [vmem:[%s195 + $0x10] sm:$0xff] %vm230, %v335
      %360 = vst.msk [vmem:[%s195 + $0x18] sm:$0xff] %vm230, %v338
      %361 = vst.msk [vmem:[%s195 + $0x20] sm:$0xff] %vm230, %v343
      %362 = vst.msk [vmem:[%s195 + $0x28] sm:$0xff] %vm230, %v346
      %363 = vst.msk [vmem:[%s195 + $0x30] sm:$0xff] %vm230, %v351
      %364 = vst.msk [vmem:[%s195 + $0x38] sm:$0xff] %vm230, %v354
      %p365 = scmp.lt.s32.totalorder %s15, 1
      %s366 = scalar_select %p365, %s15, 1
      %s367 = smul.addr %s366, 2
      %s368 = scalar_lea.vmem %s2, %s367
      %p369 = scmp.lt.s32.totalorder %s15, 1
      %s370 = scalar_select %p369, %s15, 1
      %s371 = smul.addr %s370, 8
      %s372 = smul.addr %s371, 8
      %s373 = scalar_lea.vmem %s3, %s372
      // Predicated region
      $region29: #{temporal_decoder2_forward.60} parent=27 // pred_check
        %p374 = pneg %p85
      $region30: #{temporal_decoder2_forward.60} parent=27 // pred_check_branch
        %376 = sbr.rel (%p374) target = $region32
      $region31: #{temporal_decoder2_forward.60} parent=27 // pred_region
        _
      $region32: #{temporal_decoder2_forward.60} parent=27 // pred_fallthru
        _
      // Predicated region
      $region33: #{temporal_decoder2_forward.60} parent=27 // pred_check
        %p377 = pneg %p111
      $region34: #{temporal_decoder2_forward.60} parent=27 // pred_check_branch
        %379 = sbr.rel (%p377) target = $region36
      $region35: #{temporal_decoder2_forward.60} parent=27 // pred_region
        _
      $region36: #{temporal_decoder2_forward.60} parent=27 // pred_fallthru
        _
    $region28: #{temporal_decoder2_forward.60} parent=5 // pred_fallthru
      _
    %p380 = scmp.le.s32.totalorder 2, %s10
    // Predicated region
    $region37: #{temporal_decoder2_forward.60} parent=5 // pred_check
      %p381 = pneg %p380
    $region38: #{temporal_decoder2_forward.60} parent=5 // pred_check_branch
      %383 = sbr.rel (%p381) target = $region40
    $region39: #{temporal_decoder2_forward.60} parent=5 // pred_region
      %s384 = ssub.s32 %s10, 2
      // Predicated region
      $region41: #{temporal_decoder2_forward.60} parent=39 // pred_check
        %p385 = pneg %p91
      $region42: #{temporal_decoder2_forward.60} parent=39 // pred_check_branch
        %387 = sbr.rel (%p385) target = $region44
      $region43: #{temporal_decoder2_forward.60} parent=39 // pred_region
        %p388 = scmp.lt.s32.totalorder %s16, 1
        %s389 = scalar_select %p388, %s16, 1
        %s390 = smul.addr %s389, 2
        %s391 = scalar_lea.vmem %s2, %s390
      $region44: #{temporal_decoder2_forward.60} parent=39 // pred_fallthru
        _
      // Predicated region
      $region45: #{temporal_decoder2_forward.60} parent=39 // pred_check
        %p392 = pneg %p117
      $region46: #{temporal_decoder2_forward.60} parent=39 // pred_check_branch
        %394 = sbr.rel (%p392) target = $region48
      $region47: #{temporal_decoder2_forward.60} parent=39 // pred_region
        %p395 = scmp.lt.s32.totalorder %s16, 1
        %s396 = scalar_select %p395, %s16, 1
        %s397 = smul.addr %s396, 8
        %s398 = smul.addr %s397, 8
        %s399 = scalar_lea.vmem %s3, %s398
      $region48: #{temporal_decoder2_forward.60} parent=39 // pred_fallthru
        _
    $region40: #{temporal_decoder2_forward.60} parent=5 // pred_fallthru
      _
  $region6: #{temporal_decoder2_forward.60} parent=0 // loop_footer
    %s14 = sadd.s32 1, %s10
  $region7: #{temporal_decoder2_forward.60} parent=0 // loop_footer_branch
    %9 = sbr.rel target = $region3
  $region8: #{temporal_decoder2_forward.60} parent=0 // loop_exit
    _

// kernel: temporal_decoder2_forward.56
$region0: #{temporal_decoder2_forward.56}
  #allocation0 [shape = 'u32[]', space=smem, size = 0x4, offset = 0x4, fixed_abs, tag = 'smem constant byte address 0x4 - core index']
  #allocation1 [shape = 'u32[144,128]{1,0:T(1,128)}', space=vmem, size = 0x12000, scoped, tag = 'internal scratch']
  #allocation2 [shape = 'f32[1,1]{1,0:T(1,128)S(1)}', space=vmem, size = 0x200, scoped, tag = 'scoped memory for temporal_decoder2_forward.56']
  %s0 = inlined_call_operand.vmem [shape: bf16[1,27], index: 0, kind: input, shape index: {}]
  %s1 = inlined_call_operand.<no memory space> [shape: f32[1,1], index: 1, kind: input, shape index: {}]
  %s2 = inlined_call_operand.vmem [shape: bf16[27,256], index: 2, kind: input, shape index: {}]
  %s3 = inlined_call_operand.vmem [shape: f32[1,256], index: 3, kind: input, shape index: {}]
  %s4 = inlined_call_operand.vmem [shape: f32[1,256], index: 4, kind: output, shape index: {}]
  %s5 = sld [smem:[#allocation0]]
  $region26: #{temporal_decoder2_forward.56} parent=0
    _
  %s7 = ssub.s32 1, %s5
  %s8 = scalar_select 0, %s7, %s5
  %v9 = vstv %s1
  %10 = vst [vmem:[#allocation2] sm:$0x1] %v9
  // Predicated region
  $region2: #{temporal_decoder2_forward.56} parent=0 // pred_check
    _
  $region3: #{temporal_decoder2_forward.56} parent=0 // pred_check_branch
    %12 = sbr.rel (0) target = $region5
  $region4: #{temporal_decoder2_forward.56} parent=0 // pred_region
    _
  $region5: #{temporal_decoder2_forward.56} parent=0 // pred_fallthru
    _
  // Predicated region
  $region6: #{temporal_decoder2_forward.56} parent=0 // pred_check
    _
  $region7: #{temporal_decoder2_forward.56} parent=0 // pred_check_branch
    %14 = sbr.rel (0) target = $region9
  $region8: #{temporal_decoder2_forward.56} parent=0 // pred_region
    _
  $region9: #{temporal_decoder2_forward.56} parent=0 // pred_fallthru
    _
  // Predicated region
  $region10: #{temporal_decoder2_forward.56} parent=0 // pred_check
    _
  $region11: #{temporal_decoder2_forward.56} parent=0 // pred_check_branch
    %16 = sbr.rel (0) target = $region13
  $region12: #{temporal_decoder2_forward.56} parent=0 // pred_region
    _
  $region13: #{temporal_decoder2_forward.56} parent=0 // pred_fallthru
    _
  // Predicated region
  $region14: #{temporal_decoder2_forward.56} parent=0 // pred_check
    _
  $region15: #{temporal_decoder2_forward.56} parent=0 // pred_check_branch
    %18 = sbr.rel (0) target = $region17
  $region16: #{temporal_decoder2_forward.56} parent=0 // pred_region
    _
  $region17: #{temporal_decoder2_forward.56} parent=0 // pred_fallthru
    _
  %v20 = vld [vmem:[%s0] sm:$0x1]
  %v21 = vld [vmem:[%s2] sm:$0xff]
  %v22 = vld [vmem:[%s2 + $0x8] sm:$0xff]
  %v23 = vld [vmem:[%s2 + $0x10] sm:$0xff]
  %v24 = vld [vmem:[%s2 + $0x18] sm:$0x33]
  %v25 = vld [vmem:[#allocation2] sm:$0x1]
  %27 = vset.pattern.permute.xlu0 0
  %28 = vperm.xlu0 %27, %v25
  %v29 = vpop.permute.xlu0 %28
  %v31 = vlaneseq
  %v32 = vshrl.u32 %v31, 7
  %v33 = vsub.s32 0, %v32
  %v34 = vrot.slane %v29, %v33
  %v39 = vunpack.c.l.b16 %v21
  %v40 = vunpack.c.h.b16 %v21
  %v41 = vunpack.c.l.b16 %v22
  %v42 = vunpack.c.h.b16 %v22
  %v43 = vunpack.c.l.b16 %v23
  %v44 = vunpack.c.h.b16 %v23
  %v45 = vunpack.c.l.b16 %v24
  %v46 = vunpack.c.h.b16 %v24
  %v47 = vpack.c.b16 %v41, %v39
  %v48 = vpack.c.b16 %v42, %v40
  %v49 = vpack.c.b16 %v45, %v43
  %v50 = vpack.c.b16 %v46, %v44
  %vm53 = vcmask 220160
  %v55 = vsel %vm53, %v20, 0
  %vm57 = vcmask 1044480
  %vm58 = vcmask 1045504
  %v59 = vsel %vm57, 4294967295, 65535
  %v60 = vsel %vm58, %v59, 0
  %v62 = vand.u32 %v49, %v60
  %v65 = vand.u32 %v50, %v60
  %67 = vmatprep.subr.bf16.mxu0 0
  %68 = vmatpush1.bf16.msra.mxu0 0
  %69 = vmatprep.subr.bf16.mxu0 0
  %70 = vmatpush1.bf16.msra.mxu0 0
  %71 = vmatprep.subr.bf16.mxu0 0
  %72 = vmatpush1.bf16.msra.mxu0 0
  %73 = vmatprep.subr.bf16.mxu0 0
  %74 = vmatpush1.bf16.msra.mxu0 0
  %75 = vmatprep.subr.bf16.mxu0 0
  %76 = vmatpush1.bf16.msra.mxu0 0
  %77 = vmatprep.subr.bf16.mxu0 0
  %78 = vmatpush1.bf16.msra.mxu0 0
  %79 = vmatprep.subr.bf16.mxu0 %v65
  %80 = vmatpush1.bf16.msra.mxu0 %v62
  %81 = vmatprep.subr.bf16.mxu0 %v48
  %82 = vmatpush1.bf16.msra.mxu0 %v47
  %83 = vmatprep.subr.bf16.mxu0 0
  %84 = vmatpush2.bf16.msra.mxu0 0
  %85 = vmatprep.subr.bf16.mxu0 0
  %86 = vmatpush2.bf16.msra.mxu0 0
  %87 = vmatprep.subr.bf16.mxu0 0
  %88 = vmatpush2.bf16.msra.mxu0 0
  %89 = vmatprep.subr.bf16.mxu0 0
  %90 = vmatpush2.bf16.msra.mxu0 0
  %91 = vmatprep.subr.bf16.mxu0 0
  %92 = vmatpush2.bf16.msra.mxu0 0
  %93 = vmatprep.subr.bf16.mxu0 0
  %94 = vmatpush2.bf16.msra.mxu0 0
  %95 = vmatprep.subr.bf16.mxu0 0
  %96 = vmatpush2.bf16.msra.mxu0 0
  %97 = vmatprep.subr.bf16.mxu0 0
  %98 = vmatpush2.bf16.msra.mxu0 0
  %99 = vmatprep.mubr.bf16.mxu0 0
  %100 = vmatmul.mubr.bf16.gmra.mxu0 %v55
  %v101 = vpop.f32.mrf.mxu0
  %v102 = vadd.f32 %v34, %v101
  %v103 = vpop.f32.mrf.mxu0
  %v104 = vadd.f32 %v34, %v103
  %v105 = vpop.f32.mrf.mxu0
  %v106 = vpop.f32.mrf.mxu0
  %107 = vdwg.mxu0
  %v108 = vld [vmem:[%s3] sm:$0x3]
  %v110 = vlaneseq
  %v111 = vshrl.u32 %v110, 7
  %v112 = vsub.s32 0, %v111
  %v113 = vrot.slane %v108, %v112
  %v114 = vlaneseq
  %v115 = vshrl.u32 %v114, 7
  %v116 = vsub.s32 1, %v115
  %v117 = vrot.slane %v108, %v116
  %v120 = vadd.f32 %v102, %v113
  %v121 = vadd.f32 %v104, %v117
  %v122 = vmax.f32 %v120, 0.0
  %v123 = vmax.f32 %v121, 0.0
  %v126 = vcombine.low %v122, %v123
  %v128 = vunpack.c.l.s4 1966171168
  %v129 = vunpack.c.0.s8 %v128
  %v130 = vlaneseq
  %v131 = vshrl.u32 %v130, 7
  %v132 = vsub.s32 %v129, %v131
  %v133 = vrot.slane %v126, %v132
  %v135 = vunpack.c.l.s4 1966171168
  %v136 = vunpack.c.0.s8 %v135
  %v137 = vlaneseq
  %v138 = vshrl.u32 %v137, 7
  %v139 = vsub.s32 %v136, %v138
  %v140 = vrot.slane %v133, %v139
  %v142 = vlaneseq
  %vm143 = vcmp.ge.s32.totalorder %v142, 0
  %vm144 = vcmp.lt.s32.totalorder %v142, 256
  %vm145 = vmand %vm143, %vm144
  %146 = vst.msk [vmem:[%s4] sm:$0x3] %vm145, %v140
  // Predicated region
  $region18: #{temporal_decoder2_forward.56} parent=0 // pred_check
    _
  $region19: #{temporal_decoder2_forward.56} parent=0 // pred_check_branch
    %148 = sbr.rel (0) target = $region21
  $region20: #{temporal_decoder2_forward.56} parent=0 // pred_region
    _
  $region21: #{temporal_decoder2_forward.56} parent=0 // pred_fallthru
    _
  // Predicated region
  $region22: #{temporal_decoder2_forward.56} parent=0 // pred_check
    _
  $region23: #{temporal_decoder2_forward.56} parent=0 // pred_check_branch
    %150 = sbr.rel (0) target = $region25
  $region24: #{temporal_decoder2_forward.56} parent=0 // pred_region
    _
  $region25: #{temporal_decoder2_forward.56} parent=0 // pred_fallthru
    _

// kernel: temporal_decoder2_forward.61
$region0: #{temporal_decoder2_forward.61}
  #allocation0 [shape = 'u32[]', space=smem, size = 0x4, offset = 0x4, fixed_abs, tag = 'smem constant byte address 0x4 - core index']
  #allocation1 [shape = 'u32[144,128]{1,0:T(1,128)}', space=vmem, size = 0x12000, scoped, tag = 'internal scratch']
  %s0 = inlined_call_operand.vmem [shape: bf16[2,2,2], index: 0, kind: input, shape index: {}]
  %s1 = inlined_call_operand.vmem [shape: bf16[2,64,64], index: 1, kind: input, shape index: {}]
  %s2 = inlined_call_operand.vmem [shape: bf16[4,2,2,64], index: 2, kind: input, shape index: {}]
  %s3 = inlined_call_operand.vmem [shape: f32[4,2,2,64], index: 3, kind: output, shape index: {}]
  %s4 = sld [smem:[#allocation0]]
  $region45: #{temporal_decoder2_forward.61} parent=0
    _
  %s6 = ssub.s32 1, %s4
  %s7 = scalar_select 0, %s6, %s4
  loop: start=0, step=1, limit=10
  $region2: #{temporal_decoder2_forward.61} parent=0 // loop_pre_header
    _
  $region3: #{temporal_decoder2_forward.61} parent=0 // loop_header
    %s9 = sphi 0, %s13
    %p10 = scmp.ge.s32.totalorder %s9, 10
    %s16 = sphi 0, %s28
    %s17 = sphi 0, %s24
    %s18 = sphi 0, %s16
    %s19 = sphi 0, %s17
    %s20 = sphi 0, %s18
    %s21 = sphi 0, %s19
    %s31 = sphi 0, %s33
    %s34 = sphi 0, %s31
    %s35 = sphi 0, %s34
    %s51 = sphi 0, %s35
    %s57 = sphi 0, %s59
    %s60 = sphi 0, %s57
    %s61 = sphi 0, %s60
    %s77 = sphi 0, %s61
    %s85 = sphi 0, %s87
    %s88 = sphi 0, %s85
    %s89 = sphi 0, %s88
    %s105 = sphi 0, %s89
    %s113 = sphi 0, %s115
    %s116 = sphi 0, %s113
    %s117 = sphi 0, %s116
    %s133 = sphi 0, %s117
  $region4: #{temporal_decoder2_forward.61} parent=0 // loop_header_branch
    %12 = sbr.rel (%p10) target = $region8
  $region5: #{temporal_decoder2_forward.61} parent=0 // loop_body
    %s14 = ssub.s32 %s9, 1
    %s15 = ssub.s32 %s9, 2
    %s22 = sadd.s32 1, %s17
    %p23 = scmp.ge.s32.totalorder %s22, 4
    %s24 = scalar_select %p23, 0, %s22
    %s25 = sadd.s32 1, %s16
    %s26 = scalar_select %p23, %s25, %s16
    %p27 = scmp.ge.s32.totalorder %s26, 2
    %s28 = scalar_select %p27, 0, %s26
    %s29 = ssub.s32 %s16, %s28
    %p30 = scmp.eq.s32.totalorder %s29, 0
    %s32 = sadd.s32 %s31, 1
    %s33 = scalar_select %p30, %s31, %s32
    %p36 = pneg %p30
    %p37 = scmp.eq.s32.totalorder %s9, 7
    %p38 = por %p36, %p37
    %p39 = scmp.ne.s32.totalorder %s31, %s34
    %p40 = scmp.eq.s32.totalorder %s9, 0
    %p41 = por %p39, %p40
    %p42 = scmp.ne.s32.totalorder %s31, %s34
    %p43 = scmp.eq.s32.totalorder %s14, 7
    %p44 = por %p42, %p43
    %p45 = scmp.ne.s32.totalorder %s34, %s35
    %p46 = scmp.eq.s32.totalorder %s14, 0
    %p47 = por %p45, %p46
    %p48 = scmp.ne.s32.totalorder %s34, %s35
    %p49 = scmp.eq.s32.totalorder %s15, 7
    %p50 = por %p48, %p49
    %p52 = scmp.ne.s32.totalorder %s35, %s51
    %p53 = scmp.eq.s32.totalorder %s15, 0
    %p54 = por %p52, %p53
    %s55 = ssub.s32 %s16, %s28
    %p56 = scmp.eq.s32.totalorder %s55, 0
    %s58 = sadd.s32 %s57, 1
    %s59 = scalar_select %p56, %s57, %s58
    %p62 = pneg %p56
    %p63 = scmp.eq.s32.totalorder %s9, 7
    %p64 = por %p62, %p63
    %p65 = scmp.ne.s32.totalorder %s57, %s60
    %p66 = scmp.eq.s32.totalorder %s9, 0
    %p67 = por %p65, %p66
    %p68 = scmp.ne.s32.totalorder %s57, %s60
    %p69 = scmp.eq.s32.totalorder %s14, 7
    %p70 = por %p68, %p69
    %p71 = scmp.ne.s32.totalorder %s60, %s61
    %p72 = scmp.eq.s32.totalorder %s14, 0
    %p73 = por %p71, %p72
    %p74 = scmp.ne.s32.totalorder %s60, %s61
    %p75 = scmp.eq.s32.totalorder %s15, 7
    %p76 = por %p74, %p75
    %p78 = scmp.ne.s32.totalorder %s61, %s77
    %p79 = scmp.eq.s32.totalorder %s15, 0
    %p80 = por %p78, %p79
    %s81 = ssub.s32 %s17, %s24
    %s82 = ssub.s32 %s16, %s28
    %s83 = sor.u32 %s81, %s82
    %p84 = scmp.eq.s32.totalorder %s83, 0
    %s86 = sadd.s32 %s85, 1
    %s87 = scalar_select %p84, %s85, %s86
    %p90 = pneg %p84
    %p91 = scmp.eq.s32.totalorder %s9, 7
    %p92 = por %p90, %p91
    %p93 = scmp.ne.s32.totalorder %s85, %s88
    %p94 = scmp.eq.s32.totalorder %s9, 0
    %p95 = por %p93, %p94
    %p96 = scmp.ne.s32.totalorder %s85, %s88
    %p97 = scmp.eq.s32.totalorder %s14, 7
    %p98 = por %p96, %p97
    %p99 = scmp.ne.s32.totalorder %s88, %s89
    %p100 = scmp.eq.s32.totalorder %s14, 0
    %p101 = por %p99, %p100
    %p102 = scmp.ne.s32.totalorder %s88, %s89
    %p103 = scmp.eq.s32.totalorder %s15, 7
    %p104 = por %p102, %p103
    %p106 = scmp.ne.s32.totalorder %s89, %s105
    %p107 = scmp.eq.s32.totalorder %s15, 0
    %p108 = por %p106, %p107
    %s109 = ssub.s32 %s17, %s24
    %s110 = ssub.s32 %s16, %s28
    %s111 = sor.u32 %s109, %s110
    %p112 = scmp.eq.s32.totalorder %s111, 0
    %s114 = sadd.s32 %s113, 1
    %s115 = scalar_select %p112, %s113, %s114
    %p118 = pneg %p112
    %p119 = scmp.eq.s32.totalorder %s9, 7
    %p120 = por %p118, %p119
    %p121 = scmp.ne.s32.totalorder %s113, %s116
    %p122 = scmp.eq.s32.totalorder %s9, 0
    %p123 = por %p121, %p122
    %p124 = scmp.ne.s32.totalorder %s113, %s116
    %p125 = scmp.eq.s32.totalorder %s14, 7
    %p126 = por %p124, %p125
    %p127 = scmp.ne.s32.totalorder %s116, %s117
    %p128 = scmp.eq.s32.totalorder %s14, 0
    %p129 = por %p127, %p128
    %p130 = scmp.ne.s32.totalorder %s116, %s117
    %p131 = scmp.eq.s32.totalorder %s15, 7
    %p132 = por %p130, %p131
    %p134 = scmp.ne.s32.totalorder %s117, %s133
    %p135 = scmp.eq.s32.totalorder %s15, 0
    %p136 = por %p134, %p135
    %p137 = scmp.le.s32.totalorder 1, %s9
    %p138 = scmp.lt.s32.totalorder %s9, 9
    %p139 = pnand %p137, %p138
    %p140 = pneg %p139
    // Predicated region
    $region9: #{temporal_decoder2_forward.61} parent=5 // pred_check
      _
    $region10: #{temporal_decoder2_forward.61} parent=5 // pred_check_branch
      %142 = sbr.rel (%p139) target = $region12
    $region11: #{temporal_decoder2_forward.61} parent=5 // pred_region
      %s143 = ssub.s32 %s9, 1
    $region12: #{temporal_decoder2_forward.61} parent=5 // pred_fallthru
      _
    %p144 = scmp.lt.s32.totalorder %s9, 8
    // Predicated region
    $region13: #{temporal_decoder2_forward.61} parent=5 // pred_check
      %p145 = pneg %p144
    $region14: #{temporal_decoder2_forward.61} parent=5 // pred_check_branch
      %147 = sbr.rel (%p145) target = $region16
    $region15: #{temporal_decoder2_forward.61} parent=5 // pred_region
      // Predicated region
      $region17: #{temporal_decoder2_forward.61} parent=15 // pred_check
        %p148 = pneg %p41
      $region18: #{temporal_decoder2_forward.61} parent=15 // pred_check_branch
        %150 = sbr.rel (%p148) target = $region20
      $region19: #{temporal_decoder2_forward.61} parent=15 // pred_region
        %p151 = scmp.lt.s32.totalorder %s16, 1
        %s152 = scalar_select %p151, %s16, 1
        %s153 = scalar_lea.vmem %s0, %s152
      $region20: #{temporal_decoder2_forward.61} parent=15 // pred_fallthru
        _
      // Predicated region
      $region21: #{temporal_decoder2_forward.61} parent=15 // pred_check
        %p154 = pneg %p67
      $region22: #{temporal_decoder2_forward.61} parent=15 // pred_check_branch
        %156 = sbr.rel (%p154) target = $region24
      $region23: #{temporal_decoder2_forward.61} parent=15 // pred_region
        %p157 = scmp.lt.s32.totalorder %s16, 1
        %s158 = scalar_select %p157, %s16, 1
        %s159 = smul.addr %s158, 8
        %s160 = smul.addr %s159, 4
        %s161 = scalar_lea.vmem %s1, %s160
      $region24: #{temporal_decoder2_forward.61} parent=15 // pred_fallthru
        _
      // Predicated region
      $region25: #{temporal_decoder2_forward.61} parent=15 // pred_check
        %p162 = pneg %p95
      $region26: #{temporal_decoder2_forward.61} parent=15 // pred_check_branch
        %164 = sbr.rel (%p162) target = $region28
      $region27: #{temporal_decoder2_forward.61} parent=15 // pred_region
        %p165 = scmp.lt.s32.totalorder %s17, 3
        %s166 = scalar_select %p165, %s17, 3
        %p167 = scmp.lt.s32.totalorder %s16, 1
        %s168 = scalar_select %p167, %s16, 1
        %s169 = smul.addr %s166, 2
        %s170 = sadd.s32 %s168, %s169
        %s171 = scalar_lea.vmem %s2, %s170
      $region28: #{temporal_decoder2_forward.61} parent=15 // pred_fallthru
        _
    $region16: #{temporal_decoder2_forward.61} parent=5 // pred_fallthru
      _
    %p172 = scmp.le.s32.totalorder 1, %s9
    %p173 = scmp.lt.s32.totalorder %s9, 9
    %p174 = pnand %p172, %p173
    %p175 = pneg %p174
    // Predicated region
    $region29: #{temporal_decoder2_forward.61} parent=5 // pred_check
      _
    $region30: #{temporal_decoder2_forward.61} parent=5 // pred_check_branch
      %177 = sbr.rel (%p174) target = $region32
    $region31: #{temporal_decoder2_forward.61} parent=5 // pred_region
      %s178 = ssub.s32 %s9, 1
      %p179 = scmp.lt.s32.totalorder %s18, 1
      %s180 = scalar_select %p179, %s18, 1
      %s181 = scalar_lea.vmem %s0, %s180
      %p182 = pneg %p47
      %p183 = pneg %p44
      %p184 = scmp.lt.s32.totalorder %s18, 1
      %s185 = scalar_select %p184, %s18, 1
      %s186 = smul.addr %s185, 8
      %s187 = smul.addr %s186, 4
      %s188 = scalar_lea.vmem %s1, %s187
      %p189 = pneg %p73
      %p190 = pneg %p70
      %p191 = scmp.lt.s32.totalorder %s19, 3
      %s192 = scalar_select %p191, %s19, 3
      %p193 = scmp.lt.s32.totalorder %s18, 1
      %s194 = scalar_select %p193, %s18, 1
      %s195 = smul.addr %s192, 2
      %s196 = sadd.s32 %s194, %s195
      %s197 = scalar_lea.vmem %s2, %s196
      %p198 = pneg %p101
      %p199 = pneg %p98
      %p200 = pneg %p129
      %p201 = pneg %p126
      %p202 = scmp.lt.s32.totalorder %s19, 3
      %s203 = scalar_select %p202, %s19, 3
      %p204 = scmp.lt.s32.totalorder %s18, 1
      %s205 = scalar_select %p204, %s18, 1
      %s206 = smul.addr %s203, 2
      %s207 = sadd.s32 %s205, %s206
      %s208 = smul.addr %s207, 2
      %s209 = scalar_lea.vmem %s3, %s208
      %p210 = scmp.lt.s32.totalorder %s18, 1
      %s211 = scalar_select %p210, %s18, 1
      %s212 = scalar_lea.vmem %s0, %s211
      %p213 = scmp.lt.s32.totalorder %s18, 1
      %s214 = scalar_select %p213, %s18, 1
      %s215 = smul.addr %s214, 8
      %s216 = smul.addr %s215, 4
      %s217 = scalar_lea.vmem %s1, %s216
      %p218 = scmp.lt.s32.totalorder %s19, 3
      %s219 = scalar_select %p218, %s19, 3
      %p220 = scmp.lt.s32.totalorder %s18, 1
      %s221 = scalar_select %p220, %s18, 1
      %s222 = smul.addr %s219, 2
      %s223 = sadd.s32 %s221, %s222
      %s224 = scalar_lea.vmem %s2, %s223
      %p225 = scmp.lt.s32.totalorder %s19, 3
      %s226 = scalar_select %p225, %s19, 3
      %p227 = scmp.lt.s32.totalorder %s18, 1
      %s228 = scalar_select %p227, %s18, 1
      %s229 = smul.addr %s226, 2
      %s230 = sadd.s32 %s228, %s229
      %s231 = smul.addr %s230, 2
      %s232 = scalar_lea.vmem %s3, %s231
      %v234 = vld [vmem:[%s212] sm:$0x1]
      %v235 = vld [vmem:[%s217] sm:$0xf]
      %v236 = vld [vmem:[%s217 + $0x4] sm:$0xf]
      %v237 = vld [vmem:[%s217 + $0x8] sm:$0xf]
      %v238 = vld [vmem:[%s217 + $0xc] sm:$0xf]
      %v239 = vld [vmem:[%s217 + $0x10] sm:$0xf]
      %v240 = vld [vmem:[%s217 + $0x14] sm:$0xf]
      %v241 = vld [vmem:[%s217 + $0x18] sm:$0xf]
      %v242 = vld [vmem:[%s217 + $0x1c] sm:$0xf]
      %v243 = vld [vmem:[%s224] sm:$0x1]
      %vm244 = vcmask 15360
      %v246 = vsel %vm244, %v234, 0
      %vm248 = vcmask 1040384
      %v250 = vsel %vm248, %v243, 0
      %252 = vmatprep.subr.bf16.mxu0 0
      %253 = vmatpush1.bf16.msra.mxu0 0
      %254 = vmatprep.subr.bf16.mxu0 0
      %255 = vmatpush1.bf16.msra.mxu0 0
      %256 = vmatprep.subr.bf16.mxu0 0
      %257 = vmatpush1.bf16.msra.mxu0 0
      %258 = vmatprep.subr.bf16.mxu0 0
      %259 = vmatpush1.bf16.msra.mxu0 0
      %260 = vmatprep.subr.bf16.mxu0 0
      %261 = vmatpush1.bf16.msra.mxu0 0
      %262 = vmatprep.subr.bf16.mxu0 0
      %263 = vmatpush1.bf16.msra.mxu0 0
      %264 = vmatprep.subr.bf16.mxu0 0
      %265 = vmatpush1.bf16.msra.mxu0 0
      %266 = vmatprep.subr.bf16.mxu0 0
      %267 = vmatpush1.bf16.msra.mxu0 %v250
      %268 = vmatprep.subr.bf16.mxu0 0
      %269 = vmatpush2.bf16.msra.mxu0 0
      %270 = vmatprep.subr.bf16.mxu0 0
      %271 = vmatpush2.bf16.msra.mxu0 0
      %272 = vmatprep.subr.bf16.mxu0 0
      %273 = vmatpush2.bf16.msra.mxu0 0
      %274 = vmatprep.subr.bf16.mxu0 0
      %275 = vmatpush2.bf16.msra.mxu0 0
      %276 = vmatprep.subr.bf16.mxu0 0
      %277 = vmatpush2.bf16.msra.mxu0 0
      %278 = vmatprep.subr.bf16.mxu0 0
      %279 = vmatpush2.bf16.msra.mxu0 0
      %280 = vmatprep.subr.bf16.mxu0 0
      %281 = vmatpush2.bf16.msra.mxu0 0
      %282 = vmatprep.subr.bf16.mxu0 0
      %283 = vmatpush2.bf16.msra.mxu0 0
      %284 = vmatprep.mubr.bf16.mxu0 0
      %285 = vmatmul.mubr.bf16.gmra.mxu0 %v246
      %v286 = vpop.f32.mrf.mxu0
      %v287 = vadd.f32 0.0, %v286
      %v288 = vpop.f32.mrf.mxu0
      %v289 = vpop.f32.mrf.mxu0
      %v290 = vpop.f32.mrf.mxu0
      %291 = vdwg.mxu0
      %v292 = vpack.c.bf16 %v287, %v287
      %v301 = vunpack.c.l.b16 %v235
      %v302 = vunpack.c.l.b16 %v236
      %v303 = vunpack.c.l.b16 %v237
      %v304 = vunpack.c.l.b16 %v238
      %v305 = vunpack.c.l.b16 %v239
      %v306 = vunpack.c.l.b16 %v240
      %v307 = vunpack.c.l.b16 %v241
      %v308 = vunpack.c.l.b16 %v242
      %v309 = vpack.c.b16 %v302, %v301
      %v310 = vpack.c.b16 %v304, %v303
      %v311 = vpack.c.b16 %v306, %v305
      %v312 = vpack.c.b16 %v308, %v307
      %vm317 = vcmask 523264
      %v319 = vsel %vm317, %v292, 0
      %321 = vmatprep.subr.bf16.mxu0 0
      %322 = vmatpush1.bf16.msra.mxu0 0
      %323 = vmatprep.subr.bf16.mxu0 0
      %324 = vmatpush1.bf16.msra.mxu0 0
      %325 = vmatprep.subr.bf16.mxu0 0
      %326 = vmatpush1.bf16.msra.mxu0 0
      %327 = vmatprep.subr.bf16.mxu0 0
      %328 = vmatpush1.bf16.msra.mxu0 0
      %329 = vmatprep.subr.bf16.mxu0 0
      %330 = vmatpush1.bf16.msra.mxu0 %v312
      %331 = vmatprep.subr.bf16.mxu0 0
      %332 = vmatpush1.bf16.msra.mxu0 %v311
      %333 = vmatprep.subr.bf16.mxu0 0
      %334 = vmatpush1.bf16.msra.mxu0 %v310
      %335 = vmatprep.subr.bf16.mxu0 0
      %336 = vmatpush1.bf16.msra.mxu0 %v309
      %337 = vmatprep.subr.bf16.mxu0 0
      %338 = vmatpush2.bf16.msra.mxu0 0
      %339 = vmatprep.subr.bf16.mxu0 0
      %340 = vmatpush2.bf16.msra.mxu0 0
      %341 = vmatprep.subr.bf16.mxu0 0
      %342 = vmatpush2.bf16.msra.mxu0 0
      %343 = vmatprep.subr.bf16.mxu0 0
      %344 = vmatpush2.bf16.msra.mxu0 0
      %345 = vmatprep.subr.bf16.mxu0 0
      %346 = vmatpush2.bf16.msra.mxu0 0
      %347 = vmatprep.subr.bf16.mxu0 0
      %348 = vmatpush2.bf16.msra.mxu0 0
      %349 = vmatprep.subr.bf16.mxu0 0
      %350 = vmatpush2.bf16.msra.mxu0 0
      %351 = vmatprep.subr.bf16.mxu0 0
      %352 = vmatpush2.bf16.msra.mxu0 0
      %353 = vmatprep.mubr.bf16.mxu0 0
      %354 = vmatmul.mubr.bf16.gmra.mxu0 %v319
      %v355 = vpop.f32.mrf.mxu0
      %v356 = vadd.f32 0.0, %v355
      %v357 = vpop.f32.mrf.mxu0
      %v358 = vpop.f32.mrf.mxu0
      %v359 = vpop.f32.mrf.mxu0
      %360 = vdwg.mxu0
      %vm361 = vcmask 517120
      %362 = vst.msk [vmem:[%s232] sm:$0x3] %vm361, %v356
      %p363 = scmp.lt.s32.totalorder %s19, 3
      %s364 = scalar_select %p363, %s19, 3
      %p365 = scmp.lt.s32.totalorder %s18, 1
      %s366 = scalar_select %p365, %s18, 1
      %s367 = smul.addr %s364, 2
      %s368 = sadd.s32 %s366, %s367
      %s369 = smul.addr %s368, 2
      %s370 = scalar_lea.vmem %s3, %s369
      // Predicated region
      $region33: #{temporal_decoder2_forward.61} parent=31 // pred_check
        %p371 = pneg %p126
      $region34: #{temporal_decoder2_forward.61} parent=31 // pred_check_branch
        %373 = sbr.rel (%p371) target = $region36
      $region35: #{temporal_decoder2_forward.61} parent=31 // pred_region
        _
      $region36: #{temporal_decoder2_forward.61} parent=31 // pred_fallthru
        _
    $region32: #{temporal_decoder2_forward.61} parent=5 // pred_fallthru
      _
    %p374 = scmp.le.s32.totalorder 2, %s9
    // Predicated region
    $region37: #{temporal_decoder2_forward.61} parent=5 // pred_check
      %p375 = pneg %p374
    $region38: #{temporal_decoder2_forward.61} parent=5 // pred_check_branch
      %377 = sbr.rel (%p375) target = $region40
    $region39: #{temporal_decoder2_forward.61} parent=5 // pred_region
      %s378 = ssub.s32 %s9, 2
      // Predicated region
      $region41: #{temporal_decoder2_forward.61} parent=39 // pred_check
        %p379 = pneg %p132
      $region42: #{temporal_decoder2_forward.61} parent=39 // pred_check_branch
        %381 = sbr.rel (%p379) target = $region44
      $region43: #{temporal_decoder2_forward.61} parent=39 // pred_region
        %p382 = scmp.lt.s32.totalorder %s21, 3
        %s383 = scalar_select %p382, %s21, 3
        %p384 = scmp.lt.s32.totalorder %s20, 1
        %s385 = scalar_select %p384, %s20, 1
        %s386 = smul.addr %s383, 2
        %s387 = sadd.s32 %s385, %s386
        %s388 = smul.addr %s387, 2
        %s389 = scalar_lea.vmem %s3, %s388
      $region44: #{temporal_decoder2_forward.61} parent=39 // pred_fallthru
        _
    $region40: #{temporal_decoder2_forward.61} parent=5 // pred_fallthru
      _
  $region6: #{temporal_decoder2_forward.61} parent=0 // loop_footer
    %s13 = sadd.s32 1, %s9
  $region7: #{temporal_decoder2_forward.61} parent=0 // loop_footer_branch
    %8 = sbr.rel target = $region3
  $region8: #{temporal_decoder2_forward.61} parent=0 // loop_exit
    _

// kernel: temporal_decoder2_forward.63
$region0: #{temporal_decoder2_forward.63}
  #allocation0 [shape = 'u32[]', space=smem, size = 0x4, offset = 0x4, fixed_abs, tag = 'smem constant byte address 0x4 - core index']
  #allocation1 [shape = 'u32[144,128]{1,0:T(1,128)}', space=vmem, size = 0x12000, scoped, tag = 'internal scratch']
  %s0 = inlined_call_operand.vmem [shape: bf16[4,216], index: 0, kind: input, shape index: {}]
  %s1 = inlined_call_operand.vmem [shape: f32[4,1], index: 1, kind: input, shape index: {}]
  %s2 = inlined_call_operand.vmem [shape: bf16[216,256], index: 2, kind: input, shape index: {}]
  %s3 = inlined_call_operand.vmem [shape: f32[4,256], index: 3, kind: output, shape index: {}]
  %s4 = sld [smem:[#allocation0]]
  $region22: #{temporal_decoder2_forward.63} parent=0
    _
  %s6 = ssub.s32 1, %s4
  %s7 = scalar_select 0, %s6, %s4
  // Predicated region
  $region2: #{temporal_decoder2_forward.63} parent=0 // pred_check
    _
  $region3: #{temporal_decoder2_forward.63} parent=0 // pred_check_branch
    %9 = sbr.rel (0) target = $region5
  $region4: #{temporal_decoder2_forward.63} parent=0 // pred_region
    _
  $region5: #{temporal_decoder2_forward.63} parent=0 // pred_fallthru
    _
  // Predicated region
  $region6: #{temporal_decoder2_forward.63} parent=0 // pred_check
    _
  $region7: #{temporal_decoder2_forward.63} parent=0 // pred_check_branch
    %11 = sbr.rel (0) target = $region9
  $region8: #{temporal_decoder2_forward.63} parent=0 // pred_region
    _
  $region9: #{temporal_decoder2_forward.63} parent=0 // pred_fallthru
    _
  // Predicated region
  $region10: #{temporal_decoder2_forward.63} parent=0 // pred_check
    _
  $region11: #{temporal_decoder2_forward.63} parent=0 // pred_check_branch
    %13 = sbr.rel (0) target = $region13
  $region12: #{temporal_decoder2_forward.63} parent=0 // pred_region
    _
  $region13: #{temporal_decoder2_forward.63} parent=0 // pred_fallthru
    _
  %v15 = vld [vmem:[%s0] sm:$0xf]
  %v16 = vld [vmem:[%s2] sm:$0xff]
  %v17 = vld [vmem:[%s2 + $0x8] sm:$0xff]
  %v18 = vld [vmem:[%s2 + $0x10] sm:$0xff]
  %v19 = vld [vmem:[%s2 + $0x18] sm:$0xff]
  %v20 = vld [vmem:[%s2 + $0x20] sm:$0xff]
  %v21 = vld [vmem:[%s2 + $0x28] sm:$0xff]
  %v22 = vld [vmem:[%s2 + $0x30] sm:$0xff]
  %v23 = vld [vmem:[%s2 + $0x38] sm:$0xff]
  %v24 = vld [vmem:[%s2 + $0x40] sm:$0xff]
  %v25 = vld [vmem:[%s2 + $0x48] sm:$0xff]
  %v26 = vld [vmem:[%s2 + $0x50] sm:$0xff]
  %v27 = vld [vmem:[%s2 + $0x58] sm:$0xff]
  %v28 = vld [vmem:[%s2 + $0x60] sm:$0xff]
  %v29 = vld [vmem:[%s2 + $0x68] sm:$0xff]
  %v30 = vld [vmem:[%s2 + $0x70] sm:$0xff]
  %v31 = vld [vmem:[%s2 + $0x78] sm:$0xff]
  %v32 = vld [vmem:[%s2 + $0x80] sm:$0xff]
  %v33 = vld [vmem:[%s2 + $0x88] sm:$0xff]
  %v34 = vld [vmem:[%s2 + $0x90] sm:$0xff]
  %v35 = vld [vmem:[%s2 + $0x98] sm:$0xff]
  %v36 = vld [vmem:[%s2 + $0xa0] sm:$0xff]
  %v37 = vld [vmem:[%s2 + $0xa8] sm:$0xff]
  %v38 = vld [vmem:[%s2 + $0xb0] sm:$0xff]
  %v39 = vld [vmem:[%s2 + $0xb8] sm:$0xff]
  %v40 = vld [vmem:[%s2 + $0xc0] sm:$0xff]
  %v41 = vld [vmem:[%s2 + $0xc8] sm:$0xff]
  %v42 = vld [vmem:[%s2 + $0xd0] sm:$0xff]
  %v43 = vld [vmem:[%s1] sm:$0xf]
  %45 = vset.pattern.permute.xlu0 0
  %46 = vperm.xlu0 %45, %v43
  %v47 = vpop.permute.xlu0 %46
  %v51 = vunpack.c.l.s4 1983009808
  %v52 = vunpack.c.0.s8 %v51
  %v53 = vlaneseq
  %v54 = vshrl.u32 %v53, 7
  %v55 = vsub.s32 %v52, %v54
  %v56 = vrot.slane %v15, %v55
  %v57 = vcombine.high %v56, %v56
  %v86 = vunpack.c.l.b16 %v16
  %v87 = vunpack.c.h.b16 %v16
  %v88 = vunpack.c.l.b16 %v17
  %v89 = vunpack.c.h.b16 %v17
  %v90 = vunpack.c.l.b16 %v18
  %v91 = vunpack.c.h.b16 %v18
  %v92 = vunpack.c.l.b16 %v19
  %v93 = vunpack.c.h.b16 %v19
  %v94 = vunpack.c.l.b16 %v20
  %v95 = vunpack.c.h.b16 %v20
  %v96 = vunpack.c.l.b16 %v21
  %v97 = vunpack.c.h.b16 %v21
  %v98 = vunpack.c.l.b16 %v22
  %v99 = vunpack.c.h.b16 %v22
  %v100 = vunpack.c.l.b16 %v23
  %v101 = vunpack.c.h.b16 %v23
  %v102 = vunpack.c.l.b16 %v24
  %v103 = vunpack.c.h.b16 %v24
  %v104 = vunpack.c.l.b16 %v25
  %v105 = vunpack.c.h.b16 %v25
  %v106 = vunpack.c.l.b16 %v26
  %v107 = vunpack.c.h.b16 %v26
  %v108 = vunpack.c.l.b16 %v27
  %v109 = vunpack.c.h.b16 %v27
  %v110 = vunpack.c.l.b16 %v28
  %v111 = vunpack.c.h.b16 %v28
  %v112 = vunpack.c.l.b16 %v29
  %v113 = vunpack.c.h.b16 %v29
  %v114 = vunpack.c.l.b16 %v30
  %v115 = vunpack.c.h.b16 %v30
  %v116 = vunpack.c.l.b16 %v31
  %v117 = vunpack.c.h.b16 %v31
  %v118 = vunpack.c.l.b16 %v32
  %v119 = vunpack.c.h.b16 %v32
  %v120 = vunpack.c.l.b16 %v33
  %v121 = vunpack.c.h.b16 %v33
  %v122 = vunpack.c.l.b16 %v34
  %v123 = vunpack.c.h.b16 %v34
  %v124 = vunpack.c.l.b16 %v35
  %v125 = vunpack.c.h.b16 %v35
  %v126 = vunpack.c.l.b16 %v36
  %v127 = vunpack.c.h.b16 %v36
  %v128 = vunpack.c.l.b16 %v37
  %v129 = vunpack.c.h.b16 %v37
  %v130 = vunpack.c.l.b16 %v38
  %v131 = vunpack.c.h.b16 %v38
  %v132 = vunpack.c.l.b16 %v39
  %v133 = vunpack.c.h.b16 %v39
  %v134 = vunpack.c.l.b16 %v40
  %v135 = vunpack.c.h.b16 %v40
  %v136 = vunpack.c.l.b16 %v41
  %v137 = vunpack.c.h.b16 %v41
  %v138 = vunpack.c.l.b16 %v42
  %v139 = vunpack.c.h.b16 %v42
  %v140 = vpack.c.b16 %v88, %v86
  %v141 = vpack.c.b16 %v89, %v87
  %v142 = vpack.c.b16 %v92, %v90
  %v143 = vpack.c.b16 %v93, %v91
  %v144 = vpack.c.b16 %v96, %v94
  %v145 = vpack.c.b16 %v97, %v95
  %v146 = vpack.c.b16 %v100, %v98
  %v147 = vpack.c.b16 %v101, %v99
  %v148 = vpack.c.b16 %v104, %v102
  %v149 = vpack.c.b16 %v105, %v103
  %v150 = vpack.c.b16 %v108, %v106
  %v151 = vpack.c.b16 %v109, %v107
  %v152 = vpack.c.b16 %v112, %v110
  %v153 = vpack.c.b16 %v113, %v111
  %v154 = vpack.c.b16 %v116, %v114
  %v155 = vpack.c.b16 %v117, %v115
  %v156 = vpack.c.b16 %v120, %v118
  %v157 = vpack.c.b16 %v121, %v119
  %v158 = vpack.c.b16 %v124, %v122
  %v159 = vpack.c.b16 %v125, %v123
  %v160 = vpack.c.b16 %v128, %v126
  %v161 = vpack.c.b16 %v129, %v127
  %v162 = vpack.c.b16 %v132, %v130
  %v163 = vpack.c.b16 %v133, %v131
  %v164 = vpack.c.b16 %v136, %v134
  %v165 = vpack.c.b16 %v137, %v135
  %v166 = vpack.c.b16 %v138, %v138
  %v167 = vpack.c.b16 %v139, %v139
  %vm194 = vcmask 719872
  %v196 = vsel %vm194, %v57, 0
  %vm198 = vcmask 1043456
  %v200 = vsel %vm198, %v166, 0
  %v203 = vsel %vm198, %v167, 0
  %205 = vmatprep.subr.bf16.mxu0 %v155
  %206 = vmatpush1.bf16.msra.mxu0 %v154
  %207 = vmatprep.subr.bf16.mxu0 %v153
  %208 = vmatpush1.bf16.msra.mxu0 %v152
  %209 = vmatprep.subr.bf16.mxu0 %v151
  %210 = vmatpush1.bf16.msra.mxu0 %v150
  %211 = vmatprep.subr.bf16.mxu0 %v149
  %212 = vmatpush1.bf16.msra.mxu0 %v148
  %213 = vmatprep.subr.bf16.mxu0 %v147
  %214 = vmatpush1.bf16.msra.mxu0 %v146
  %215 = vmatprep.subr.bf16.mxu0 %v145
  %216 = vmatpush1.bf16.msra.mxu0 %v144
  %217 = vmatprep.subr.bf16.mxu0 %v143
  %218 = vmatpush1.bf16.msra.mxu0 %v142
  %219 = vmatprep.subr.bf16.mxu0 %v141
  %220 = vmatpush1.bf16.msra.mxu0 %v140
  %221 = vmatprep.subr.bf16.mxu0 0
  %222 = vmatpush2.bf16.msra.mxu0 0
  %223 = vmatprep.subr.bf16.mxu0 0
  %224 = vmatpush2.bf16.msra.mxu0 0
  %225 = vmatprep.subr.bf16.mxu0 %v203
  %226 = vmatpush2.bf16.msra.mxu0 %v200
  %227 = vmatprep.subr.bf16.mxu0 %v165
  %228 = vmatpush2.bf16.msra.mxu0 %v164
  %229 = vmatprep.subr.bf16.mxu0 %v163
  %230 = vmatpush2.bf16.msra.mxu0 %v162
  %231 = vmatprep.subr.bf16.mxu0 %v161
  %232 = vmatpush2.bf16.msra.mxu0 %v160
  %233 = vmatprep.subr.bf16.mxu0 %v159
  %234 = vmatpush2.bf16.msra.mxu0 %v158
  %235 = vmatprep.subr.bf16.mxu0 %v157
  %236 = vmatpush2.bf16.msra.mxu0 %v156
  %237 = vmatprep.mubr.bf16.mxu0 %v196
  %238 = vmatmul.mubr.bf16.gmra.mxu0 %v56
  %v239 = vpop.f32.mrf.mxu0
  %v240 = vadd.f32 %v47, %v239
  %v241 = vpop.f32.mrf.mxu0
  %v242 = vadd.f32 %v47, %v241
  %v243 = vpop.f32.mrf.mxu0
  %v244 = vpop.f32.mrf.mxu0
  %245 = vdwg.mxu0
  %v246 = vmax.f32 %v240, 0.0
  %v247 = vmax.f32 %v242, 0.0
  %v250 = vcombine.low %v246, %v247
  %252 = vst [vmem:[%s3] sm:$0xff] %v250
  // Predicated region
  $region14: #{temporal_decoder2_forward.63} parent=0 // pred_check
    _
  $region15: #{temporal_decoder2_forward.63} parent=0 // pred_check_branch
    %254 = sbr.rel (0) target = $region17
  $region16: #{temporal_decoder2_forward.63} parent=0 // pred_region
    _
  $region17: #{temporal_decoder2_forward.63} parent=0 // pred_fallthru
    _
  // Predicated region
  $region18: #{temporal_decoder2_forward.63} parent=0 // pred_check
    _
  $region19: #{temporal_decoder2_forward.63} parent=0 // pred_check_branch
    %256 = sbr.rel (0) target = $region21
  $region20: #{temporal_decoder2_forward.63} parent=0 // pred_region
    _
  $region21: #{temporal_decoder2_forward.63} parent=0 // pred_fallthru
    _

// kernel: temporal_decoder2_forward.62
$region0: #{temporal_decoder2_forward.62}
  #allocation0 [shape = 'u32[]', space=smem, size = 0x4, offset = 0x4, fixed_abs, tag = 'smem constant byte address 0x4 - core index']
  #allocation1 [shape = 'u32[144,128]{1,0:T(1,128)}', space=vmem, size = 0x12000, scoped, tag = 'internal scratch']
  %s0 = inlined_call_operand.vmem [shape: bf16[4,216], index: 0, kind: input, shape index: {}]
  %s1 = inlined_call_operand.vmem [shape: f32[4,1], index: 1, kind: input, shape index: {}]
  %s2 = inlined_call_operand.vmem [shape: bf16[216,256], index: 2, kind: input, shape index: {}]
  %s3 = inlined_call_operand.vmem [shape: f32[4,256], index: 3, kind: output, shape index: {}]
  %s4 = sld [smem:[#allocation0]]
  $region22: #{temporal_decoder2_forward.62} parent=0
    _
  %s6 = ssub.s32 1, %s4
  %s7 = scalar_select 0, %s6, %s4
  // Predicated region
  $region2: #{temporal_decoder2_forward.62} parent=0 // pred_check
    _
  $region3: #{temporal_decoder2_forward.62} parent=0 // pred_check_branch
    %9 = sbr.rel (0) target = $region5
  $region4: #{temporal_decoder2_forward.62} parent=0 // pred_region
    _
  $region5: #{temporal_decoder2_forward.62} parent=0 // pred_fallthru
    _
  // Predicated region
  $region6: #{temporal_decoder2_forward.62} parent=0 // pred_check
    _
  $region7: #{temporal_decoder2_forward.62} parent=0 // pred_check_branch
    %11 = sbr.rel (0) target = $region9
  $region8: #{temporal_decoder2_forward.62} parent=0 // pred_region
    _
  $region9: #{temporal_decoder2_forward.62} parent=0 // pred_fallthru
    _
  // Predicated region
  $region10: #{temporal_decoder2_forward.62} parent=0 // pred_check
    _
  $region11: #{temporal_decoder2_forward.62} parent=0 // pred_check_branch
    %13 = sbr.rel (0) target = $region13
  $region12: #{temporal_decoder2_forward.62} parent=0 // pred_region
    _
  $region13: #{temporal_decoder2_forward.62} parent=0 // pred_fallthru
    _
  %v15 = vld [vmem:[%s0] sm:$0xf]
  %v16 = vld [vmem:[%s2] sm:$0xff]
  %v17 = vld [vmem:[%s2 + $0x8] sm:$0xff]
  %v18 = vld [vmem:[%s2 + $0x10] sm:$0xff]
  %v19 = vld [vmem:[%s2 + $0x18] sm:$0xff]
  %v20 = vld [vmem:[%s2 + $0x20] sm:$0xff]
  %v21 = vld [vmem:[%s2 + $0x28] sm:$0xff]
  %v22 = vld [vmem:[%s2 + $0x30] sm:$0xff]
  %v23 = vld [vmem:[%s2 + $0x38] sm:$0xff]
  %v24 = vld [vmem:[%s2 + $0x40] sm:$0xff]
  %v25 = vld [vmem:[%s2 + $0x48] sm:$0xff]
  %v26 = vld [vmem:[%s2 + $0x50] sm:$0xff]
  %v27 = vld [vmem:[%s2 + $0x58] sm:$0xff]
  %v28 = vld [vmem:[%s2 + $0x60] sm:$0xff]
  %v29 = vld [vmem:[%s2 + $0x68] sm:$0xff]
  %v30 = vld [vmem:[%s2 + $0x70] sm:$0xff]
  %v31 = vld [vmem:[%s2 + $0x78] sm:$0xff]
  %v32 = vld [vmem:[%s2 + $0x80] sm:$0xff]
  %v33 = vld [vmem:[%s2 + $0x88] sm:$0xff]
  %v34 = vld [vmem:[%s2 + $0x90] sm:$0xff]
  %v35 = vld [vmem:[%s2 + $0x98] sm:$0xff]
  %v36 = vld [vmem:[%s2 + $0xa0] sm:$0xff]
  %v37 = vld [vmem:[%s2 + $0xa8] sm:$0xff]
  %v38 = vld [vmem:[%s2 + $0xb0] sm:$0xff]
  %v39 = vld [vmem:[%s2 + $0xb8] sm:$0xff]
  %v40 = vld [vmem:[%s2 + $0xc0] sm:$0xff]
  %v41 = vld [vmem:[%s2 + $0xc8] sm:$0xff]
  %v42 = vld [vmem:[%s2 + $0xd0] sm:$0xff]
  %v43 = vld [vmem:[%s1] sm:$0xf]
  %45 = vset.pattern.permute.xlu0 0
  %46 = vperm.xlu0 %45, %v43
  %v47 = vpop.permute.xlu0 %46
  %v51 = vunpack.c.l.s4 1983009808
  %v52 = vunpack.c.0.s8 %v51
  %v53 = vlaneseq
  %v54 = vshrl.u32 %v53, 7
  %v55 = vsub.s32 %v52, %v54
  %v56 = vrot.slane %v15, %v55
  %v57 = vcombine.high %v56, %v56
  %v86 = vunpack.c.l.b16 %v16
  %v87 = vunpack.c.h.b16 %v16
  %v88 = vunpack.c.l.b16 %v17
  %v89 = vunpack.c.h.b16 %v17
  %v90 = vunpack.c.l.b16 %v18
  %v91 = vunpack.c.h.b16 %v18
  %v92 = vunpack.c.l.b16 %v19
  %v93 = vunpack.c.h.b16 %v19
  %v94 = vunpack.c.l.b16 %v20
  %v95 = vunpack.c.h.b16 %v20
  %v96 = vunpack.c.l.b16 %v21
  %v97 = vunpack.c.h.b16 %v21
  %v98 = vunpack.c.l.b16 %v22
  %v99 = vunpack.c.h.b16 %v22
  %v100 = vunpack.c.l.b16 %v23
  %v101 = vunpack.c.h.b16 %v23
  %v102 = vunpack.c.l.b16 %v24
  %v103 = vunpack.c.h.b16 %v24
  %v104 = vunpack.c.l.b16 %v25
  %v105 = vunpack.c.h.b16 %v25
  %v106 = vunpack.c.l.b16 %v26
  %v107 = vunpack.c.h.b16 %v26
  %v108 = vunpack.c.l.b16 %v27
  %v109 = vunpack.c.h.b16 %v27
  %v110 = vunpack.c.l.b16 %v28
  %v111 = vunpack.c.h.b16 %v28
  %v112 = vunpack.c.l.b16 %v29
  %v113 = vunpack.c.h.b16 %v29
  %v114 = vunpack.c.l.b16 %v30
  %v115 = vunpack.c.h.b16 %v30
  %v116 = vunpack.c.l.b16 %v31
  %v117 = vunpack.c.h.b16 %v31
  %v118 = vunpack.c.l.b16 %v32
  %v119 = vunpack.c.h.b16 %v32
  %v120 = vunpack.c.l.b16 %v33
  %v121 = vunpack.c.h.b16 %v33
  %v122 = vunpack.c.l.b16 %v34
  %v123 = vunpack.c.h.b16 %v34
  %v124 = vunpack.c.l.b16 %v35
  %v125 = vunpack.c.h.b16 %v35
  %v126 = vunpack.c.l.b16 %v36
  %v127 = vunpack.c.h.b16 %v36
  %v128 = vunpack.c.l.b16 %v37
  %v129 = vunpack.c.h.b16 %v37
  %v130 = vunpack.c.l.b16 %v38
  %v131 = vunpack.c.h.b16 %v38
  %v132 = vunpack.c.l.b16 %v39
  %v133 = vunpack.c.h.b16 %v39
  %v134 = vunpack.c.l.b16 %v40
  %v135 = vunpack.c.h.b16 %v40
  %v136 = vunpack.c.l.b16 %v41
  %v137 = vunpack.c.h.b16 %v41
  %v138 = vunpack.c.l.b16 %v42
  %v139 = vunpack.c.h.b16 %v42
  %v140 = vpack.c.b16 %v88, %v86
  %v141 = vpack.c.b16 %v89, %v87
  %v142 = vpack.c.b16 %v92, %v90
  %v143 = vpack.c.b16 %v93, %v91
  %v144 = vpack.c.b16 %v96, %v94
  %v145 = vpack.c.b16 %v97, %v95
  %v146 = vpack.c.b16 %v100, %v98
  %v147 = vpack.c.b16 %v101, %v99
  %v148 = vpack.c.b16 %v104, %v102
  %v149 = vpack.c.b16 %v105, %v103
  %v150 = vpack.c.b16 %v108, %v106
  %v151 = vpack.c.b16 %v109, %v107
  %v152 = vpack.c.b16 %v112, %v110
  %v153 = vpack.c.b16 %v113, %v111
  %v154 = vpack.c.b16 %v116, %v114
  %v155 = vpack.c.b16 %v117, %v115
  %v156 = vpack.c.b16 %v120, %v118
  %v157 = vpack.c.b16 %v121, %v119
  %v158 = vpack.c.b16 %v124, %v122
  %v159 = vpack.c.b16 %v125, %v123
  %v160 = vpack.c.b16 %v128, %v126
  %v161 = vpack.c.b16 %v129, %v127
  %v162 = vpack.c.b16 %v132, %v130
  %v163 = vpack.c.b16 %v133, %v131
  %v164 = vpack.c.b16 %v136, %v134
  %v165 = vpack.c.b16 %v137, %v135
  %v166 = vpack.c.b16 %v138, %v138
  %v167 = vpack.c.b16 %v139, %v139
  %vm194 = vcmask 719872
  %v196 = vsel %vm194, %v57, 0
  %vm198 = vcmask 1043456
  %v200 = vsel %vm198, %v166, 0
  %v203 = vsel %vm198, %v167, 0
  %205 = vmatprep.subr.bf16.mxu0 %v155
  %206 = vmatpush1.bf16.msra.mxu0 %v154
  %207 = vmatprep.subr.bf16.mxu0 %v153
  %208 = vmatpush1.bf16.msra.mxu0 %v152
  %209 = vmatprep.subr.bf16.mxu0 %v151
  %210 = vmatpush1.bf16.msra.mxu0 %v150
  %211 = vmatprep.subr.bf16.mxu0 %v149
  %212 = vmatpush1.bf16.msra.mxu0 %v148
  %213 = vmatprep.subr.bf16.mxu0 %v147
  %214 = vmatpush1.bf16.msra.mxu0 %v146
  %215 = vmatprep.subr.bf16.mxu0 %v145
  %216 = vmatpush1.bf16.msra.mxu0 %v144
  %217 = vmatprep.subr.bf16.mxu0 %v143
  %218 = vmatpush1.bf16.msra.mxu0 %v142
  %219 = vmatprep.subr.bf16.mxu0 %v141
  %220 = vmatpush1.bf16.msra.mxu0 %v140
  %221 = vmatprep.subr.bf16.mxu0 0
  %222 = vmatpush2.bf16.msra.mxu0 0
  %223 = vmatprep.subr.bf16.mxu0 0
  %224 = vmatpush2.bf16.msra.mxu0 0
  %225 = vmatprep.subr.bf16.mxu0 %v203
  %226 = vmatpush2.bf16.msra.mxu0 %v200
  %227 = vmatprep.subr.bf16.mxu0 %v165
  %228 = vmatpush2.bf16.msra.mxu0 %v164
  %229 = vmatprep.subr.bf16.mxu0 %v163
  %230 = vmatpush2.bf16.msra.mxu0 %v162
  %231 = vmatprep.subr.bf16.mxu0 %v161
  %232 = vmatpush2.bf16.msra.mxu0 %v160
  %233 = vmatprep.subr.bf16.mxu0 %v159
  %234 = vmatpush2.bf16.msra.mxu0 %v158
  %235 = vmatprep.subr.bf16.mxu0 %v157
  %236 = vmatpush2.bf16.msra.mxu0 %v156
  %237 = vmatprep.mubr.bf16.mxu0 %v196
  %238 = vmatmul.mubr.bf16.gmra.mxu0 %v56
  %v239 = vpop.f32.mrf.mxu0
  %v240 = vadd.f32 %v47, %v239
  %v241 = vpop.f32.mrf.mxu0
  %v242 = vadd.f32 %v47, %v241
  %v243 = vpop.f32.mrf.mxu0
  %v244 = vpop.f32.mrf.mxu0
  %245 = vdwg.mxu0
  %v248 = vcombine.low %v240, %v242
  %250 = vst [vmem:[%s3] sm:$0xff] %v248
  // Predicated region
  $region14: #{temporal_decoder2_forward.62} parent=0 // pred_check
    _
  $region15: #{temporal_decoder2_forward.62} parent=0 // pred_check_branch
    %252 = sbr.rel (0) target = $region17
  $region16: #{temporal_decoder2_forward.62} parent=0 // pred_region
    _
  $region17: #{temporal_decoder2_forward.62} parent=0 // pred_fallthru
    _
  // Predicated region
  $region18: #{temporal_decoder2_forward.62} parent=0 // pred_check
    _
  $region19: #{temporal_decoder2_forward.62} parent=0 // pred_check_branch
    %254 = sbr.rel (0) target = $region21
  $region20: #{temporal_decoder2_forward.62} parent=0 // pred_region
    _
  $region21: #{temporal_decoder2_forward.62} parent=0 // pred_fallthru
    _

// kernel: temporal_decoder2_forward.64
$region0: #{temporal_decoder2_forward.64}
  #allocation0 [shape = 'u32[]', space=smem, size = 0x4, offset = 0x4, fixed_abs, tag = 'smem constant byte address 0x4 - core index']
  #allocation1 [shape = 'u32[144,128]{1,0:T(1,128)}', space=vmem, size = 0x12000, scoped, tag = 'internal scratch']
  %s0 = inlined_call_operand.vmem [shape: bf16[4,108], index: 0, kind: input, shape index: {}]
  %s1 = inlined_call_operand.vmem [shape: f32[4,1], index: 1, kind: input, shape index: {}]
  %s2 = inlined_call_operand.vmem [shape: bf16[108,256], index: 2, kind: input, shape index: {}]
  %s3 = inlined_call_operand.vmem [shape: f32[4,256], index: 3, kind: input, shape index: {}]
  %s4 = inlined_call_operand.vmem [shape: f32[4,256], index: 4, kind: output, shape index: {}]
  %s5 = sld [smem:[#allocation0]]
  $region26: #{temporal_decoder2_forward.64} parent=0
    _
  %s7 = ssub.s32 1, %s5
  %s8 = scalar_select 0, %s7, %s5
  // Predicated region
  $region2: #{temporal_decoder2_forward.64} parent=0 // pred_check
    _
  $region3: #{temporal_decoder2_forward.64} parent=0 // pred_check_branch
    %10 = sbr.rel (0) target = $region5
  $region4: #{temporal_decoder2_forward.64} parent=0 // pred_region
    _
  $region5: #{temporal_decoder2_forward.64} parent=0 // pred_fallthru
    _
  // Predicated region
  $region6: #{temporal_decoder2_forward.64} parent=0 // pred_check
    _
  $region7: #{temporal_decoder2_forward.64} parent=0 // pred_check_branch
    %12 = sbr.rel (0) target = $region9
  $region8: #{temporal_decoder2_forward.64} parent=0 // pred_region
    _
  $region9: #{temporal_decoder2_forward.64} parent=0 // pred_fallthru
    _
  // Predicated region
  $region10: #{temporal_decoder2_forward.64} parent=0 // pred_check
    _
  $region11: #{temporal_decoder2_forward.64} parent=0 // pred_check_branch
    %14 = sbr.rel (0) target = $region13
  $region12: #{temporal_decoder2_forward.64} parent=0 // pred_region
    _
  $region13: #{temporal_decoder2_forward.64} parent=0 // pred_fallthru
    _
  // Predicated region
  $region14: #{temporal_decoder2_forward.64} parent=0 // pred_check
    _
  $region15: #{temporal_decoder2_forward.64} parent=0 // pred_check_branch
    %16 = sbr.rel (0) target = $region17
  $region16: #{temporal_decoder2_forward.64} parent=0 // pred_region
    _
  $region17: #{temporal_decoder2_forward.64} parent=0 // pred_fallthru
    _
  %v18 = vld [vmem:[%s0] sm:$0x3]
  %v19 = vld [vmem:[%s2] sm:$0xff]
  %v20 = vld [vmem:[%s2 + $0x8] sm:$0xff]
  %v21 = vld [vmem:[%s2 + $0x10] sm:$0xff]
  %v22 = vld [vmem:[%s2 + $0x18] sm:$0xff]
  %v23 = vld [vmem:[%s2 + $0x20] sm:$0xff]
  %v24 = vld [vmem:[%s2 + $0x28] sm:$0xff]
  %v25 = vld [vmem:[%s2 + $0x30] sm:$0xff]
  %v26 = vld [vmem:[%s2 + $0x38] sm:$0xff]
  %v27 = vld [vmem:[%s2 + $0x40] sm:$0xff]
  %v28 = vld [vmem:[%s2 + $0x48] sm:$0xff]
  %v29 = vld [vmem:[%s2 + $0x50] sm:$0xff]
  %v30 = vld [vmem:[%s2 + $0x58] sm:$0xff]
  %v31 = vld [vmem:[%s2 + $0x60] sm:$0xff]
  %v32 = vld [vmem:[%s2 + $0x68] sm:$0x33]
  %v33 = vld [vmem:[%s1] sm:$0xf]
  %35 = vset.pattern.permute.xlu0 0
  %36 = vperm.xlu0 %35, %v33
  %v37 = vpop.permute.xlu0 %36
  %v53 = vunpack.c.l.b16 %v19
  %v54 = vunpack.c.h.b16 %v19
  %v55 = vunpack.c.l.b16 %v20
  %v56 = vunpack.c.h.b16 %v20
  %v57 = vunpack.c.l.b16 %v21
  %v58 = vunpack.c.h.b16 %v21
  %v59 = vunpack.c.l.b16 %v22
  %v60 = vunpack.c.h.b16 %v22
  %v61 = vunpack.c.l.b16 %v23
  %v62 = vunpack.c.h.b16 %v23
  %v63 = vunpack.c.l.b16 %v24
  %v64 = vunpack.c.h.b16 %v24
  %v65 = vunpack.c.l.b16 %v25
  %v66 = vunpack.c.h.b16 %v25
  %v67 = vunpack.c.l.b16 %v26
  %v68 = vunpack.c.h.b16 %v26
  %v69 = vunpack.c.l.b16 %v27
  %v70 = vunpack.c.h.b16 %v27
  %v71 = vunpack.c.l.b16 %v28
  %v72 = vunpack.c.h.b16 %v28
  %v73 = vunpack.c.l.b16 %v29
  %v74 = vunpack.c.h.b16 %v29
  %v75 = vunpack.c.l.b16 %v30
  %v76 = vunpack.c.h.b16 %v30
  %v77 = vunpack.c.l.b16 %v31
  %v78 = vunpack.c.h.b16 %v31
  %v79 = vunpack.c.l.b16 %v32
  %v80 = vunpack.c.h.b16 %v32
  %v81 = vpack.c.b16 %v55, %v53
  %v82 = vpack.c.b16 %v56, %v54
  %v83 = vpack.c.b16 %v59, %v57
  %v84 = vpack.c.b16 %v60, %v58
  %v85 = vpack.c.b16 %v63, %v61
  %v86 = vpack.c.b16 %v64, %v62
  %v87 = vpack.c.b16 %v67, %v65
  %v88 = vpack.c.b16 %v68, %v66
  %v89 = vpack.c.b16 %v71, %v69
  %v90 = vpack.c.b16 %v72, %v70
  %v91 = vpack.c.b16 %v75, %v73
  %v92 = vpack.c.b16 %v76, %v74
  %v93 = vpack.c.b16 %v79, %v77
  %v94 = vpack.c.b16 %v80, %v78
  %vm107 = vcmask 883712
  %v109 = vsel %vm107, %v18, 0
  %vm111 = vcmask 1045504
  %v113 = vsel %vm111, %v93, 0
  %v116 = vsel %vm111, %v94, 0
  %118 = vmatprep.subr.bf16.mxu0 0
  %119 = vmatpush1.bf16.msra.mxu0 0
  %120 = vmatprep.subr.bf16.mxu0 %v116
  %121 = vmatpush1.bf16.msra.mxu0 %v113
  %122 = vmatprep.subr.bf16.mxu0 %v92
  %123 = vmatpush1.bf16.msra.mxu0 %v91
  %124 = vmatprep.subr.bf16.mxu0 %v90
  %125 = vmatpush1.bf16.msra.mxu0 %v89
  %126 = vmatprep.subr.bf16.mxu0 %v88
  %127 = vmatpush1.bf16.msra.mxu0 %v87
  %128 = vmatprep.subr.bf16.mxu0 %v86
  %129 = vmatpush1.bf16.msra.mxu0 %v85
  %130 = vmatprep.subr.bf16.mxu0 %v84
  %131 = vmatpush1.bf16.msra.mxu0 %v83
  %132 = vmatprep.subr.bf16.mxu0 %v82
  %133 = vmatpush1.bf16.msra.mxu0 %v81
  %134 = vmatprep.subr.bf16.mxu0 0
  %135 = vmatpush2.bf16.msra.mxu0 0
  %136 = vmatprep.subr.bf16.mxu0 0
  %137 = vmatpush2.bf16.msra.mxu0 0
  %138 = vmatprep.subr.bf16.mxu0 0
  %139 = vmatpush2.bf16.msra.mxu0 0
  %140 = vmatprep.subr.bf16.mxu0 0
  %141 = vmatpush2.bf16.msra.mxu0 0
  %142 = vmatprep.subr.bf16.mxu0 0
  %143 = vmatpush2.bf16.msra.mxu0 0
  %144 = vmatprep.subr.bf16.mxu0 0
  %145 = vmatpush2.bf16.msra.mxu0 0
  %146 = vmatprep.subr.bf16.mxu0 0
  %147 = vmatpush2.bf16.msra.mxu0 0
  %148 = vmatprep.subr.bf16.mxu0 0
  %149 = vmatpush2.bf16.msra.mxu0 0
  %150 = vmatprep.mubr.bf16.mxu0 0
  %151 = vmatmul.mubr.bf16.gmra.mxu0 %v109
  %v152 = vpop.f32.mrf.mxu0
  %v153 = vadd.f32 %v37, %v152
  %v154 = vpop.f32.mrf.mxu0
  %v155 = vadd.f32 %v37, %v154
  %v156 = vpop.f32.mrf.mxu0
  %v157 = vpop.f32.mrf.mxu0
  %158 = vdwg.mxu0
  %v159 = vld [vmem:[%s3] sm:$0xff]
  %v161 = vcombine.high %v159, %v159
  %v163 = vadd.f32 %v153, %v159
  %v164 = vadd.f32 %v155, %v161
  %v165 = vmax.f32 %v163, 0.0
  %v166 = vmax.f32 %v164, 0.0
  %v169 = vcombine.low %v165, %v166
  %171 = vst [vmem:[%s4] sm:$0xff] %v169
  // Predicated region
  $region18: #{temporal_decoder2_forward.64} parent=0 // pred_check
    _
  $region19: #{temporal_decoder2_forward.64} parent=0 // pred_check_branch
    %173 = sbr.rel (0) target = $region21
  $region20: #{temporal_decoder2_forward.64} parent=0 // pred_region
    _
  $region21: #{temporal_decoder2_forward.64} parent=0 // pred_fallthru
    _
  // Predicated region
  $region22: #{temporal_decoder2_forward.64} parent=0 // pred_check
    _
  $region23: #{temporal_decoder2_forward.64} parent=0 // pred_check_branch
    %175 = sbr.rel (0) target = $region25
  $region24: #{temporal_decoder2_forward.64} parent=0 // pred_region
    _
  $region25: #{temporal_decoder2_forward.64} parent=0 // pred_fallthru
    _

// kernel: temporal_decoder2_forward.66
$region0: #{temporal_decoder2_forward.66}
  #allocation0 [shape = 'u32[]', space=smem, size = 0x4, offset = 0x4, fixed_abs, tag = 'smem constant byte address 0x4 - core index']
  #allocation1 [shape = 'u32[144,128]{1,0:T(1,128)}', space=vmem, size = 0x12000, scoped, tag = 'internal scratch']
  %s0 = inlined_call_operand.vmem [shape: bf16[4,108], index: 0, kind: input, shape index: {}]
  %s1 = inlined_call_operand.vmem [shape: f32[4,1], index: 1, kind: input, shape index: {}]
  %s2 = inlined_call_operand.vmem [shape: bf16[108,256], index: 2, kind: input, shape index: {}]
  %s3 = inlined_call_operand.vmem [shape: f32[4,256], index: 3, kind: output, shape index: {}]
  %s4 = sld [smem:[#allocation0]]
  $region22: #{temporal_decoder2_forward.66} parent=0
    _
  %s6 = ssub.s32 1, %s4
  %s7 = scalar_select 0, %s6, %s4
  // Predicated region
  $region2: #{temporal_decoder2_forward.66} parent=0 // pred_check
    _
  $region3: #{temporal_decoder2_forward.66} parent=0 // pred_check_branch
    %9 = sbr.rel (0) target = $region5
  $region4: #{temporal_decoder2_forward.66} parent=0 // pred_region
    _
  $region5: #{temporal_decoder2_forward.66} parent=0 // pred_fallthru
    _
  // Predicated region
  $region6: #{temporal_decoder2_forward.66} parent=0 // pred_check
    _
  $region7: #{temporal_decoder2_forward.66} parent=0 // pred_check_branch
    %11 = sbr.rel (0) target = $region9
  $region8: #{temporal_decoder2_forward.66} parent=0 // pred_region
    _
  $region9: #{temporal_decoder2_forward.66} parent=0 // pred_fallthru
    _
  // Predicated region
  $region10: #{temporal_decoder2_forward.66} parent=0 // pred_check
    _
  $region11: #{temporal_decoder2_forward.66} parent=0 // pred_check_branch
    %13 = sbr.rel (0) target = $region13
  $region12: #{temporal_decoder2_forward.66} parent=0 // pred_region
    _
  $region13: #{temporal_decoder2_forward.66} parent=0 // pred_fallthru
    _
  %v15 = vld [vmem:[%s0] sm:$0x3]
  %v16 = vld [vmem:[%s2] sm:$0xff]
  %v17 = vld [vmem:[%s2 + $0x8] sm:$0xff]
  %v18 = vld [vmem:[%s2 + $0x10] sm:$0xff]
  %v19 = vld [vmem:[%s2 + $0x18] sm:$0xff]
  %v20 = vld [vmem:[%s2 + $0x20] sm:$0xff]
  %v21 = vld [vmem:[%s2 + $0x28] sm:$0xff]
  %v22 = vld [vmem:[%s2 + $0x30] sm:$0xff]
  %v23 = vld [vmem:[%s2 + $0x38] sm:$0xff]
  %v24 = vld [vmem:[%s2 + $0x40] sm:$0xff]
  %v25 = vld [vmem:[%s2 + $0x48] sm:$0xff]
  %v26 = vld [vmem:[%s2 + $0x50] sm:$0xff]
  %v27 = vld [vmem:[%s2 + $0x58] sm:$0xff]
  %v28 = vld [vmem:[%s2 + $0x60] sm:$0xff]
  %v29 = vld [vmem:[%s2 + $0x68] sm:$0x33]
  %v30 = vld [vmem:[%s1] sm:$0xf]
  %32 = vset.pattern.permute.xlu0 0
  %33 = vperm.xlu0 %32, %v30
  %v34 = vpop.permute.xlu0 %33
  %v50 = vunpack.c.l.b16 %v16
  %v51 = vunpack.c.h.b16 %v16
  %v52 = vunpack.c.l.b16 %v17
  %v53 = vunpack.c.h.b16 %v17
  %v54 = vunpack.c.l.b16 %v18
  %v55 = vunpack.c.h.b16 %v18
  %v56 = vunpack.c.l.b16 %v19
  %v57 = vunpack.c.h.b16 %v19
  %v58 = vunpack.c.l.b16 %v20
  %v59 = vunpack.c.h.b16 %v20
  %v60 = vunpack.c.l.b16 %v21
  %v61 = vunpack.c.h.b16 %v21
  %v62 = vunpack.c.l.b16 %v22
  %v63 = vunpack.c.h.b16 %v22
  %v64 = vunpack.c.l.b16 %v23
  %v65 = vunpack.c.h.b16 %v23
  %v66 = vunpack.c.l.b16 %v24
  %v67 = vunpack.c.h.b16 %v24
  %v68 = vunpack.c.l.b16 %v25
  %v69 = vunpack.c.h.b16 %v25
  %v70 = vunpack.c.l.b16 %v26
  %v71 = vunpack.c.h.b16 %v26
  %v72 = vunpack.c.l.b16 %v27
  %v73 = vunpack.c.h.b16 %v27
  %v74 = vunpack.c.l.b16 %v28
  %v75 = vunpack.c.h.b16 %v28
  %v76 = vunpack.c.l.b16 %v29
  %v77 = vunpack.c.h.b16 %v29
  %v78 = vpack.c.b16 %v52, %v50
  %v79 = vpack.c.b16 %v53, %v51
  %v80 = vpack.c.b16 %v56, %v54
  %v81 = vpack.c.b16 %v57, %v55
  %v82 = vpack.c.b16 %v60, %v58
  %v83 = vpack.c.b16 %v61, %v59
  %v84 = vpack.c.b16 %v64, %v62
  %v85 = vpack.c.b16 %v65, %v63
  %v86 = vpack.c.b16 %v68, %v66
  %v87 = vpack.c.b16 %v69, %v67
  %v88 = vpack.c.b16 %v72, %v70
  %v89 = vpack.c.b16 %v73, %v71
  %v90 = vpack.c.b16 %v76, %v74
  %v91 = vpack.c.b16 %v77, %v75
  %vm104 = vcmask 883712
  %v106 = vsel %vm104, %v15, 0
  %vm108 = vcmask 1045504
  %v110 = vsel %vm108, %v90, 0
  %v113 = vsel %vm108, %v91, 0
  %115 = vmatprep.subr.bf16.mxu0 0
  %116 = vmatpush1.bf16.msra.mxu0 0
  %117 = vmatprep.subr.bf16.mxu0 %v113
  %118 = vmatpush1.bf16.msra.mxu0 %v110
  %119 = vmatprep.subr.bf16.mxu0 %v89
  %120 = vmatpush1.bf16.msra.mxu0 %v88
  %121 = vmatprep.subr.bf16.mxu0 %v87
  %122 = vmatpush1.bf16.msra.mxu0 %v86
  %123 = vmatprep.subr.bf16.mxu0 %v85
  %124 = vmatpush1.bf16.msra.mxu0 %v84
  %125 = vmatprep.subr.bf16.mxu0 %v83
  %126 = vmatpush1.bf16.msra.mxu0 %v82
  %127 = vmatprep.subr.bf16.mxu0 %v81
  %128 = vmatpush1.bf16.msra.mxu0 %v80
  %129 = vmatprep.subr.bf16.mxu0 %v79
  %130 = vmatpush1.bf16.msra.mxu0 %v78
  %131 = vmatprep.subr.bf16.mxu0 0
  %132 = vmatpush2.bf16.msra.mxu0 0
  %133 = vmatprep.subr.bf16.mxu0 0
  %134 = vmatpush2.bf16.msra.mxu0 0
  %135 = vmatprep.subr.bf16.mxu0 0
  %136 = vmatpush2.bf16.msra.mxu0 0
  %137 = vmatprep.subr.bf16.mxu0 0
  %138 = vmatpush2.bf16.msra.mxu0 0
  %139 = vmatprep.subr.bf16.mxu0 0
  %140 = vmatpush2.bf16.msra.mxu0 0
  %141 = vmatprep.subr.bf16.mxu0 0
  %142 = vmatpush2.bf16.msra.mxu0 0
  %143 = vmatprep.subr.bf16.mxu0 0
  %144 = vmatpush2.bf16.msra.mxu0 0
  %145 = vmatprep.subr.bf16.mxu0 0
  %146 = vmatpush2.bf16.msra.mxu0 0
  %147 = vmatprep.mubr.bf16.mxu0 0
  %148 = vmatmul.mubr.bf16.gmra.mxu0 %v106
  %v149 = vpop.f32.mrf.mxu0
  %v150 = vadd.f32 %v34, %v149
  %v151 = vpop.f32.mrf.mxu0
  %v152 = vadd.f32 %v34, %v151
  %v153 = vpop.f32.mrf.mxu0
  %v154 = vpop.f32.mrf.mxu0
  %155 = vdwg.mxu0
  %v156 = vmax.f32 %v150, 0.0
  %v157 = vmax.f32 %v152, 0.0
  %v160 = vcombine.low %v156, %v157
  %162 = vst [vmem:[%s3] sm:$0xff] %v160
  // Predicated region
  $region14: #{temporal_decoder2_forward.66} parent=0 // pred_check
    _
  $region15: #{temporal_decoder2_forward.66} parent=0 // pred_check_branch
    %164 = sbr.rel (0) target = $region17
  $region16: #{temporal_decoder2_forward.66} parent=0 // pred_region
    _
  $region17: #{temporal_decoder2_forward.66} parent=0 // pred_fallthru
    _
  // Predicated region
  $region18: #{temporal_decoder2_forward.66} parent=0 // pred_check
    _
  $region19: #{temporal_decoder2_forward.66} parent=0 // pred_check_branch
    %166 = sbr.rel (0) target = $region21
  $region20: #{temporal_decoder2_forward.66} parent=0 // pred_region
    _
  $region21: #{temporal_decoder2_forward.66} parent=0 // pred_fallthru
    _

// kernel: temporal_decoder2_forward.65
$region0: #{temporal_decoder2_forward.65}
  #allocation0 [shape = 'u32[]', space=smem, size = 0x4, offset = 0x4, fixed_abs, tag = 'smem constant byte address 0x4 - core index']
  #allocation1 [shape = 'u32[144,128]{1,0:T(1,128)}', space=vmem, size = 0x12000, scoped, tag = 'internal scratch']
  %s0 = inlined_call_operand.vmem [shape: bf16[4,108], index: 0, kind: input, shape index: {}]
  %s1 = inlined_call_operand.vmem [shape: f32[4,1], index: 1, kind: input, shape index: {}]
  %s2 = inlined_call_operand.vmem [shape: bf16[108,256], index: 2, kind: input, shape index: {}]
  %s3 = inlined_call_operand.vmem [shape: f32[4,256], index: 3, kind: output, shape index: {}]
  %s4 = sld [smem:[#allocation0]]
  $region22: #{temporal_decoder2_forward.65} parent=0
    _
  %s6 = ssub.s32 1, %s4
  %s7 = scalar_select 0, %s6, %s4
  // Predicated region
  $region2: #{temporal_decoder2_forward.65} parent=0 // pred_check
    _
  $region3: #{temporal_decoder2_forward.65} parent=0 // pred_check_branch
    %9 = sbr.rel (0) target = $region5
  $region4: #{temporal_decoder2_forward.65} parent=0 // pred_region
    _
  $region5: #{temporal_decoder2_forward.65} parent=0 // pred_fallthru
    _
  // Predicated region
  $region6: #{temporal_decoder2_forward.65} parent=0 // pred_check
    _
  $region7: #{temporal_decoder2_forward.65} parent=0 // pred_check_branch
    %11 = sbr.rel (0) target = $region9
  $region8: #{temporal_decoder2_forward.65} parent=0 // pred_region
    _
  $region9: #{temporal_decoder2_forward.65} parent=0 // pred_fallthru
    _
  // Predicated region
  $region10: #{temporal_decoder2_forward.65} parent=0 // pred_check
    _
  $region11: #{temporal_decoder2_forward.65} parent=0 // pred_check_branch
    %13 = sbr.rel (0) target = $region13
  $region12: #{temporal_decoder2_forward.65} parent=0 // pred_region
    _
  $region13: #{temporal_decoder2_forward.65} parent=0 // pred_fallthru
    _
  %v15 = vld [vmem:[%s0] sm:$0x3]
  %v16 = vld [vmem:[%s2] sm:$0xff]
  %v17 = vld [vmem:[%s2 + $0x8] sm:$0xff]
  %v18 = vld [vmem:[%s2 + $0x10] sm:$0xff]
  %v19 = vld [vmem:[%s2 + $0x18] sm:$0xff]
  %v20 = vld [vmem:[%s2 + $0x20] sm:$0xff]
  %v21 = vld [vmem:[%s2 + $0x28] sm:$0xff]
  %v22 = vld [vmem:[%s2 + $0x30] sm:$0xff]
  %v23 = vld [vmem:[%s2 + $0x38] sm:$0xff]
  %v24 = vld [vmem:[%s2 + $0x40] sm:$0xff]
  %v25 = vld [vmem:[%s2 + $0x48] sm:$0xff]
  %v26 = vld [vmem:[%s2 + $0x50] sm:$0xff]
  %v27 = vld [vmem:[%s2 + $0x58] sm:$0xff]
  %v28 = vld [vmem:[%s2 + $0x60] sm:$0xff]
  %v29 = vld [vmem:[%s2 + $0x68] sm:$0x33]
  %v30 = vld [vmem:[%s1] sm:$0xf]
  %32 = vset.pattern.permute.xlu0 0
  %33 = vperm.xlu0 %32, %v30
  %v34 = vpop.permute.xlu0 %33
  %v50 = vunpack.c.l.b16 %v16
  %v51 = vunpack.c.h.b16 %v16
  %v52 = vunpack.c.l.b16 %v17
  %v53 = vunpack.c.h.b16 %v17
  %v54 = vunpack.c.l.b16 %v18
  %v55 = vunpack.c.h.b16 %v18
  %v56 = vunpack.c.l.b16 %v19
  %v57 = vunpack.c.h.b16 %v19
  %v58 = vunpack.c.l.b16 %v20
  %v59 = vunpack.c.h.b16 %v20
  %v60 = vunpack.c.l.b16 %v21
  %v61 = vunpack.c.h.b16 %v21
  %v62 = vunpack.c.l.b16 %v22
  %v63 = vunpack.c.h.b16 %v22
  %v64 = vunpack.c.l.b16 %v23
  %v65 = vunpack.c.h.b16 %v23
  %v66 = vunpack.c.l.b16 %v24
  %v67 = vunpack.c.h.b16 %v24
  %v68 = vunpack.c.l.b16 %v25
  %v69 = vunpack.c.h.b16 %v25
  %v70 = vunpack.c.l.b16 %v26
  %v71 = vunpack.c.h.b16 %v26
  %v72 = vunpack.c.l.b16 %v27
  %v73 = vunpack.c.h.b16 %v27
  %v74 = vunpack.c.l.b16 %v28
  %v75 = vunpack.c.h.b16 %v28
  %v76 = vunpack.c.l.b16 %v29
  %v77 = vunpack.c.h.b16 %v29
  %v78 = vpack.c.b16 %v52, %v50
  %v79 = vpack.c.b16 %v53, %v51
  %v80 = vpack.c.b16 %v56, %v54
  %v81 = vpack.c.b16 %v57, %v55
  %v82 = vpack.c.b16 %v60, %v58
  %v83 = vpack.c.b16 %v61, %v59
  %v84 = vpack.c.b16 %v64, %v62
  %v85 = vpack.c.b16 %v65, %v63
  %v86 = vpack.c.b16 %v68, %v66
  %v87 = vpack.c.b16 %v69, %v67
  %v88 = vpack.c.b16 %v72, %v70
  %v89 = vpack.c.b16 %v73, %v71
  %v90 = vpack.c.b16 %v76, %v74
  %v91 = vpack.c.b16 %v77, %v75
  %vm104 = vcmask 883712
  %v106 = vsel %vm104, %v15, 0
  %vm108 = vcmask 1045504
  %v110 = vsel %vm108, %v90, 0
  %v113 = vsel %vm108, %v91, 0
  %115 = vmatprep.subr.bf16.mxu0 0
  %116 = vmatpush1.bf16.msra.mxu0 0
  %117 = vmatprep.subr.bf16.mxu0 %v113
  %118 = vmatpush1.bf16.msra.mxu0 %v110
  %119 = vmatprep.subr.bf16.mxu0 %v89
  %120 = vmatpush1.bf16.msra.mxu0 %v88
  %121 = vmatprep.subr.bf16.mxu0 %v87
  %122 = vmatpush1.bf16.msra.mxu0 %v86
  %123 = vmatprep.subr.bf16.mxu0 %v85
  %124 = vmatpush1.bf16.msra.mxu0 %v84
  %125 = vmatprep.subr.bf16.mxu0 %v83
  %126 = vmatpush1.bf16.msra.mxu0 %v82
  %127 = vmatprep.subr.bf16.mxu0 %v81
  %128 = vmatpush1.bf16.msra.mxu0 %v80
  %129 = vmatprep.subr.bf16.mxu0 %v79
  %130 = vmatpush1.bf16.msra.mxu0 %v78
  %131 = vmatprep.subr.bf16.mxu0 0
  %132 = vmatpush2.bf16.msra.mxu0 0
  %133 = vmatprep.subr.bf16.mxu0 0
  %134 = vmatpush2.bf16.msra.mxu0 0
  %135 = vmatprep.subr.bf16.mxu0 0
  %136 = vmatpush2.bf16.msra.mxu0 0
  %137 = vmatprep.subr.bf16.mxu0 0
  %138 = vmatpush2.bf16.msra.mxu0 0
  %139 = vmatprep.subr.bf16.mxu0 0
  %140 = vmatpush2.bf16.msra.mxu0 0
  %141 = vmatprep.subr.bf16.mxu0 0
  %142 = vmatpush2.bf16.msra.mxu0 0
  %143 = vmatprep.subr.bf16.mxu0 0
  %144 = vmatpush2.bf16.msra.mxu0 0
  %145 = vmatprep.subr.bf16.mxu0 0
  %146 = vmatpush2.bf16.msra.mxu0 0
  %147 = vmatprep.mubr.bf16.mxu0 0
  %148 = vmatmul.mubr.bf16.gmra.mxu0 %v106
  %v149 = vpop.f32.mrf.mxu0
  %v150 = vadd.f32 %v34, %v149
  %v151 = vpop.f32.mrf.mxu0
  %v152 = vadd.f32 %v34, %v151
  %v153 = vpop.f32.mrf.mxu0
  %v154 = vpop.f32.mrf.mxu0
  %155 = vdwg.mxu0
  %v158 = vcombine.low %v150, %v152
  %160 = vst [vmem:[%s3] sm:$0xff] %v158
  // Predicated region
  $region14: #{temporal_decoder2_forward.65} parent=0 // pred_check
    _
  $region15: #{temporal_decoder2_forward.65} parent=0 // pred_check_branch
    %162 = sbr.rel (0) target = $region17
  $region16: #{temporal_decoder2_forward.65} parent=0 // pred_region
    _
  $region17: #{temporal_decoder2_forward.65} parent=0 // pred_fallthru
    _
  // Predicated region
  $region18: #{temporal_decoder2_forward.65} parent=0 // pred_check
    _
  $region19: #{temporal_decoder2_forward.65} parent=0 // pred_check_branch
    %164 = sbr.rel (0) target = $region21
  $region20: #{temporal_decoder2_forward.65} parent=0 // pred_region
    _
  $region21: #{temporal_decoder2_forward.65} parent=0 // pred_fallthru
    _

</llo_original>
